<compile_context>
chip_gen: v7x
topology: tpu7x:2x2x1
jax: 0.10.0
libtpu: 0.0.40
codegen_flags: <defaults>
</compile_context>

<pallas_src>
import functools

import jax
import jax.numpy as jnp
import numpy as np
from jax.experimental import pallas as pl
from jax.experimental.pallas import tpu as pltpu

INV_SQRT2 = 0.7071067811865476
GN_EPS = 1e-5  # nn.GroupNorm default
LANE = 128


def _gelu_exact(x):
    # PyTorch nn.GELU() default (approximate='none'): 0.5*x*(1+erf(x/sqrt(2)))
    return 0.5 * x * (1.0 + jax.lax.erf(x * INV_SQRT2))


def _f32(v):
    # No-op (not even a convert) when the value is already f32.
    return v if v.dtype == jnp.float32 else v.astype(jnp.float32)


def _mednext_kernel(x_ref, dww_ref, gnw_ref, gnb_ref,
                    w1_ref, b1_ref, w2_ref, b2_ref, ls_ref,
                    o_ref, xpad_ref, y_ref, *, K, dil, E, pad, w_lo):
    """Fused MedNeXt block for one (batch, 128-channel tile) slab.

    x_ref    : (D, H, W, CB)    channels-last input slab            [VMEM]
    dww_ref  : (K^3, CB)        depthwise conv weights              [VMEM]
    gnw/gnb/b2/ls : (1, CB)     per-channel rows                    [VMEM]
    w1/b1/w2 : (E, CB)          grouped 1x1 conv params (group=1)   [VMEM]
    o_ref    : (D, H, W, CB)    output slab                         [VMEM]
    xpad_ref : (Dp, Hp, Wp, CB) halo scratch (low W pad = w_lo)     [scratch]
    y_ref    : (D, H, W, CB)    f32 conv-output scratch             [scratch]
    """
    D, H, W, CB = x_ref.shape
    Dp, Hp, Wp, _ = xpad_ref.shape

    # ---- zero only the thin halo shells (interior is overwritten below) ----
    if pad > 0:
        zD = jnp.zeros((pad, Hp, Wp, CB), xpad_ref.dtype)
        xpad_ref[pl.ds(0, pad), pl.ds(0, Hp), pl.ds(0, Wp), :] = zD
        xpad_ref[pl.ds(pad + D, pad), pl.ds(0, Hp), pl.ds(0, Wp), :] = zD
        zH = jnp.zeros((D, pad, Wp, CB), xpad_ref.dtype)
        xpad_ref[pl.ds(pad, D), pl.ds(0, pad), pl.ds(0, Wp), :] = zH
        xpad_ref[pl.ds(pad, D), pl.ds(pad + H, pad), pl.ds(0, Wp), :] = zH
        zW = jnp.zeros((D, H, pad, CB), xpad_ref.dtype)
        xpad_ref[pl.ds(pad, D), pl.ds(pad, H), pl.ds(w_lo - pad, pad), :] = zW
        xpad_ref[pl.ds(pad, D), pl.ds(pad, H), pl.ds(w_lo + W, pad), :] = zW

    # ---- sublane-aligned interior copy (w_lo is a multiple of 8) ----
    xpad_ref[pl.ds(pad, D), pl.ds(pad, H), pl.ds(w_lo, W), :] = x_ref[...]

    # ---- depthwise K^3 conv, dilation `dil` ----
    # kw (W / sublane shift) is the OUTER loop: one realigned read per kw;
    # kd/kh taps are leading-dim slices of the pre-shifted slab (cheap, no
    # sublane realignment).  Channels stay on lanes -> lane-wise FMAs only.
    dww = _f32(dww_ref[...])                               # (K^3, CB), cast once
    w_base = w_lo - pad
    y = None
    for kw in range(K):
        xw = _f32(xpad_ref[pl.ds(0, Dp), pl.ds(0, Hp),
                           pl.ds(w_base + kw * dil, W), :])   # (Dp, Hp, W, CB)
        for kd in range(K):
            for kh in range(K):
                wv = dww[kd * K * K + kh * K + kw, :]
                tap = xw[kd * dil:kd * dil + D, kh * dil:kh * dil + H]
                t = wv * tap
                y = t if y is None else y + t

    # ---- GroupNorm(num_groups=dim): per-channel stats, fused pass, f32 ----
    # The depthwise-conv bias is a per-channel constant, so it cancels exactly
    # under the per-channel mean subtraction and never touches the volume.
    inv_n = 1.0 / float(D * H * W)
    s = jnp.sum(y, axis=(0, 1, 2))                         # (CB,)
    s2 = jnp.sum(y * y, axis=(0, 1, 2))                    # (CB,)
    mu = s * inv_n
    var = jnp.maximum(s2 * inv_n - mu * mu, 0.0)           # clamp cancellation
    inv = jax.lax.rsqrt(var + GN_EPS)
    scale = _f32(gnw_ref[0, :]) * inv
    shift = _f32(gnb_ref[0, :]) - mu * scale

    y_ref[...] = y                                         # single f32 scratch

    w1 = _f32(w1_ref[...])                                 # (E, CB)
    b1 = _f32(b1_ref[...])
    w2 = _f32(w2_ref[...])
    b2 = _f32(b2_ref[0, :])
    ls = _f32(ls_ref[0, :])

    # ---- D-chunked normalize -> expand -> GELU -> contract -> scale+residual
    # (no full-volume yn / h / out temporaries; StochasticDepth p=0 -> identity)
    def mlp_row(d, carry):
        yn = y_ref[d] * scale + shift                      # (H, W, CB)
        acc = None
        for e in range(E):
            h = yn * w1[e] + b1[e]
            t = w2[e] * _gelu_exact(h)
            acc = t if acc is None else acc + t
        acc = acc + b2
        o_ref[d] = (ls * acc + _f32(x_ref[d])).astype(o_ref.dtype)
        return carry

    jax.lax.fori_loop(0, D, mlp_row, 0, unroll=True if D <= 8 else 2)


def _vmem_limit_bytes():
    # ~3/4 of physical VMEM: ~48 MiB on v7x (64 MiB), ~96 MiB on v5e/v6e.
    try:
        cap = int(pltpu.get_tpu_info().vmem_capacity_bytes)
    except Exception:
        cap = 64 * 1024 * 1024
    return min(cap * 3 // 4, 112 * 1024 * 1024)


def mednext_block(x, params, *, kernel_size, dilation, exp_rate):
    """x: (N, C, D, H, W) like the PyTorch module; returns the same layout.

    NCDHW<->NDHWC transposes are layout plumbing for the lane-dense kernel.
    """
    N, C, D, H, W = x.shape
    K, E = kernel_size, exp_rate
    assert K % 2 == 1, "odd kernel sizes only ('same' depthwise conv)"
    pad = (K + (K - 1) * (dilation - 1) - 1) // 2

    # Lane-dense channel tiling: pad C up to a multiple of 128.  Padded
    # channels stay exactly zero through every stage (incl. GroupNorm, whose
    # rsqrt(0+eps) is finite and multiplied by a zero gamma) and are sliced off.
    Cp = ((C + LANE - 1) // LANE) * LANE
    CB = LANE
    n_ct = Cp // CB

    # Sublane-aligned low-side W padding inside the halo scratch.
    w_lo = ((pad + 7) // 8) * 8 if pad > 0 else 0
    Dp, Hp, Wp = D + 2 * pad, H + 2 * pad, w_lo + W + pad

    def cpad(a, axis):
        if Cp == C:
            return a
        widths = [(0, 0)] * a.ndim
        widths[axis] = (0, Cp - C)
        return jnp.pad(a, widths)

    # Channels-last input (N, D, H, W, Cp): channels on the lane axis.
    xl = cpad(jnp.transpose(x, (0, 2, 3, 4, 1)), 4)

    # Per-channel params as lane-aligned rows.
    dw_w = jnp.transpose(cpad(params["dw_w"].reshape(C, K * K * K), 0), (1, 0))
    w1 = jnp.transpose(cpad(params["w1"], 0), (1, 0))   # (E, Cp)
    b1 = jnp.transpose(cpad(params["b1"], 0), (1, 0))
    w2 = jnp.transpose(cpad(params["w2"], 0), (1, 0))
    row = lambda p: cpad(p, 0).reshape(1, Cp)
    gn_w, gn_b = row(params["gn_w"]), row(params["gn_b"])
    b2, ls = row(params["b2"]), row(params["ls"])
    # NOTE: params["dw_b"] is intentionally not passed to the kernel: the
    # per-channel depthwise bias cancels exactly under per-channel GroupNorm.

    kern = functools.partial(_mednext_kernel, K=K, dil=dilation, E=E,
                             pad=pad, w_lo=w_lo)

    vol_spec = pl.BlockSpec((None, D, H, W, CB), lambda n, cb: (n, 0, 0, 0, cb))
    c_spec = lambda rows: pl.BlockSpec((rows, CB), lambda n, cb: (0, cb))

    out = pl.pallas_call(
        kern,
        out_shape=jax.ShapeDtypeStruct((N, D, H, W, Cp), x.dtype),
        grid_spec=pltpu.PrefetchScalarGridSpec(
            num_scalar_prefetch=0,
            grid=(N, n_ct),
            in_specs=[
                vol_spec,           # x (channels-last)
                c_spec(K * K * K),  # dw_w
                c_spec(1),          # gn_w
                c_spec(1),          # gn_b
                c_spec(E),          # w1
                c_spec(E),          # b1
                c_spec(E),          # w2
                c_spec(1),          # b2
                c_spec(1),          # layer_scale
            ],
            out_specs=vol_spec,
            scratch_shapes=[pltpu.VMEM((Dp, Hp, Wp, CB), x.dtype),
                            pltpu.VMEM((D, H, W, CB), jnp.float32)]),
        compiler_params=pltpu.CompilerParams(
            dimension_semantics=("parallel", "parallel"),
            vmem_limit_bytes=_vmem_limit_bytes()),
    )(xl, dw_w, gn_w, gn_b, w1, b1, w2, b2, ls)

    if Cp != C:
        out = out[..., :C]
    return jnp.transpose(out, (0, 4, 1, 2, 3))  # back to NCDHW


def mednext_reference(x, p, *, kernel_size, dilation, exp_rate):
    """Pure-JAX reference mirroring the PyTorch forward pass (NCDHW)."""
    N, C, D, H, W = x.shape
    K = kernel_size
    pad = (K + (K - 1) * (dilation - 1) - 1) // 2

    # depthwise conv3d (groups=dim) + bias
    y = jax.lax.conv_general_dilated(
        x, p["dw_w"].reshape(C, 1, K, K, K),
        window_strides=(1, 1, 1),
        padding=[(pad, pad)] * 3,
        rhs_dilation=(dilation,) * 3,
        dimension_numbers=("NCDHW", "OIDHW", "NCDHW"),
        feature_group_count=C,
        precision=jax.lax.Precision.HIGHEST)
    y = y + p["dw_b"][None, :, None, None, None]

    # GroupNorm(dim, dim)
    mu = jnp.mean(y, axis=(2, 3, 4), keepdims=True)
    var = jnp.var(y, axis=(2, 3, 4), keepdims=True)
    yn = (y - mu) * jax.lax.rsqrt(var + GN_EPS)
    yn = yn * p["gn_w"][None, :, None, None, None] + p["gn_b"][None, :, None, None, None]

    # grouped 1x1 expand -> exact GELU -> grouped 1x1 contract (group size 1)
    h = (yn[:, :, None] * p["w1"][None, :, :, None, None, None]
         + p["b1"][None, :, :, None, None, None])
    g = 0.5 * h * (1.0 + jax.lax.erf(h * INV_SQRT2))
    out = (jnp.sum(g * p["w2"][None, :, :, None, None, None], axis=2)
           + p["b2"][None, :, None, None, None])

    return p["ls"][None, :, None, None, None] * out + x


if __name__ == "__main__":
    def run_case(key, N, C, D, H, W, K, DIL, E):
        ks = jax.random.split(key, 10)
        params = {
            "dw_w": 0.1 * jax.random.normal(ks[0], (C, K, K, K), jnp.float32),
            "dw_b": 0.1 * jax.random.normal(ks[1], (C,), jnp.float32),
            "gn_w": 1.0 + 0.1 * jax.random.normal(ks[2], (C,), jnp.float32),
            "gn_b": 0.1 * jax.random.normal(ks[3], (C,), jnp.float32),
            "w1": 0.1 * jax.random.normal(ks[4], (C, E), jnp.float32),
            "b1": 0.1 * jax.random.normal(ks[5], (C, E), jnp.float32),
            "w2": 0.1 * jax.random.normal(ks[6], (C, E), jnp.float32),
            "b2": 0.1 * jax.random.normal(ks[7], (C,), jnp.float32),
            # module default is 1e-6 * ones; larger value so the correctness
            # check actually exercises the block path.
            "ls": jnp.full((C,), 1e-2, jnp.float32),
        }
        x = jax.random.normal(ks[8], (N, C, D, H, W), jnp.float32)

        fn = jax.jit(functools.partial(mednext_block, kernel_size=K,
                                       dilation=DIL, exp_rate=E))
        out = jax.block_until_ready(fn(x, params))
        ref = jax.block_until_ready(
            mednext_reference(x, params, kernel_size=K, dilation=DIL, exp_rate=E))

        assert out.shape == (N, C, D, H, W)
        np.testing.assert_allclose(np.asarray(out), np.asarray(ref),
                                   rtol=1e-4, atol=1e-4)

    key = jax.random.PRNGKey(0)
    k1, k2 = jax.random.split(key)
    # 1) fully lane-dense channels (C=128), dilation 1.
    run_case(k1, N=2, C=128, D=8, H=8, W=8, K=3, DIL=1, E=4)
    # 2) module-default-ish C=48 (padded to 128 lanes in the wrapper) and
    #    dilation 2 to exercise the dilated-halo path.
    run_case(k2, N=1, C=48, D=6, H=10, W=8, K=3, DIL=2, E=2)
    print("KERNEL_OK")
</pallas_src>

<mosaic_0001>
module attributes {stable_mosaic.version = 11 : i64} {
  func.func @_mednext_kernel(%arg0: i32, %arg1: i32, %arg2: memref<1x8x8x8x128xf32, #tpu.memory_space<vmem>>, %arg3: memref<27x128xf32, #tpu.memory_space<vmem>>, %arg4: memref<1x128xf32, #tpu.memory_space<vmem>>, %arg5: memref<1x128xf32, #tpu.memory_space<vmem>>, %arg6: memref<4x128xf32, #tpu.memory_space<vmem>>, %arg7: memref<4x128xf32, #tpu.memory_space<vmem>>, %arg8: memref<4x128xf32, #tpu.memory_space<vmem>>, %arg9: memref<1x128xf32, #tpu.memory_space<vmem>>, %arg10: memref<1x128xf32, #tpu.memory_space<vmem>>, %arg11: memref<1x8x8x8x128xf32, #tpu.memory_space<vmem>>, %arg12: memref<10x10x17x128xf32, #tpu.memory_space<vmem>>, %arg13: memref<8x8x8x128xf32, #tpu.memory_space<vmem>>) attributes {dimension_semantics = [#tpu.dimension_semantics<parallel>, #tpu.dimension_semantics<parallel>], iteration_bounds = array<i64: 2, 1>, scalar_prefetch = 0 : i64, scratch_operands = 2 : i64, tpu.core_type = #tpu.core_type<tc>, window_params = [{transform_indices = @transform_0, window_bounds = array<i64: 1, 8, 8, 8, 128>}, {transform_indices = @transform_1, window_bounds = array<i64: 27, 128>}, {transform_indices = @transform_2, window_bounds = array<i64: 1, 128>}, {transform_indices = @transform_3, window_bounds = array<i64: 1, 128>}, {transform_indices = @transform_4, window_bounds = array<i64: 4, 128>}, {transform_indices = @transform_5, window_bounds = array<i64: 4, 128>}, {transform_indices = @transform_6, window_bounds = array<i64: 4, 128>}, {transform_indices = @transform_7, window_bounds = array<i64: 1, 128>}, {transform_indices = @transform_8, window_bounds = array<i64: 1, 128>}, {transform_indices = @transform_9, window_bounds = array<i64: 1, 8, 8, 8, 128>}]} {
    %cst = arith.constant 0.000000e+00 : f32
    %0 = vector.broadcast %cst : f32 to vector<1x10x17x128xf32>
    %c0 = arith.constant 0 : index
    %c0_0 = arith.constant 0 : index
    %c0_1 = arith.constant 0 : index
    %c0_2 = arith.constant 0 : index
    %1 = vector.load %arg12[%c0, %c0_0, %c0_1, %c0_2] : memref<10x10x17x128xf32, #tpu.memory_space<vmem>>, vector<1x10x17x128xf32>
    tpu.vector_store %arg12[%c0, %c0_0, %c0_1, %c0_2], %0 {strides = array<i32>} : memref<10x10x17x128xf32, #tpu.memory_space<vmem>>, vector<1x10x17x128xf32>,
    %c9 = arith.constant 9 : index
    %c0_3 = arith.constant 0 : index
    %c0_4 = arith.constant 0 : index
    %c0_5 = arith.constant 0 : index
    %2 = vector.load %arg12[%c9, %c0_3, %c0_4, %c0_5] : memref<10x10x17x128xf32, #tpu.memory_space<vmem>>, vector<1x10x17x128xf32>
    tpu.vector_store %arg12[%c9, %c0_3, %c0_4, %c0_5], %0 {strides = array<i32>} : memref<10x10x17x128xf32, #tpu.memory_space<vmem>>, vector<1x10x17x128xf32>,
    %cst_6 = arith.constant 0.000000e+00 : f32
    %3 = vector.broadcast %cst_6 : f32 to vector<8x1x17x128xf32>
    %c1 = arith.constant 1 : index
    %c0_7 = arith.constant 0 : index
    %c0_8 = arith.constant 0 : index
    %c0_9 = arith.constant 0 : index
    %4 = vector.load %arg12[%c1, %c0_7, %c0_8, %c0_9] : memref<10x10x17x128xf32, #tpu.memory_space<vmem>>, vector<8x1x17x128xf32>
    tpu.vector_store %arg12[%c1, %c0_7, %c0_8, %c0_9], %3 {strides = array<i32>} : memref<10x10x17x128xf32, #tpu.memory_space<vmem>>, vector<8x1x17x128xf32>,
    %c1_10 = arith.constant 1 : index
    %c9_11 = arith.constant 9 : index
    %c0_12 = arith.constant 0 : index
    %c0_13 = arith.constant 0 : index
    %5 = vector.load %arg12[%c1_10, %c9_11, %c0_12, %c0_13] : memref<10x10x17x128xf32, #tpu.memory_space<vmem>>, vector<8x1x17x128xf32>
    tpu.vector_store %arg12[%c1_10, %c9_11, %c0_12, %c0_13], %3 {strides = array<i32>} : memref<10x10x17x128xf32, #tpu.memory_space<vmem>>, vector<8x1x17x128xf32>,
    %cst_14 = arith.constant 0.000000e+00 : f32
    %6 = vector.broadcast %cst_14 : f32 to vector<8x8x1x128xf32>
    %c1_15 = arith.constant 1 : index
    %c1_16 = arith.constant 1 : index
    %c7 = arith.constant 7 : index
    %c0_17 = arith.constant 0 : index
    %7 = vector.load %arg12[%c1_15, %c1_16, %c7, %c0_17] : memref<10x10x17x128xf32, #tpu.memory_space<vmem>>, vector<8x8x1x128xf32>
    tpu.vector_store %arg12[%c1_15, %c1_16, %c7, %c0_17], %6 {strides = array<i32>} : memref<10x10x17x128xf32, #tpu.memory_space<vmem>>, vector<8x8x1x128xf32>,
    %c1_18 = arith.constant 1 : index
    %c1_19 = arith.constant 1 : index
    %c16 = arith.constant 16 : index
    %c0_20 = arith.constant 0 : index
    %8 = vector.load %arg12[%c1_18, %c1_19, %c16, %c0_20] : memref<10x10x17x128xf32, #tpu.memory_space<vmem>>, vector<8x8x1x128xf32>
    tpu.vector_store %arg12[%c1_18, %c1_19, %c16, %c0_20], %6 {strides = array<i32>} : memref<10x10x17x128xf32, #tpu.memory_space<vmem>>, vector<8x8x1x128xf32>,
    %c0_21 = arith.constant 0 : index
    %c0_22 = arith.constant 0 : index
    %c0_23 = arith.constant 0 : index
    %c0_24 = arith.constant 0 : index
    %c0_25 = arith.constant 0 : index
    %9 = vector.load %arg2[%c0_21, %c0_22, %c0_23, %c0_24, %c0_25] : memref<1x8x8x8x128xf32, #tpu.memory_space<vmem>>, vector<1x8x8x8x128xf32>
    %10 = vector.shape_cast %9 : vector<1x8x8x8x128xf32> to vector<8x8x8x128xf32>
    %c1_26 = arith.constant 1 : index
    %c1_27 = arith.constant 1 : index
    %c8 = arith.constant 8 : index
    %c0_28 = arith.constant 0 : index
    %11 = vector.load %arg12[%c1_26, %c1_27, %c8, %c0_28] : memref<10x10x17x128xf32, #tpu.memory_space<vmem>>, vector<8x8x8x128xf32>
    tpu.vector_store %arg12[%c1_26, %c1_27, %c8, %c0_28], %10 {strides = array<i32>} : memref<10x10x17x128xf32, #tpu.memory_space<vmem>>, vector<8x8x8x128xf32>,
    %c0_29 = arith.constant 0 : index
    %c0_30 = arith.constant 0 : index
    %12 = vector.load %arg3[%c0_29, %c0_30] : memref<27x128xf32, #tpu.memory_space<vmem>>, vector<27x128xf32>
    %c0_31 = arith.constant 0 : index
    %c0_32 = arith.constant 0 : index
    %c7_33 = arith.constant 7 : index
    %c0_34 = arith.constant 0 : index
    %13 = vector.load %arg12[%c0_31, %c0_32, %c7_33, %c0_34] : memref<10x10x17x128xf32, #tpu.memory_space<vmem>>, vector<10x10x8x128xf32>
    %14 = vector.extract_strided_slice %12 {offsets = [0, 0], sizes = [1, 128], strides = [1, 1]} : vector<27x128xf32> to vector<1x128xf32>
    %15 = vector.shape_cast %14 : vector<1x128xf32> to vector<128xf32>
    %16 = vector.extract_strided_slice %13 {offsets = [0, 0, 0, 0], sizes = [8, 8, 8, 128], strides = [1, 1, 1, 1]} : vector<10x10x8x128xf32> to vector<8x8x8x128xf32>
    %17 = vector.shape_cast %15 : vector<128xf32> to vector<1x1x1x128xf32>
    %18 = vector.broadcast %17 : vector<1x1x1x128xf32> to vector<8x8x8x128xf32>
    %19 = arith.mulf %18, %16 : vector<8x8x8x128xf32>
    %20 = vector.extract_strided_slice %12 {offsets = [3, 0], sizes = [1, 128], strides = [1, 1]} : vector<27x128xf32> to vector<1x128xf32>
    %21 = vector.shape_cast %20 : vector<1x128xf32> to vector<128xf32>
    %22 = vector.extract_strided_slice %13 {offsets = [0, 1, 0, 0], sizes = [8, 8, 8, 128], strides = [1, 1, 1, 1]} : vector<10x10x8x128xf32> to vector<8x8x8x128xf32>
    %23 = vector.shape_cast %21 : vector<128xf32> to vector<1x1x1x128xf32>
    %24 = vector.broadcast %23 : vector<1x1x1x128xf32> to vector<8x8x8x128xf32>
    %25 = arith.mulf %24, %22 : vector<8x8x8x128xf32>
    %26 = arith.addf %19, %25 : vector<8x8x8x128xf32>
    %27 = vector.extract_strided_slice %12 {offsets = [6, 0], sizes = [1, 128], strides = [1, 1]} : vector<27x128xf32> to vector<1x128xf32>
    %28 = vector.shape_cast %27 : vector<1x128xf32> to vector<128xf32>
    %29 = vector.extract_strided_slice %13 {offsets = [0, 2, 0, 0], sizes = [8, 8, 8, 128], strides = [1, 1, 1, 1]} : vector<10x10x8x128xf32> to vector<8x8x8x128xf32>
    %30 = vector.shape_cast %28 : vector<128xf32> to vector<1x1x1x128xf32>
    %31 = vector.broadcast %30 : vector<1x1x1x128xf32> to vector<8x8x8x128xf32>
    %32 = arith.mulf %31, %29 : vector<8x8x8x128xf32>
    %33 = arith.addf %26, %32 : vector<8x8x8x128xf32>
    %34 = vector.extract_strided_slice %12 {offsets = [9, 0], sizes = [1, 128], strides = [1, 1]} : vector<27x128xf32> to vector<1x128xf32>
    %35 = vector.shape_cast %34 : vector<1x128xf32> to vector<128xf32>
    %36 = vector.extract_strided_slice %13 {offsets = [1, 0, 0, 0], sizes = [8, 8, 8, 128], strides = [1, 1, 1, 1]} : vector<10x10x8x128xf32> to vector<8x8x8x128xf32>
    %37 = vector.shape_cast %35 : vector<128xf32> to vector<1x1x1x128xf32>
    %38 = vector.broadcast %37 : vector<1x1x1x128xf32> to vector<8x8x8x128xf32>
    %39 = arith.mulf %38, %36 : vector<8x8x8x128xf32>
    %40 = arith.addf %33, %39 : vector<8x8x8x128xf32>
    %41 = vector.extract_strided_slice %12 {offsets = [12, 0], sizes = [1, 128], strides = [1, 1]} : vector<27x128xf32> to vector<1x128xf32>
    %42 = vector.shape_cast %41 : vector<1x128xf32> to vector<128xf32>
    %43 = vector.extract_strided_slice %13 {offsets = [1, 1, 0, 0], sizes = [8, 8, 8, 128], strides = [1, 1, 1, 1]} : vector<10x10x8x128xf32> to vector<8x8x8x128xf32>
    %44 = vector.shape_cast %42 : vector<128xf32> to vector<1x1x1x128xf32>
    %45 = vector.broadcast %44 : vector<1x1x1x128xf32> to vector<8x8x8x128xf32>
    %46 = arith.mulf %45, %43 : vector<8x8x8x128xf32>
    %47 = arith.addf %40, %46 : vector<8x8x8x128xf32>
    %48 = vector.extract_strided_slice %12 {offsets = [15, 0], sizes = [1, 128], strides = [1, 1]} : vector<27x128xf32> to vector<1x128xf32>
    %49 = vector.shape_cast %48 : vector<1x128xf32> to vector<128xf32>
    %50 = vector.extract_strided_slice %13 {offsets = [1, 2, 0, 0], sizes = [8, 8, 8, 128], strides = [1, 1, 1, 1]} : vector<10x10x8x128xf32> to vector<8x8x8x128xf32>
    %51 = vector.shape_cast %49 : vector<128xf32> to vector<1x1x1x128xf32>
    %52 = vector.broadcast %51 : vector<1x1x1x128xf32> to vector<8x8x8x128xf32>
    %53 = arith.mulf %52, %50 : vector<8x8x8x128xf32>
    %54 = arith.addf %47, %53 : vector<8x8x8x128xf32>
    %55 = vector.extract_strided_slice %12 {offsets = [18, 0], sizes = [1, 128], strides = [1, 1]} : vector<27x128xf32> to vector<1x128xf32>
    %56 = vector.shape_cast %55 : vector<1x128xf32> to vector<128xf32>
    %57 = vector.extract_strided_slice %13 {offsets = [2, 0, 0, 0], sizes = [8, 8, 8, 128], strides = [1, 1, 1, 1]} : vector<10x10x8x128xf32> to vector<8x8x8x128xf32>
    %58 = vector.shape_cast %56 : vector<128xf32> to vector<1x1x1x128xf32>
    %59 = vector.broadcast %58 : vector<1x1x1x128xf32> to vector<8x8x8x128xf32>
    %60 = arith.mulf %59, %57 : vector<8x8x8x128xf32>
    %61 = arith.addf %54, %60 : vector<8x8x8x128xf32>
    %62 = vector.extract_strided_slice %12 {offsets = [21, 0], sizes = [1, 128], strides = [1, 1]} : vector<27x128xf32> to vector<1x128xf32>
    %63 = vector.shape_cast %62 : vector<1x128xf32> to vector<128xf32>
    %64 = vector.extract_strided_slice %13 {offsets = [2, 1, 0, 0], sizes = [8, 8, 8, 128], strides = [1, 1, 1, 1]} : vector<10x10x8x128xf32> to vector<8x8x8x128xf32>
    %65 = vector.shape_cast %63 : vector<128xf32> to vector<1x1x1x128xf32>
    %66 = vector.broadcast %65 : vector<1x1x1x128xf32> to vector<8x8x8x128xf32>
    %67 = arith.mulf %66, %64 : vector<8x8x8x128xf32>
    %68 = arith.addf %61, %67 : vector<8x8x8x128xf32>
    %69 = vector.extract_strided_slice %12 {offsets = [24, 0], sizes = [1, 128], strides = [1, 1]} : vector<27x128xf32> to vector<1x128xf32>
    %70 = vector.shape_cast %69 : vector<1x128xf32> to vector<128xf32>
    %71 = vector.extract_strided_slice %13 {offsets = [2, 2, 0, 0], sizes = [8, 8, 8, 128], strides = [1, 1, 1, 1]} : vector<10x10x8x128xf32> to vector<8x8x8x128xf32>
    %72 = vector.shape_cast %70 : vector<128xf32> to vector<1x1x1x128xf32>
    %73 = vector.broadcast %72 : vector<1x1x1x128xf32> to vector<8x8x8x128xf32>
    %74 = arith.mulf %73, %71 : vector<8x8x8x128xf32>
    %75 = arith.addf %68, %74 : vector<8x8x8x128xf32>
    %c0_35 = arith.constant 0 : index
    %c0_36 = arith.constant 0 : index
    %c8_37 = arith.constant 8 : index
    %c0_38 = arith.constant 0 : index
    %76 = vector.load %arg12[%c0_35, %c0_36, %c8_37, %c0_38] : memref<10x10x17x128xf32, #tpu.memory_space<vmem>>, vector<10x10x8x128xf32>
    %77 = vector.extract_strided_slice %12 {offsets = [1, 0], sizes = [1, 128], strides = [1, 1]} : vector<27x128xf32> to vector<1x128xf32>
    %78 = vector.shape_cast %77 : vector<1x128xf32> to vector<128xf32>
    %79 = vector.extract_strided_slice %76 {offsets = [0, 0, 0, 0], sizes = [8, 8, 8, 128], strides = [1, 1, 1, 1]} : vector<10x10x8x128xf32> to vector<8x8x8x128xf32>
    %80 = vector.shape_cast %78 : vector<128xf32> to vector<1x1x1x128xf32>
    %81 = vector.broadcast %80 : vector<1x1x1x128xf32> to vector<8x8x8x128xf32>
    %82 = arith.mulf %81, %79 : vector<8x8x8x128xf32>
    %83 = arith.addf %75, %82 : vector<8x8x8x128xf32>
    %84 = vector.extract_strided_slice %12 {offsets = [4, 0], sizes = [1, 128], strides = [1, 1]} : vector<27x128xf32> to vector<1x128xf32>
    %85 = vector.shape_cast %84 : vector<1x128xf32> to vector<128xf32>
    %86 = vector.extract_strided_slice %76 {offsets = [0, 1, 0, 0], sizes = [8, 8, 8, 128], strides = [1, 1, 1, 1]} : vector<10x10x8x128xf32> to vector<8x8x8x128xf32>
    %87 = vector.shape_cast %85 : vector<128xf32> to vector<1x1x1x128xf32>
    %88 = vector.broadcast %87 : vector<1x1x1x128xf32> to vector<8x8x8x128xf32>
    %89 = arith.mulf %88, %86 : vector<8x8x8x128xf32>
    %90 = arith.addf %83, %89 : vector<8x8x8x128xf32>
    %91 = vector.extract_strided_slice %12 {offsets = [7, 0], sizes = [1, 128], strides = [1, 1]} : vector<27x128xf32> to vector<1x128xf32>
    %92 = vector.shape_cast %91 : vector<1x128xf32> to vector<128xf32>
    %93 = vector.extract_strided_slice %76 {offsets = [0, 2, 0, 0], sizes = [8, 8, 8, 128], strides = [1, 1, 1, 1]} : vector<10x10x8x128xf32> to vector<8x8x8x128xf32>
    %94 = vector.shape_cast %92 : vector<128xf32> to vector<1x1x1x128xf32>
    %95 = vector.broadcast %94 : vector<1x1x1x128xf32> to vector<8x8x8x128xf32>
    %96 = arith.mulf %95, %93 : vector<8x8x8x128xf32>
    %97 = arith.addf %90, %96 : vector<8x8x8x128xf32>
    %98 = vector.extract_strided_slice %12 {offsets = [10, 0], sizes = [1, 128], strides = [1, 1]} : vector<27x128xf32> to vector<1x128xf32>
    %99 = vector.shape_cast %98 : vector<1x128xf32> to vector<128xf32>
    %100 = vector.extract_strided_slice %76 {offsets = [1, 0, 0, 0], sizes = [8, 8, 8, 128], strides = [1, 1, 1, 1]} : vector<10x10x8x128xf32> to vector<8x8x8x128xf32>
    %101 = vector.shape_cast %99 : vector<128xf32> to vector<1x1x1x128xf32>
    %102 = vector.broadcast %101 : vector<1x1x1x128xf32> to vector<8x8x8x128xf32>
    %103 = arith.mulf %102, %100 : vector<8x8x8x128xf32>
    %104 = arith.addf %97, %103 : vector<8x8x8x128xf32>
    %105 = vector.extract_strided_slice %12 {offsets = [13, 0], sizes = [1, 128], strides = [1, 1]} : vector<27x128xf32> to vector<1x128xf32>
    %106 = vector.shape_cast %105 : vector<1x128xf32> to vector<128xf32>
    %107 = vector.extract_strided_slice %76 {offsets = [1, 1, 0, 0], sizes = [8, 8, 8, 128], strides = [1, 1, 1, 1]} : vector<10x10x8x128xf32> to vector<8x8x8x128xf32>
    %108 = vector.shape_cast %106 : vector<128xf32> to vector<1x1x1x128xf32>
    %109 = vector.broadcast %108 : vector<1x1x1x128xf32> to vector<8x8x8x128xf32>
    %110 = arith.mulf %109, %107 : vector<8x8x8x128xf32>
    %111 = arith.addf %104, %110 : vector<8x8x8x128xf32>
    %112 = vector.extract_strided_slice %12 {offsets = [16, 0], sizes = [1, 128], strides = [1, 1]} : vector<27x128xf32> to vector<1x128xf32>
    %113 = vector.shape_cast %112 : vector<1x128xf32> to vector<128xf32>
    %114 = vector.extract_strided_slice %76 {offsets = [1, 2, 0, 0], sizes = [8, 8, 8, 128], strides = [1, 1, 1, 1]} : vector<10x10x8x128xf32> to vector<8x8x8x128xf32>
    %115 = vector.shape_cast %113 : vector<128xf32> to vector<1x1x1x128xf32>
    %116 = vector.broadcast %115 : vector<1x1x1x128xf32> to vector<8x8x8x128xf32>
    %117 = arith.mulf %116, %114 : vector<8x8x8x128xf32>
    %118 = arith.addf %111, %117 : vector<8x8x8x128xf32>
    %119 = vector.extract_strided_slice %12 {offsets = [19, 0], sizes = [1, 128], strides = [1, 1]} : vector<27x128xf32> to vector<1x128xf32>
    %120 = vector.shape_cast %119 : vector<1x128xf32> to vector<128xf32>
    %121 = vector.extract_strided_slice %76 {offsets = [2, 0, 0, 0], sizes = [8, 8, 8, 128], strides = [1, 1, 1, 1]} : vector<10x10x8x128xf32> to vector<8x8x8x128xf32>
    %122 = vector.shape_cast %120 : vector<128xf32> to vector<1x1x1x128xf32>
    %123 = vector.broadcast %122 : vector<1x1x1x128xf32> to vector<8x8x8x128xf32>
    %124 = arith.mulf %123, %121 : vector<8x8x8x128xf32>
    %125 = arith.addf %118, %124 : vector<8x8x8x128xf32>
    %126 = vector.extract_strided_slice %12 {offsets = [22, 0], sizes = [1, 128], strides = [1, 1]} : vector<27x128xf32> to vector<1x128xf32>
    %127 = vector.shape_cast %126 : vector<1x128xf32> to vector<128xf32>
    %128 = vector.extract_strided_slice %76 {offsets = [2, 1, 0, 0], sizes = [8, 8, 8, 128], strides = [1, 1, 1, 1]} : vector<10x10x8x128xf32> to vector<8x8x8x128xf32>
    %129 = vector.shape_cast %127 : vector<128xf32> to vector<1x1x1x128xf32>
    %130 = vector.broadcast %129 : vector<1x1x1x128xf32> to vector<8x8x8x128xf32>
    %131 = arith.mulf %130, %128 : vector<8x8x8x128xf32>
    %132 = arith.addf %125, %131 : vector<8x8x8x128xf32>
    %133 = vector.extract_strided_slice %12 {offsets = [25, 0], sizes = [1, 128], strides = [1, 1]} : vector<27x128xf32> to vector<1x128xf32>
    %134 = vector.shape_cast %133 : vector<1x128xf32> to vector<128xf32>
    %135 = vector.extract_strided_slice %76 {offsets = [2, 2, 0, 0], sizes = [8, 8, 8, 128], strides = [1, 1, 1, 1]} : vector<10x10x8x128xf32> to vector<8x8x8x128xf32>
    %136 = vector.shape_cast %134 : vector<128xf32> to vector<1x1x1x128xf32>
    %137 = vector.broadcast %136 : vector<1x1x1x128xf32> to vector<8x8x8x128xf32>
    %138 = arith.mulf %137, %135 : vector<8x8x8x128xf32>
    %139 = arith.addf %132, %138 : vector<8x8x8x128xf32>
    %c0_39 = arith.constant 0 : index
    %c0_40 = arith.constant 0 : index
    %c9_41 = arith.constant 9 : index
    %c0_42 = arith.constant 0 : index
    %140 = vector.load %arg12[%c0_39, %c0_40, %c9_41, %c0_42] : memref<10x10x17x128xf32, #tpu.memory_space<vmem>>, vector<10x10x8x128xf32>
    %141 = vector.extract_strided_slice %12 {offsets = [2, 0], sizes = [1, 128], strides = [1, 1]} : vector<27x128xf32> to vector<1x128xf32>
    %142 = vector.shape_cast %141 : vector<1x128xf32> to vector<128xf32>
    %143 = vector.extract_strided_slice %140 {offsets = [0, 0, 0, 0], sizes = [8, 8, 8, 128], strides = [1, 1, 1, 1]} : vector<10x10x8x128xf32> to vector<8x8x8x128xf32>
    %144 = vector.shape_cast %142 : vector<128xf32> to vector<1x1x1x128xf32>
    %145 = vector.broadcast %144 : vector<1x1x1x128xf32> to vector<8x8x8x128xf32>
    %146 = arith.mulf %145, %143 : vector<8x8x8x128xf32>
    %147 = arith.addf %139, %146 : vector<8x8x8x128xf32>
    %148 = vector.extract_strided_slice %12 {offsets = [5, 0], sizes = [1, 128], strides = [1, 1]} : vector<27x128xf32> to vector<1x128xf32>
    %149 = vector.shape_cast %148 : vector<1x128xf32> to vector<128xf32>
    %150 = vector.extract_strided_slice %140 {offsets = [0, 1, 0, 0], sizes = [8, 8, 8, 128], strides = [1, 1, 1, 1]} : vector<10x10x8x128xf32> to vector<8x8x8x128xf32>
    %151 = vector.shape_cast %149 : vector<128xf32> to vector<1x1x1x128xf32>
    %152 = vector.broadcast %151 : vector<1x1x1x128xf32> to vector<8x8x8x128xf32>
    %153 = arith.mulf %152, %150 : vector<8x8x8x128xf32>
    %154 = arith.addf %147, %153 : vector<8x8x8x128xf32>
    %155 = vector.extract_strided_slice %12 {offsets = [8, 0], sizes = [1, 128], strides = [1, 1]} : vector<27x128xf32> to vector<1x128xf32>
    %156 = vector.shape_cast %155 : vector<1x128xf32> to vector<128xf32>
    %157 = vector.extract_strided_slice %140 {offsets = [0, 2, 0, 0], sizes = [8, 8, 8, 128], strides = [1, 1, 1, 1]} : vector<10x10x8x128xf32> to vector<8x8x8x128xf32>
    %158 = vector.shape_cast %156 : vector<128xf32> to vector<1x1x1x128xf32>
    %159 = vector.broadcast %158 : vector<1x1x1x128xf32> to vector<8x8x8x128xf32>
    %160 = arith.mulf %159, %157 : vector<8x8x8x128xf32>
    %161 = arith.addf %154, %160 : vector<8x8x8x128xf32>
    %162 = vector.extract_strided_slice %12 {offsets = [11, 0], sizes = [1, 128], strides = [1, 1]} : vector<27x128xf32> to vector<1x128xf32>
    %163 = vector.shape_cast %162 : vector<1x128xf32> to vector<128xf32>
    %164 = vector.extract_strided_slice %140 {offsets = [1, 0, 0, 0], sizes = [8, 8, 8, 128], strides = [1, 1, 1, 1]} : vector<10x10x8x128xf32> to vector<8x8x8x128xf32>
    %165 = vector.shape_cast %163 : vector<128xf32> to vector<1x1x1x128xf32>
    %166 = vector.broadcast %165 : vector<1x1x1x128xf32> to vector<8x8x8x128xf32>
    %167 = arith.mulf %166, %164 : vector<8x8x8x128xf32>
    %168 = arith.addf %161, %167 : vector<8x8x8x128xf32>
    %169 = vector.extract_strided_slice %12 {offsets = [14, 0], sizes = [1, 128], strides = [1, 1]} : vector<27x128xf32> to vector<1x128xf32>
    %170 = vector.shape_cast %169 : vector<1x128xf32> to vector<128xf32>
    %171 = vector.extract_strided_slice %140 {offsets = [1, 1, 0, 0], sizes = [8, 8, 8, 128], strides = [1, 1, 1, 1]} : vector<10x10x8x128xf32> to vector<8x8x8x128xf32>
    %172 = vector.shape_cast %170 : vector<128xf32> to vector<1x1x1x128xf32>
    %173 = vector.broadcast %172 : vector<1x1x1x128xf32> to vector<8x8x8x128xf32>
    %174 = arith.mulf %173, %171 : vector<8x8x8x128xf32>
    %175 = arith.addf %168, %174 : vector<8x8x8x128xf32>
    %176 = vector.extract_strided_slice %12 {offsets = [17, 0], sizes = [1, 128], strides = [1, 1]} : vector<27x128xf32> to vector<1x128xf32>
    %177 = vector.shape_cast %176 : vector<1x128xf32> to vector<128xf32>
    %178 = vector.extract_strided_slice %140 {offsets = [1, 2, 0, 0], sizes = [8, 8, 8, 128], strides = [1, 1, 1, 1]} : vector<10x10x8x128xf32> to vector<8x8x8x128xf32>
    %179 = vector.shape_cast %177 : vector<128xf32> to vector<1x1x1x128xf32>
    %180 = vector.broadcast %179 : vector<1x1x1x128xf32> to vector<8x8x8x128xf32>
    %181 = arith.mulf %180, %178 : vector<8x8x8x128xf32>
    %182 = arith.addf %175, %181 : vector<8x8x8x128xf32>
    %183 = vector.extract_strided_slice %12 {offsets = [20, 0], sizes = [1, 128], strides = [1, 1]} : vector<27x128xf32> to vector<1x128xf32>
    %184 = vector.shape_cast %183 : vector<1x128xf32> to vector<128xf32>
    %185 = vector.extract_strided_slice %140 {offsets = [2, 0, 0, 0], sizes = [8, 8, 8, 128], strides = [1, 1, 1, 1]} : vector<10x10x8x128xf32> to vector<8x8x8x128xf32>
    %186 = vector.shape_cast %184 : vector<128xf32> to vector<1x1x1x128xf32>
    %187 = vector.broadcast %186 : vector<1x1x1x128xf32> to vector<8x8x8x128xf32>
    %188 = arith.mulf %187, %185 : vector<8x8x8x128xf32>
    %189 = arith.addf %182, %188 : vector<8x8x8x128xf32>
    %190 = vector.extract_strided_slice %12 {offsets = [23, 0], sizes = [1, 128], strides = [1, 1]} : vector<27x128xf32> to vector<1x128xf32>
    %191 = vector.shape_cast %190 : vector<1x128xf32> to vector<128xf32>
    %192 = vector.extract_strided_slice %140 {offsets = [2, 1, 0, 0], sizes = [8, 8, 8, 128], strides = [1, 1, 1, 1]} : vector<10x10x8x128xf32> to vector<8x8x8x128xf32>
    %193 = vector.shape_cast %191 : vector<128xf32> to vector<1x1x1x128xf32>
    %194 = vector.broadcast %193 : vector<1x1x1x128xf32> to vector<8x8x8x128xf32>
    %195 = arith.mulf %194, %192 : vector<8x8x8x128xf32>
    %196 = arith.addf %189, %195 : vector<8x8x8x128xf32>
    %197 = vector.extract_strided_slice %12 {offsets = [26, 0], sizes = [1, 128], strides = [1, 1]} : vector<27x128xf32> to vector<1x128xf32>
    %198 = vector.shape_cast %197 : vector<1x128xf32> to vector<128xf32>
    %199 = vector.extract_strided_slice %140 {offsets = [2, 2, 0, 0], sizes = [8, 8, 8, 128], strides = [1, 1, 1, 1]} : vector<10x10x8x128xf32> to vector<8x8x8x128xf32>
    %200 = vector.shape_cast %198 : vector<128xf32> to vector<1x1x1x128xf32>
    %201 = vector.broadcast %200 : vector<1x1x1x128xf32> to vector<8x8x8x128xf32>
    %202 = arith.mulf %201, %199 : vector<8x8x8x128xf32>
    %203 = arith.addf %196, %202 : vector<8x8x8x128xf32>
    %cst_43 = arith.constant dense<0.000000e+00> : vector<128xf32>
    %204 = vector.multi_reduction <add>, %203, %cst_43 [0, 1, 2] : vector<8x8x8x128xf32> to vector<128xf32>
    %205 = arith.mulf %203, %203 : vector<8x8x8x128xf32>
    %cst_44 = arith.constant dense<0.000000e+00> : vector<128xf32>
    %206 = vector.multi_reduction <add>, %205, %cst_44 [0, 1, 2] : vector<8x8x8x128xf32> to vector<128xf32>
    %cst_45 = arith.constant 0.001953125 : f32
    %207 = vector.broadcast %cst_45 : f32 to vector<128xf32>
    %208 = arith.mulf %204, %207 : vector<128xf32>
    %cst_46 = arith.constant 0.001953125 : f32
    %209 = vector.broadcast %cst_46 : f32 to vector<128xf32>
    %210 = arith.mulf %206, %209 : vector<128xf32>
    %211 = arith.mulf %208, %208 : vector<128xf32>
    %212 = arith.subf %210, %211 : vector<128xf32>
    %cst_47 = arith.constant 0.000000e+00 : f32
    %213 = vector.broadcast %cst_47 : f32 to vector<128xf32>
    %214 = arith.maximumf %212, %213 : vector<128xf32>
    %cst_48 = arith.constant 9.99999974E-6 : f32
    %215 = vector.broadcast %cst_48 : f32 to vector<128xf32>
    %216 = arith.addf %214, %215 : vector<128xf32>
    %217 = math.rsqrt %216 : vector<128xf32>
    %c0_49 = arith.constant 0 : index
    %c0_50 = arith.constant 0 : index
    %218 = vector.load %arg4[%c0_49, %c0_50] : memref<1x128xf32, #tpu.memory_space<vmem>>, vector<1x128xf32>
    %219 = vector.shape_cast %218 : vector<1x128xf32> to vector<128xf32>
    %220 = arith.mulf %219, %217 : vector<128xf32>
    %c0_51 = arith.constant 0 : index
    %c0_52 = arith.constant 0 : index
    %221 = vector.load %arg5[%c0_51, %c0_52] : memref<1x128xf32, #tpu.memory_space<vmem>>, vector<1x128xf32>
    %222 = vector.shape_cast %221 : vector<1x128xf32> to vector<128xf32>
    %223 = arith.mulf %208, %220 : vector<128xf32>
    %224 = arith.subf %222, %223 : vector<128xf32>
    %c0_53 = arith.constant 0 : index
    %c0_54 = arith.constant 0 : index
    %c0_55 = arith.constant 0 : index
    %c0_56 = arith.constant 0 : index
    %225 = vector.load %arg13[%c0_53, %c0_54, %c0_55, %c0_56] : memref<8x8x8x128xf32, #tpu.memory_space<vmem>>, vector<8x8x8x128xf32>
    tpu.vector_store %arg13[%c0_53, %c0_54, %c0_55, %c0_56], %203 {strides = array<i32>} : memref<8x8x8x128xf32, #tpu.memory_space<vmem>>, vector<8x8x8x128xf32>,
    %c0_57 = arith.constant 0 : index
    %c0_58 = arith.constant 0 : index
    %226 = vector.load %arg6[%c0_57, %c0_58] : memref<4x128xf32, #tpu.memory_space<vmem>>, vector<4x128xf32>
    %c0_59 = arith.constant 0 : index
    %c0_60 = arith.constant 0 : index
    %227 = vector.load %arg7[%c0_59, %c0_60] : memref<4x128xf32, #tpu.memory_space<vmem>>, vector<4x128xf32>
    %c0_61 = arith.constant 0 : index
    %c0_62 = arith.constant 0 : index
    %228 = vector.load %arg8[%c0_61, %c0_62] : memref<4x128xf32, #tpu.memory_space<vmem>>, vector<4x128xf32>
    %c0_63 = arith.constant 0 : index
    %c0_64 = arith.constant 0 : index
    %229 = vector.load %arg9[%c0_63, %c0_64] : memref<1x128xf32, #tpu.memory_space<vmem>>, vector<1x128xf32>
    %230 = vector.shape_cast %229 : vector<1x128xf32> to vector<128xf32>
    %c0_65 = arith.constant 0 : index
    %c0_66 = arith.constant 0 : index
    %231 = vector.load %arg10[%c0_65, %c0_66] : memref<1x128xf32, #tpu.memory_space<vmem>>, vector<1x128xf32>
    %232 = vector.shape_cast %231 : vector<1x128xf32> to vector<128xf32>
    %c0_i32 = arith.constant 0 : i32
    %233 = arith.index_cast %c0_i32 : i32 to index
    %c0_67 = arith.constant 0 : index
    %c0_68 = arith.constant 0 : index
    %c0_69 = arith.constant 0 : index
    %234 = vector.load %arg13[%233, %c0_67, %c0_68, %c0_69] : memref<8x8x8x128xf32, #tpu.memory_space<vmem>>, vector<1x8x8x128xf32>
    %235 = vector.shape_cast %234 : vector<1x8x8x128xf32> to vector<8x8x128xf32>
    %236 = vector.shape_cast %220 : vector<128xf32> to vector<1x1x128xf32>
    %237 = vector.broadcast %236 : vector<1x1x128xf32> to vector<8x8x128xf32>
    %238 = arith.mulf %235, %237 : vector<8x8x128xf32>
    %239 = vector.shape_cast %224 : vector<128xf32> to vector<1x1x128xf32>
    %240 = vector.broadcast %239 : vector<1x1x128xf32> to vector<8x8x128xf32>
    %241 = arith.addf %238, %240 : vector<8x8x128xf32>
    %242 = vector.extract_strided_slice %226 {offsets = [0, 0], sizes = [1, 128], strides = [1, 1]} : vector<4x128xf32> to vector<1x128xf32>
    %243 = vector.shape_cast %242 : vector<1x128xf32> to vector<128xf32>
    %244 = vector.shape_cast %243 : vector<128xf32> to vector<1x1x128xf32>
    %245 = vector.broadcast %244 : vector<1x1x128xf32> to vector<8x8x128xf32>
    %246 = arith.mulf %241, %245 : vector<8x8x128xf32>
    %247 = vector.extract_strided_slice %227 {offsets = [0, 0], sizes = [1, 128], strides = [1, 1]} : vector<4x128xf32> to vector<1x128xf32>
    %248 = vector.shape_cast %247 : vector<1x128xf32> to vector<128xf32>
    %249 = vector.shape_cast %248 : vector<128xf32> to vector<1x1x128xf32>
    %250 = vector.broadcast %249 : vector<1x1x128xf32> to vector<8x8x128xf32>
    %251 = arith.addf %246, %250 : vector<8x8x128xf32>
    %252 = vector.extract_strided_slice %228 {offsets = [0, 0], sizes = [1, 128], strides = [1, 1]} : vector<4x128xf32> to vector<1x128xf32>
    %253 = vector.shape_cast %252 : vector<1x128xf32> to vector<128xf32>
    %cst_70 = arith.constant 5.000000e-01 : f32
    %254 = vector.broadcast %cst_70 : f32 to vector<8x8x128xf32>
    %255 = arith.mulf %254, %251 : vector<8x8x128xf32>
    %cst_71 = arith.constant 0.707106769 : f32
    %256 = vector.broadcast %cst_71 : f32 to vector<8x8x128xf32>
    %257 = arith.mulf %251, %256 : vector<8x8x128xf32>
    %258 = math.erf %257 : vector<8x8x128xf32>
    %cst_72 = arith.constant 1.000000e+00 : f32
    %259 = vector.broadcast %cst_72 : f32 to vector<8x8x128xf32>
    %260 = arith.addf %259, %258 : vector<8x8x128xf32>
    %261 = arith.mulf %255, %260 : vector<8x8x128xf32>
    %262 = vector.shape_cast %253 : vector<128xf32> to vector<1x1x128xf32>
    %263 = vector.broadcast %262 : vector<1x1x128xf32> to vector<8x8x128xf32>
    %264 = arith.mulf %263, %261 : vector<8x8x128xf32>
    %265 = vector.extract_strided_slice %226 {offsets = [1, 0], sizes = [1, 128], strides = [1, 1]} : vector<4x128xf32> to vector<1x128xf32>
    %266 = vector.shape_cast %265 : vector<1x128xf32> to vector<128xf32>
    %267 = vector.shape_cast %266 : vector<128xf32> to vector<1x1x128xf32>
    %268 = vector.broadcast %267 : vector<1x1x128xf32> to vector<8x8x128xf32>
    %269 = arith.mulf %241, %268 : vector<8x8x128xf32>
    %270 = vector.extract_strided_slice %227 {offsets = [1, 0], sizes = [1, 128], strides = [1, 1]} : vector<4x128xf32> to vector<1x128xf32>
    %271 = vector.shape_cast %270 : vector<1x128xf32> to vector<128xf32>
    %272 = vector.shape_cast %271 : vector<128xf32> to vector<1x1x128xf32>
    %273 = vector.broadcast %272 : vector<1x1x128xf32> to vector<8x8x128xf32>
    %274 = arith.addf %269, %273 : vector<8x8x128xf32>
    %275 = vector.extract_strided_slice %228 {offsets = [1, 0], sizes = [1, 128], strides = [1, 1]} : vector<4x128xf32> to vector<1x128xf32>
    %276 = vector.shape_cast %275 : vector<1x128xf32> to vector<128xf32>
    %cst_73 = arith.constant 5.000000e-01 : f32
    %277 = vector.broadcast %cst_73 : f32 to vector<8x8x128xf32>
    %278 = arith.mulf %277, %274 : vector<8x8x128xf32>
    %cst_74 = arith.constant 0.707106769 : f32
    %279 = vector.broadcast %cst_74 : f32 to vector<8x8x128xf32>
    %280 = arith.mulf %274, %279 : vector<8x8x128xf32>
    %281 = math.erf %280 : vector<8x8x128xf32>
    %cst_75 = arith.constant 1.000000e+00 : f32
    %282 = vector.broadcast %cst_75 : f32 to vector<8x8x128xf32>
    %283 = arith.addf %282, %281 : vector<8x8x128xf32>
    %284 = arith.mulf %278, %283 : vector<8x8x128xf32>
    %285 = vector.shape_cast %276 : vector<128xf32> to vector<1x1x128xf32>
    %286 = vector.broadcast %285 : vector<1x1x128xf32> to vector<8x8x128xf32>
    %287 = arith.mulf %286, %284 : vector<8x8x128xf32>
    %288 = arith.addf %264, %287 : vector<8x8x128xf32>
    %289 = vector.extract_strided_slice %226 {offsets = [2, 0], sizes = [1, 128], strides = [1, 1]} : vector<4x128xf32> to vector<1x128xf32>
    %290 = vector.shape_cast %289 : vector<1x128xf32> to vector<128xf32>
    %291 = vector.shape_cast %290 : vector<128xf32> to vector<1x1x128xf32>
    %292 = vector.broadcast %291 : vector<1x1x128xf32> to vector<8x8x128xf32>
    %293 = arith.mulf %241, %292 : vector<8x8x128xf32>
    %294 = vector.extract_strided_slice %227 {offsets = [2, 0], sizes = [1, 128], strides = [1, 1]} : vector<4x128xf32> to vector<1x128xf32>
    %295 = vector.shape_cast %294 : vector<1x128xf32> to vector<128xf32>
    %296 = vector.shape_cast %295 : vector<128xf32> to vector<1x1x128xf32>
    %297 = vector.broadcast %296 : vector<1x1x128xf32> to vector<8x8x128xf32>
    %298 = arith.addf %293, %297 : vector<8x8x128xf32>
    %299 = vector.extract_strided_slice %228 {offsets = [2, 0], sizes = [1, 128], strides = [1, 1]} : vector<4x128xf32> to vector<1x128xf32>
    %300 = vector.shape_cast %299 : vector<1x128xf32> to vector<128xf32>
    %cst_76 = arith.constant 5.000000e-01 : f32
    %301 = vector.broadcast %cst_76 : f32 to vector<8x8x128xf32>
    %302 = arith.mulf %301, %298 : vector<8x8x128xf32>
    %cst_77 = arith.constant 0.707106769 : f32
    %303 = vector.broadcast %cst_77 : f32 to vector<8x8x128xf32>
    %304 = arith.mulf %298, %303 : vector<8x8x128xf32>
    %305 = math.erf %304 : vector<8x8x128xf32>
    %cst_78 = arith.constant 1.000000e+00 : f32
    %306 = vector.broadcast %cst_78 : f32 to vector<8x8x128xf32>
    %307 = arith.addf %306, %305 : vector<8x8x128xf32>
    %308 = arith.mulf %302, %307 : vector<8x8x128xf32>
    %309 = vector.shape_cast %300 : vector<128xf32> to vector<1x1x128xf32>
    %310 = vector.broadcast %309 : vector<1x1x128xf32> to vector<8x8x128xf32>
    %311 = arith.mulf %310, %308 : vector<8x8x128xf32>
    %312 = arith.addf %288, %311 : vector<8x8x128xf32>
    %313 = vector.extract_strided_slice %226 {offsets = [3, 0], sizes = [1, 128], strides = [1, 1]} : vector<4x128xf32> to vector<1x128xf32>
    %314 = vector.shape_cast %313 : vector<1x128xf32> to vector<128xf32>
    %315 = vector.shape_cast %314 : vector<128xf32> to vector<1x1x128xf32>
    %316 = vector.broadcast %315 : vector<1x1x128xf32> to vector<8x8x128xf32>
    %317 = arith.mulf %241, %316 : vector<8x8x128xf32>
    %318 = vector.extract_strided_slice %227 {offsets = [3, 0], sizes = [1, 128], strides = [1, 1]} : vector<4x128xf32> to vector<1x128xf32>
    %319 = vector.shape_cast %318 : vector<1x128xf32> to vector<128xf32>
    %320 = vector.shape_cast %319 : vector<128xf32> to vector<1x1x128xf32>
    %321 = vector.broadcast %320 : vector<1x1x128xf32> to vector<8x8x128xf32>
    %322 = arith.addf %317, %321 : vector<8x8x128xf32>
    %323 = vector.extract_strided_slice %228 {offsets = [3, 0], sizes = [1, 128], strides = [1, 1]} : vector<4x128xf32> to vector<1x128xf32>
    %324 = vector.shape_cast %323 : vector<1x128xf32> to vector<128xf32>
    %cst_79 = arith.constant 5.000000e-01 : f32
    %325 = vector.broadcast %cst_79 : f32 to vector<8x8x128xf32>
    %326 = arith.mulf %325, %322 : vector<8x8x128xf32>
    %cst_80 = arith.constant 0.707106769 : f32
    %327 = vector.broadcast %cst_80 : f32 to vector<8x8x128xf32>
    %328 = arith.mulf %322, %327 : vector<8x8x128xf32>
    %329 = math.erf %328 : vector<8x8x128xf32>
    %cst_81 = arith.constant 1.000000e+00 : f32
    %330 = vector.broadcast %cst_81 : f32 to vector<8x8x128xf32>
    %331 = arith.addf %330, %329 : vector<8x8x128xf32>
    %332 = arith.mulf %326, %331 : vector<8x8x128xf32>
    %333 = vector.shape_cast %324 : vector<128xf32> to vector<1x1x128xf32>
    %334 = vector.broadcast %333 : vector<1x1x128xf32> to vector<8x8x128xf32>
    %335 = arith.mulf %334, %332 : vector<8x8x128xf32>
    %336 = arith.addf %312, %335 : vector<8x8x128xf32>
    %337 = vector.shape_cast %230 : vector<128xf32> to vector<1x1x128xf32>
    %338 = vector.broadcast %337 : vector<1x1x128xf32> to vector<8x8x128xf32>
    %339 = arith.addf %336, %338 : vector<8x8x128xf32>
    %340 = vector.shape_cast %232 : vector<128xf32> to vector<1x1x128xf32>
    %341 = vector.broadcast %340 : vector<1x1x128xf32> to vector<8x8x128xf32>
    %342 = arith.mulf %341, %339 : vector<8x8x128xf32>
    %c0_82 = arith.constant 0 : index
    %343 = arith.index_cast %c0_i32 : i32 to index
    %c0_83 = arith.constant 0 : index
    %c0_84 = arith.constant 0 : index
    %c0_85 = arith.constant 0 : index
    %344 = vector.load %arg2[%c0_82, %343, %c0_83, %c0_84, %c0_85] : memref<1x8x8x8x128xf32, #tpu.memory_space<vmem>>, vector<1x1x8x8x128xf32>
    %345 = vector.shape_cast %344 : vector<1x1x8x8x128xf32> to vector<8x8x128xf32>
    %346 = arith.addf %342, %345 : vector<8x8x128xf32>
    %c0_86 = arith.constant 0 : index
    %347 = arith.index_cast %c0_i32 : i32 to index
    %c0_87 = arith.constant 0 : index
    %c0_88 = arith.constant 0 : index
    %c0_89 = arith.constant 0 : index
    %348 = vector.load %arg11[%c0_86, %347, %c0_87, %c0_88, %c0_89] : memref<1x8x8x8x128xf32, #tpu.memory_space<vmem>>, vector<1x1x8x8x128xf32>
    %349 = vector.shape_cast %348 : vector<1x1x8x8x128xf32> to vector<8x8x128xf32>
    %350 = vector.shape_cast %346 : vector<8x8x128xf32> to vector<1x1x8x8x128xf32>
    tpu.vector_store %arg11[%c0_86, %347, %c0_87, %c0_88, %c0_89], %350 {strides = array<i32>} : memref<1x8x8x8x128xf32, #tpu.memory_space<vmem>>, vector<1x1x8x8x128xf32>,
    %c1_i32 = arith.constant 1 : i32
    %351 = arith.index_cast %c1_i32 : i32 to index
    %c0_90 = arith.constant 0 : index
    %c0_91 = arith.constant 0 : index
    %c0_92 = arith.constant 0 : index
    %352 = vector.load %arg13[%351, %c0_90, %c0_91, %c0_92] : memref<8x8x8x128xf32, #tpu.memory_space<vmem>>, vector<1x8x8x128xf32>
    %353 = vector.shape_cast %352 : vector<1x8x8x128xf32> to vector<8x8x128xf32>
    %354 = vector.shape_cast %220 : vector<128xf32> to vector<1x1x128xf32>
    %355 = vector.broadcast %354 : vector<1x1x128xf32> to vector<8x8x128xf32>
    %356 = arith.mulf %353, %355 : vector<8x8x128xf32>
    %357 = vector.shape_cast %224 : vector<128xf32> to vector<1x1x128xf32>
    %358 = vector.broadcast %357 : vector<1x1x128xf32> to vector<8x8x128xf32>
    %359 = arith.addf %356, %358 : vector<8x8x128xf32>
    %360 = vector.extract_strided_slice %226 {offsets = [0, 0], sizes = [1, 128], strides = [1, 1]} : vector<4x128xf32> to vector<1x128xf32>
    %361 = vector.shape_cast %360 : vector<1x128xf32> to vector<128xf32>
    %362 = vector.shape_cast %361 : vector<128xf32> to vector<1x1x128xf32>
    %363 = vector.broadcast %362 : vector<1x1x128xf32> to vector<8x8x128xf32>
    %364 = arith.mulf %359, %363 : vector<8x8x128xf32>
    %365 = vector.extract_strided_slice %227 {offsets = [0, 0], sizes = [1, 128], strides = [1, 1]} : vector<4x128xf32> to vector<1x128xf32>
    %366 = vector.shape_cast %365 : vector<1x128xf32> to vector<128xf32>
    %367 = vector.shape_cast %366 : vector<128xf32> to vector<1x1x128xf32>
    %368 = vector.broadcast %367 : vector<1x1x128xf32> to vector<8x8x128xf32>
    %369 = arith.addf %364, %368 : vector<8x8x128xf32>
    %370 = vector.extract_strided_slice %228 {offsets = [0, 0], sizes = [1, 128], strides = [1, 1]} : vector<4x128xf32> to vector<1x128xf32>
    %371 = vector.shape_cast %370 : vector<1x128xf32> to vector<128xf32>
    %cst_93 = arith.constant 5.000000e-01 : f32
    %372 = vector.broadcast %cst_93 : f32 to vector<8x8x128xf32>
    %373 = arith.mulf %372, %369 : vector<8x8x128xf32>
    %cst_94 = arith.constant 0.707106769 : f32
    %374 = vector.broadcast %cst_94 : f32 to vector<8x8x128xf32>
    %375 = arith.mulf %369, %374 : vector<8x8x128xf32>
    %376 = math.erf %375 : vector<8x8x128xf32>
    %cst_95 = arith.constant 1.000000e+00 : f32
    %377 = vector.broadcast %cst_95 : f32 to vector<8x8x128xf32>
    %378 = arith.addf %377, %376 : vector<8x8x128xf32>
    %379 = arith.mulf %373, %378 : vector<8x8x128xf32>
    %380 = vector.shape_cast %371 : vector<128xf32> to vector<1x1x128xf32>
    %381 = vector.broadcast %380 : vector<1x1x128xf32> to vector<8x8x128xf32>
    %382 = arith.mulf %381, %379 : vector<8x8x128xf32>
    %383 = vector.extract_strided_slice %226 {offsets = [1, 0], sizes = [1, 128], strides = [1, 1]} : vector<4x128xf32> to vector<1x128xf32>
    %384 = vector.shape_cast %383 : vector<1x128xf32> to vector<128xf32>
    %385 = vector.shape_cast %384 : vector<128xf32> to vector<1x1x128xf32>
    %386 = vector.broadcast %385 : vector<1x1x128xf32> to vector<8x8x128xf32>
    %387 = arith.mulf %359, %386 : vector<8x8x128xf32>
    %388 = vector.extract_strided_slice %227 {offsets = [1, 0], sizes = [1, 128], strides = [1, 1]} : vector<4x128xf32> to vector<1x128xf32>
    %389 = vector.shape_cast %388 : vector<1x128xf32> to vector<128xf32>
    %390 = vector.shape_cast %389 : vector<128xf32> to vector<1x1x128xf32>
    %391 = vector.broadcast %390 : vector<1x1x128xf32> to vector<8x8x128xf32>
    %392 = arith.addf %387, %391 : vector<8x8x128xf32>
    %393 = vector.extract_strided_slice %228 {offsets = [1, 0], sizes = [1, 128], strides = [1, 1]} : vector<4x128xf32> to vector<1x128xf32>
    %394 = vector.shape_cast %393 : vector<1x128xf32> to vector<128xf32>
    %cst_96 = arith.constant 5.000000e-01 : f32
    %395 = vector.broadcast %cst_96 : f32 to vector<8x8x128xf32>
    %396 = arith.mulf %395, %392 : vector<8x8x128xf32>
    %cst_97 = arith.constant 0.707106769 : f32
    %397 = vector.broadcast %cst_97 : f32 to vector<8x8x128xf32>
    %398 = arith.mulf %392, %397 : vector<8x8x128xf32>
    %399 = math.erf %398 : vector<8x8x128xf32>
    %cst_98 = arith.constant 1.000000e+00 : f32
    %400 = vector.broadcast %cst_98 : f32 to vector<8x8x128xf32>
    %401 = arith.addf %400, %399 : vector<8x8x128xf32>
    %402 = arith.mulf %396, %401 : vector<8x8x128xf32>
    %403 = vector.shape_cast %394 : vector<128xf32> to vector<1x1x128xf32>
    %404 = vector.broadcast %403 : vector<1x1x128xf32> to vector<8x8x128xf32>
    %405 = arith.mulf %404, %402 : vector<8x8x128xf32>
    %406 = arith.addf %382, %405 : vector<8x8x128xf32>
    %407 = vector.extract_strided_slice %226 {offsets = [2, 0], sizes = [1, 128], strides = [1, 1]} : vector<4x128xf32> to vector<1x128xf32>
    %408 = vector.shape_cast %407 : vector<1x128xf32> to vector<128xf32>
    %409 = vector.shape_cast %408 : vector<128xf32> to vector<1x1x128xf32>
    %410 = vector.broadcast %409 : vector<1x1x128xf32> to vector<8x8x128xf32>
    %411 = arith.mulf %359, %410 : vector<8x8x128xf32>
    %412 = vector.extract_strided_slice %227 {offsets = [2, 0], sizes = [1, 128], strides = [1, 1]} : vector<4x128xf32> to vector<1x128xf32>
    %413 = vector.shape_cast %412 : vector<1x128xf32> to vector<128xf32>
    %414 = vector.shape_cast %413 : vector<128xf32> to vector<1x1x128xf32>
    %415 = vector.broadcast %414 : vector<1x1x128xf32> to vector<8x8x128xf32>
    %416 = arith.addf %411, %415 : vector<8x8x128xf32>
    %417 = vector.extract_strided_slice %228 {offsets = [2, 0], sizes = [1, 128], strides = [1, 1]} : vector<4x128xf32> to vector<1x128xf32>
    %418 = vector.shape_cast %417 : vector<1x128xf32> to vector<128xf32>
    %cst_99 = arith.constant 5.000000e-01 : f32
    %419 = vector.broadcast %cst_99 : f32 to vector<8x8x128xf32>
    %420 = arith.mulf %419, %416 : vector<8x8x128xf32>
    %cst_100 = arith.constant 0.707106769 : f32
    %421 = vector.broadcast %cst_100 : f32 to vector<8x8x128xf32>
    %422 = arith.mulf %416, %421 : vector<8x8x128xf32>
    %423 = math.erf %422 : vector<8x8x128xf32>
    %cst_101 = arith.constant 1.000000e+00 : f32
    %424 = vector.broadcast %cst_101 : f32 to vector<8x8x128xf32>
    %425 = arith.addf %424, %423 : vector<8x8x128xf32>
    %426 = arith.mulf %420, %425 : vector<8x8x128xf32>
    %427 = vector.shape_cast %418 : vector<128xf32> to vector<1x1x128xf32>
    %428 = vector.broadcast %427 : vector<1x1x128xf32> to vector<8x8x128xf32>
    %429 = arith.mulf %428, %426 : vector<8x8x128xf32>
    %430 = arith.addf %406, %429 : vector<8x8x128xf32>
    %431 = vector.extract_strided_slice %226 {offsets = [3, 0], sizes = [1, 128], strides = [1, 1]} : vector<4x128xf32> to vector<1x128xf32>
    %432 = vector.shape_cast %431 : vector<1x128xf32> to vector<128xf32>
    %433 = vector.shape_cast %432 : vector<128xf32> to vector<1x1x128xf32>
    %434 = vector.broadcast %433 : vector<1x1x128xf32> to vector<8x8x128xf32>
    %435 = arith.mulf %359, %434 : vector<8x8x128xf32>
    %436 = vector.extract_strided_slice %227 {offsets = [3, 0], sizes = [1, 128], strides = [1, 1]} : vector<4x128xf32> to vector<1x128xf32>
    %437 = vector.shape_cast %436 : vector<1x128xf32> to vector<128xf32>
    %438 = vector.shape_cast %437 : vector<128xf32> to vector<1x1x128xf32>
    %439 = vector.broadcast %438 : vector<1x1x128xf32> to vector<8x8x128xf32>
    %440 = arith.addf %435, %439 : vector<8x8x128xf32>
    %441 = vector.extract_strided_slice %228 {offsets = [3, 0], sizes = [1, 128], strides = [1, 1]} : vector<4x128xf32> to vector<1x128xf32>
    %442 = vector.shape_cast %441 : vector<1x128xf32> to vector<128xf32>
    %cst_102 = arith.constant 5.000000e-01 : f32
    %443 = vector.broadcast %cst_102 : f32 to vector<8x8x128xf32>
    %444 = arith.mulf %443, %440 : vector<8x8x128xf32>
    %cst_103 = arith.constant 0.707106769 : f32
    %445 = vector.broadcast %cst_103 : f32 to vector<8x8x128xf32>
    %446 = arith.mulf %440, %445 : vector<8x8x128xf32>
    %447 = math.erf %446 : vector<8x8x128xf32>
    %cst_104 = arith.constant 1.000000e+00 : f32
    %448 = vector.broadcast %cst_104 : f32 to vector<8x8x128xf32>
    %449 = arith.addf %448, %447 : vector<8x8x128xf32>
    %450 = arith.mulf %444, %449 : vector<8x8x128xf32>
    %451 = vector.shape_cast %442 : vector<128xf32> to vector<1x1x128xf32>
    %452 = vector.broadcast %451 : vector<1x1x128xf32> to vector<8x8x128xf32>
    %453 = arith.mulf %452, %450 : vector<8x8x128xf32>
    %454 = arith.addf %430, %453 : vector<8x8x128xf32>
    %455 = vector.shape_cast %230 : vector<128xf32> to vector<1x1x128xf32>
    %456 = vector.broadcast %455 : vector<1x1x128xf32> to vector<8x8x128xf32>
    %457 = arith.addf %454, %456 : vector<8x8x128xf32>
    %458 = vector.shape_cast %232 : vector<128xf32> to vector<1x1x128xf32>
    %459 = vector.broadcast %458 : vector<1x1x128xf32> to vector<8x8x128xf32>
    %460 = arith.mulf %459, %457 : vector<8x8x128xf32>
    %c0_105 = arith.constant 0 : index
    %461 = arith.index_cast %c1_i32 : i32 to index
    %c0_106 = arith.constant 0 : index
    %c0_107 = arith.constant 0 : index
    %c0_108 = arith.constant 0 : index
    %462 = vector.load %arg2[%c0_105, %461, %c0_106, %c0_107, %c0_108] : memref<1x8x8x8x128xf32, #tpu.memory_space<vmem>>, vector<1x1x8x8x128xf32>
    %463 = vector.shape_cast %462 : vector<1x1x8x8x128xf32> to vector<8x8x128xf32>
    %464 = arith.addf %460, %463 : vector<8x8x128xf32>
    %c0_109 = arith.constant 0 : index
    %465 = arith.index_cast %c1_i32 : i32 to index
    %c0_110 = arith.constant 0 : index
    %c0_111 = arith.constant 0 : index
    %c0_112 = arith.constant 0 : index
    %466 = vector.load %arg11[%c0_109, %465, %c0_110, %c0_111, %c0_112] : memref<1x8x8x8x128xf32, #tpu.memory_space<vmem>>, vector<1x1x8x8x128xf32>
    %467 = vector.shape_cast %466 : vector<1x1x8x8x128xf32> to vector<8x8x128xf32>
    %468 = vector.shape_cast %464 : vector<8x8x128xf32> to vector<1x1x8x8x128xf32>
    tpu.vector_store %arg11[%c0_109, %465, %c0_110, %c0_111, %c0_112], %468 {strides = array<i32>} : memref<1x8x8x8x128xf32, #tpu.memory_space<vmem>>, vector<1x1x8x8x128xf32>,
    %c2_i32 = arith.constant 2 : i32
    %469 = arith.index_cast %c2_i32 : i32 to index
    %c0_113 = arith.constant 0 : index
    %c0_114 = arith.constant 0 : index
    %c0_115 = arith.constant 0 : index
    %470 = vector.load %arg13[%469, %c0_113, %c0_114, %c0_115] : memref<8x8x8x128xf32, #tpu.memory_space<vmem>>, vector<1x8x8x128xf32>
    %471 = vector.shape_cast %470 : vector<1x8x8x128xf32> to vector<8x8x128xf32>
    %472 = vector.shape_cast %220 : vector<128xf32> to vector<1x1x128xf32>
    %473 = vector.broadcast %472 : vector<1x1x128xf32> to vector<8x8x128xf32>
    %474 = arith.mulf %471, %473 : vector<8x8x128xf32>
    %475 = vector.shape_cast %224 : vector<128xf32> to vector<1x1x128xf32>
    %476 = vector.broadcast %475 : vector<1x1x128xf32> to vector<8x8x128xf32>
    %477 = arith.addf %474, %476 : vector<8x8x128xf32>
    %478 = vector.extract_strided_slice %226 {offsets = [0, 0], sizes = [1, 128], strides = [1, 1]} : vector<4x128xf32> to vector<1x128xf32>
    %479 = vector.shape_cast %478 : vector<1x128xf32> to vector<128xf32>
    %480 = vector.shape_cast %479 : vector<128xf32> to vector<1x1x128xf32>
    %481 = vector.broadcast %480 : vector<1x1x128xf32> to vector<8x8x128xf32>
    %482 = arith.mulf %477, %481 : vector<8x8x128xf32>
    %483 = vector.extract_strided_slice %227 {offsets = [0, 0], sizes = [1, 128], strides = [1, 1]} : vector<4x128xf32> to vector<1x128xf32>
    %484 = vector.shape_cast %483 : vector<1x128xf32> to vector<128xf32>
    %485 = vector.shape_cast %484 : vector<128xf32> to vector<1x1x128xf32>
    %486 = vector.broadcast %485 : vector<1x1x128xf32> to vector<8x8x128xf32>
    %487 = arith.addf %482, %486 : vector<8x8x128xf32>
    %488 = vector.extract_strided_slice %228 {offsets = [0, 0], sizes = [1, 128], strides = [1, 1]} : vector<4x128xf32> to vector<1x128xf32>
    %489 = vector.shape_cast %488 : vector<1x128xf32> to vector<128xf32>
    %cst_116 = arith.constant 5.000000e-01 : f32
    %490 = vector.broadcast %cst_116 : f32 to vector<8x8x128xf32>
    %491 = arith.mulf %490, %487 : vector<8x8x128xf32>
    %cst_117 = arith.constant 0.707106769 : f32
    %492 = vector.broadcast %cst_117 : f32 to vector<8x8x128xf32>
    %493 = arith.mulf %487, %492 : vector<8x8x128xf32>
    %494 = math.erf %493 : vector<8x8x128xf32>
    %cst_118 = arith.constant 1.000000e+00 : f32
    %495 = vector.broadcast %cst_118 : f32 to vector<8x8x128xf32>
    %496 = arith.addf %495, %494 : vector<8x8x128xf32>
    %497 = arith.mulf %491, %496 : vector<8x8x128xf32>
    %498 = vector.shape_cast %489 : vector<128xf32> to vector<1x1x128xf32>
    %499 = vector.broadcast %498 : vector<1x1x128xf32> to vector<8x8x128xf32>
    %500 = arith.mulf %499, %497 : vector<8x8x128xf32>
    %501 = vector.extract_strided_slice %226 {offsets = [1, 0], sizes = [1, 128], strides = [1, 1]} : vector<4x128xf32> to vector<1x128xf32>
    %502 = vector.shape_cast %501 : vector<1x128xf32> to vector<128xf32>
    %503 = vector.shape_cast %502 : vector<128xf32> to vector<1x1x128xf32>
    %504 = vector.broadcast %503 : vector<1x1x128xf32> to vector<8x8x128xf32>
    %505 = arith.mulf %477, %504 : vector<8x8x128xf32>
    %506 = vector.extract_strided_slice %227 {offsets = [1, 0], sizes = [1, 128], strides = [1, 1]} : vector<4x128xf32> to vector<1x128xf32>
    %507 = vector.shape_cast %506 : vector<1x128xf32> to vector<128xf32>
    %508 = vector.shape_cast %507 : vector<128xf32> to vector<1x1x128xf32>
    %509 = vector.broadcast %508 : vector<1x1x128xf32> to vector<8x8x128xf32>
    %510 = arith.addf %505, %509 : vector<8x8x128xf32>
    %511 = vector.extract_strided_slice %228 {offsets = [1, 0], sizes = [1, 128], strides = [1, 1]} : vector<4x128xf32> to vector<1x128xf32>
    %512 = vector.shape_cast %511 : vector<1x128xf32> to vector<128xf32>
    %cst_119 = arith.constant 5.000000e-01 : f32
    %513 = vector.broadcast %cst_119 : f32 to vector<8x8x128xf32>
    %514 = arith.mulf %513, %510 : vector<8x8x128xf32>
    %cst_120 = arith.constant 0.707106769 : f32
    %515 = vector.broadcast %cst_120 : f32 to vector<8x8x128xf32>
    %516 = arith.mulf %510, %515 : vector<8x8x128xf32>
    %517 = math.erf %516 : vector<8x8x128xf32>
    %cst_121 = arith.constant 1.000000e+00 : f32
    %518 = vector.broadcast %cst_121 : f32 to vector<8x8x128xf32>
    %519 = arith.addf %518, %517 : vector<8x8x128xf32>
    %520 = arith.mulf %514, %519 : vector<8x8x128xf32>
    %521 = vector.shape_cast %512 : vector<128xf32> to vector<1x1x128xf32>
    %522 = vector.broadcast %521 : vector<1x1x128xf32> to vector<8x8x128xf32>
    %523 = arith.mulf %522, %520 : vector<8x8x128xf32>
    %524 = arith.addf %500, %523 : vector<8x8x128xf32>
    %525 = vector.extract_strided_slice %226 {offsets = [2, 0], sizes = [1, 128], strides = [1, 1]} : vector<4x128xf32> to vector<1x128xf32>
    %526 = vector.shape_cast %525 : vector<1x128xf32> to vector<128xf32>
    %527 = vector.shape_cast %526 : vector<128xf32> to vector<1x1x128xf32>
    %528 = vector.broadcast %527 : vector<1x1x128xf32> to vector<8x8x128xf32>
    %529 = arith.mulf %477, %528 : vector<8x8x128xf32>
    %530 = vector.extract_strided_slice %227 {offsets = [2, 0], sizes = [1, 128], strides = [1, 1]} : vector<4x128xf32> to vector<1x128xf32>
    %531 = vector.shape_cast %530 : vector<1x128xf32> to vector<128xf32>
    %532 = vector.shape_cast %531 : vector<128xf32> to vector<1x1x128xf32>
    %533 = vector.broadcast %532 : vector<1x1x128xf32> to vector<8x8x128xf32>
    %534 = arith.addf %529, %533 : vector<8x8x128xf32>
    %535 = vector.extract_strided_slice %228 {offsets = [2, 0], sizes = [1, 128], strides = [1, 1]} : vector<4x128xf32> to vector<1x128xf32>
    %536 = vector.shape_cast %535 : vector<1x128xf32> to vector<128xf32>
    %cst_122 = arith.constant 5.000000e-01 : f32
    %537 = vector.broadcast %cst_122 : f32 to vector<8x8x128xf32>
    %538 = arith.mulf %537, %534 : vector<8x8x128xf32>
    %cst_123 = arith.constant 0.707106769 : f32
    %539 = vector.broadcast %cst_123 : f32 to vector<8x8x128xf32>
    %540 = arith.mulf %534, %539 : vector<8x8x128xf32>
    %541 = math.erf %540 : vector<8x8x128xf32>
    %cst_124 = arith.constant 1.000000e+00 : f32
    %542 = vector.broadcast %cst_124 : f32 to vector<8x8x128xf32>
    %543 = arith.addf %542, %541 : vector<8x8x128xf32>
    %544 = arith.mulf %538, %543 : vector<8x8x128xf32>
    %545 = vector.shape_cast %536 : vector<128xf32> to vector<1x1x128xf32>
    %546 = vector.broadcast %545 : vector<1x1x128xf32> to vector<8x8x128xf32>
    %547 = arith.mulf %546, %544 : vector<8x8x128xf32>
    %548 = arith.addf %524, %547 : vector<8x8x128xf32>
    %549 = vector.extract_strided_slice %226 {offsets = [3, 0], sizes = [1, 128], strides = [1, 1]} : vector<4x128xf32> to vector<1x128xf32>
    %550 = vector.shape_cast %549 : vector<1x128xf32> to vector<128xf32>
    %551 = vector.shape_cast %550 : vector<128xf32> to vector<1x1x128xf32>
    %552 = vector.broadcast %551 : vector<1x1x128xf32> to vector<8x8x128xf32>
    %553 = arith.mulf %477, %552 : vector<8x8x128xf32>
    %554 = vector.extract_strided_slice %227 {offsets = [3, 0], sizes = [1, 128], strides = [1, 1]} : vector<4x128xf32> to vector<1x128xf32>
    %555 = vector.shape_cast %554 : vector<1x128xf32> to vector<128xf32>
    %556 = vector.shape_cast %555 : vector<128xf32> to vector<1x1x128xf32>
    %557 = vector.broadcast %556 : vector<1x1x128xf32> to vector<8x8x128xf32>
    %558 = arith.addf %553, %557 : vector<8x8x128xf32>
    %559 = vector.extract_strided_slice %228 {offsets = [3, 0], sizes = [1, 128], strides = [1, 1]} : vector<4x128xf32> to vector<1x128xf32>
    %560 = vector.shape_cast %559 : vector<1x128xf32> to vector<128xf32>
    %cst_125 = arith.constant 5.000000e-01 : f32
    %561 = vector.broadcast %cst_125 : f32 to vector<8x8x128xf32>
    %562 = arith.mulf %561, %558 : vector<8x8x128xf32>
    %cst_126 = arith.constant 0.707106769 : f32
    %563 = vector.broadcast %cst_126 : f32 to vector<8x8x128xf32>
    %564 = arith.mulf %558, %563 : vector<8x8x128xf32>
    %565 = math.erf %564 : vector<8x8x128xf32>
    %cst_127 = arith.constant 1.000000e+00 : f32
    %566 = vector.broadcast %cst_127 : f32 to vector<8x8x128xf32>
    %567 = arith.addf %566, %565 : vector<8x8x128xf32>
    %568 = arith.mulf %562, %567 : vector<8x8x128xf32>
    %569 = vector.shape_cast %560 : vector<128xf32> to vector<1x1x128xf32>
    %570 = vector.broadcast %569 : vector<1x1x128xf32> to vector<8x8x128xf32>
    %571 = arith.mulf %570, %568 : vector<8x8x128xf32>
    %572 = arith.addf %548, %571 : vector<8x8x128xf32>
    %573 = vector.shape_cast %230 : vector<128xf32> to vector<1x1x128xf32>
    %574 = vector.broadcast %573 : vector<1x1x128xf32> to vector<8x8x128xf32>
    %575 = arith.addf %572, %574 : vector<8x8x128xf32>
    %576 = vector.shape_cast %232 : vector<128xf32> to vector<1x1x128xf32>
    %577 = vector.broadcast %576 : vector<1x1x128xf32> to vector<8x8x128xf32>
    %578 = arith.mulf %577, %575 : vector<8x8x128xf32>
    %c0_128 = arith.constant 0 : index
    %579 = arith.index_cast %c2_i32 : i32 to index
    %c0_129 = arith.constant 0 : index
    %c0_130 = arith.constant 0 : index
    %c0_131 = arith.constant 0 : index
    %580 = vector.load %arg2[%c0_128, %579, %c0_129, %c0_130, %c0_131] : memref<1x8x8x8x128xf32, #tpu.memory_space<vmem>>, vector<1x1x8x8x128xf32>
    %581 = vector.shape_cast %580 : vector<1x1x8x8x128xf32> to vector<8x8x128xf32>
    %582 = arith.addf %578, %581 : vector<8x8x128xf32>
    %c0_132 = arith.constant 0 : index
    %583 = arith.index_cast %c2_i32 : i32 to index
    %c0_133 = arith.constant 0 : index
    %c0_134 = arith.constant 0 : index
    %c0_135 = arith.constant 0 : index
    %584 = vector.load %arg11[%c0_132, %583, %c0_133, %c0_134, %c0_135] : memref<1x8x8x8x128xf32, #tpu.memory_space<vmem>>, vector<1x1x8x8x128xf32>
    %585 = vector.shape_cast %584 : vector<1x1x8x8x128xf32> to vector<8x8x128xf32>
    %586 = vector.shape_cast %582 : vector<8x8x128xf32> to vector<1x1x8x8x128xf32>
    tpu.vector_store %arg11[%c0_132, %583, %c0_133, %c0_134, %c0_135], %586 {strides = array<i32>} : memref<1x8x8x8x128xf32, #tpu.memory_space<vmem>>, vector<1x1x8x8x128xf32>,
    %c3_i32 = arith.constant 3 : i32
    %587 = arith.index_cast %c3_i32 : i32 to index
    %c0_136 = arith.constant 0 : index
    %c0_137 = arith.constant 0 : index
    %c0_138 = arith.constant 0 : index
    %588 = vector.load %arg13[%587, %c0_136, %c0_137, %c0_138] : memref<8x8x8x128xf32, #tpu.memory_space<vmem>>, vector<1x8x8x128xf32>
    %589 = vector.shape_cast %588 : vector<1x8x8x128xf32> to vector<8x8x128xf32>
    %590 = vector.shape_cast %220 : vector<128xf32> to vector<1x1x128xf32>
    %591 = vector.broadcast %590 : vector<1x1x128xf32> to vector<8x8x128xf32>
    %592 = arith.mulf %589, %591 : vector<8x8x128xf32>
    %593 = vector.shape_cast %224 : vector<128xf32> to vector<1x1x128xf32>
    %594 = vector.broadcast %593 : vector<1x1x128xf32> to vector<8x8x128xf32>
    %595 = arith.addf %592, %594 : vector<8x8x128xf32>
    %596 = vector.extract_strided_slice %226 {offsets = [0, 0], sizes = [1, 128], strides = [1, 1]} : vector<4x128xf32> to vector<1x128xf32>
    %597 = vector.shape_cast %596 : vector<1x128xf32> to vector<128xf32>
    %598 = vector.shape_cast %597 : vector<128xf32> to vector<1x1x128xf32>
    %599 = vector.broadcast %598 : vector<1x1x128xf32> to vector<8x8x128xf32>
    %600 = arith.mulf %595, %599 : vector<8x8x128xf32>
    %601 = vector.extract_strided_slice %227 {offsets = [0, 0], sizes = [1, 128], strides = [1, 1]} : vector<4x128xf32> to vector<1x128xf32>
    %602 = vector.shape_cast %601 : vector<1x128xf32> to vector<128xf32>
    %603 = vector.shape_cast %602 : vector<128xf32> to vector<1x1x128xf32>
    %604 = vector.broadcast %603 : vector<1x1x128xf32> to vector<8x8x128xf32>
    %605 = arith.addf %600, %604 : vector<8x8x128xf32>
    %606 = vector.extract_strided_slice %228 {offsets = [0, 0], sizes = [1, 128], strides = [1, 1]} : vector<4x128xf32> to vector<1x128xf32>
    %607 = vector.shape_cast %606 : vector<1x128xf32> to vector<128xf32>
    %cst_139 = arith.constant 5.000000e-01 : f32
    %608 = vector.broadcast %cst_139 : f32 to vector<8x8x128xf32>
    %609 = arith.mulf %608, %605 : vector<8x8x128xf32>
    %cst_140 = arith.constant 0.707106769 : f32
    %610 = vector.broadcast %cst_140 : f32 to vector<8x8x128xf32>
    %611 = arith.mulf %605, %610 : vector<8x8x128xf32>
    %612 = math.erf %611 : vector<8x8x128xf32>
    %cst_141 = arith.constant 1.000000e+00 : f32
    %613 = vector.broadcast %cst_141 : f32 to vector<8x8x128xf32>
    %614 = arith.addf %613, %612 : vector<8x8x128xf32>
    %615 = arith.mulf %609, %614 : vector<8x8x128xf32>
    %616 = vector.shape_cast %607 : vector<128xf32> to vector<1x1x128xf32>
    %617 = vector.broadcast %616 : vector<1x1x128xf32> to vector<8x8x128xf32>
    %618 = arith.mulf %617, %615 : vector<8x8x128xf32>
    %619 = vector.extract_strided_slice %226 {offsets = [1, 0], sizes = [1, 128], strides = [1, 1]} : vector<4x128xf32> to vector<1x128xf32>
    %620 = vector.shape_cast %619 : vector<1x128xf32> to vector<128xf32>
    %621 = vector.shape_cast %620 : vector<128xf32> to vector<1x1x128xf32>
    %622 = vector.broadcast %621 : vector<1x1x128xf32> to vector<8x8x128xf32>
    %623 = arith.mulf %595, %622 : vector<8x8x128xf32>
    %624 = vector.extract_strided_slice %227 {offsets = [1, 0], sizes = [1, 128], strides = [1, 1]} : vector<4x128xf32> to vector<1x128xf32>
    %625 = vector.shape_cast %624 : vector<1x128xf32> to vector<128xf32>
    %626 = vector.shape_cast %625 : vector<128xf32> to vector<1x1x128xf32>
    %627 = vector.broadcast %626 : vector<1x1x128xf32> to vector<8x8x128xf32>
    %628 = arith.addf %623, %627 : vector<8x8x128xf32>
    %629 = vector.extract_strided_slice %228 {offsets = [1, 0], sizes = [1, 128], strides = [1, 1]} : vector<4x128xf32> to vector<1x128xf32>
    %630 = vector.shape_cast %629 : vector<1x128xf32> to vector<128xf32>
    %cst_142 = arith.constant 5.000000e-01 : f32
    %631 = vector.broadcast %cst_142 : f32 to vector<8x8x128xf32>
    %632 = arith.mulf %631, %628 : vector<8x8x128xf32>
    %cst_143 = arith.constant 0.707106769 : f32
    %633 = vector.broadcast %cst_143 : f32 to vector<8x8x128xf32>
    %634 = arith.mulf %628, %633 : vector<8x8x128xf32>
    %635 = math.erf %634 : vector<8x8x128xf32>
    %cst_144 = arith.constant 1.000000e+00 : f32
    %636 = vector.broadcast %cst_144 : f32 to vector<8x8x128xf32>
    %637 = arith.addf %636, %635 : vector<8x8x128xf32>
    %638 = arith.mulf %632, %637 : vector<8x8x128xf32>
    %639 = vector.shape_cast %630 : vector<128xf32> to vector<1x1x128xf32>
    %640 = vector.broadcast %639 : vector<1x1x128xf32> to vector<8x8x128xf32>
    %641 = arith.mulf %640, %638 : vector<8x8x128xf32>
    %642 = arith.addf %618, %641 : vector<8x8x128xf32>
    %643 = vector.extract_strided_slice %226 {offsets = [2, 0], sizes = [1, 128], strides = [1, 1]} : vector<4x128xf32> to vector<1x128xf32>
    %644 = vector.shape_cast %643 : vector<1x128xf32> to vector<128xf32>
    %645 = vector.shape_cast %644 : vector<128xf32> to vector<1x1x128xf32>
    %646 = vector.broadcast %645 : vector<1x1x128xf32> to vector<8x8x128xf32>
    %647 = arith.mulf %595, %646 : vector<8x8x128xf32>
    %648 = vector.extract_strided_slice %227 {offsets = [2, 0], sizes = [1, 128], strides = [1, 1]} : vector<4x128xf32> to vector<1x128xf32>
    %649 = vector.shape_cast %648 : vector<1x128xf32> to vector<128xf32>
    %650 = vector.shape_cast %649 : vector<128xf32> to vector<1x1x128xf32>
    %651 = vector.broadcast %650 : vector<1x1x128xf32> to vector<8x8x128xf32>
    %652 = arith.addf %647, %651 : vector<8x8x128xf32>
    %653 = vector.extract_strided_slice %228 {offsets = [2, 0], sizes = [1, 128], strides = [1, 1]} : vector<4x128xf32> to vector<1x128xf32>
    %654 = vector.shape_cast %653 : vector<1x128xf32> to vector<128xf32>
    %cst_145 = arith.constant 5.000000e-01 : f32
    %655 = vector.broadcast %cst_145 : f32 to vector<8x8x128xf32>
    %656 = arith.mulf %655, %652 : vector<8x8x128xf32>
    %cst_146 = arith.constant 0.707106769 : f32
    %657 = vector.broadcast %cst_146 : f32 to vector<8x8x128xf32>
    %658 = arith.mulf %652, %657 : vector<8x8x128xf32>
    %659 = math.erf %658 : vector<8x8x128xf32>
    %cst_147 = arith.constant 1.000000e+00 : f32
    %660 = vector.broadcast %cst_147 : f32 to vector<8x8x128xf32>
    %661 = arith.addf %660, %659 : vector<8x8x128xf32>
    %662 = arith.mulf %656, %661 : vector<8x8x128xf32>
    %663 = vector.shape_cast %654 : vector<128xf32> to vector<1x1x128xf32>
    %664 = vector.broadcast %663 : vector<1x1x128xf32> to vector<8x8x128xf32>
    %665 = arith.mulf %664, %662 : vector<8x8x128xf32>
    %666 = arith.addf %642, %665 : vector<8x8x128xf32>
    %667 = vector.extract_strided_slice %226 {offsets = [3, 0], sizes = [1, 128], strides = [1, 1]} : vector<4x128xf32> to vector<1x128xf32>
    %668 = vector.shape_cast %667 : vector<1x128xf32> to vector<128xf32>
    %669 = vector.shape_cast %668 : vector<128xf32> to vector<1x1x128xf32>
    %670 = vector.broadcast %669 : vector<1x1x128xf32> to vector<8x8x128xf32>
    %671 = arith.mulf %595, %670 : vector<8x8x128xf32>
    %672 = vector.extract_strided_slice %227 {offsets = [3, 0], sizes = [1, 128], strides = [1, 1]} : vector<4x128xf32> to vector<1x128xf32>
    %673 = vector.shape_cast %672 : vector<1x128xf32> to vector<128xf32>
    %674 = vector.shape_cast %673 : vector<128xf32> to vector<1x1x128xf32>
    %675 = vector.broadcast %674 : vector<1x1x128xf32> to vector<8x8x128xf32>
    %676 = arith.addf %671, %675 : vector<8x8x128xf32>
    %677 = vector.extract_strided_slice %228 {offsets = [3, 0], sizes = [1, 128], strides = [1, 1]} : vector<4x128xf32> to vector<1x128xf32>
    %678 = vector.shape_cast %677 : vector<1x128xf32> to vector<128xf32>
    %cst_148 = arith.constant 5.000000e-01 : f32
    %679 = vector.broadcast %cst_148 : f32 to vector<8x8x128xf32>
    %680 = arith.mulf %679, %676 : vector<8x8x128xf32>
    %cst_149 = arith.constant 0.707106769 : f32
    %681 = vector.broadcast %cst_149 : f32 to vector<8x8x128xf32>
    %682 = arith.mulf %676, %681 : vector<8x8x128xf32>
    %683 = math.erf %682 : vector<8x8x128xf32>
    %cst_150 = arith.constant 1.000000e+00 : f32
    %684 = vector.broadcast %cst_150 : f32 to vector<8x8x128xf32>
    %685 = arith.addf %684, %683 : vector<8x8x128xf32>
    %686 = arith.mulf %680, %685 : vector<8x8x128xf32>
    %687 = vector.shape_cast %678 : vector<128xf32> to vector<1x1x128xf32>
    %688 = vector.broadcast %687 : vector<1x1x128xf32> to vector<8x8x128xf32>
    %689 = arith.mulf %688, %686 : vector<8x8x128xf32>
    %690 = arith.addf %666, %689 : vector<8x8x128xf32>
    %691 = vector.shape_cast %230 : vector<128xf32> to vector<1x1x128xf32>
    %692 = vector.broadcast %691 : vector<1x1x128xf32> to vector<8x8x128xf32>
    %693 = arith.addf %690, %692 : vector<8x8x128xf32>
    %694 = vector.shape_cast %232 : vector<128xf32> to vector<1x1x128xf32>
    %695 = vector.broadcast %694 : vector<1x1x128xf32> to vector<8x8x128xf32>
    %696 = arith.mulf %695, %693 : vector<8x8x128xf32>
    %c0_151 = arith.constant 0 : index
    %697 = arith.index_cast %c3_i32 : i32 to index
    %c0_152 = arith.constant 0 : index
    %c0_153 = arith.constant 0 : index
    %c0_154 = arith.constant 0 : index
    %698 = vector.load %arg2[%c0_151, %697, %c0_152, %c0_153, %c0_154] : memref<1x8x8x8x128xf32, #tpu.memory_space<vmem>>, vector<1x1x8x8x128xf32>
    %699 = vector.shape_cast %698 : vector<1x1x8x8x128xf32> to vector<8x8x128xf32>
    %700 = arith.addf %696, %699 : vector<8x8x128xf32>
    %c0_155 = arith.constant 0 : index
    %701 = arith.index_cast %c3_i32 : i32 to index
    %c0_156 = arith.constant 0 : index
    %c0_157 = arith.constant 0 : index
    %c0_158 = arith.constant 0 : index
    %702 = vector.load %arg11[%c0_155, %701, %c0_156, %c0_157, %c0_158] : memref<1x8x8x8x128xf32, #tpu.memory_space<vmem>>, vector<1x1x8x8x128xf32>
    %703 = vector.shape_cast %702 : vector<1x1x8x8x128xf32> to vector<8x8x128xf32>
    %704 = vector.shape_cast %700 : vector<8x8x128xf32> to vector<1x1x8x8x128xf32>
    tpu.vector_store %arg11[%c0_155, %701, %c0_156, %c0_157, %c0_158], %704 {strides = array<i32>} : memref<1x8x8x8x128xf32, #tpu.memory_space<vmem>>, vector<1x1x8x8x128xf32>,
    %c4_i32 = arith.constant 4 : i32
    %705 = arith.index_cast %c4_i32 : i32 to index
    %c0_159 = arith.constant 0 : index
    %c0_160 = arith.constant 0 : index
    %c0_161 = arith.constant 0 : index
    %706 = vector.load %arg13[%705, %c0_159, %c0_160, %c0_161] : memref<8x8x8x128xf32, #tpu.memory_space<vmem>>, vector<1x8x8x128xf32>
    %707 = vector.shape_cast %706 : vector<1x8x8x128xf32> to vector<8x8x128xf32>
    %708 = vector.shape_cast %220 : vector<128xf32> to vector<1x1x128xf32>
    %709 = vector.broadcast %708 : vector<1x1x128xf32> to vector<8x8x128xf32>
    %710 = arith.mulf %707, %709 : vector<8x8x128xf32>
    %711 = vector.shape_cast %224 : vector<128xf32> to vector<1x1x128xf32>
    %712 = vector.broadcast %711 : vector<1x1x128xf32> to vector<8x8x128xf32>
    %713 = arith.addf %710, %712 : vector<8x8x128xf32>
    %714 = vector.extract_strided_slice %226 {offsets = [0, 0], sizes = [1, 128], strides = [1, 1]} : vector<4x128xf32> to vector<1x128xf32>
    %715 = vector.shape_cast %714 : vector<1x128xf32> to vector<128xf32>
    %716 = vector.shape_cast %715 : vector<128xf32> to vector<1x1x128xf32>
    %717 = vector.broadcast %716 : vector<1x1x128xf32> to vector<8x8x128xf32>
    %718 = arith.mulf %713, %717 : vector<8x8x128xf32>
    %719 = vector.extract_strided_slice %227 {offsets = [0, 0], sizes = [1, 128], strides = [1, 1]} : vector<4x128xf32> to vector<1x128xf32>
    %720 = vector.shape_cast %719 : vector<1x128xf32> to vector<128xf32>
    %721 = vector.shape_cast %720 : vector<128xf32> to vector<1x1x128xf32>
    %722 = vector.broadcast %721 : vector<1x1x128xf32> to vector<8x8x128xf32>
    %723 = arith.addf %718, %722 : vector<8x8x128xf32>
    %724 = vector.extract_strided_slice %228 {offsets = [0, 0], sizes = [1, 128], strides = [1, 1]} : vector<4x128xf32> to vector<1x128xf32>
    %725 = vector.shape_cast %724 : vector<1x128xf32> to vector<128xf32>
    %cst_162 = arith.constant 5.000000e-01 : f32
    %726 = vector.broadcast %cst_162 : f32 to vector<8x8x128xf32>
    %727 = arith.mulf %726, %723 : vector<8x8x128xf32>
    %cst_163 = arith.constant 0.707106769 : f32
    %728 = vector.broadcast %cst_163 : f32 to vector<8x8x128xf32>
    %729 = arith.mulf %723, %728 : vector<8x8x128xf32>
    %730 = math.erf %729 : vector<8x8x128xf32>
    %cst_164 = arith.constant 1.000000e+00 : f32
    %731 = vector.broadcast %cst_164 : f32 to vector<8x8x128xf32>
    %732 = arith.addf %731, %730 : vector<8x8x128xf32>
    %733 = arith.mulf %727, %732 : vector<8x8x128xf32>
    %734 = vector.shape_cast %725 : vector<128xf32> to vector<1x1x128xf32>
    %735 = vector.broadcast %734 : vector<1x1x128xf32> to vector<8x8x128xf32>
    %736 = arith.mulf %735, %733 : vector<8x8x128xf32>
    %737 = vector.extract_strided_slice %226 {offsets = [1, 0], sizes = [1, 128], strides = [1, 1]} : vector<4x128xf32> to vector<1x128xf32>
    %738 = vector.shape_cast %737 : vector<1x128xf32> to vector<128xf32>
    %739 = vector.shape_cast %738 : vector<128xf32> to vector<1x1x128xf32>
    %740 = vector.broadcast %739 : vector<1x1x128xf32> to vector<8x8x128xf32>
    %741 = arith.mulf %713, %740 : vector<8x8x128xf32>
    %742 = vector.extract_strided_slice %227 {offsets = [1, 0], sizes = [1, 128], strides = [1, 1]} : vector<4x128xf32> to vector<1x128xf32>
    %743 = vector.shape_cast %742 : vector<1x128xf32> to vector<128xf32>
    %744 = vector.shape_cast %743 : vector<128xf32> to vector<1x1x128xf32>
    %745 = vector.broadcast %744 : vector<1x1x128xf32> to vector<8x8x128xf32>
    %746 = arith.addf %741, %745 : vector<8x8x128xf32>
    %747 = vector.extract_strided_slice %228 {offsets = [1, 0], sizes = [1, 128], strides = [1, 1]} : vector<4x128xf32> to vector<1x128xf32>
    %748 = vector.shape_cast %747 : vector<1x128xf32> to vector<128xf32>
    %cst_165 = arith.constant 5.000000e-01 : f32
    %749 = vector.broadcast %cst_165 : f32 to vector<8x8x128xf32>
    %750 = arith.mulf %749, %746 : vector<8x8x128xf32>
    %cst_166 = arith.constant 0.707106769 : f32
    %751 = vector.broadcast %cst_166 : f32 to vector<8x8x128xf32>
    %752 = arith.mulf %746, %751 : vector<8x8x128xf32>
    %753 = math.erf %752 : vector<8x8x128xf32>
    %cst_167 = arith.constant 1.000000e+00 : f32
    %754 = vector.broadcast %cst_167 : f32 to vector<8x8x128xf32>
    %755 = arith.addf %754, %753 : vector<8x8x128xf32>
    %756 = arith.mulf %750, %755 : vector<8x8x128xf32>
    %757 = vector.shape_cast %748 : vector<128xf32> to vector<1x1x128xf32>
    %758 = vector.broadcast %757 : vector<1x1x128xf32> to vector<8x8x128xf32>
    %759 = arith.mulf %758, %756 : vector<8x8x128xf32>
    %760 = arith.addf %736, %759 : vector<8x8x128xf32>
    %761 = vector.extract_strided_slice %226 {offsets = [2, 0], sizes = [1, 128], strides = [1, 1]} : vector<4x128xf32> to vector<1x128xf32>
    %762 = vector.shape_cast %761 : vector<1x128xf32> to vector<128xf32>
    %763 = vector.shape_cast %762 : vector<128xf32> to vector<1x1x128xf32>
    %764 = vector.broadcast %763 : vector<1x1x128xf32> to vector<8x8x128xf32>
    %765 = arith.mulf %713, %764 : vector<8x8x128xf32>
    %766 = vector.extract_strided_slice %227 {offsets = [2, 0], sizes = [1, 128], strides = [1, 1]} : vector<4x128xf32> to vector<1x128xf32>
    %767 = vector.shape_cast %766 : vector<1x128xf32> to vector<128xf32>
    %768 = vector.shape_cast %767 : vector<128xf32> to vector<1x1x128xf32>
    %769 = vector.broadcast %768 : vector<1x1x128xf32> to vector<8x8x128xf32>
    %770 = arith.addf %765, %769 : vector<8x8x128xf32>
    %771 = vector.extract_strided_slice %228 {offsets = [2, 0], sizes = [1, 128], strides = [1, 1]} : vector<4x128xf32> to vector<1x128xf32>
    %772 = vector.shape_cast %771 : vector<1x128xf32> to vector<128xf32>
    %cst_168 = arith.constant 5.000000e-01 : f32
    %773 = vector.broadcast %cst_168 : f32 to vector<8x8x128xf32>
    %774 = arith.mulf %773, %770 : vector<8x8x128xf32>
    %cst_169 = arith.constant 0.707106769 : f32
    %775 = vector.broadcast %cst_169 : f32 to vector<8x8x128xf32>
    %776 = arith.mulf %770, %775 : vector<8x8x128xf32>
    %777 = math.erf %776 : vector<8x8x128xf32>
    %cst_170 = arith.constant 1.000000e+00 : f32
    %778 = vector.broadcast %cst_170 : f32 to vector<8x8x128xf32>
    %779 = arith.addf %778, %777 : vector<8x8x128xf32>
    %780 = arith.mulf %774, %779 : vector<8x8x128xf32>
    %781 = vector.shape_cast %772 : vector<128xf32> to vector<1x1x128xf32>
    %782 = vector.broadcast %781 : vector<1x1x128xf32> to vector<8x8x128xf32>
    %783 = arith.mulf %782, %780 : vector<8x8x128xf32>
    %784 = arith.addf %760, %783 : vector<8x8x128xf32>
    %785 = vector.extract_strided_slice %226 {offsets = [3, 0], sizes = [1, 128], strides = [1, 1]} : vector<4x128xf32> to vector<1x128xf32>
    %786 = vector.shape_cast %785 : vector<1x128xf32> to vector<128xf32>
    %787 = vector.shape_cast %786 : vector<128xf32> to vector<1x1x128xf32>
    %788 = vector.broadcast %787 : vector<1x1x128xf32> to vector<8x8x128xf32>
    %789 = arith.mulf %713, %788 : vector<8x8x128xf32>
    %790 = vector.extract_strided_slice %227 {offsets = [3, 0], sizes = [1, 128], strides = [1, 1]} : vector<4x128xf32> to vector<1x128xf32>
    %791 = vector.shape_cast %790 : vector<1x128xf32> to vector<128xf32>
    %792 = vector.shape_cast %791 : vector<128xf32> to vector<1x1x128xf32>
    %793 = vector.broadcast %792 : vector<1x1x128xf32> to vector<8x8x128xf32>
    %794 = arith.addf %789, %793 : vector<8x8x128xf32>
    %795 = vector.extract_strided_slice %228 {offsets = [3, 0], sizes = [1, 128], strides = [1, 1]} : vector<4x128xf32> to vector<1x128xf32>
    %796 = vector.shape_cast %795 : vector<1x128xf32> to vector<128xf32>
    %cst_171 = arith.constant 5.000000e-01 : f32
    %797 = vector.broadcast %cst_171 : f32 to vector<8x8x128xf32>
    %798 = arith.mulf %797, %794 : vector<8x8x128xf32>
    %cst_172 = arith.constant 0.707106769 : f32
    %799 = vector.broadcast %cst_172 : f32 to vector<8x8x128xf32>
    %800 = arith.mulf %794, %799 : vector<8x8x128xf32>
    %801 = math.erf %800 : vector<8x8x128xf32>
    %cst_173 = arith.constant 1.000000e+00 : f32
    %802 = vector.broadcast %cst_173 : f32 to vector<8x8x128xf32>
    %803 = arith.addf %802, %801 : vector<8x8x128xf32>
    %804 = arith.mulf %798, %803 : vector<8x8x128xf32>
    %805 = vector.shape_cast %796 : vector<128xf32> to vector<1x1x128xf32>
    %806 = vector.broadcast %805 : vector<1x1x128xf32> to vector<8x8x128xf32>
    %807 = arith.mulf %806, %804 : vector<8x8x128xf32>
    %808 = arith.addf %784, %807 : vector<8x8x128xf32>
    %809 = vector.shape_cast %230 : vector<128xf32> to vector<1x1x128xf32>
    %810 = vector.broadcast %809 : vector<1x1x128xf32> to vector<8x8x128xf32>
    %811 = arith.addf %808, %810 : vector<8x8x128xf32>
    %812 = vector.shape_cast %232 : vector<128xf32> to vector<1x1x128xf32>
    %813 = vector.broadcast %812 : vector<1x1x128xf32> to vector<8x8x128xf32>
    %814 = arith.mulf %813, %811 : vector<8x8x128xf32>
    %c0_174 = arith.constant 0 : index
    %815 = arith.index_cast %c4_i32 : i32 to index
    %c0_175 = arith.constant 0 : index
    %c0_176 = arith.constant 0 : index
    %c0_177 = arith.constant 0 : index
    %816 = vector.load %arg2[%c0_174, %815, %c0_175, %c0_176, %c0_177] : memref<1x8x8x8x128xf32, #tpu.memory_space<vmem>>, vector<1x1x8x8x128xf32>
    %817 = vector.shape_cast %816 : vector<1x1x8x8x128xf32> to vector<8x8x128xf32>
    %818 = arith.addf %814, %817 : vector<8x8x128xf32>
    %c0_178 = arith.constant 0 : index
    %819 = arith.index_cast %c4_i32 : i32 to index
    %c0_179 = arith.constant 0 : index
    %c0_180 = arith.constant 0 : index
    %c0_181 = arith.constant 0 : index
    %820 = vector.load %arg11[%c0_178, %819, %c0_179, %c0_180, %c0_181] : memref<1x8x8x8x128xf32, #tpu.memory_space<vmem>>, vector<1x1x8x8x128xf32>
    %821 = vector.shape_cast %820 : vector<1x1x8x8x128xf32> to vector<8x8x128xf32>
    %822 = vector.shape_cast %818 : vector<8x8x128xf32> to vector<1x1x8x8x128xf32>
    tpu.vector_store %arg11[%c0_178, %819, %c0_179, %c0_180, %c0_181], %822 {strides = array<i32>} : memref<1x8x8x8x128xf32, #tpu.memory_space<vmem>>, vector<1x1x8x8x128xf32>,
    %c5_i32 = arith.constant 5 : i32
    %823 = arith.index_cast %c5_i32 : i32 to index
    %c0_182 = arith.constant 0 : index
    %c0_183 = arith.constant 0 : index
    %c0_184 = arith.constant 0 : index
    %824 = vector.load %arg13[%823, %c0_182, %c0_183, %c0_184] : memref<8x8x8x128xf32, #tpu.memory_space<vmem>>, vector<1x8x8x128xf32>
    %825 = vector.shape_cast %824 : vector<1x8x8x128xf32> to vector<8x8x128xf32>
    %826 = vector.shape_cast %220 : vector<128xf32> to vector<1x1x128xf32>
    %827 = vector.broadcast %826 : vector<1x1x128xf32> to vector<8x8x128xf32>
    %828 = arith.mulf %825, %827 : vector<8x8x128xf32>
    %829 = vector.shape_cast %224 : vector<128xf32> to vector<1x1x128xf32>
    %830 = vector.broadcast %829 : vector<1x1x128xf32> to vector<8x8x128xf32>
    %831 = arith.addf %828, %830 : vector<8x8x128xf32>
    %832 = vector.extract_strided_slice %226 {offsets = [0, 0], sizes = [1, 128], strides = [1, 1]} : vector<4x128xf32> to vector<1x128xf32>
    %833 = vector.shape_cast %832 : vector<1x128xf32> to vector<128xf32>
    %834 = vector.shape_cast %833 : vector<128xf32> to vector<1x1x128xf32>
    %835 = vector.broadcast %834 : vector<1x1x128xf32> to vector<8x8x128xf32>
    %836 = arith.mulf %831, %835 : vector<8x8x128xf32>
    %837 = vector.extract_strided_slice %227 {offsets = [0, 0], sizes = [1, 128], strides = [1, 1]} : vector<4x128xf32> to vector<1x128xf32>
    %838 = vector.shape_cast %837 : vector<1x128xf32> to vector<128xf32>
    %839 = vector.shape_cast %838 : vector<128xf32> to vector<1x1x128xf32>
    %840 = vector.broadcast %839 : vector<1x1x128xf32> to vector<8x8x128xf32>
    %841 = arith.addf %836, %840 : vector<8x8x128xf32>
    %842 = vector.extract_strided_slice %228 {offsets = [0, 0], sizes = [1, 128], strides = [1, 1]} : vector<4x128xf32> to vector<1x128xf32>
    %843 = vector.shape_cast %842 : vector<1x128xf32> to vector<128xf32>
    %cst_185 = arith.constant 5.000000e-01 : f32
    %844 = vector.broadcast %cst_185 : f32 to vector<8x8x128xf32>
    %845 = arith.mulf %844, %841 : vector<8x8x128xf32>
    %cst_186 = arith.constant 0.707106769 : f32
    %846 = vector.broadcast %cst_186 : f32 to vector<8x8x128xf32>
    %847 = arith.mulf %841, %846 : vector<8x8x128xf32>
    %848 = math.erf %847 : vector<8x8x128xf32>
    %cst_187 = arith.constant 1.000000e+00 : f32
    %849 = vector.broadcast %cst_187 : f32 to vector<8x8x128xf32>
    %850 = arith.addf %849, %848 : vector<8x8x128xf32>
    %851 = arith.mulf %845, %850 : vector<8x8x128xf32>
    %852 = vector.shape_cast %843 : vector<128xf32> to vector<1x1x128xf32>
    %853 = vector.broadcast %852 : vector<1x1x128xf32> to vector<8x8x128xf32>
    %854 = arith.mulf %853, %851 : vector<8x8x128xf32>
    %855 = vector.extract_strided_slice %226 {offsets = [1, 0], sizes = [1, 128], strides = [1, 1]} : vector<4x128xf32> to vector<1x128xf32>
    %856 = vector.shape_cast %855 : vector<1x128xf32> to vector<128xf32>
    %857 = vector.shape_cast %856 : vector<128xf32> to vector<1x1x128xf32>
    %858 = vector.broadcast %857 : vector<1x1x128xf32> to vector<8x8x128xf32>
    %859 = arith.mulf %831, %858 : vector<8x8x128xf32>
    %860 = vector.extract_strided_slice %227 {offsets = [1, 0], sizes = [1, 128], strides = [1, 1]} : vector<4x128xf32> to vector<1x128xf32>
    %861 = vector.shape_cast %860 : vector<1x128xf32> to vector<128xf32>
    %862 = vector.shape_cast %861 : vector<128xf32> to vector<1x1x128xf32>
    %863 = vector.broadcast %862 : vector<1x1x128xf32> to vector<8x8x128xf32>
    %864 = arith.addf %859, %863 : vector<8x8x128xf32>
    %865 = vector.extract_strided_slice %228 {offsets = [1, 0], sizes = [1, 128], strides = [1, 1]} : vector<4x128xf32> to vector<1x128xf32>
    %866 = vector.shape_cast %865 : vector<1x128xf32> to vector<128xf32>
    %cst_188 = arith.constant 5.000000e-01 : f32
    %867 = vector.broadcast %cst_188 : f32 to vector<8x8x128xf32>
    %868 = arith.mulf %867, %864 : vector<8x8x128xf32>
    %cst_189 = arith.constant 0.707106769 : f32
    %869 = vector.broadcast %cst_189 : f32 to vector<8x8x128xf32>
    %870 = arith.mulf %864, %869 : vector<8x8x128xf32>
    %871 = math.erf %870 : vector<8x8x128xf32>
    %cst_190 = arith.constant 1.000000e+00 : f32
    %872 = vector.broadcast %cst_190 : f32 to vector<8x8x128xf32>
    %873 = arith.addf %872, %871 : vector<8x8x128xf32>
    %874 = arith.mulf %868, %873 : vector<8x8x128xf32>
    %875 = vector.shape_cast %866 : vector<128xf32> to vector<1x1x128xf32>
    %876 = vector.broadcast %875 : vector<1x1x128xf32> to vector<8x8x128xf32>
    %877 = arith.mulf %876, %874 : vector<8x8x128xf32>
    %878 = arith.addf %854, %877 : vector<8x8x128xf32>
    %879 = vector.extract_strided_slice %226 {offsets = [2, 0], sizes = [1, 128], strides = [1, 1]} : vector<4x128xf32> to vector<1x128xf32>
    %880 = vector.shape_cast %879 : vector<1x128xf32> to vector<128xf32>
    %881 = vector.shape_cast %880 : vector<128xf32> to vector<1x1x128xf32>
    %882 = vector.broadcast %881 : vector<1x1x128xf32> to vector<8x8x128xf32>
    %883 = arith.mulf %831, %882 : vector<8x8x128xf32>
    %884 = vector.extract_strided_slice %227 {offsets = [2, 0], sizes = [1, 128], strides = [1, 1]} : vector<4x128xf32> to vector<1x128xf32>
    %885 = vector.shape_cast %884 : vector<1x128xf32> to vector<128xf32>
    %886 = vector.shape_cast %885 : vector<128xf32> to vector<1x1x128xf32>
    %887 = vector.broadcast %886 : vector<1x1x128xf32> to vector<8x8x128xf32>
    %888 = arith.addf %883, %887 : vector<8x8x128xf32>
    %889 = vector.extract_strided_slice %228 {offsets = [2, 0], sizes = [1, 128], strides = [1, 1]} : vector<4x128xf32> to vector<1x128xf32>
    %890 = vector.shape_cast %889 : vector<1x128xf32> to vector<128xf32>
    %cst_191 = arith.constant 5.000000e-01 : f32
    %891 = vector.broadcast %cst_191 : f32 to vector<8x8x128xf32>
    %892 = arith.mulf %891, %888 : vector<8x8x128xf32>
    %cst_192 = arith.constant 0.707106769 : f32
    %893 = vector.broadcast %cst_192 : f32 to vector<8x8x128xf32>
    %894 = arith.mulf %888, %893 : vector<8x8x128xf32>
    %895 = math.erf %894 : vector<8x8x128xf32>
    %cst_193 = arith.constant 1.000000e+00 : f32
    %896 = vector.broadcast %cst_193 : f32 to vector<8x8x128xf32>
    %897 = arith.addf %896, %895 : vector<8x8x128xf32>
    %898 = arith.mulf %892, %897 : vector<8x8x128xf32>
    %899 = vector.shape_cast %890 : vector<128xf32> to vector<1x1x128xf32>
    %900 = vector.broadcast %899 : vector<1x1x128xf32> to vector<8x8x128xf32>
    %901 = arith.mulf %900, %898 : vector<8x8x128xf32>
    %902 = arith.addf %878, %901 : vector<8x8x128xf32>
    %903 = vector.extract_strided_slice %226 {offsets = [3, 0], sizes = [1, 128], strides = [1, 1]} : vector<4x128xf32> to vector<1x128xf32>
    %904 = vector.shape_cast %903 : vector<1x128xf32> to vector<128xf32>
    %905 = vector.shape_cast %904 : vector<128xf32> to vector<1x1x128xf32>
    %906 = vector.broadcast %905 : vector<1x1x128xf32> to vector<8x8x128xf32>
    %907 = arith.mulf %831, %906 : vector<8x8x128xf32>
    %908 = vector.extract_strided_slice %227 {offsets = [3, 0], sizes = [1, 128], strides = [1, 1]} : vector<4x128xf32> to vector<1x128xf32>
    %909 = vector.shape_cast %908 : vector<1x128xf32> to vector<128xf32>
    %910 = vector.shape_cast %909 : vector<128xf32> to vector<1x1x128xf32>
    %911 = vector.broadcast %910 : vector<1x1x128xf32> to vector<8x8x128xf32>
    %912 = arith.addf %907, %911 : vector<8x8x128xf32>
    %913 = vector.extract_strided_slice %228 {offsets = [3, 0], sizes = [1, 128], strides = [1, 1]} : vector<4x128xf32> to vector<1x128xf32>
    %914 = vector.shape_cast %913 : vector<1x128xf32> to vector<128xf32>
    %cst_194 = arith.constant 5.000000e-01 : f32
    %915 = vector.broadcast %cst_194 : f32 to vector<8x8x128xf32>
    %916 = arith.mulf %915, %912 : vector<8x8x128xf32>
    %cst_195 = arith.constant 0.707106769 : f32
    %917 = vector.broadcast %cst_195 : f32 to vector<8x8x128xf32>
    %918 = arith.mulf %912, %917 : vector<8x8x128xf32>
    %919 = math.erf %918 : vector<8x8x128xf32>
    %cst_196 = arith.constant 1.000000e+00 : f32
    %920 = vector.broadcast %cst_196 : f32 to vector<8x8x128xf32>
    %921 = arith.addf %920, %919 : vector<8x8x128xf32>
    %922 = arith.mulf %916, %921 : vector<8x8x128xf32>
    %923 = vector.shape_cast %914 : vector<128xf32> to vector<1x1x128xf32>
    %924 = vector.broadcast %923 : vector<1x1x128xf32> to vector<8x8x128xf32>
    %925 = arith.mulf %924, %922 : vector<8x8x128xf32>
    %926 = arith.addf %902, %925 : vector<8x8x128xf32>
    %927 = vector.shape_cast %230 : vector<128xf32> to vector<1x1x128xf32>
    %928 = vector.broadcast %927 : vector<1x1x128xf32> to vector<8x8x128xf32>
    %929 = arith.addf %926, %928 : vector<8x8x128xf32>
    %930 = vector.shape_cast %232 : vector<128xf32> to vector<1x1x128xf32>
    %931 = vector.broadcast %930 : vector<1x1x128xf32> to vector<8x8x128xf32>
    %932 = arith.mulf %931, %929 : vector<8x8x128xf32>
    %c0_197 = arith.constant 0 : index
    %933 = arith.index_cast %c5_i32 : i32 to index
    %c0_198 = arith.constant 0 : index
    %c0_199 = arith.constant 0 : index
    %c0_200 = arith.constant 0 : index
    %934 = vector.load %arg2[%c0_197, %933, %c0_198, %c0_199, %c0_200] : memref<1x8x8x8x128xf32, #tpu.memory_space<vmem>>, vector<1x1x8x8x128xf32>
    %935 = vector.shape_cast %934 : vector<1x1x8x8x128xf32> to vector<8x8x128xf32>
    %936 = arith.addf %932, %935 : vector<8x8x128xf32>
    %c0_201 = arith.constant 0 : index
    %937 = arith.index_cast %c5_i32 : i32 to index
    %c0_202 = arith.constant 0 : index
    %c0_203 = arith.constant 0 : index
    %c0_204 = arith.constant 0 : index
    %938 = vector.load %arg11[%c0_201, %937, %c0_202, %c0_203, %c0_204] : memref<1x8x8x8x128xf32, #tpu.memory_space<vmem>>, vector<1x1x8x8x128xf32>
    %939 = vector.shape_cast %938 : vector<1x1x8x8x128xf32> to vector<8x8x128xf32>
    %940 = vector.shape_cast %936 : vector<8x8x128xf32> to vector<1x1x8x8x128xf32>
    tpu.vector_store %arg11[%c0_201, %937, %c0_202, %c0_203, %c0_204], %940 {strides = array<i32>} : memref<1x8x8x8x128xf32, #tpu.memory_space<vmem>>, vector<1x1x8x8x128xf32>,
    %c6_i32 = arith.constant 6 : i32
    %941 = arith.index_cast %c6_i32 : i32 to index
    %c0_205 = arith.constant 0 : index
    %c0_206 = arith.constant 0 : index
    %c0_207 = arith.constant 0 : index
    %942 = vector.load %arg13[%941, %c0_205, %c0_206, %c0_207] : memref<8x8x8x128xf32, #tpu.memory_space<vmem>>, vector<1x8x8x128xf32>
    %943 = vector.shape_cast %942 : vector<1x8x8x128xf32> to vector<8x8x128xf32>
    %944 = vector.shape_cast %220 : vector<128xf32> to vector<1x1x128xf32>
    %945 = vector.broadcast %944 : vector<1x1x128xf32> to vector<8x8x128xf32>
    %946 = arith.mulf %943, %945 : vector<8x8x128xf32>
    %947 = vector.shape_cast %224 : vector<128xf32> to vector<1x1x128xf32>
    %948 = vector.broadcast %947 : vector<1x1x128xf32> to vector<8x8x128xf32>
    %949 = arith.addf %946, %948 : vector<8x8x128xf32>
    %950 = vector.extract_strided_slice %226 {offsets = [0, 0], sizes = [1, 128], strides = [1, 1]} : vector<4x128xf32> to vector<1x128xf32>
    %951 = vector.shape_cast %950 : vector<1x128xf32> to vector<128xf32>
    %952 = vector.shape_cast %951 : vector<128xf32> to vector<1x1x128xf32>
    %953 = vector.broadcast %952 : vector<1x1x128xf32> to vector<8x8x128xf32>
    %954 = arith.mulf %949, %953 : vector<8x8x128xf32>
    %955 = vector.extract_strided_slice %227 {offsets = [0, 0], sizes = [1, 128], strides = [1, 1]} : vector<4x128xf32> to vector<1x128xf32>
    %956 = vector.shape_cast %955 : vector<1x128xf32> to vector<128xf32>
    %957 = vector.shape_cast %956 : vector<128xf32> to vector<1x1x128xf32>
    %958 = vector.broadcast %957 : vector<1x1x128xf32> to vector<8x8x128xf32>
    %959 = arith.addf %954, %958 : vector<8x8x128xf32>
    %960 = vector.extract_strided_slice %228 {offsets = [0, 0], sizes = [1, 128], strides = [1, 1]} : vector<4x128xf32> to vector<1x128xf32>
    %961 = vector.shape_cast %960 : vector<1x128xf32> to vector<128xf32>
    %cst_208 = arith.constant 5.000000e-01 : f32
    %962 = vector.broadcast %cst_208 : f32 to vector<8x8x128xf32>
    %963 = arith.mulf %962, %959 : vector<8x8x128xf32>
    %cst_209 = arith.constant 0.707106769 : f32
    %964 = vector.broadcast %cst_209 : f32 to vector<8x8x128xf32>
    %965 = arith.mulf %959, %964 : vector<8x8x128xf32>
    %966 = math.erf %965 : vector<8x8x128xf32>
    %cst_210 = arith.constant 1.000000e+00 : f32
    %967 = vector.broadcast %cst_210 : f32 to vector<8x8x128xf32>
    %968 = arith.addf %967, %966 : vector<8x8x128xf32>
    %969 = arith.mulf %963, %968 : vector<8x8x128xf32>
    %970 = vector.shape_cast %961 : vector<128xf32> to vector<1x1x128xf32>
    %971 = vector.broadcast %970 : vector<1x1x128xf32> to vector<8x8x128xf32>
    %972 = arith.mulf %971, %969 : vector<8x8x128xf32>
    %973 = vector.extract_strided_slice %226 {offsets = [1, 0], sizes = [1, 128], strides = [1, 1]} : vector<4x128xf32> to vector<1x128xf32>
    %974 = vector.shape_cast %973 : vector<1x128xf32> to vector<128xf32>
    %975 = vector.shape_cast %974 : vector<128xf32> to vector<1x1x128xf32>
    %976 = vector.broadcast %975 : vector<1x1x128xf32> to vector<8x8x128xf32>
    %977 = arith.mulf %949, %976 : vector<8x8x128xf32>
    %978 = vector.extract_strided_slice %227 {offsets = [1, 0], sizes = [1, 128], strides = [1, 1]} : vector<4x128xf32> to vector<1x128xf32>
    %979 = vector.shape_cast %978 : vector<1x128xf32> to vector<128xf32>
    %980 = vector.shape_cast %979 : vector<128xf32> to vector<1x1x128xf32>
    %981 = vector.broadcast %980 : vector<1x1x128xf32> to vector<8x8x128xf32>
    %982 = arith.addf %977, %981 : vector<8x8x128xf32>
    %983 = vector.extract_strided_slice %228 {offsets = [1, 0], sizes = [1, 128], strides = [1, 1]} : vector<4x128xf32> to vector<1x128xf32>
    %984 = vector.shape_cast %983 : vector<1x128xf32> to vector<128xf32>
    %cst_211 = arith.constant 5.000000e-01 : f32
    %985 = vector.broadcast %cst_211 : f32 to vector<8x8x128xf32>
    %986 = arith.mulf %985, %982 : vector<8x8x128xf32>
    %cst_212 = arith.constant 0.707106769 : f32
    %987 = vector.broadcast %cst_212 : f32 to vector<8x8x128xf32>
    %988 = arith.mulf %982, %987 : vector<8x8x128xf32>
    %989 = math.erf %988 : vector<8x8x128xf32>
    %cst_213 = arith.constant 1.000000e+00 : f32
    %990 = vector.broadcast %cst_213 : f32 to vector<8x8x128xf32>
    %991 = arith.addf %990, %989 : vector<8x8x128xf32>
    %992 = arith.mulf %986, %991 : vector<8x8x128xf32>
    %993 = vector.shape_cast %984 : vector<128xf32> to vector<1x1x128xf32>
    %994 = vector.broadcast %993 : vector<1x1x128xf32> to vector<8x8x128xf32>
    %995 = arith.mulf %994, %992 : vector<8x8x128xf32>
    %996 = arith.addf %972, %995 : vector<8x8x128xf32>
    %997 = vector.extract_strided_slice %226 {offsets = [2, 0], sizes = [1, 128], strides = [1, 1]} : vector<4x128xf32> to vector<1x128xf32>
    %998 = vector.shape_cast %997 : vector<1x128xf32> to vector<128xf32>
    %999 = vector.shape_cast %998 : vector<128xf32> to vector<1x1x128xf32>
    %1000 = vector.broadcast %999 : vector<1x1x128xf32> to vector<8x8x128xf32>
    %1001 = arith.mulf %949, %1000 : vector<8x8x128xf32>
    %1002 = vector.extract_strided_slice %227 {offsets = [2, 0], sizes = [1, 128], strides = [1, 1]} : vector<4x128xf32> to vector<1x128xf32>
    %1003 = vector.shape_cast %1002 : vector<1x128xf32> to vector<128xf32>
    %1004 = vector.shape_cast %1003 : vector<128xf32> to vector<1x1x128xf32>
    %1005 = vector.broadcast %1004 : vector<1x1x128xf32> to vector<8x8x128xf32>
    %1006 = arith.addf %1001, %1005 : vector<8x8x128xf32>
    %1007 = vector.extract_strided_slice %228 {offsets = [2, 0], sizes = [1, 128], strides = [1, 1]} : vector<4x128xf32> to vector<1x128xf32>
    %1008 = vector.shape_cast %1007 : vector<1x128xf32> to vector<128xf32>
    %cst_214 = arith.constant 5.000000e-01 : f32
    %1009 = vector.broadcast %cst_214 : f32 to vector<8x8x128xf32>
    %1010 = arith.mulf %1009, %1006 : vector<8x8x128xf32>
    %cst_215 = arith.constant 0.707106769 : f32
    %1011 = vector.broadcast %cst_215 : f32 to vector<8x8x128xf32>
    %1012 = arith.mulf %1006, %1011 : vector<8x8x128xf32>
    %1013 = math.erf %1012 : vector<8x8x128xf32>
    %cst_216 = arith.constant 1.000000e+00 : f32
    %1014 = vector.broadcast %cst_216 : f32 to vector<8x8x128xf32>
    %1015 = arith.addf %1014, %1013 : vector<8x8x128xf32>
    %1016 = arith.mulf %1010, %1015 : vector<8x8x128xf32>
    %1017 = vector.shape_cast %1008 : vector<128xf32> to vector<1x1x128xf32>
    %1018 = vector.broadcast %1017 : vector<1x1x128xf32> to vector<8x8x128xf32>
    %1019 = arith.mulf %1018, %1016 : vector<8x8x128xf32>
    %1020 = arith.addf %996, %1019 : vector<8x8x128xf32>
    %1021 = vector.extract_strided_slice %226 {offsets = [3, 0], sizes = [1, 128], strides = [1, 1]} : vector<4x128xf32> to vector<1x128xf32>
    %1022 = vector.shape_cast %1021 : vector<1x128xf32> to vector<128xf32>
    %1023 = vector.shape_cast %1022 : vector<128xf32> to vector<1x1x128xf32>
    %1024 = vector.broadcast %1023 : vector<1x1x128xf32> to vector<8x8x128xf32>
    %1025 = arith.mulf %949, %1024 : vector<8x8x128xf32>
    %1026 = vector.extract_strided_slice %227 {offsets = [3, 0], sizes = [1, 128], strides = [1, 1]} : vector<4x128xf32> to vector<1x128xf32>
    %1027 = vector.shape_cast %1026 : vector<1x128xf32> to vector<128xf32>
    %1028 = vector.shape_cast %1027 : vector<128xf32> to vector<1x1x128xf32>
    %1029 = vector.broadcast %1028 : vector<1x1x128xf32> to vector<8x8x128xf32>
    %1030 = arith.addf %1025, %1029 : vector<8x8x128xf32>
    %1031 = vector.extract_strided_slice %228 {offsets = [3, 0], sizes = [1, 128], strides = [1, 1]} : vector<4x128xf32> to vector<1x128xf32>
    %1032 = vector.shape_cast %1031 : vector<1x128xf32> to vector<128xf32>
    %cst_217 = arith.constant 5.000000e-01 : f32
    %1033 = vector.broadcast %cst_217 : f32 to vector<8x8x128xf32>
    %1034 = arith.mulf %1033, %1030 : vector<8x8x128xf32>
    %cst_218 = arith.constant 0.707106769 : f32
    %1035 = vector.broadcast %cst_218 : f32 to vector<8x8x128xf32>
    %1036 = arith.mulf %1030, %1035 : vector<8x8x128xf32>
    %1037 = math.erf %1036 : vector<8x8x128xf32>
    %cst_219 = arith.constant 1.000000e+00 : f32
    %1038 = vector.broadcast %cst_219 : f32 to vector<8x8x128xf32>
    %1039 = arith.addf %1038, %1037 : vector<8x8x128xf32>
    %1040 = arith.mulf %1034, %1039 : vector<8x8x128xf32>
    %1041 = vector.shape_cast %1032 : vector<128xf32> to vector<1x1x128xf32>
    %1042 = vector.broadcast %1041 : vector<1x1x128xf32> to vector<8x8x128xf32>
    %1043 = arith.mulf %1042, %1040 : vector<8x8x128xf32>
    %1044 = arith.addf %1020, %1043 : vector<8x8x128xf32>
    %1045 = vector.shape_cast %230 : vector<128xf32> to vector<1x1x128xf32>
    %1046 = vector.broadcast %1045 : vector<1x1x128xf32> to vector<8x8x128xf32>
    %1047 = arith.addf %1044, %1046 : vector<8x8x128xf32>
    %1048 = vector.shape_cast %232 : vector<128xf32> to vector<1x1x128xf32>
    %1049 = vector.broadcast %1048 : vector<1x1x128xf32> to vector<8x8x128xf32>
    %1050 = arith.mulf %1049, %1047 : vector<8x8x128xf32>
    %c0_220 = arith.constant 0 : index
    %1051 = arith.index_cast %c6_i32 : i32 to index
    %c0_221 = arith.constant 0 : index
    %c0_222 = arith.constant 0 : index
    %c0_223 = arith.constant 0 : index
    %1052 = vector.load %arg2[%c0_220, %1051, %c0_221, %c0_222, %c0_223] : memref<1x8x8x8x128xf32, #tpu.memory_space<vmem>>, vector<1x1x8x8x128xf32>
    %1053 = vector.shape_cast %1052 : vector<1x1x8x8x128xf32> to vector<8x8x128xf32>
    %1054 = arith.addf %1050, %1053 : vector<8x8x128xf32>
    %c0_224 = arith.constant 0 : index
    %1055 = arith.index_cast %c6_i32 : i32 to index
    %c0_225 = arith.constant 0 : index
    %c0_226 = arith.constant 0 : index
    %c0_227 = arith.constant 0 : index
    %1056 = vector.load %arg11[%c0_224, %1055, %c0_225, %c0_226, %c0_227] : memref<1x8x8x8x128xf32, #tpu.memory_space<vmem>>, vector<1x1x8x8x128xf32>
    %1057 = vector.shape_cast %1056 : vector<1x1x8x8x128xf32> to vector<8x8x128xf32>
    %1058 = vector.shape_cast %1054 : vector<8x8x128xf32> to vector<1x1x8x8x128xf32>
    tpu.vector_store %arg11[%c0_224, %1055, %c0_225, %c0_226, %c0_227], %1058 {strides = array<i32>} : memref<1x8x8x8x128xf32, #tpu.memory_space<vmem>>, vector<1x1x8x8x128xf32>,
    %c7_i32 = arith.constant 7 : i32
    %1059 = arith.index_cast %c7_i32 : i32 to index
    %c0_228 = arith.constant 0 : index
    %c0_229 = arith.constant 0 : index
    %c0_230 = arith.constant 0 : index
    %1060 = vector.load %arg13[%1059, %c0_228, %c0_229, %c0_230] : memref<8x8x8x128xf32, #tpu.memory_space<vmem>>, vector<1x8x8x128xf32>
    %1061 = vector.shape_cast %1060 : vector<1x8x8x128xf32> to vector<8x8x128xf32>
    %1062 = vector.shape_cast %220 : vector<128xf32> to vector<1x1x128xf32>
    %1063 = vector.broadcast %1062 : vector<1x1x128xf32> to vector<8x8x128xf32>
    %1064 = arith.mulf %1061, %1063 : vector<8x8x128xf32>
    %1065 = vector.shape_cast %224 : vector<128xf32> to vector<1x1x128xf32>
    %1066 = vector.broadcast %1065 : vector<1x1x128xf32> to vector<8x8x128xf32>
    %1067 = arith.addf %1064, %1066 : vector<8x8x128xf32>
    %1068 = vector.extract_strided_slice %226 {offsets = [0, 0], sizes = [1, 128], strides = [1, 1]} : vector<4x128xf32> to vector<1x128xf32>
    %1069 = vector.shape_cast %1068 : vector<1x128xf32> to vector<128xf32>
    %1070 = vector.shape_cast %1069 : vector<128xf32> to vector<1x1x128xf32>
    %1071 = vector.broadcast %1070 : vector<1x1x128xf32> to vector<8x8x128xf32>
    %1072 = arith.mulf %1067, %1071 : vector<8x8x128xf32>
    %1073 = vector.extract_strided_slice %227 {offsets = [0, 0], sizes = [1, 128], strides = [1, 1]} : vector<4x128xf32> to vector<1x128xf32>
    %1074 = vector.shape_cast %1073 : vector<1x128xf32> to vector<128xf32>
    %1075 = vector.shape_cast %1074 : vector<128xf32> to vector<1x1x128xf32>
    %1076 = vector.broadcast %1075 : vector<1x1x128xf32> to vector<8x8x128xf32>
    %1077 = arith.addf %1072, %1076 : vector<8x8x128xf32>
    %1078 = vector.extract_strided_slice %228 {offsets = [0, 0], sizes = [1, 128], strides = [1, 1]} : vector<4x128xf32> to vector<1x128xf32>
    %1079 = vector.shape_cast %1078 : vector<1x128xf32> to vector<128xf32>
    %cst_231 = arith.constant 5.000000e-01 : f32
    %1080 = vector.broadcast %cst_231 : f32 to vector<8x8x128xf32>
    %1081 = arith.mulf %1080, %1077 : vector<8x8x128xf32>
    %cst_232 = arith.constant 0.707106769 : f32
    %1082 = vector.broadcast %cst_232 : f32 to vector<8x8x128xf32>
    %1083 = arith.mulf %1077, %1082 : vector<8x8x128xf32>
    %1084 = math.erf %1083 : vector<8x8x128xf32>
    %cst_233 = arith.constant 1.000000e+00 : f32
    %1085 = vector.broadcast %cst_233 : f32 to vector<8x8x128xf32>
    %1086 = arith.addf %1085, %1084 : vector<8x8x128xf32>
    %1087 = arith.mulf %1081, %1086 : vector<8x8x128xf32>
    %1088 = vector.shape_cast %1079 : vector<128xf32> to vector<1x1x128xf32>
    %1089 = vector.broadcast %1088 : vector<1x1x128xf32> to vector<8x8x128xf32>
    %1090 = arith.mulf %1089, %1087 : vector<8x8x128xf32>
    %1091 = vector.extract_strided_slice %226 {offsets = [1, 0], sizes = [1, 128], strides = [1, 1]} : vector<4x128xf32> to vector<1x128xf32>
    %1092 = vector.shape_cast %1091 : vector<1x128xf32> to vector<128xf32>
    %1093 = vector.shape_cast %1092 : vector<128xf32> to vector<1x1x128xf32>
    %1094 = vector.broadcast %1093 : vector<1x1x128xf32> to vector<8x8x128xf32>
    %1095 = arith.mulf %1067, %1094 : vector<8x8x128xf32>
    %1096 = vector.extract_strided_slice %227 {offsets = [1, 0], sizes = [1, 128], strides = [1, 1]} : vector<4x128xf32> to vector<1x128xf32>
    %1097 = vector.shape_cast %1096 : vector<1x128xf32> to vector<128xf32>
    %1098 = vector.shape_cast %1097 : vector<128xf32> to vector<1x1x128xf32>
    %1099 = vector.broadcast %1098 : vector<1x1x128xf32> to vector<8x8x128xf32>
    %1100 = arith.addf %1095, %1099 : vector<8x8x128xf32>
    %1101 = vector.extract_strided_slice %228 {offsets = [1, 0], sizes = [1, 128], strides = [1, 1]} : vector<4x128xf32> to vector<1x128xf32>
    %1102 = vector.shape_cast %1101 : vector<1x128xf32> to vector<128xf32>
    %cst_234 = arith.constant 5.000000e-01 : f32
    %1103 = vector.broadcast %cst_234 : f32 to vector<8x8x128xf32>
    %1104 = arith.mulf %1103, %1100 : vector<8x8x128xf32>
    %cst_235 = arith.constant 0.707106769 : f32
    %1105 = vector.broadcast %cst_235 : f32 to vector<8x8x128xf32>
    %1106 = arith.mulf %1100, %1105 : vector<8x8x128xf32>
    %1107 = math.erf %1106 : vector<8x8x128xf32>
    %cst_236 = arith.constant 1.000000e+00 : f32
    %1108 = vector.broadcast %cst_236 : f32 to vector<8x8x128xf32>
    %1109 = arith.addf %1108, %1107 : vector<8x8x128xf32>
    %1110 = arith.mulf %1104, %1109 : vector<8x8x128xf32>
    %1111 = vector.shape_cast %1102 : vector<128xf32> to vector<1x1x128xf32>
    %1112 = vector.broadcast %1111 : vector<1x1x128xf32> to vector<8x8x128xf32>
    %1113 = arith.mulf %1112, %1110 : vector<8x8x128xf32>
    %1114 = arith.addf %1090, %1113 : vector<8x8x128xf32>
    %1115 = vector.extract_strided_slice %226 {offsets = [2, 0], sizes = [1, 128], strides = [1, 1]} : vector<4x128xf32> to vector<1x128xf32>
    %1116 = vector.shape_cast %1115 : vector<1x128xf32> to vector<128xf32>
    %1117 = vector.shape_cast %1116 : vector<128xf32> to vector<1x1x128xf32>
    %1118 = vector.broadcast %1117 : vector<1x1x128xf32> to vector<8x8x128xf32>
    %1119 = arith.mulf %1067, %1118 : vector<8x8x128xf32>
    %1120 = vector.extract_strided_slice %227 {offsets = [2, 0], sizes = [1, 128], strides = [1, 1]} : vector<4x128xf32> to vector<1x128xf32>
    %1121 = vector.shape_cast %1120 : vector<1x128xf32> to vector<128xf32>
    %1122 = vector.shape_cast %1121 : vector<128xf32> to vector<1x1x128xf32>
    %1123 = vector.broadcast %1122 : vector<1x1x128xf32> to vector<8x8x128xf32>
    %1124 = arith.addf %1119, %1123 : vector<8x8x128xf32>
    %1125 = vector.extract_strided_slice %228 {offsets = [2, 0], sizes = [1, 128], strides = [1, 1]} : vector<4x128xf32> to vector<1x128xf32>
    %1126 = vector.shape_cast %1125 : vector<1x128xf32> to vector<128xf32>
    %cst_237 = arith.constant 5.000000e-01 : f32
    %1127 = vector.broadcast %cst_237 : f32 to vector<8x8x128xf32>
    %1128 = arith.mulf %1127, %1124 : vector<8x8x128xf32>
    %cst_238 = arith.constant 0.707106769 : f32
    %1129 = vector.broadcast %cst_238 : f32 to vector<8x8x128xf32>
    %1130 = arith.mulf %1124, %1129 : vector<8x8x128xf32>
    %1131 = math.erf %1130 : vector<8x8x128xf32>
    %cst_239 = arith.constant 1.000000e+00 : f32
    %1132 = vector.broadcast %cst_239 : f32 to vector<8x8x128xf32>
    %1133 = arith.addf %1132, %1131 : vector<8x8x128xf32>
    %1134 = arith.mulf %1128, %1133 : vector<8x8x128xf32>
    %1135 = vector.shape_cast %1126 : vector<128xf32> to vector<1x1x128xf32>
    %1136 = vector.broadcast %1135 : vector<1x1x128xf32> to vector<8x8x128xf32>
    %1137 = arith.mulf %1136, %1134 : vector<8x8x128xf32>
    %1138 = arith.addf %1114, %1137 : vector<8x8x128xf32>
    %1139 = vector.extract_strided_slice %226 {offsets = [3, 0], sizes = [1, 128], strides = [1, 1]} : vector<4x128xf32> to vector<1x128xf32>
    %1140 = vector.shape_cast %1139 : vector<1x128xf32> to vector<128xf32>
    %1141 = vector.shape_cast %1140 : vector<128xf32> to vector<1x1x128xf32>
    %1142 = vector.broadcast %1141 : vector<1x1x128xf32> to vector<8x8x128xf32>
    %1143 = arith.mulf %1067, %1142 : vector<8x8x128xf32>
    %1144 = vector.extract_strided_slice %227 {offsets = [3, 0], sizes = [1, 128], strides = [1, 1]} : vector<4x128xf32> to vector<1x128xf32>
    %1145 = vector.shape_cast %1144 : vector<1x128xf32> to vector<128xf32>
    %1146 = vector.shape_cast %1145 : vector<128xf32> to vector<1x1x128xf32>
    %1147 = vector.broadcast %1146 : vector<1x1x128xf32> to vector<8x8x128xf32>
    %1148 = arith.addf %1143, %1147 : vector<8x8x128xf32>
    %1149 = vector.extract_strided_slice %228 {offsets = [3, 0], sizes = [1, 128], strides = [1, 1]} : vector<4x128xf32> to vector<1x128xf32>
    %1150 = vector.shape_cast %1149 : vector<1x128xf32> to vector<128xf32>
    %cst_240 = arith.constant 5.000000e-01 : f32
    %1151 = vector.broadcast %cst_240 : f32 to vector<8x8x128xf32>
    %1152 = arith.mulf %1151, %1148 : vector<8x8x128xf32>
    %cst_241 = arith.constant 0.707106769 : f32
    %1153 = vector.broadcast %cst_241 : f32 to vector<8x8x128xf32>
    %1154 = arith.mulf %1148, %1153 : vector<8x8x128xf32>
    %1155 = math.erf %1154 : vector<8x8x128xf32>
    %cst_242 = arith.constant 1.000000e+00 : f32
    %1156 = vector.broadcast %cst_242 : f32 to vector<8x8x128xf32>
    %1157 = arith.addf %1156, %1155 : vector<8x8x128xf32>
    %1158 = arith.mulf %1152, %1157 : vector<8x8x128xf32>
    %1159 = vector.shape_cast %1150 : vector<128xf32> to vector<1x1x128xf32>
    %1160 = vector.broadcast %1159 : vector<1x1x128xf32> to vector<8x8x128xf32>
    %1161 = arith.mulf %1160, %1158 : vector<8x8x128xf32>
    %1162 = arith.addf %1138, %1161 : vector<8x8x128xf32>
    %1163 = vector.shape_cast %230 : vector<128xf32> to vector<1x1x128xf32>
    %1164 = vector.broadcast %1163 : vector<1x1x128xf32> to vector<8x8x128xf32>
    %1165 = arith.addf %1162, %1164 : vector<8x8x128xf32>
    %1166 = vector.shape_cast %232 : vector<128xf32> to vector<1x1x128xf32>
    %1167 = vector.broadcast %1166 : vector<1x1x128xf32> to vector<8x8x128xf32>
    %1168 = arith.mulf %1167, %1165 : vector<8x8x128xf32>
    %c0_243 = arith.constant 0 : index
    %1169 = arith.index_cast %c7_i32 : i32 to index
    %c0_244 = arith.constant 0 : index
    %c0_245 = arith.constant 0 : index
    %c0_246 = arith.constant 0 : index
    %1170 = vector.load %arg2[%c0_243, %1169, %c0_244, %c0_245, %c0_246] : memref<1x8x8x8x128xf32, #tpu.memory_space<vmem>>, vector<1x1x8x8x128xf32>
    %1171 = vector.shape_cast %1170 : vector<1x1x8x8x128xf32> to vector<8x8x128xf32>
    %1172 = arith.addf %1168, %1171 : vector<8x8x128xf32>
    %c0_247 = arith.constant 0 : index
    %1173 = arith.index_cast %c7_i32 : i32 to index
    %c0_248 = arith.constant 0 : index
    %c0_249 = arith.constant 0 : index
    %c0_250 = arith.constant 0 : index
    %1174 = vector.load %arg11[%c0_247, %1173, %c0_248, %c0_249, %c0_250] : memref<1x8x8x8x128xf32, #tpu.memory_space<vmem>>, vector<1x1x8x8x128xf32>
    %1175 = vector.shape_cast %1174 : vector<1x1x8x8x128xf32> to vector<8x8x128xf32>
    %1176 = vector.shape_cast %1172 : vector<8x8x128xf32> to vector<1x1x8x8x128xf32>
    tpu.vector_store %arg11[%c0_247, %1173, %c0_248, %c0_249, %c0_250], %1176 {strides = array<i32>} : memref<1x8x8x8x128xf32, #tpu.memory_space<vmem>>, vector<1x1x8x8x128xf32>,
    %c8_i32 = arith.constant 8 : i32
    return
  }
  func.func @transform_0(%arg0: i32, %arg1: i32) -> (i32, i32, i32, i32, i32) {
    %c0_i32 = arith.constant 0 : i32
    %c0_i32_0 = arith.constant 0 : i32
    %c0_i32_1 = arith.constant 0 : i32
    %c0_i32_2 = arith.constant 0 : i32
    return %arg0, %c0_i32, %c0_i32_0, %c0_i32_1, %arg1 : i32, i32, i32, i32, i32
  }
  func.func @transform_1(%arg0: i32, %arg1: i32) -> (i32, i32) {
    %c0_i32 = arith.constant 0 : i32
    %c0_i32_0 = arith.constant 0 : i32
    return %c0_i32, %arg1 : i32, i32
  }
  func.func @transform_2(%arg0: i32, %arg1: i32) -> (i32, i32) {
    %c0_i32 = arith.constant 0 : i32
    %c0_i32_0 = arith.constant 0 : i32
    return %c0_i32, %arg1 : i32, i32
  }
  func.func @transform_3(%arg0: i32, %arg1: i32) -> (i32, i32) {
    %c0_i32 = arith.constant 0 : i32
    %c0_i32_0 = arith.constant 0 : i32
    return %c0_i32, %arg1 : i32, i32
  }
  func.func @transform_4(%arg0: i32, %arg1: i32) -> (i32, i32) {
    %c0_i32 = arith.constant 0 : i32
    %c0_i32_0 = arith.constant 0 : i32
    return %c0_i32, %arg1 : i32, i32
  }
  func.func @transform_5(%arg0: i32, %arg1: i32) -> (i32, i32) {
    %c0_i32 = arith.constant 0 : i32
    %c0_i32_0 = arith.constant 0 : i32
    return %c0_i32, %arg1 : i32, i32
  }
  func.func @transform_6(%arg0: i32, %arg1: i32) -> (i32, i32) {
    %c0_i32 = arith.constant 0 : i32
    %c0_i32_0 = arith.constant 0 : i32
    return %c0_i32, %arg1 : i32, i32
  }
  func.func @transform_7(%arg0: i32, %arg1: i32) -> (i32, i32) {
    %c0_i32 = arith.constant 0 : i32
    %c0_i32_0 = arith.constant 0 : i32
    return %c0_i32, %arg1 : i32, i32
  }
  func.func @transform_8(%arg0: i32, %arg1: i32) -> (i32, i32) {
    %c0_i32 = arith.constant 0 : i32
    %c0_i32_0 = arith.constant 0 : i32
    return %c0_i32, %arg1 : i32, i32
  }
  func.func @transform_9(%arg0: i32, %arg1: i32) -> (i32, i32, i32, i32, i32) {
    %c0_i32 = arith.constant 0 : i32
    %c0_i32_0 = arith.constant 0 : i32
    %c0_i32_1 = arith.constant 0 : i32
    %c0_i32_2 = arith.constant 0 : i32
    return %arg0, %c0_i32, %c0_i32_0, %c0_i32_1, %arg1 : i32, i32, i32, i32, i32
  }
}

</mosaic_0001>

<llo_original>
// kernel: mednext_block.1
$region0: #{mednext_block.1}
  #allocation0 [shape = 'u32[]', space=smem, size = 0x4, offset = 0x4, fixed_abs, tag = 'smem constant byte address 0x4 - core index']
  #allocation1 [shape = 'u32[144,128]{1,0:T(1,128)}', space=vmem, size = 0x12000, scoped, tag = 'internal scratch']
  #allocation2 [shape = 'f32[10,10,17,128]{3,2,1,0:T(8,128)}', space=vmem, size = 0x12c000, scoped, tag = 'scratch operand']
  #allocation3 [shape = 'f32[8,8,8,128]{3,2,1,0:T(8,128)}', space=vmem, size = 0x40000, scoped, tag = 'scratch operand']
  %s0 = inlined_call_operand.hbm [shape: f32[2,8,8,8,128], index: 0, kind: input, shape index: {}]
  %s1 = inlined_call_operand.vmem [shape: f32[27,128], index: 1, kind: input, shape index: {}]
  %s2 = inlined_call_operand.vmem [shape: f32[1,128], index: 2, kind: input, shape index: {}]
  %s3 = inlined_call_operand.vmem [shape: f32[1,128], index: 3, kind: input, shape index: {}]
  %s4 = inlined_call_operand.vmem [shape: f32[4,128], index: 4, kind: input, shape index: {}]
  %s5 = inlined_call_operand.vmem [shape: f32[4,128], index: 5, kind: input, shape index: {}]
  %s6 = inlined_call_operand.vmem [shape: f32[4,128], index: 6, kind: input, shape index: {}]
  %s7 = inlined_call_operand.vmem [shape: f32[1,128], index: 7, kind: input, shape index: {}]
  %s8 = inlined_call_operand.vmem [shape: f32[1,128], index: 8, kind: input, shape index: {}]
  %s9 = inlined_call_operand.hbm [shape: f32[2,8,8,8,128], index: 9, kind: output, shape index: {}]
  %s10 = sld [smem:[#allocation0]]
  $region73: #{mednext_block.1} parent=0
    _
  %s12 = ssub.s32 1, %s10
  %s13 = scalar_select 0, %s12, %s10
  $region1: #{mednext_block.1} parent=0
    #allocation4 [shape = 'u8[524288]{0}', space=vmem, size = 0x80000, scoped, tag = 'input window, operand 0']
    #allocation5 [shape = 's32[2]{0}', space=sflag, size = 0x8, scoped, tag = 'scoped memory for mednext_block.1']
    #allocation6 [shape = 's32[2]{0}', space=sflag, size = 0x8, scoped, tag = 'scoped memory for mednext_block.1']
    #allocation7 [shape = 'u8[524288]{0}', space=vmem, size = 0x80000, scoped, tag = 'output window, operand 0']
    %14 = vsyncpa [#allocation5], 0
    %s15 = scalar_lea.sflag [#allocation5], 1
    %16 = vsyncpa %s15, 0
    %17 = vsyncpa [#allocation6], 0
    %s18 = scalar_lea.sflag [#allocation6], 1
    %19 = vsyncpa %s18, 0
    loop: start=0, step=1, limit=4
    $region2: #{mednext_block.1} parent=1 // loop_pre_header
      _
    $region3: #{mednext_block.1} parent=1 // loop_header
      %s21 = sphi 0, %s25
      %p22 = scmp.ge.s32.totalorder %s21, 4
      %s28 = sphi 0, %s40
      %s29 = sphi 0, %s36
      %s30 = sphi 0, %s28
      %s31 = sphi 0, %s29
      %s32 = sphi 0, %s30
      %s33 = sphi 0, %s31
      %s45 = sphi 0, %s47
      %s48 = sphi 0, %s45
      %s49 = sphi 0, %s48
      %s65 = sphi 0, %s49
      %s71 = sphi 0, %s73
      %s74 = sphi 0, %s71
      %s75 = sphi 0, %s74
      %s91 = sphi 0, %s75
      %s97 = sphi 0, %s99
      %s100 = sphi 0, %s97
      %s101 = sphi 0, %s100
      %s117 = sphi 0, %s101
      %s123 = sphi 0, %s125
      %s126 = sphi 0, %s123
      %s127 = sphi 0, %s126
      %s143 = sphi 0, %s127
      %s149 = sphi 0, %s151
      %s152 = sphi 0, %s149
      %s153 = sphi 0, %s152
      %s169 = sphi 0, %s153
      %s175 = sphi 0, %s177
      %s178 = sphi 0, %s175
      %s179 = sphi 0, %s178
      %s195 = sphi 0, %s179
      %s201 = sphi 0, %s203
      %s204 = sphi 0, %s201
      %s205 = sphi 0, %s204
      %s221 = sphi 0, %s205
      %s227 = sphi 0, %s229
      %s230 = sphi 0, %s227
      %s231 = sphi 0, %s230
      %s247 = sphi 0, %s231
      %s253 = sphi 0, %s255
      %s256 = sphi 0, %s253
      %s257 = sphi 0, %s256
      %s273 = sphi 0, %s257
      %s281 = sphi 0, %s283
      %s284 = sphi 0, %s281
      %s285 = sphi 0, %s284
      %s301 = sphi 0, %s285
    $region4: #{mednext_block.1} parent=1 // loop_header_branch
      %24 = sbr.rel (%p22) target = $region8
    $region5: #{mednext_block.1} parent=1 // loop_body
      %s26 = ssub.s32 %s21, 1
      %s27 = ssub.s32 %s21, 2
      %s34 = sadd.s32 1, %s29
      %p35 = scmp.ge.s32.totalorder %s34, 1
      %s36 = scalar_select %p35, 0, %s34
      %s37 = sadd.s32 1, %s28
      %s38 = scalar_select %p35, %s37, %s28
      %p39 = scmp.ge.s32.totalorder %s38, 2
      %s40 = scalar_select %p39, 0, %s38
      %s41 = ssub.s32 %s28, %s40
      %s42 = ssub.s32 %s29, %s36
      %s43 = sor.u32 %s41, %s42
      %p44 = scmp.eq.s32.totalorder %s43, 0
      %s46 = sadd.s32 %s45, 1
      %s47 = scalar_select %p44, %s45, %s46
      %p50 = pneg %p44
      %p51 = scmp.eq.s32.totalorder %s21, 1
      %p52 = por %p50, %p51
      %p53 = scmp.ne.s32.totalorder %s45, %s48
      %p54 = scmp.eq.s32.totalorder %s21, 0
      %p55 = por %p53, %p54
      %p56 = scmp.ne.s32.totalorder %s45, %s48
      %p57 = scmp.eq.s32.totalorder %s26, 1
      %p58 = por %p56, %p57
      %p59 = scmp.ne.s32.totalorder %s48, %s49
      %p60 = scmp.eq.s32.totalorder %s26, 0
      %p61 = por %p59, %p60
      %p62 = scmp.ne.s32.totalorder %s48, %s49
      %p63 = scmp.eq.s32.totalorder %s27, 1
      %p64 = por %p62, %p63
      %p66 = scmp.ne.s32.totalorder %s49, %s65
      %p67 = scmp.eq.s32.totalorder %s27, 0
      %p68 = por %p66, %p67
      %s69 = ssub.s32 %s29, %s36
      %p70 = scmp.eq.s32.totalorder %s69, 0
      %s72 = sadd.s32 %s71, 1
      %s73 = scalar_select %p70, %s71, %s72
      %p76 = pneg %p70
      %p77 = scmp.eq.s32.totalorder %s21, 1
      %p78 = por %p76, %p77
      %p79 = scmp.ne.s32.totalorder %s71, %s74
      %p80 = scmp.eq.s32.totalorder %s21, 0
      %p81 = por %p79, %p80
      %p82 = scmp.ne.s32.totalorder %s71, %s74
      %p83 = scmp.eq.s32.totalorder %s26, 1
      %p84 = por %p82, %p83
      %p85 = scmp.ne.s32.totalorder %s74, %s75
      %p86 = scmp.eq.s32.totalorder %s26, 0
      %p87 = por %p85, %p86
      %p88 = scmp.ne.s32.totalorder %s74, %s75
      %p89 = scmp.eq.s32.totalorder %s27, 1
      %p90 = por %p88, %p89
      %p92 = scmp.ne.s32.totalorder %s75, %s91
      %p93 = scmp.eq.s32.totalorder %s27, 0
      %p94 = por %p92, %p93
      %s95 = ssub.s32 %s29, %s36
      %p96 = scmp.eq.s32.totalorder %s95, 0
      %s98 = sadd.s32 %s97, 1
      %s99 = scalar_select %p96, %s97, %s98
      %p102 = pneg %p96
      %p103 = scmp.eq.s32.totalorder %s21, 1
      %p104 = por %p102, %p103
      %p105 = scmp.ne.s32.totalorder %s97, %s100
      %p106 = scmp.eq.s32.totalorder %s21, 0
      %p107 = por %p105, %p106
      %p108 = scmp.ne.s32.totalorder %s97, %s100
      %p109 = scmp.eq.s32.totalorder %s26, 1
      %p110 = por %p108, %p109
      %p111 = scmp.ne.s32.totalorder %s100, %s101
      %p112 = scmp.eq.s32.totalorder %s26, 0
      %p113 = por %p111, %p112
      %p114 = scmp.ne.s32.totalorder %s100, %s101
      %p115 = scmp.eq.s32.totalorder %s27, 1
      %p116 = por %p114, %p115
      %p118 = scmp.ne.s32.totalorder %s101, %s117
      %p119 = scmp.eq.s32.totalorder %s27, 0
      %p120 = por %p118, %p119
      %s121 = ssub.s32 %s29, %s36
      %p122 = scmp.eq.s32.totalorder %s121, 0
      %s124 = sadd.s32 %s123, 1
      %s125 = scalar_select %p122, %s123, %s124
      %p128 = pneg %p122
      %p129 = scmp.eq.s32.totalorder %s21, 1
      %p130 = por %p128, %p129
      %p131 = scmp.ne.s32.totalorder %s123, %s126
      %p132 = scmp.eq.s32.totalorder %s21, 0
      %p133 = por %p131, %p132
      %p134 = scmp.ne.s32.totalorder %s123, %s126
      %p135 = scmp.eq.s32.totalorder %s26, 1
      %p136 = por %p134, %p135
      %p137 = scmp.ne.s32.totalorder %s126, %s127
      %p138 = scmp.eq.s32.totalorder %s26, 0
      %p139 = por %p137, %p138
      %p140 = scmp.ne.s32.totalorder %s126, %s127
      %p141 = scmp.eq.s32.totalorder %s27, 1
      %p142 = por %p140, %p141
      %p144 = scmp.ne.s32.totalorder %s127, %s143
      %p145 = scmp.eq.s32.totalorder %s27, 0
      %p146 = por %p144, %p145
      %s147 = ssub.s32 %s29, %s36
      %p148 = scmp.eq.s32.totalorder %s147, 0
      %s150 = sadd.s32 %s149, 1
      %s151 = scalar_select %p148, %s149, %s150
      %p154 = pneg %p148
      %p155 = scmp.eq.s32.totalorder %s21, 1
      %p156 = por %p154, %p155
      %p157 = scmp.ne.s32.totalorder %s149, %s152
      %p158 = scmp.eq.s32.totalorder %s21, 0
      %p159 = por %p157, %p158
      %p160 = scmp.ne.s32.totalorder %s149, %s152
      %p161 = scmp.eq.s32.totalorder %s26, 1
      %p162 = por %p160, %p161
      %p163 = scmp.ne.s32.totalorder %s152, %s153
      %p164 = scmp.eq.s32.totalorder %s26, 0
      %p165 = por %p163, %p164
      %p166 = scmp.ne.s32.totalorder %s152, %s153
      %p167 = scmp.eq.s32.totalorder %s27, 1
      %p168 = por %p166, %p167
      %p170 = scmp.ne.s32.totalorder %s153, %s169
      %p171 = scmp.eq.s32.totalorder %s27, 0
      %p172 = por %p170, %p171
      %s173 = ssub.s32 %s29, %s36
      %p174 = scmp.eq.s32.totalorder %s173, 0
      %s176 = sadd.s32 %s175, 1
      %s177 = scalar_select %p174, %s175, %s176
      %p180 = pneg %p174
      %p181 = scmp.eq.s32.totalorder %s21, 1
      %p182 = por %p180, %p181
      %p183 = scmp.ne.s32.totalorder %s175, %s178
      %p184 = scmp.eq.s32.totalorder %s21, 0
      %p185 = por %p183, %p184
      %p186 = scmp.ne.s32.totalorder %s175, %s178
      %p187 = scmp.eq.s32.totalorder %s26, 1
      %p188 = por %p186, %p187
      %p189 = scmp.ne.s32.totalorder %s178, %s179
      %p190 = scmp.eq.s32.totalorder %s26, 0
      %p191 = por %p189, %p190
      %p192 = scmp.ne.s32.totalorder %s178, %s179
      %p193 = scmp.eq.s32.totalorder %s27, 1
      %p194 = por %p192, %p193
      %p196 = scmp.ne.s32.totalorder %s179, %s195
      %p197 = scmp.eq.s32.totalorder %s27, 0
      %p198 = por %p196, %p197
      %s199 = ssub.s32 %s29, %s36
      %p200 = scmp.eq.s32.totalorder %s199, 0
      %s202 = sadd.s32 %s201, 1
      %s203 = scalar_select %p200, %s201, %s202
      %p206 = pneg %p200
      %p207 = scmp.eq.s32.totalorder %s21, 1
      %p208 = por %p206, %p207
      %p209 = scmp.ne.s32.totalorder %s201, %s204
      %p210 = scmp.eq.s32.totalorder %s21, 0
      %p211 = por %p209, %p210
      %p212 = scmp.ne.s32.totalorder %s201, %s204
      %p213 = scmp.eq.s32.totalorder %s26, 1
      %p214 = por %p212, %p213
      %p215 = scmp.ne.s32.totalorder %s204, %s205
      %p216 = scmp.eq.s32.totalorder %s26, 0
      %p217 = por %p215, %p216
      %p218 = scmp.ne.s32.totalorder %s204, %s205
      %p219 = scmp.eq.s32.totalorder %s27, 1
      %p220 = por %p218, %p219
      %p222 = scmp.ne.s32.totalorder %s205, %s221
      %p223 = scmp.eq.s32.totalorder %s27, 0
      %p224 = por %p222, %p223
      %s225 = ssub.s32 %s29, %s36
      %p226 = scmp.eq.s32.totalorder %s225, 0
      %s228 = sadd.s32 %s227, 1
      %s229 = scalar_select %p226, %s227, %s228
      %p232 = pneg %p226
      %p233 = scmp.eq.s32.totalorder %s21, 1
      %p234 = por %p232, %p233
      %p235 = scmp.ne.s32.totalorder %s227, %s230
      %p236 = scmp.eq.s32.totalorder %s21, 0
      %p237 = por %p235, %p236
      %p238 = scmp.ne.s32.totalorder %s227, %s230
      %p239 = scmp.eq.s32.totalorder %s26, 1
      %p240 = por %p238, %p239
      %p241 = scmp.ne.s32.totalorder %s230, %s231
      %p242 = scmp.eq.s32.totalorder %s26, 0
      %p243 = por %p241, %p242
      %p244 = scmp.ne.s32.totalorder %s230, %s231
      %p245 = scmp.eq.s32.totalorder %s27, 1
      %p246 = por %p244, %p245
      %p248 = scmp.ne.s32.totalorder %s231, %s247
      %p249 = scmp.eq.s32.totalorder %s27, 0
      %p250 = por %p248, %p249
      %s251 = ssub.s32 %s29, %s36
      %p252 = scmp.eq.s32.totalorder %s251, 0
      %s254 = sadd.s32 %s253, 1
      %s255 = scalar_select %p252, %s253, %s254
      %p258 = pneg %p252
      %p259 = scmp.eq.s32.totalorder %s21, 1
      %p260 = por %p258, %p259
      %p261 = scmp.ne.s32.totalorder %s253, %s256
      %p262 = scmp.eq.s32.totalorder %s21, 0
      %p263 = por %p261, %p262
      %p264 = scmp.ne.s32.totalorder %s253, %s256
      %p265 = scmp.eq.s32.totalorder %s26, 1
      %p266 = por %p264, %p265
      %p267 = scmp.ne.s32.totalorder %s256, %s257
      %p268 = scmp.eq.s32.totalorder %s26, 0
      %p269 = por %p267, %p268
      %p270 = scmp.ne.s32.totalorder %s256, %s257
      %p271 = scmp.eq.s32.totalorder %s27, 1
      %p272 = por %p270, %p271
      %p274 = scmp.ne.s32.totalorder %s257, %s273
      %p275 = scmp.eq.s32.totalorder %s27, 0
      %p276 = por %p274, %p275
      %s277 = ssub.s32 %s28, %s40
      %s278 = ssub.s32 %s29, %s36
      %s279 = sor.u32 %s277, %s278
      %p280 = scmp.eq.s32.totalorder %s279, 0
      %s282 = sadd.s32 %s281, 1
      %s283 = scalar_select %p280, %s281, %s282
      %p286 = pneg %p280
      %p287 = scmp.eq.s32.totalorder %s21, 1
      %p288 = por %p286, %p287
      %p289 = scmp.ne.s32.totalorder %s281, %s284
      %p290 = scmp.eq.s32.totalorder %s21, 0
      %p291 = por %p289, %p290
      %p292 = scmp.ne.s32.totalorder %s281, %s284
      %p293 = scmp.eq.s32.totalorder %s26, 1
      %p294 = por %p292, %p293
      %p295 = scmp.ne.s32.totalorder %s284, %s285
      %p296 = scmp.eq.s32.totalorder %s26, 0
      %p297 = por %p295, %p296
      %p298 = scmp.ne.s32.totalorder %s284, %s285
      %p299 = scmp.eq.s32.totalorder %s27, 1
      %p300 = por %p298, %p299
      %p302 = scmp.ne.s32.totalorder %s285, %s301
      %p303 = scmp.eq.s32.totalorder %s27, 0
      %p304 = por %p302, %p303
      %p305 = scmp.le.s32.totalorder 1, %s21
      %p306 = scmp.lt.s32.totalorder %s21, 3
      %p307 = pnand %p305, %p306
      %p308 = pneg %p307
      // Predicated region
      $region9: #{mednext_block.1} parent=5 // pred_check
        _
      $region10: #{mednext_block.1} parent=5 // pred_check_branch
        %310 = sbr.rel (%p307) target = $region12
      $region11: #{mednext_block.1} parent=5 // pred_region
        %s311 = ssub.s32 %s21, 1
        // Predicated region
        $region13: #{mednext_block.1} parent=11 // pred_check
          %p312 = pneg %p87
        $region14: #{mednext_block.1} parent=11 // pred_check_branch
          %314 = sbr.rel (%p312) target = $region16
        $region15: #{mednext_block.1} parent=11 // pred_region
          %p315 = scmp.lt.s32.totalorder %s31, 0
          %s316 = scalar_select %p315, %s31, 0
          %s317 = smul.addr %s316, 8
          %s318 = scalar_lea.vmem %s1, %s317
        $region16: #{mednext_block.1} parent=11 // pred_fallthru
          _
        // Predicated region
        $region17: #{mednext_block.1} parent=11 // pred_check
          %p319 = pneg %p113
        $region18: #{mednext_block.1} parent=11 // pred_check_branch
          %321 = sbr.rel (%p319) target = $region20
        $region19: #{mednext_block.1} parent=11 // pred_region
          %p322 = scmp.lt.s32.totalorder %s31, 0
          %s323 = scalar_select %p322, %s31, 0
          %s324 = scalar_lea.vmem %s2, %s323
        $region20: #{mednext_block.1} parent=11 // pred_fallthru
          _
        // Predicated region
        $region21: #{mednext_block.1} parent=11 // pred_check
          %p325 = pneg %p139
        $region22: #{mednext_block.1} parent=11 // pred_check_branch
          %327 = sbr.rel (%p325) target = $region24
        $region23: #{mednext_block.1} parent=11 // pred_region
          %p328 = scmp.lt.s32.totalorder %s31, 0
          %s329 = scalar_select %p328, %s31, 0
          %s330 = scalar_lea.vmem %s3, %s329
        $region24: #{mednext_block.1} parent=11 // pred_fallthru
          _
        // Predicated region
        $region25: #{mednext_block.1} parent=11 // pred_check
          %p331 = pneg %p165
        $region26: #{mednext_block.1} parent=11 // pred_check_branch
          %333 = sbr.rel (%p331) target = $region28
        $region27: #{mednext_block.1} parent=11 // pred_region
          %p334 = scmp.lt.s32.totalorder %s31, 0
          %s335 = scalar_select %p334, %s31, 0
          %s336 = smul.addr %s335, 4
          %s337 = scalar_lea.vmem %s4, %s336
        $region28: #{mednext_block.1} parent=11 // pred_fallthru
          _
        // Predicated region
        $region29: #{mednext_block.1} parent=11 // pred_check
          %p338 = pneg %p191
        $region30: #{mednext_block.1} parent=11 // pred_check_branch
          %340 = sbr.rel (%p338) target = $region32
        $region31: #{mednext_block.1} parent=11 // pred_region
          %p341 = scmp.lt.s32.totalorder %s31, 0
          %s342 = scalar_select %p341, %s31, 0
          %s343 = smul.addr %s342, 4
          %s344 = scalar_lea.vmem %s5, %s343
        $region32: #{mednext_block.1} parent=11 // pred_fallthru
          _
        // Predicated region
        $region33: #{mednext_block.1} parent=11 // pred_check
          %p345 = pneg %p217
        $region34: #{mednext_block.1} parent=11 // pred_check_branch
          %347 = sbr.rel (%p345) target = $region36
        $region35: #{mednext_block.1} parent=11 // pred_region
          %p348 = scmp.lt.s32.totalorder %s31, 0
          %s349 = scalar_select %p348, %s31, 0
          %s350 = smul.addr %s349, 4
          %s351 = scalar_lea.vmem %s6, %s350
        $region36: #{mednext_block.1} parent=11 // pred_fallthru
          _
        // Predicated region
        $region37: #{mednext_block.1} parent=11 // pred_check
          %p352 = pneg %p243
        $region38: #{mednext_block.1} parent=11 // pred_check_branch
          %354 = sbr.rel (%p352) target = $region40
        $region39: #{mednext_block.1} parent=11 // pred_region
          %p355 = scmp.lt.s32.totalorder %s31, 0
          %s356 = scalar_select %p355, %s31, 0
          %s357 = scalar_lea.vmem %s7, %s356
        $region40: #{mednext_block.1} parent=11 // pred_fallthru
          _
        // Predicated region
        $region41: #{mednext_block.1} parent=11 // pred_check
          %p358 = pneg %p269
        $region42: #{mednext_block.1} parent=11 // pred_check_branch
          %360 = sbr.rel (%p358) target = $region44
        $region43: #{mednext_block.1} parent=11 // pred_region
          %p361 = scmp.lt.s32.totalorder %s31, 0
          %s362 = scalar_select %p361, %s31, 0
          %s363 = scalar_lea.vmem %s8, %s362
        $region44: #{mednext_block.1} parent=11 // pred_fallthru
          _
      $region12: #{mednext_block.1} parent=5 // pred_fallthru
        _
      %p364 = scmp.lt.s32.totalorder %s21, 2
      // Predicated region
      $region45: #{mednext_block.1} parent=5 // pred_check
        %p365 = pneg %p364
      $region46: #{mednext_block.1} parent=5 // pred_check_branch
        %367 = sbr.rel (%p365) target = $region48
      $region47: #{mednext_block.1} parent=5 // pred_region
        // Predicated region
        $region49: #{mednext_block.1} parent=47 // pred_check
          %p368 = pneg %p55
        $region50: #{mednext_block.1} parent=47 // pred_check_branch
          %370 = sbr.rel (%p368) target = $region52
        $region51: #{mednext_block.1} parent=47 // pred_region
          %s371 = sand.u32 %s45, 1
          %s372 = scalar_lea.sflag [#allocation5], %s371
          %s373 = sand.u32 %s45, 1
          %s374 = smul.addr %s373, 512
          %s375 = scalar_lea.vmem [#allocation4], %s374
          %s377 = ssub.s32 8192, 8192
          %378 = vsyncadd %s372, %s377
          %s379 = smul.addr %s28, 64
          %s380 = sadd.s32 %s29, %s379
          %s381 = smul.addr %s380, 128
          %s382 = scalar_lea.hbm %s0, %s381
          %s383 = sshll.u32 %s375, 4
          %s384 = int_to_ptr.vmem [resolvable:$true] %s383
          %389 = dma.hbm_to_vmem [thread:$0]  %s382, 8192, %s384, %s372, 128, 128, 8
        $region52: #{mednext_block.1} parent=47 // pred_fallthru
          _
      $region48: #{mednext_block.1} parent=5 // pred_fallthru
        _
      %p390 = scmp.le.s32.totalorder 1, %s21
      %p391 = scmp.lt.s32.totalorder %s21, 3
      %p392 = pnand %p390, %p391
      %p393 = pneg %p392
      // Predicated region
      $region53: #{mednext_block.1} parent=5 // pred_check
        _
      $region54: #{mednext_block.1} parent=5 // pred_check_branch
        %395 = sbr.rel (%p392) target = $region56
      $region55: #{mednext_block.1} parent=5 // pred_region
        %s396 = ssub.s32 %s21, 1
        %s397 = sand.u32 %s48, 1
        %s398 = scalar_lea.sflag [#allocation5], %s397
        %s399 = sand.u32 %s48, 1
        %s400 = smul.addr %s399, 512
        %s401 = scalar_lea.vmem [#allocation4], %s400
        // Predicated region
        $region57: #{mednext_block.1} parent=55 // pred_check
          %p402 = pneg %p61
        $region58: #{mednext_block.1} parent=55 // pred_check_branch
          %404 = sbr.rel (%p402) target = $region60
        $region59: #{mednext_block.1} parent=55 // pred_region
          %405 = dma.done %s398, 8192
        $region60: #{mednext_block.1} parent=55 // pred_fallthru
          _
        %s406 = sand.u32 %s48, 1
        %s407 = scalar_lea.sflag [#allocation5], %s406
        %s408 = sand.u32 %s48, 1
        %s409 = smul.addr %s408, 512
        %s410 = scalar_lea.vmem [#allocation4], %s409
        %p411 = pneg %p61
        %p412 = pneg %p58
        %p413 = scmp.lt.s32.totalorder %s31, 0
        %s414 = scalar_select %p413, %s31, 0
        %s415 = smul.addr %s414, 8
        %s416 = scalar_lea.vmem %s1, %s415
        %p417 = pneg %p87
        %p418 = pneg %p84
        %p419 = scmp.lt.s32.totalorder %s31, 0
        %s420 = scalar_select %p419, %s31, 0
        %s421 = scalar_lea.vmem %s2, %s420
        %p422 = pneg %p113
        %p423 = pneg %p110
        %p424 = scmp.lt.s32.totalorder %s31, 0
        %s425 = scalar_select %p424, %s31, 0
        %s426 = scalar_lea.vmem %s3, %s425
        %p427 = pneg %p139
        %p428 = pneg %p136
        %p429 = scmp.lt.s32.totalorder %s31, 0
        %s430 = scalar_select %p429, %s31, 0
        %s431 = smul.addr %s430, 4
        %s432 = scalar_lea.vmem %s4, %s431
        %p433 = pneg %p165
        %p434 = pneg %p162
        %p435 = scmp.lt.s32.totalorder %s31, 0
        %s436 = scalar_select %p435, %s31, 0
        %s437 = smul.addr %s436, 4
        %s438 = scalar_lea.vmem %s5, %s437
        %p439 = pneg %p191
        %p440 = pneg %p188
        %p441 = scmp.lt.s32.totalorder %s31, 0
        %s442 = scalar_select %p441, %s31, 0
        %s443 = smul.addr %s442, 4
        %s444 = scalar_lea.vmem %s6, %s443
        %p445 = pneg %p217
        %p446 = pneg %p214
        %p447 = scmp.lt.s32.totalorder %s31, 0
        %s448 = scalar_select %p447, %s31, 0
        %s449 = scalar_lea.vmem %s7, %s448
        %p450 = pneg %p243
        %p451 = pneg %p240
        %p452 = scmp.lt.s32.totalorder %s31, 0
        %s453 = scalar_select %p452, %s31, 0
        %s454 = scalar_lea.vmem %s8, %s453
        %p455 = pneg %p269
        %p456 = pneg %p266
        %p457 = pneg %p297
        %p458 = pneg %p294
        %s459 = sand.u32 %s284, 1
        %s460 = scalar_lea.sflag [#allocation6], %s459
        %s461 = sand.u32 %s284, 1
        %s462 = smul.addr %s461, 512
        %s463 = scalar_lea.vmem [#allocation7], %s462
        %p464 = scmp.lt.s32.totalorder %s31, 0
        %s465 = scalar_select %p464, %s31, 0
        %s466 = smul.addr %s465, 8
        %s467 = scalar_lea.vmem %s1, %s466
        %p468 = scmp.lt.s32.totalorder %s31, 0
        %s469 = scalar_select %p468, %s31, 0
        %s470 = scalar_lea.vmem %s2, %s469
        %p471 = scmp.lt.s32.totalorder %s31, 0
        %s472 = scalar_select %p471, %s31, 0
        %s473 = scalar_lea.vmem %s3, %s472
        %p474 = scmp.lt.s32.totalorder %s31, 0
        %s475 = scalar_select %p474, %s31, 0
        %s476 = smul.addr %s475, 4
        %s477 = scalar_lea.vmem %s4, %s476
        %p478 = scmp.lt.s32.totalorder %s31, 0
        %s479 = scalar_select %p478, %s31, 0
        %s480 = smul.addr %s479, 4
        %s481 = scalar_lea.vmem %s5, %s480
        %p482 = scmp.lt.s32.totalorder %s31, 0
        %s483 = scalar_select %p482, %s31, 0
        %s484 = smul.addr %s483, 4
        %s485 = scalar_lea.vmem %s6, %s484
        %p486 = scmp.lt.s32.totalorder %s31, 0
        %s487 = scalar_select %p486, %s31, 0
        %s488 = scalar_lea.vmem %s7, %s487
        %p489 = scmp.lt.s32.totalorder %s31, 0
        %s490 = scalar_select %p489, %s31, 0
        %s491 = scalar_lea.vmem %s8, %s490
        %492 = vst [vmem:[#allocation2] sm:$0xff] 0.0
        %493 = vst [vmem:[#allocation2 + $0x8] sm:$0xff] 0.0
        %494 = vst [vmem:[#allocation2 + $0x10] sm:$0x1] 0.0
        %495 = vst [vmem:[#allocation2 + $0x18] sm:$0xff] 0.0
        %496 = vst [vmem:[#allocation2 + $0x20] sm:$0xff] 0.0
        %497 = vst [vmem:[#allocation2 + $0x28] sm:$0x1] 0.0
        %498 = vst [vmem:[#allocation2 + $0x30] sm:$0xff] 0.0
        %499 = vst [vmem:[#allocation2 + $0x38] sm:$0xff] 0.0
        %500 = vst [vmem:[#allocation2 + $0x40] sm:$0x1] 0.0
        %501 = vst [vmem:[#allocation2 + $0x48] sm:$0xff] 0.0
        %502 = vst [vmem:[#allocation2 + $0x50] sm:$0xff] 0.0
        %503 = vst [vmem:[#allocation2 + $0x58] sm:$0x1] 0.0
        %504 = vst [vmem:[#allocation2 + $0x60] sm:$0xff] 0.0
        %505 = vst [vmem:[#allocation2 + $0x68] sm:$0xff] 0.0
        %506 = vst [vmem:[#allocation2 + $0x70] sm:$0x1] 0.0
        %507 = vst [vmem:[#allocation2 + $0x78] sm:$0xff] 0.0
        %508 = vst [vmem:[#allocation2 + $0x80] sm:$0xff] 0.0
        %509 = vst [vmem:[#allocation2 + $0x88] sm:$0x1] 0.0
        %510 = vst [vmem:[#allocation2 + $0x90] sm:$0xff] 0.0
        %511 = vst [vmem:[#allocation2 + $0x98] sm:$0xff] 0.0
        %512 = vst [vmem:[#allocation2 + $0xa0] sm:$0x1] 0.0
        %513 = vst [vmem:[#allocation2 + $0xa8] sm:$0xff] 0.0
        %514 = vst [vmem:[#allocation2 + $0xb0] sm:$0xff] 0.0
        %515 = vst [vmem:[#allocation2 + $0xb8] sm:$0x1] 0.0
        %516 = vst [vmem:[#allocation2 + $0xc0] sm:$0xff] 0.0
        %517 = vst [vmem:[#allocation2 + $0xc8] sm:$0xff] 0.0
        %518 = vst [vmem:[#allocation2 + $0xd0] sm:$0x1] 0.0
        %519 = vst [vmem:[#allocation2 + $0xd8] sm:$0xff] 0.0
        %520 = vst [vmem:[#allocation2 + $0xe0] sm:$0xff] 0.0
        %521 = vst [vmem:[#allocation2 + $0xe8] sm:$0x1] 0.0
        %s522 = scalar_lea.vmem [#allocation2], 2160
        %523 = vst [vmem:[%s522] sm:$0xff] 0.0
        %524 = vst [vmem:[%s522 + $0x8] sm:$0xff] 0.0
        %525 = vst [vmem:[%s522 + $0x10] sm:$0x1] 0.0
        %526 = vst [vmem:[%s522 + $0x18] sm:$0xff] 0.0
        %527 = vst [vmem:[%s522 + $0x20] sm:$0xff] 0.0
        %528 = vst [vmem:[%s522 + $0x28] sm:$0x1] 0.0
        %529 = vst [vmem:[%s522 + $0x30] sm:$0xff] 0.0
        %530 = vst [vmem:[%s522 + $0x38] sm:$0xff] 0.0
        %531 = vst [vmem:[%s522 + $0x40] sm:$0x1] 0.0
        %532 = vst [vmem:[%s522 + $0x48] sm:$0xff] 0.0
        %533 = vst [vmem:[%s522 + $0x50] sm:$0xff] 0.0
        %534 = vst [vmem:[%s522 + $0x58] sm:$0x1] 0.0
        %535 = vst [vmem:[%s522 + $0x60] sm:$0xff] 0.0
        %536 = vst [vmem:[%s522 + $0x68] sm:$0xff] 0.0
        %537 = vst [vmem:[%s522 + $0x70] sm:$0x1] 0.0
        %538 = vst [vmem:[%s522 + $0x78] sm:$0xff] 0.0
        %539 = vst [vmem:[%s522 + $0x80] sm:$0xff] 0.0
        %540 = vst [vmem:[%s522 + $0x88] sm:$0x1] 0.0
        %541 = vst [vmem:[%s522 + $0x90] sm:$0xff] 0.0
        %542 = vst [vmem:[%s522 + $0x98] sm:$0xff] 0.0
        %543 = vst [vmem:[%s522 + $0xa0] sm:$0x1] 0.0
        %544 = vst [vmem:[%s522 + $0xa8] sm:$0xff] 0.0
        %545 = vst [vmem:[%s522 + $0xb0] sm:$0xff] 0.0
        %546 = vst [vmem:[%s522 + $0xb8] sm:$0x1] 0.0
        %547 = vst [vmem:[%s522 + $0xc0] sm:$0xff] 0.0
        %548 = vst [vmem:[%s522 + $0xc8] sm:$0xff] 0.0
        %549 = vst [vmem:[%s522 + $0xd0] sm:$0x1] 0.0
        %550 = vst [vmem:[%s522 + $0xd8] sm:$0xff] 0.0
        %551 = vst [vmem:[%s522 + $0xe0] sm:$0xff] 0.0
        %552 = vst [vmem:[%s522 + $0xe8] sm:$0x1] 0.0
        %s553 = scalar_lea.vmem [#allocation2], 240
        %554 = vst [vmem:[%s553] sm:$0xff] 0.0
        %555 = vst [vmem:[%s553 + $0x8] sm:$0xff] 0.0
        %556 = vst [vmem:[%s553 + $0x10] sm:$0x1] 0.0
        %557 = vst [vmem:[%s553 + $0xf0] sm:$0xff] 0.0
        %558 = vst [vmem:[%s553 + $0xf8] sm:$0xff] 0.0
        %559 = vst [vmem:[%s553 + $0x100] sm:$0x1] 0.0
        %560 = vst [vmem:[%s553 + $0x1e0] sm:$0xff] 0.0
        %561 = vst [vmem:[%s553 + $0x1e8] sm:$0xff] 0.0
        %562 = vst [vmem:[%s553 + $0x1f0] sm:$0x1] 0.0
        %563 = vst [vmem:[%s553 + $0x2d0] sm:$0xff] 0.0
        %564 = vst [vmem:[%s553 + $0x2d8] sm:$0xff] 0.0
        %565 = vst [vmem:[%s553 + $0x2e0] sm:$0x1] 0.0
        %566 = vst [vmem:[%s553 + $0x3c0] sm:$0xff] 0.0
        %567 = vst [vmem:[%s553 + $0x3c8] sm:$0xff] 0.0
        %568 = vst [vmem:[%s553 + $0x3d0] sm:$0x1] 0.0
        %569 = vst [vmem:[%s553 + $0x4b0] sm:$0xff] 0.0
        %570 = vst [vmem:[%s553 + $0x4b8] sm:$0xff] 0.0
        %571 = vst [vmem:[%s553 + $0x4c0] sm:$0x1] 0.0
        %572 = vst [vmem:[%s553 + $0x5a0] sm:$0xff] 0.0
        %573 = vst [vmem:[%s553 + $0x5a8] sm:$0xff] 0.0
        %574 = vst [vmem:[%s553 + $0x5b0] sm:$0x1] 0.0
        %575 = vst [vmem:[%s553 + $0x690] sm:$0xff] 0.0
        %576 = vst [vmem:[%s553 + $0x698] sm:$0xff] 0.0
        %577 = vst [vmem:[%s553 + $0x6a0] sm:$0x1] 0.0
        %s578 = scalar_lea.vmem [#allocation2], 456
        %579 = vst [vmem:[%s578] sm:$0xff] 0.0
        %580 = vst [vmem:[%s578 + $0x8] sm:$0xff] 0.0
        %581 = vst [vmem:[%s578 + $0x10] sm:$0x1] 0.0
        %582 = vst [vmem:[%s578 + $0xf0] sm:$0xff] 0.0
        %583 = vst [vmem:[%s578 + $0xf8] sm:$0xff] 0.0
        %584 = vst [vmem:[%s578 + $0x100] sm:$0x1] 0.0
        %585 = vst [vmem:[%s578 + $0x1e0] sm:$0xff] 0.0
        %586 = vst [vmem:[%s578 + $0x1e8] sm:$0xff] 0.0
        %587 = vst [vmem:[%s578 + $0x1f0] sm:$0x1] 0.0
        %588 = vst [vmem:[%s578 + $0x2d0] sm:$0xff] 0.0
        %589 = vst [vmem:[%s578 + $0x2d8] sm:$0xff] 0.0
        %590 = vst [vmem:[%s578 + $0x2e0] sm:$0x1] 0.0
        %591 = vst [vmem:[%s578 + $0x3c0] sm:$0xff] 0.0
        %592 = vst [vmem:[%s578 + $0x3c8] sm:$0xff] 0.0
        %593 = vst [vmem:[%s578 + $0x3d0] sm:$0x1] 0.0
        %594 = vst [vmem:[%s578 + $0x4b0] sm:$0xff] 0.0
        %595 = vst [vmem:[%s578 + $0x4b8] sm:$0xff] 0.0
        %596 = vst [vmem:[%s578 + $0x4c0] sm:$0x1] 0.0
        %597 = vst [vmem:[%s578 + $0x5a0] sm:$0xff] 0.0
        %598 = vst [vmem:[%s578 + $0x5a8] sm:$0xff] 0.0
        %599 = vst [vmem:[%s578 + $0x5b0] sm:$0x1] 0.0
        %600 = vst [vmem:[%s578 + $0x690] sm:$0xff] 0.0
        %601 = vst [vmem:[%s578 + $0x698] sm:$0xff] 0.0
        %602 = vst [vmem:[%s578 + $0x6a0] sm:$0x1] 0.0
        %s603 = scalar_lea.vmem [#allocation2], 264
        %604 = vst [vmem:[%s603 + $0x7] sm:$0x1] 0.0
        %605 = vst [vmem:[%s603 + $0x1f] sm:$0x1] 0.0
        %606 = vst [vmem:[%s603 + $0x37] sm:$0x1] 0.0
        %607 = vst [vmem:[%s603 + $0x4f] sm:$0x1] 0.0
        %608 = vst [vmem:[%s603 + $0x67] sm:$0x1] 0.0
        %609 = vst [vmem:[%s603 + $0x7f] sm:$0x1] 0.0
        %610 = vst [vmem:[%s603 + $0x97] sm:$0x1] 0.0
        %611 = vst [vmem:[%s603 + $0xaf] sm:$0x1] 0.0
        %612 = vst [vmem:[%s603 + $0xf7] sm:$0x1] 0.0
        %613 = vst [vmem:[%s603 + $0x10f] sm:$0x1] 0.0
        %614 = vst [vmem:[%s603 + $0x127] sm:$0x1] 0.0
        %615 = vst [vmem:[%s603 + $0x13f] sm:$0x1] 0.0
        %616 = vst [vmem:[%s603 + $0x157] sm:$0x1] 0.0
        %617 = vst [vmem:[%s603 + $0x16f] sm:$0x1] 0.0
        %618 = vst [vmem:[%s603 + $0x187] sm:$0x1] 0.0
        %619 = vst [vmem:[%s603 + $0x19f] sm:$0x1] 0.0
        %620 = vst [vmem:[%s603 + $0x1e7] sm:$0x1] 0.0
        %621 = vst [vmem:[%s603 + $0x1ff] sm:$0x1] 0.0
        %622 = vst [vmem:[%s603 + $0x217] sm:$0x1] 0.0
        %623 = vst [vmem:[%s603 + $0x22f] sm:$0x1] 0.0
        %624 = vst [vmem:[%s603 + $0x247] sm:$0x1] 0.0
        %625 = vst [vmem:[%s603 + $0x25f] sm:$0x1] 0.0
        %626 = vst [vmem:[%s603 + $0x277] sm:$0x1] 0.0
        %627 = vst [vmem:[%s603 + $0x28f] sm:$0x1] 0.0
        %628 = vst [vmem:[%s603 + $0x2d7] sm:$0x1] 0.0
        %629 = vst [vmem:[%s603 + $0x2ef] sm:$0x1] 0.0
        %630 = vst [vmem:[%s603 + $0x307] sm:$0x1] 0.0
        %631 = vst [vmem:[%s603 + $0x31f] sm:$0x1] 0.0
        %632 = vst [vmem:[%s603 + $0x337] sm:$0x1] 0.0
        %633 = vst [vmem:[%s603 + $0x34f] sm:$0x1] 0.0
        %634 = vst [vmem:[%s603 + $0x367] sm:$0x1] 0.0
        %635 = vst [vmem:[%s603 + $0x37f] sm:$0x1] 0.0
        %636 = vst [vmem:[%s603 + $0x3c7] sm:$0x1] 0.0
        %637 = vst [vmem:[%s603 + $0x3df] sm:$0x1] 0.0
        %638 = vst [vmem:[%s603 + $0x3f7] sm:$0x1] 0.0
        %639 = vst [vmem:[%s603 + $0x40f] sm:$0x1] 0.0
        %640 = vst [vmem:[%s603 + $0x427] sm:$0x1] 0.0
        %641 = vst [vmem:[%s603 + $0x43f] sm:$0x1] 0.0
        %642 = vst [vmem:[%s603 + $0x457] sm:$0x1] 0.0
        %643 = vst [vmem:[%s603 + $0x46f] sm:$0x1] 0.0
        %644 = vst [vmem:[%s603 + $0x4b7] sm:$0x1] 0.0
        %645 = vst [vmem:[%s603 + $0x4cf] sm:$0x1] 0.0
        %646 = vst [vmem:[%s603 + $0x4e7] sm:$0x1] 0.0
        %647 = vst [vmem:[%s603 + $0x4ff] sm:$0x1] 0.0
        %648 = vst [vmem:[%s603 + $0x517] sm:$0x1] 0.0
        %649 = vst [vmem:[%s603 + $0x52f] sm:$0x1] 0.0
        %650 = vst [vmem:[%s603 + $0x547] sm:$0x1] 0.0
        %651 = vst [vmem:[%s603 + $0x55f] sm:$0x1] 0.0
        %652 = vst [vmem:[%s603 + $0x5a7] sm:$0x1] 0.0
        %653 = vst [vmem:[%s603 + $0x5bf] sm:$0x1] 0.0
        %654 = vst [vmem:[%s603 + $0x5d7] sm:$0x1] 0.0
        %655 = vst [vmem:[%s603 + $0x5ef] sm:$0x1] 0.0
        %656 = vst [vmem:[%s603 + $0x607] sm:$0x1] 0.0
        %657 = vst [vmem:[%s603 + $0x61f] sm:$0x1] 0.0
        %658 = vst [vmem:[%s603 + $0x637] sm:$0x1] 0.0
        %659 = vst [vmem:[%s603 + $0x64f] sm:$0x1] 0.0
        %660 = vst [vmem:[%s603 + $0x697] sm:$0x1] 0.0
        %661 = vst [vmem:[%s603 + $0x6af] sm:$0x1] 0.0
        %662 = vst [vmem:[%s603 + $0x6c7] sm:$0x1] 0.0
        %663 = vst [vmem:[%s603 + $0x6df] sm:$0x1] 0.0
        %664 = vst [vmem:[%s603 + $0x6f7] sm:$0x1] 0.0
        %665 = vst [vmem:[%s603 + $0x70f] sm:$0x1] 0.0
        %666 = vst [vmem:[%s603 + $0x727] sm:$0x1] 0.0
        %667 = vst [vmem:[%s603 + $0x73f] sm:$0x1] 0.0
        %668 = vst [vmem:[%s603 + $0x10] sm:$0x1] 0.0
        %669 = vst [vmem:[%s603 + $0x28] sm:$0x1] 0.0
        %670 = vst [vmem:[%s603 + $0x40] sm:$0x1] 0.0
        %671 = vst [vmem:[%s603 + $0x58] sm:$0x1] 0.0
        %672 = vst [vmem:[%s603 + $0x70] sm:$0x1] 0.0
        %673 = vst [vmem:[%s603 + $0x88] sm:$0x1] 0.0
        %674 = vst [vmem:[%s603 + $0xa0] sm:$0x1] 0.0
        %675 = vst [vmem:[%s603 + $0xb8] sm:$0x1] 0.0
        %676 = vst [vmem:[%s603 + $0x100] sm:$0x1] 0.0
        %677 = vst [vmem:[%s603 + $0x118] sm:$0x1] 0.0
        %678 = vst [vmem:[%s603 + $0x130] sm:$0x1] 0.0
        %679 = vst [vmem:[%s603 + $0x148] sm:$0x1] 0.0
        %680 = vst [vmem:[%s603 + $0x160] sm:$0x1] 0.0
        %681 = vst [vmem:[%s603 + $0x178] sm:$0x1] 0.0
        %682 = vst [vmem:[%s603 + $0x190] sm:$0x1] 0.0
        %683 = vst [vmem:[%s603 + $0x1a8] sm:$0x1] 0.0
        %684 = vst [vmem:[%s603 + $0x1f0] sm:$0x1] 0.0
        %685 = vst [vmem:[%s603 + $0x208] sm:$0x1] 0.0
        %686 = vst [vmem:[%s603 + $0x220] sm:$0x1] 0.0
        %687 = vst [vmem:[%s603 + $0x238] sm:$0x1] 0.0
        %688 = vst [vmem:[%s603 + $0x250] sm:$0x1] 0.0
        %689 = vst [vmem:[%s603 + $0x268] sm:$0x1] 0.0
        %690 = vst [vmem:[%s603 + $0x280] sm:$0x1] 0.0
        %691 = vst [vmem:[%s603 + $0x298] sm:$0x1] 0.0
        %692 = vst [vmem:[%s603 + $0x2e0] sm:$0x1] 0.0
        %693 = vst [vmem:[%s603 + $0x2f8] sm:$0x1] 0.0
        %694 = vst [vmem:[%s603 + $0x310] sm:$0x1] 0.0
        %695 = vst [vmem:[%s603 + $0x328] sm:$0x1] 0.0
        %696 = vst [vmem:[%s603 + $0x340] sm:$0x1] 0.0
        %697 = vst [vmem:[%s603 + $0x358] sm:$0x1] 0.0
        %698 = vst [vmem:[%s603 + $0x370] sm:$0x1] 0.0
        %699 = vst [vmem:[%s603 + $0x388] sm:$0x1] 0.0
        %700 = vst [vmem:[%s603 + $0x3d0] sm:$0x1] 0.0
        %701 = vst [vmem:[%s603 + $0x3e8] sm:$0x1] 0.0
        %702 = vst [vmem:[%s603 + $0x400] sm:$0x1] 0.0
        %703 = vst [vmem:[%s603 + $0x418] sm:$0x1] 0.0
        %704 = vst [vmem:[%s603 + $0x430] sm:$0x1] 0.0
        %705 = vst [vmem:[%s603 + $0x448] sm:$0x1] 0.0
        %706 = vst [vmem:[%s603 + $0x460] sm:$0x1] 0.0
        %707 = vst [vmem:[%s603 + $0x478] sm:$0x1] 0.0
        %708 = vst [vmem:[%s603 + $0x4c0] sm:$0x1] 0.0
        %709 = vst [vmem:[%s603 + $0x4d8] sm:$0x1] 0.0
        %710 = vst [vmem:[%s603 + $0x4f0] sm:$0x1] 0.0
        %711 = vst [vmem:[%s603 + $0x508] sm:$0x1] 0.0
        %712 = vst [vmem:[%s603 + $0x520] sm:$0x1] 0.0
        %713 = vst [vmem:[%s603 + $0x538] sm:$0x1] 0.0
        %714 = vst [vmem:[%s603 + $0x550] sm:$0x1] 0.0
        %715 = vst [vmem:[%s603 + $0x568] sm:$0x1] 0.0
        %716 = vst [vmem:[%s603 + $0x5b0] sm:$0x1] 0.0
        %717 = vst [vmem:[%s603 + $0x5c8] sm:$0x1] 0.0
        %718 = vst [vmem:[%s603 + $0x5e0] sm:$0x1] 0.0
        %719 = vst [vmem:[%s603 + $0x5f8] sm:$0x1] 0.0
        %720 = vst [vmem:[%s603 + $0x610] sm:$0x1] 0.0
        %721 = vst [vmem:[%s603 + $0x628] sm:$0x1] 0.0
        %722 = vst [vmem:[%s603 + $0x640] sm:$0x1] 0.0
        %723 = vst [vmem:[%s603 + $0x658] sm:$0x1] 0.0
        %724 = vst [vmem:[%s603 + $0x6a0] sm:$0x1] 0.0
        %725 = vst [vmem:[%s603 + $0x6b8] sm:$0x1] 0.0
        %726 = vst [vmem:[%s603 + $0x6d0] sm:$0x1] 0.0
        %727 = vst [vmem:[%s603 + $0x6e8] sm:$0x1] 0.0
        %728 = vst [vmem:[%s603 + $0x700] sm:$0x1] 0.0
        %729 = vst [vmem:[%s603 + $0x718] sm:$0x1] 0.0
        %730 = vst [vmem:[%s603 + $0x730] sm:$0x1] 0.0
        %731 = vst [vmem:[%s603 + $0x748] sm:$0x1] 0.0
        %v732 = vld [vmem:[%s401] sm:$0xff]
        %v733 = vld [vmem:[%s401 + $0x8] sm:$0xff]
        %v734 = vld [vmem:[%s401 + $0x10] sm:$0xff]
        %v735 = vld [vmem:[%s401 + $0x18] sm:$0xff]
        %v736 = vld [vmem:[%s401 + $0x20] sm:$0xff]
        %v737 = vld [vmem:[%s401 + $0x28] sm:$0xff]
        %v738 = vld [vmem:[%s401 + $0x30] sm:$0xff]
        %v739 = vld [vmem:[%s401 + $0x38] sm:$0xff]
        %v740 = vld [vmem:[%s401 + $0x40] sm:$0xff]
        %v741 = vld [vmem:[%s401 + $0x48] sm:$0xff]
        %v742 = vld [vmem:[%s401 + $0x50] sm:$0xff]
        %v743 = vld [vmem:[%s401 + $0x58] sm:$0xff]
        %v744 = vld [vmem:[%s401 + $0x60] sm:$0xff]
        %v745 = vld [vmem:[%s401 + $0x68] sm:$0xff]
        %v746 = vld [vmem:[%s401 + $0x70] sm:$0xff]
        %v747 = vld [vmem:[%s401 + $0x78] sm:$0xff]
        %v748 = vld [vmem:[%s401 + $0x80] sm:$0xff]
        %v749 = vld [vmem:[%s401 + $0x88] sm:$0xff]
        %v750 = vld [vmem:[%s401 + $0x90] sm:$0xff]
        %v751 = vld [vmem:[%s401 + $0x98] sm:$0xff]
        %v752 = vld [vmem:[%s401 + $0xa0] sm:$0xff]
        %v753 = vld [vmem:[%s401 + $0xa8] sm:$0xff]
        %v754 = vld [vmem:[%s401 + $0xb0] sm:$0xff]
        %v755 = vld [vmem:[%s401 + $0xb8] sm:$0xff]
        %v756 = vld [vmem:[%s401 + $0xc0] sm:$0xff]
        %v757 = vld [vmem:[%s401 + $0xc8] sm:$0xff]
        %v758 = vld [vmem:[%s401 + $0xd0] sm:$0xff]
        %v759 = vld [vmem:[%s401 + $0xd8] sm:$0xff]
        %v760 = vld [vmem:[%s401 + $0xe0] sm:$0xff]
        %v761 = vld [vmem:[%s401 + $0xe8] sm:$0xff]
        %v762 = vld [vmem:[%s401 + $0xf0] sm:$0xff]
        %v763 = vld [vmem:[%s401 + $0xf8] sm:$0xff]
        %v764 = vld [vmem:[%s401 + $0x100] sm:$0xff]
        %v765 = vld [vmem:[%s401 + $0x108] sm:$0xff]
        %v766 = vld [vmem:[%s401 + $0x110] sm:$0xff]
        %v767 = vld [vmem:[%s401 + $0x118] sm:$0xff]
        %v768 = vld [vmem:[%s401 + $0x120] sm:$0xff]
        %v769 = vld [vmem:[%s401 + $0x128] sm:$0xff]
        %v770 = vld [vmem:[%s401 + $0x130] sm:$0xff]
        %v771 = vld [vmem:[%s401 + $0x138] sm:$0xff]
        %v772 = vld [vmem:[%s401 + $0x140] sm:$0xff]
        %v773 = vld [vmem:[%s401 + $0x148] sm:$0xff]
        %v774 = vld [vmem:[%s401 + $0x150] sm:$0xff]
        %v775 = vld [vmem:[%s401 + $0x158] sm:$0xff]
        %v776 = vld [vmem:[%s401 + $0x160] sm:$0xff]
        %v777 = vld [vmem:[%s401 + $0x168] sm:$0xff]
        %v778 = vld [vmem:[%s401 + $0x170] sm:$0xff]
        %v779 = vld [vmem:[%s401 + $0x178] sm:$0xff]
        %v780 = vld [vmem:[%s401 + $0x180] sm:$0xff]
        %v781 = vld [vmem:[%s401 + $0x188] sm:$0xff]
        %v782 = vld [vmem:[%s401 + $0x190] sm:$0xff]
        %v783 = vld [vmem:[%s401 + $0x198] sm:$0xff]
        %v784 = vld [vmem:[%s401 + $0x1a0] sm:$0xff]
        %v785 = vld [vmem:[%s401 + $0x1a8] sm:$0xff]
        %v786 = vld [vmem:[%s401 + $0x1b0] sm:$0xff]
        %v787 = vld [vmem:[%s401 + $0x1b8] sm:$0xff]
        %v788 = vld [vmem:[%s401 + $0x1c0] sm:$0xff]
        %v789 = vld [vmem:[%s401 + $0x1c8] sm:$0xff]
        %v790 = vld [vmem:[%s401 + $0x1d0] sm:$0xff]
        %v791 = vld [vmem:[%s401 + $0x1d8] sm:$0xff]
        %v792 = vld [vmem:[%s401 + $0x1e0] sm:$0xff]
        %v793 = vld [vmem:[%s401 + $0x1e8] sm:$0xff]
        %v794 = vld [vmem:[%s401 + $0x1f0] sm:$0xff]
        %v795 = vld [vmem:[%s401 + $0x1f8] sm:$0xff]
        %796 = vst [vmem:[%s603 + $0x8] sm:$0xff] %v732
        %797 = vst [vmem:[%s603 + $0x20] sm:$0xff] %v733
        %798 = vst [vmem:[%s603 + $0x38] sm:$0xff] %v734
        %799 = vst [vmem:[%s603 + $0x50] sm:$0xff] %v735
        %800 = vst [vmem:[%s603 + $0x68] sm:$0xff] %v736
        %801 = vst [vmem:[%s603 + $0x80] sm:$0xff] %v737
        %802 = vst [vmem:[%s603 + $0x98] sm:$0xff] %v738
        %803 = vst [vmem:[%s603 + $0xb0] sm:$0xff] %v739
        %804 = vst [vmem:[%s603 + $0xf8] sm:$0xff] %v740
        %805 = vst [vmem:[%s603 + $0x110] sm:$0xff] %v741
        %806 = vst [vmem:[%s603 + $0x128] sm:$0xff] %v742
        %807 = vst [vmem:[%s603 + $0x140] sm:$0xff] %v743
        %808 = vst [vmem:[%s603 + $0x158] sm:$0xff] %v744
        %809 = vst [vmem:[%s603 + $0x170] sm:$0xff] %v745
        %810 = vst [vmem:[%s603 + $0x188] sm:$0xff] %v746
        %811 = vst [vmem:[%s603 + $0x1a0] sm:$0xff] %v747
        %812 = vst [vmem:[%s603 + $0x1e8] sm:$0xff] %v748
        %813 = vst [vmem:[%s603 + $0x200] sm:$0xff] %v749
        %814 = vst [vmem:[%s603 + $0x218] sm:$0xff] %v750
        %815 = vst [vmem:[%s603 + $0x230] sm:$0xff] %v751
        %816 = vst [vmem:[%s603 + $0x248] sm:$0xff] %v752
        %817 = vst [vmem:[%s603 + $0x260] sm:$0xff] %v753
        %818 = vst [vmem:[%s603 + $0x278] sm:$0xff] %v754
        %819 = vst [vmem:[%s603 + $0x290] sm:$0xff] %v755
        %820 = vst [vmem:[%s603 + $0x2d8] sm:$0xff] %v756
        %821 = vst [vmem:[%s603 + $0x2f0] sm:$0xff] %v757
        %822 = vst [vmem:[%s603 + $0x308] sm:$0xff] %v758
        %823 = vst [vmem:[%s603 + $0x320] sm:$0xff] %v759
        %824 = vst [vmem:[%s603 + $0x338] sm:$0xff] %v760
        %825 = vst [vmem:[%s603 + $0x350] sm:$0xff] %v761
        %826 = vst [vmem:[%s603 + $0x368] sm:$0xff] %v762
        %827 = vst [vmem:[%s603 + $0x380] sm:$0xff] %v763
        %828 = vst [vmem:[%s603 + $0x3c8] sm:$0xff] %v764
        %829 = vst [vmem:[%s603 + $0x3e0] sm:$0xff] %v765
        %830 = vst [vmem:[%s603 + $0x3f8] sm:$0xff] %v766
        %831 = vst [vmem:[%s603 + $0x410] sm:$0xff] %v767
        %832 = vst [vmem:[%s603 + $0x428] sm:$0xff] %v768
        %833 = vst [vmem:[%s603 + $0x440] sm:$0xff] %v769
        %834 = vst [vmem:[%s603 + $0x458] sm:$0xff] %v770
        %835 = vst [vmem:[%s603 + $0x470] sm:$0xff] %v771
        %836 = vst [vmem:[%s603 + $0x4b8] sm:$0xff] %v772
        %837 = vst [vmem:[%s603 + $0x4d0] sm:$0xff] %v773
        %838 = vst [vmem:[%s603 + $0x4e8] sm:$0xff] %v774
        %839 = vst [vmem:[%s603 + $0x500] sm:$0xff] %v775
        %840 = vst [vmem:[%s603 + $0x518] sm:$0xff] %v776
        %841 = vst [vmem:[%s603 + $0x530] sm:$0xff] %v777
        %842 = vst [vmem:[%s603 + $0x548] sm:$0xff] %v778
        %843 = vst [vmem:[%s603 + $0x560] sm:$0xff] %v779
        %844 = vst [vmem:[%s603 + $0x5a8] sm:$0xff] %v780
        %845 = vst [vmem:[%s603 + $0x5c0] sm:$0xff] %v781
        %846 = vst [vmem:[%s603 + $0x5d8] sm:$0xff] %v782
        %847 = vst [vmem:[%s603 + $0x5f0] sm:$0xff] %v783
        %848 = vst [vmem:[%s603 + $0x608] sm:$0xff] %v784
        %849 = vst [vmem:[%s603 + $0x620] sm:$0xff] %v785
        %850 = vst [vmem:[%s603 + $0x638] sm:$0xff] %v786
        %851 = vst [vmem:[%s603 + $0x650] sm:$0xff] %v787
        %852 = vst [vmem:[%s603 + $0x698] sm:$0xff] %v788
        %853 = vst [vmem:[%s603 + $0x6b0] sm:$0xff] %v789
        %854 = vst [vmem:[%s603 + $0x6c8] sm:$0xff] %v790
        %855 = vst [vmem:[%s603 + $0x6e0] sm:$0xff] %v791
        %856 = vst [vmem:[%s603 + $0x6f8] sm:$0xff] %v792
        %857 = vst [vmem:[%s603 + $0x710] sm:$0xff] %v793
        %858 = vst [vmem:[%s603 + $0x728] sm:$0xff] %v794
        %859 = vst [vmem:[%s603 + $0x740] sm:$0xff] %v795
        %v860 = vld [vmem:[%s467] sm:$0xff]
        %v861 = vld [vmem:[%s467 + $0x8] sm:$0xff]
        %v862 = vld [vmem:[%s467 + $0x10] sm:$0xff]
        %v863 = vld [vmem:[%s467 + $0x18] sm:$0x7]
        %v864 = vld [vmem:[#allocation2 + $0x7] sm:$0xff]
        %v865 = vld [vmem:[#allocation2 + $0x1f] sm:$0xff]
        %v866 = vld [vmem:[#allocation2 + $0x37] sm:$0xff]
        %v867 = vld [vmem:[#allocation2 + $0x4f] sm:$0xff]
        %v868 = vld [vmem:[#allocation2 + $0x67] sm:$0xff]
        %v869 = vld [vmem:[#allocation2 + $0x7f] sm:$0xff]
        %v870 = vld [vmem:[#allocation2 + $0x97] sm:$0xff]
        %v871 = vld [vmem:[#allocation2 + $0xaf] sm:$0xff]
        %v872 = vld [vmem:[#allocation2 + $0xc7] sm:$0xff]
        %v873 = vld [vmem:[#allocation2 + $0xdf] sm:$0xff]
        %v874 = vld [vmem:[#allocation2 + $0xf7] sm:$0xff]
        %v875 = vld [vmem:[#allocation2 + $0x10f] sm:$0xff]
        %v876 = vld [vmem:[#allocation2 + $0x127] sm:$0xff]
        %v877 = vld [vmem:[#allocation2 + $0x13f] sm:$0xff]
        %v878 = vld [vmem:[#allocation2 + $0x157] sm:$0xff]
        %v879 = vld [vmem:[#allocation2 + $0x16f] sm:$0xff]
        %v880 = vld [vmem:[#allocation2 + $0x187] sm:$0xff]
        %v881 = vld [vmem:[#allocation2 + $0x19f] sm:$0xff]
        %v882 = vld [vmem:[#allocation2 + $0x1b7] sm:$0xff]
        %v883 = vld [vmem:[#allocation2 + $0x1cf] sm:$0xff]
        %v884 = vld [vmem:[#allocation2 + $0x1e7] sm:$0xff]
        %v885 = vld [vmem:[#allocation2 + $0x1ff] sm:$0xff]
        %v886 = vld [vmem:[#allocation2 + $0x217] sm:$0xff]
        %v887 = vld [vmem:[#allocation2 + $0x22f] sm:$0xff]
        %v888 = vld [vmem:[#allocation2 + $0x247] sm:$0xff]
        %v889 = vld [vmem:[#allocation2 + $0x25f] sm:$0xff]
        %v890 = vld [vmem:[#allocation2 + $0x277] sm:$0xff]
        %v891 = vld [vmem:[#allocation2 + $0x28f] sm:$0xff]
        %v892 = vld [vmem:[#allocation2 + $0x2a7] sm:$0xff]
        %v893 = vld [vmem:[#allocation2 + $0x2bf] sm:$0xff]
        %v894 = vld [vmem:[#allocation2 + $0x2d7] sm:$0xff]
        %v895 = vld [vmem:[#allocation2 + $0x2ef] sm:$0xff]
        %v896 = vld [vmem:[#allocation2 + $0x307] sm:$0xff]
        %v897 = vld [vmem:[#allocation2 + $0x31f] sm:$0xff]
        %v898 = vld [vmem:[#allocation2 + $0x337] sm:$0xff]
        %v899 = vld [vmem:[#allocation2 + $0x34f] sm:$0xff]
        %v900 = vld [vmem:[#allocation2 + $0x367] sm:$0xff]
        %v901 = vld [vmem:[#allocation2 + $0x37f] sm:$0xff]
        %v902 = vld [vmem:[#allocation2 + $0x397] sm:$0xff]
        %v903 = vld [vmem:[#allocation2 + $0x3af] sm:$0xff]
        %v904 = vld [vmem:[#allocation2 + $0x3c7] sm:$0xff]
        %v905 = vld [vmem:[#allocation2 + $0x3df] sm:$0xff]
        %v906 = vld [vmem:[#allocation2 + $0x3f7] sm:$0xff]
        %v907 = vld [vmem:[#allocation2 + $0x40f] sm:$0xff]
        %v908 = vld [vmem:[#allocation2 + $0x427] sm:$0xff]
        %v909 = vld [vmem:[#allocation2 + $0x43f] sm:$0xff]
        %v910 = vld [vmem:[#allocation2 + $0x457] sm:$0xff]
        %v911 = vld [vmem:[#allocation2 + $0x46f] sm:$0xff]
        %v912 = vld [vmem:[#allocation2 + $0x487] sm:$0xff]
        %v913 = vld [vmem:[#allocation2 + $0x49f] sm:$0xff]
        %v914 = vld [vmem:[#allocation2 + $0x4b7] sm:$0xff]
        %v915 = vld [vmem:[#allocation2 + $0x4cf] sm:$0xff]
        %v916 = vld [vmem:[#allocation2 + $0x4e7] sm:$0xff]
        %v917 = vld [vmem:[#allocation2 + $0x4ff] sm:$0xff]
        %v918 = vld [vmem:[#allocation2 + $0x517] sm:$0xff]
        %v919 = vld [vmem:[#allocation2 + $0x52f] sm:$0xff]
        %v920 = vld [vmem:[#allocation2 + $0x547] sm:$0xff]
        %v921 = vld [vmem:[#allocation2 + $0x55f] sm:$0xff]
        %v922 = vld [vmem:[#allocation2 + $0x577] sm:$0xff]
        %v923 = vld [vmem:[#allocation2 + $0x58f] sm:$0xff]
        %v924 = vld [vmem:[#allocation2 + $0x5a7] sm:$0xff]
        %v925 = vld [vmem:[#allocation2 + $0x5bf] sm:$0xff]
        %v926 = vld [vmem:[#allocation2 + $0x5d7] sm:$0xff]
        %v927 = vld [vmem:[#allocation2 + $0x5ef] sm:$0xff]
        %v928 = vld [vmem:[#allocation2 + $0x607] sm:$0xff]
        %v929 = vld [vmem:[#allocation2 + $0x61f] sm:$0xff]
        %v930 = vld [vmem:[#allocation2 + $0x637] sm:$0xff]
        %v931 = vld [vmem:[#allocation2 + $0x64f] sm:$0xff]
        %v932 = vld [vmem:[#allocation2 + $0x667] sm:$0xff]
        %v933 = vld [vmem:[#allocation2 + $0x67f] sm:$0xff]
        %v934 = vld [vmem:[#allocation2 + $0x697] sm:$0xff]
        %v935 = vld [vmem:[#allocation2 + $0x6af] sm:$0xff]
        %v936 = vld [vmem:[#allocation2 + $0x6c7] sm:$0xff]
        %v937 = vld [vmem:[#allocation2 + $0x6df] sm:$0xff]
        %v938 = vld [vmem:[#allocation2 + $0x6f7] sm:$0xff]
        %v939 = vld [vmem:[#allocation2 + $0x70f] sm:$0xff]
        %v940 = vld [vmem:[#allocation2 + $0x727] sm:$0xff]
        %v941 = vld [vmem:[#allocation2 + $0x73f] sm:$0xff]
        %v942 = vld [vmem:[#allocation2 + $0x757] sm:$0xff]
        %v943 = vld [vmem:[#allocation2 + $0x76f] sm:$0xff]
        %v944 = vld [vmem:[#allocation2 + $0x787] sm:$0xff]
        %v945 = vld [vmem:[#allocation2 + $0x79f] sm:$0xff]
        %v946 = vld [vmem:[#allocation2 + $0x7b7] sm:$0xff]
        %v947 = vld [vmem:[#allocation2 + $0x7cf] sm:$0xff]
        %v948 = vld [vmem:[#allocation2 + $0x7e7] sm:$0xff]
        %v949 = vld [vmem:[#allocation2 + $0x7ff] sm:$0xff]
        %v950 = vld [vmem:[#allocation2 + $0x817] sm:$0xff]
        %v951 = vld [vmem:[#allocation2 + $0x82f] sm:$0xff]
        %v952 = vld [vmem:[#allocation2 + $0x847] sm:$0xff]
        %v953 = vld [vmem:[#allocation2 + $0x85f] sm:$0xff]
        %v954 = vld [vmem:[#allocation2 + $0x877] sm:$0xff]
        %v955 = vld [vmem:[#allocation2 + $0x88f] sm:$0xff]
        %v956 = vld [vmem:[#allocation2 + $0x8a7] sm:$0xff]
        %v957 = vld [vmem:[#allocation2 + $0x8bf] sm:$0xff]
        %v958 = vld [vmem:[#allocation2 + $0x8d7] sm:$0xff]
        %v959 = vld [vmem:[#allocation2 + $0x8ef] sm:$0xff]
        %v960 = vld [vmem:[#allocation2 + $0x907] sm:$0xff]
        %v961 = vld [vmem:[#allocation2 + $0x91f] sm:$0xff]
        %v962 = vld [vmem:[#allocation2 + $0x937] sm:$0xff]
        %v963 = vld [vmem:[#allocation2 + $0x94f] sm:$0xff]
        %v964 = vlaneseq
        %v965 = vshrl.u32 %v964, 7
        %v966 = vsub.s32 0, %v965
        %v967 = vrot.slane %v860, %v966
        %v968 = vmul.f32 %v967, %v864
        %v969 = vmul.f32 %v967, %v865
        %v970 = vmul.f32 %v967, %v866
        %v971 = vmul.f32 %v967, %v867
        %v972 = vmul.f32 %v967, %v868
        %v973 = vmul.f32 %v967, %v869
        %v974 = vmul.f32 %v967, %v870
        %v975 = vmul.f32 %v967, %v871
        %v976 = vmul.f32 %v967, %v874
        %v977 = vmul.f32 %v967, %v875
        %v978 = vmul.f32 %v967, %v876
        %v979 = vmul.f32 %v967, %v877
        %v980 = vmul.f32 %v967, %v878
        %v981 = vmul.f32 %v967, %v879
        %v982 = vmul.f32 %v967, %v880
        %v983 = vmul.f32 %v967, %v881
        %v984 = vmul.f32 %v967, %v884
        %v985 = vmul.f32 %v967, %v885
        %v986 = vmul.f32 %v967, %v886
        %v987 = vmul.f32 %v967, %v887
        %v988 = vmul.f32 %v967, %v888
        %v989 = vmul.f32 %v967, %v889
        %v990 = vmul.f32 %v967, %v890
        %v991 = vmul.f32 %v967, %v891
        %v992 = vmul.f32 %v967, %v894
        %v993 = vmul.f32 %v967, %v895
        %v994 = vmul.f32 %v967, %v896
        %v995 = vmul.f32 %v967, %v897
        %v996 = vmul.f32 %v967, %v898
        %v997 = vmul.f32 %v967, %v899
        %v998 = vmul.f32 %v967, %v900
        %v999 = vmul.f32 %v967, %v901
        %v1000 = vmul.f32 %v967, %v904
        %v1001 = vmul.f32 %v967, %v905
        %v1002 = vmul.f32 %v967, %v906
        %v1003 = vmul.f32 %v967, %v907
        %v1004 = vmul.f32 %v967, %v908
        %v1005 = vmul.f32 %v967, %v909
        %v1006 = vmul.f32 %v967, %v910
        %v1007 = vmul.f32 %v967, %v911
        %v1008 = vmul.f32 %v967, %v914
        %v1009 = vmul.f32 %v967, %v915
        %v1010 = vmul.f32 %v967, %v916
        %v1011 = vmul.f32 %v967, %v917
        %v1012 = vmul.f32 %v967, %v918
        %v1013 = vmul.f32 %v967, %v919
        %v1014 = vmul.f32 %v967, %v920
        %v1015 = vmul.f32 %v967, %v921
        %v1016 = vmul.f32 %v967, %v924
        %v1017 = vmul.f32 %v967, %v925
        %v1018 = vmul.f32 %v967, %v926
        %v1019 = vmul.f32 %v967, %v927
        %v1020 = vmul.f32 %v967, %v928
        %v1021 = vmul.f32 %v967, %v929
        %v1022 = vmul.f32 %v967, %v930
        %v1023 = vmul.f32 %v967, %v931
        %v1024 = vmul.f32 %v967, %v934
        %v1025 = vmul.f32 %v967, %v935
        %v1026 = vmul.f32 %v967, %v936
        %v1027 = vmul.f32 %v967, %v937
        %v1028 = vmul.f32 %v967, %v938
        %v1029 = vmul.f32 %v967, %v939
        %v1030 = vmul.f32 %v967, %v940
        %v1031 = vmul.f32 %v967, %v941
        %v1032 = vlaneseq
        %v1033 = vshrl.u32 %v1032, 7
        %v1034 = vsub.s32 3, %v1033
        %v1035 = vrot.slane %v860, %v1034
        %v1036 = vmul.f32 %v1035, %v865
        %v1037 = vmul.f32 %v1035, %v866
        %v1038 = vmul.f32 %v1035, %v867
        %v1039 = vmul.f32 %v1035, %v868
        %v1040 = vmul.f32 %v1035, %v869
        %v1041 = vmul.f32 %v1035, %v870
        %v1042 = vmul.f32 %v1035, %v871
        %v1043 = vmul.f32 %v1035, %v872
        %v1044 = vmul.f32 %v1035, %v875
        %v1045 = vmul.f32 %v1035, %v876
        %v1046 = vmul.f32 %v1035, %v877
        %v1047 = vmul.f32 %v1035, %v878
        %v1048 = vmul.f32 %v1035, %v879
        %v1049 = vmul.f32 %v1035, %v880
        %v1050 = vmul.f32 %v1035, %v881
        %v1051 = vmul.f32 %v1035, %v882
        %v1052 = vmul.f32 %v1035, %v885
        %v1053 = vmul.f32 %v1035, %v886
        %v1054 = vmul.f32 %v1035, %v887
        %v1055 = vmul.f32 %v1035, %v888
        %v1056 = vmul.f32 %v1035, %v889
        %v1057 = vmul.f32 %v1035, %v890
        %v1058 = vmul.f32 %v1035, %v891
        %v1059 = vmul.f32 %v1035, %v892
        %v1060 = vmul.f32 %v1035, %v895
        %v1061 = vmul.f32 %v1035, %v896
        %v1062 = vmul.f32 %v1035, %v897
        %v1063 = vmul.f32 %v1035, %v898
        %v1064 = vmul.f32 %v1035, %v899
        %v1065 = vmul.f32 %v1035, %v900
        %v1066 = vmul.f32 %v1035, %v901
        %v1067 = vmul.f32 %v1035, %v902
        %v1068 = vmul.f32 %v1035, %v905
        %v1069 = vmul.f32 %v1035, %v906
        %v1070 = vmul.f32 %v1035, %v907
        %v1071 = vmul.f32 %v1035, %v908
        %v1072 = vmul.f32 %v1035, %v909
        %v1073 = vmul.f32 %v1035, %v910
        %v1074 = vmul.f32 %v1035, %v911
        %v1075 = vmul.f32 %v1035, %v912
        %v1076 = vmul.f32 %v1035, %v915
        %v1077 = vmul.f32 %v1035, %v916
        %v1078 = vmul.f32 %v1035, %v917
        %v1079 = vmul.f32 %v1035, %v918
        %v1080 = vmul.f32 %v1035, %v919
        %v1081 = vmul.f32 %v1035, %v920
        %v1082 = vmul.f32 %v1035, %v921
        %v1083 = vmul.f32 %v1035, %v922
        %v1084 = vmul.f32 %v1035, %v925
        %v1085 = vmul.f32 %v1035, %v926
        %v1086 = vmul.f32 %v1035, %v927
        %v1087 = vmul.f32 %v1035, %v928
        %v1088 = vmul.f32 %v1035, %v929
        %v1089 = vmul.f32 %v1035, %v930
        %v1090 = vmul.f32 %v1035, %v931
        %v1091 = vmul.f32 %v1035, %v932
        %v1092 = vmul.f32 %v1035, %v935
        %v1093 = vmul.f32 %v1035, %v936
        %v1094 = vmul.f32 %v1035, %v937
        %v1095 = vmul.f32 %v1035, %v938
        %v1096 = vmul.f32 %v1035, %v939
        %v1097 = vmul.f32 %v1035, %v940
        %v1098 = vmul.f32 %v1035, %v941
        %v1099 = vmul.f32 %v1035, %v942
        %v1100 = vadd.f32 %v968, %v1036
        %v1101 = vadd.f32 %v969, %v1037
        %v1102 = vadd.f32 %v970, %v1038
        %v1103 = vadd.f32 %v971, %v1039
        %v1104 = vadd.f32 %v972, %v1040
        %v1105 = vadd.f32 %v973, %v1041
        %v1106 = vadd.f32 %v974, %v1042
        %v1107 = vadd.f32 %v975, %v1043
        %v1108 = vadd.f32 %v976, %v1044
        %v1109 = vadd.f32 %v977, %v1045
        %v1110 = vadd.f32 %v978, %v1046
        %v1111 = vadd.f32 %v979, %v1047
        %v1112 = vadd.f32 %v980, %v1048
        %v1113 = vadd.f32 %v981, %v1049
        %v1114 = vadd.f32 %v982, %v1050
        %v1115 = vadd.f32 %v983, %v1051
        %v1116 = vadd.f32 %v984, %v1052
        %v1117 = vadd.f32 %v985, %v1053
        %v1118 = vadd.f32 %v986, %v1054
        %v1119 = vadd.f32 %v987, %v1055
        %v1120 = vadd.f32 %v988, %v1056
        %v1121 = vadd.f32 %v989, %v1057
        %v1122 = vadd.f32 %v990, %v1058
        %v1123 = vadd.f32 %v991, %v1059
        %v1124 = vadd.f32 %v992, %v1060
        %v1125 = vadd.f32 %v993, %v1061
        %v1126 = vadd.f32 %v994, %v1062
        %v1127 = vadd.f32 %v995, %v1063
        %v1128 = vadd.f32 %v996, %v1064
        %v1129 = vadd.f32 %v997, %v1065
        %v1130 = vadd.f32 %v998, %v1066
        %v1131 = vadd.f32 %v999, %v1067
        %v1132 = vadd.f32 %v1000, %v1068
        %v1133 = vadd.f32 %v1001, %v1069
        %v1134 = vadd.f32 %v1002, %v1070
        %v1135 = vadd.f32 %v1003, %v1071
        %v1136 = vadd.f32 %v1004, %v1072
        %v1137 = vadd.f32 %v1005, %v1073
        %v1138 = vadd.f32 %v1006, %v1074
        %v1139 = vadd.f32 %v1007, %v1075
        %v1140 = vadd.f32 %v1008, %v1076
        %v1141 = vadd.f32 %v1009, %v1077
        %v1142 = vadd.f32 %v1010, %v1078
        %v1143 = vadd.f32 %v1011, %v1079
        %v1144 = vadd.f32 %v1012, %v1080
        %v1145 = vadd.f32 %v1013, %v1081
        %v1146 = vadd.f32 %v1014, %v1082
        %v1147 = vadd.f32 %v1015, %v1083
        %v1148 = vadd.f32 %v1016, %v1084
        %v1149 = vadd.f32 %v1017, %v1085
        %v1150 = vadd.f32 %v1018, %v1086
        %v1151 = vadd.f32 %v1019, %v1087
        %v1152 = vadd.f32 %v1020, %v1088
        %v1153 = vadd.f32 %v1021, %v1089
        %v1154 = vadd.f32 %v1022, %v1090
        %v1155 = vadd.f32 %v1023, %v1091
        %v1156 = vadd.f32 %v1024, %v1092
        %v1157 = vadd.f32 %v1025, %v1093
        %v1158 = vadd.f32 %v1026, %v1094
        %v1159 = vadd.f32 %v1027, %v1095
        %v1160 = vadd.f32 %v1028, %v1096
        %v1161 = vadd.f32 %v1029, %v1097
        %v1162 = vadd.f32 %v1030, %v1098
        %v1163 = vadd.f32 %v1031, %v1099
        %v1164 = vlaneseq
        %v1165 = vshrl.u32 %v1164, 7
        %v1166 = vsub.s32 6, %v1165
        %v1167 = vrot.slane %v860, %v1166
        %v1168 = vmul.f32 %v1167, %v866
        %v1169 = vmul.f32 %v1167, %v867
        %v1170 = vmul.f32 %v1167, %v868
        %v1171 = vmul.f32 %v1167, %v869
        %v1172 = vmul.f32 %v1167, %v870
        %v1173 = vmul.f32 %v1167, %v871
        %v1174 = vmul.f32 %v1167, %v872
        %v1175 = vmul.f32 %v1167, %v873
        %v1176 = vmul.f32 %v1167, %v876
        %v1177 = vmul.f32 %v1167, %v877
        %v1178 = vmul.f32 %v1167, %v878
        %v1179 = vmul.f32 %v1167, %v879
        %v1180 = vmul.f32 %v1167, %v880
        %v1181 = vmul.f32 %v1167, %v881
        %v1182 = vmul.f32 %v1167, %v882
        %v1183 = vmul.f32 %v1167, %v883
        %v1184 = vmul.f32 %v1167, %v886
        %v1185 = vmul.f32 %v1167, %v887
        %v1186 = vmul.f32 %v1167, %v888
        %v1187 = vmul.f32 %v1167, %v889
        %v1188 = vmul.f32 %v1167, %v890
        %v1189 = vmul.f32 %v1167, %v891
        %v1190 = vmul.f32 %v1167, %v892
        %v1191 = vmul.f32 %v1167, %v893
        %v1192 = vmul.f32 %v1167, %v896
        %v1193 = vmul.f32 %v1167, %v897
        %v1194 = vmul.f32 %v1167, %v898
        %v1195 = vmul.f32 %v1167, %v899
        %v1196 = vmul.f32 %v1167, %v900
        %v1197 = vmul.f32 %v1167, %v901
        %v1198 = vmul.f32 %v1167, %v902
        %v1199 = vmul.f32 %v1167, %v903
        %v1200 = vmul.f32 %v1167, %v906
        %v1201 = vmul.f32 %v1167, %v907
        %v1202 = vmul.f32 %v1167, %v908
        %v1203 = vmul.f32 %v1167, %v909
        %v1204 = vmul.f32 %v1167, %v910
        %v1205 = vmul.f32 %v1167, %v911
        %v1206 = vmul.f32 %v1167, %v912
        %v1207 = vmul.f32 %v1167, %v913
        %v1208 = vmul.f32 %v1167, %v916
        %v1209 = vmul.f32 %v1167, %v917
        %v1210 = vmul.f32 %v1167, %v918
        %v1211 = vmul.f32 %v1167, %v919
        %v1212 = vmul.f32 %v1167, %v920
        %v1213 = vmul.f32 %v1167, %v921
        %v1214 = vmul.f32 %v1167, %v922
        %v1215 = vmul.f32 %v1167, %v923
        %v1216 = vmul.f32 %v1167, %v926
        %v1217 = vmul.f32 %v1167, %v927
        %v1218 = vmul.f32 %v1167, %v928
        %v1219 = vmul.f32 %v1167, %v929
        %v1220 = vmul.f32 %v1167, %v930
        %v1221 = vmul.f32 %v1167, %v931
        %v1222 = vmul.f32 %v1167, %v932
        %v1223 = vmul.f32 %v1167, %v933
        %v1224 = vmul.f32 %v1167, %v936
        %v1225 = vmul.f32 %v1167, %v937
        %v1226 = vmul.f32 %v1167, %v938
        %v1227 = vmul.f32 %v1167, %v939
        %v1228 = vmul.f32 %v1167, %v940
        %v1229 = vmul.f32 %v1167, %v941
        %v1230 = vmul.f32 %v1167, %v942
        %v1231 = vmul.f32 %v1167, %v943
        %v1232 = vadd.f32 %v1100, %v1168
        %v1233 = vadd.f32 %v1101, %v1169
        %v1234 = vadd.f32 %v1102, %v1170
        %v1235 = vadd.f32 %v1103, %v1171
        %v1236 = vadd.f32 %v1104, %v1172
        %v1237 = vadd.f32 %v1105, %v1173
        %v1238 = vadd.f32 %v1106, %v1174
        %v1239 = vadd.f32 %v1107, %v1175
        %v1240 = vadd.f32 %v1108, %v1176
        %v1241 = vadd.f32 %v1109, %v1177
        %v1242 = vadd.f32 %v1110, %v1178
        %v1243 = vadd.f32 %v1111, %v1179
        %v1244 = vadd.f32 %v1112, %v1180
        %v1245 = vadd.f32 %v1113, %v1181
        %v1246 = vadd.f32 %v1114, %v1182
        %v1247 = vadd.f32 %v1115, %v1183
        %v1248 = vadd.f32 %v1116, %v1184
        %v1249 = vadd.f32 %v1117, %v1185
        %v1250 = vadd.f32 %v1118, %v1186
        %v1251 = vadd.f32 %v1119, %v1187
        %v1252 = vadd.f32 %v1120, %v1188
        %v1253 = vadd.f32 %v1121, %v1189
        %v1254 = vadd.f32 %v1122, %v1190
        %v1255 = vadd.f32 %v1123, %v1191
        %v1256 = vadd.f32 %v1124, %v1192
        %v1257 = vadd.f32 %v1125, %v1193
        %v1258 = vadd.f32 %v1126, %v1194
        %v1259 = vadd.f32 %v1127, %v1195
        %v1260 = vadd.f32 %v1128, %v1196
        %v1261 = vadd.f32 %v1129, %v1197
        %v1262 = vadd.f32 %v1130, %v1198
        %v1263 = vadd.f32 %v1131, %v1199
        %v1264 = vadd.f32 %v1132, %v1200
        %v1265 = vadd.f32 %v1133, %v1201
        %v1266 = vadd.f32 %v1134, %v1202
        %v1267 = vadd.f32 %v1135, %v1203
        %v1268 = vadd.f32 %v1136, %v1204
        %v1269 = vadd.f32 %v1137, %v1205
        %v1270 = vadd.f32 %v1138, %v1206
        %v1271 = vadd.f32 %v1139, %v1207
        %v1272 = vadd.f32 %v1140, %v1208
        %v1273 = vadd.f32 %v1141, %v1209
        %v1274 = vadd.f32 %v1142, %v1210
        %v1275 = vadd.f32 %v1143, %v1211
        %v1276 = vadd.f32 %v1144, %v1212
        %v1277 = vadd.f32 %v1145, %v1213
        %v1278 = vadd.f32 %v1146, %v1214
        %v1279 = vadd.f32 %v1147, %v1215
        %v1280 = vadd.f32 %v1148, %v1216
        %v1281 = vadd.f32 %v1149, %v1217
        %v1282 = vadd.f32 %v1150, %v1218
        %v1283 = vadd.f32 %v1151, %v1219
        %v1284 = vadd.f32 %v1152, %v1220
        %v1285 = vadd.f32 %v1153, %v1221
        %v1286 = vadd.f32 %v1154, %v1222
        %v1287 = vadd.f32 %v1155, %v1223
        %v1288 = vadd.f32 %v1156, %v1224
        %v1289 = vadd.f32 %v1157, %v1225
        %v1290 = vadd.f32 %v1158, %v1226
        %v1291 = vadd.f32 %v1159, %v1227
        %v1292 = vadd.f32 %v1160, %v1228
        %v1293 = vadd.f32 %v1161, %v1229
        %v1294 = vadd.f32 %v1162, %v1230
        %v1295 = vadd.f32 %v1163, %v1231
        %v1296 = vlaneseq
        %v1297 = vshrl.u32 %v1296, 7
        %v1298 = vsub.s32 1, %v1297
        %v1299 = vrot.slane %v861, %v1298
        %v1300 = vmul.f32 %v1299, %v874
        %v1301 = vmul.f32 %v1299, %v875
        %v1302 = vmul.f32 %v1299, %v876
        %v1303 = vmul.f32 %v1299, %v877
        %v1304 = vmul.f32 %v1299, %v878
        %v1305 = vmul.f32 %v1299, %v879
        %v1306 = vmul.f32 %v1299, %v880
        %v1307 = vmul.f32 %v1299, %v881
        %v1308 = vmul.f32 %v1299, %v884
        %v1309 = vmul.f32 %v1299, %v885
        %v1310 = vmul.f32 %v1299, %v886
        %v1311 = vmul.f32 %v1299, %v887
        %v1312 = vmul.f32 %v1299, %v888
        %v1313 = vmul.f32 %v1299, %v889
        %v1314 = vmul.f32 %v1299, %v890
        %v1315 = vmul.f32 %v1299, %v891
        %v1316 = vmul.f32 %v1299, %v894
        %v1317 = vmul.f32 %v1299, %v895
        %v1318 = vmul.f32 %v1299, %v896
        %v1319 = vmul.f32 %v1299, %v897
        %v1320 = vmul.f32 %v1299, %v898
        %v1321 = vmul.f32 %v1299, %v899
        %v1322 = vmul.f32 %v1299, %v900
        %v1323 = vmul.f32 %v1299, %v901
        %v1324 = vmul.f32 %v1299, %v904
        %v1325 = vmul.f32 %v1299, %v905
        %v1326 = vmul.f32 %v1299, %v906
        %v1327 = vmul.f32 %v1299, %v907
        %v1328 = vmul.f32 %v1299, %v908
        %v1329 = vmul.f32 %v1299, %v909
        %v1330 = vmul.f32 %v1299, %v910
        %v1331 = vmul.f32 %v1299, %v911
        %v1332 = vmul.f32 %v1299, %v914
        %v1333 = vmul.f32 %v1299, %v915
        %v1334 = vmul.f32 %v1299, %v916
        %v1335 = vmul.f32 %v1299, %v917
        %v1336 = vmul.f32 %v1299, %v918
        %v1337 = vmul.f32 %v1299, %v919
        %v1338 = vmul.f32 %v1299, %v920
        %v1339 = vmul.f32 %v1299, %v921
        %v1340 = vmul.f32 %v1299, %v924
        %v1341 = vmul.f32 %v1299, %v925
        %v1342 = vmul.f32 %v1299, %v926
        %v1343 = vmul.f32 %v1299, %v927
        %v1344 = vmul.f32 %v1299, %v928
        %v1345 = vmul.f32 %v1299, %v929
        %v1346 = vmul.f32 %v1299, %v930
        %v1347 = vmul.f32 %v1299, %v931
        %v1348 = vmul.f32 %v1299, %v934
        %v1349 = vmul.f32 %v1299, %v935
        %v1350 = vmul.f32 %v1299, %v936
        %v1351 = vmul.f32 %v1299, %v937
        %v1352 = vmul.f32 %v1299, %v938
        %v1353 = vmul.f32 %v1299, %v939
        %v1354 = vmul.f32 %v1299, %v940
        %v1355 = vmul.f32 %v1299, %v941
        %v1356 = vmul.f32 %v1299, %v944
        %v1357 = vmul.f32 %v1299, %v945
        %v1358 = vmul.f32 %v1299, %v946
        %v1359 = vmul.f32 %v1299, %v947
        %v1360 = vmul.f32 %v1299, %v948
        %v1361 = vmul.f32 %v1299, %v949
        %v1362 = vmul.f32 %v1299, %v950
        %v1363 = vmul.f32 %v1299, %v951
        %v1364 = vadd.f32 %v1232, %v1300
        %v1365 = vadd.f32 %v1233, %v1301
        %v1366 = vadd.f32 %v1234, %v1302
        %v1367 = vadd.f32 %v1235, %v1303
        %v1368 = vadd.f32 %v1236, %v1304
        %v1369 = vadd.f32 %v1237, %v1305
        %v1370 = vadd.f32 %v1238, %v1306
        %v1371 = vadd.f32 %v1239, %v1307
        %v1372 = vadd.f32 %v1240, %v1308
        %v1373 = vadd.f32 %v1241, %v1309
        %v1374 = vadd.f32 %v1242, %v1310
        %v1375 = vadd.f32 %v1243, %v1311
        %v1376 = vadd.f32 %v1244, %v1312
        %v1377 = vadd.f32 %v1245, %v1313
        %v1378 = vadd.f32 %v1246, %v1314
        %v1379 = vadd.f32 %v1247, %v1315
        %v1380 = vadd.f32 %v1248, %v1316
        %v1381 = vadd.f32 %v1249, %v1317
        %v1382 = vadd.f32 %v1250, %v1318
        %v1383 = vadd.f32 %v1251, %v1319
        %v1384 = vadd.f32 %v1252, %v1320
        %v1385 = vadd.f32 %v1253, %v1321
        %v1386 = vadd.f32 %v1254, %v1322
        %v1387 = vadd.f32 %v1255, %v1323
        %v1388 = vadd.f32 %v1256, %v1324
        %v1389 = vadd.f32 %v1257, %v1325
        %v1390 = vadd.f32 %v1258, %v1326
        %v1391 = vadd.f32 %v1259, %v1327
        %v1392 = vadd.f32 %v1260, %v1328
        %v1393 = vadd.f32 %v1261, %v1329
        %v1394 = vadd.f32 %v1262, %v1330
        %v1395 = vadd.f32 %v1263, %v1331
        %v1396 = vadd.f32 %v1264, %v1332
        %v1397 = vadd.f32 %v1265, %v1333
        %v1398 = vadd.f32 %v1266, %v1334
        %v1399 = vadd.f32 %v1267, %v1335
        %v1400 = vadd.f32 %v1268, %v1336
        %v1401 = vadd.f32 %v1269, %v1337
        %v1402 = vadd.f32 %v1270, %v1338
        %v1403 = vadd.f32 %v1271, %v1339
        %v1404 = vadd.f32 %v1272, %v1340
        %v1405 = vadd.f32 %v1273, %v1341
        %v1406 = vadd.f32 %v1274, %v1342
        %v1407 = vadd.f32 %v1275, %v1343
        %v1408 = vadd.f32 %v1276, %v1344
        %v1409 = vadd.f32 %v1277, %v1345
        %v1410 = vadd.f32 %v1278, %v1346
        %v1411 = vadd.f32 %v1279, %v1347
        %v1412 = vadd.f32 %v1280, %v1348
        %v1413 = vadd.f32 %v1281, %v1349
        %v1414 = vadd.f32 %v1282, %v1350
        %v1415 = vadd.f32 %v1283, %v1351
        %v1416 = vadd.f32 %v1284, %v1352
        %v1417 = vadd.f32 %v1285, %v1353
        %v1418 = vadd.f32 %v1286, %v1354
        %v1419 = vadd.f32 %v1287, %v1355
        %v1420 = vadd.f32 %v1288, %v1356
        %v1421 = vadd.f32 %v1289, %v1357
        %v1422 = vadd.f32 %v1290, %v1358
        %v1423 = vadd.f32 %v1291, %v1359
        %v1424 = vadd.f32 %v1292, %v1360
        %v1425 = vadd.f32 %v1293, %v1361
        %v1426 = vadd.f32 %v1294, %v1362
        %v1427 = vadd.f32 %v1295, %v1363
        %v1428 = vlaneseq
        %v1429 = vshrl.u32 %v1428, 7
        %v1430 = vsub.s32 4, %v1429
        %v1431 = vrot.slane %v861, %v1430
        %v1432 = vmul.f32 %v1431, %v875
        %v1433 = vmul.f32 %v1431, %v876
        %v1434 = vmul.f32 %v1431, %v877
        %v1435 = vmul.f32 %v1431, %v878
        %v1436 = vmul.f32 %v1431, %v879
        %v1437 = vmul.f32 %v1431, %v880
        %v1438 = vmul.f32 %v1431, %v881
        %v1439 = vmul.f32 %v1431, %v882
        %v1440 = vmul.f32 %v1431, %v885
        %v1441 = vmul.f32 %v1431, %v886
        %v1442 = vmul.f32 %v1431, %v887
        %v1443 = vmul.f32 %v1431, %v888
        %v1444 = vmul.f32 %v1431, %v889
        %v1445 = vmul.f32 %v1431, %v890
        %v1446 = vmul.f32 %v1431, %v891
        %v1447 = vmul.f32 %v1431, %v892
        %v1448 = vmul.f32 %v1431, %v895
        %v1449 = vmul.f32 %v1431, %v896
        %v1450 = vmul.f32 %v1431, %v897
        %v1451 = vmul.f32 %v1431, %v898
        %v1452 = vmul.f32 %v1431, %v899
        %v1453 = vmul.f32 %v1431, %v900
        %v1454 = vmul.f32 %v1431, %v901
        %v1455 = vmul.f32 %v1431, %v902
        %v1456 = vmul.f32 %v1431, %v905
        %v1457 = vmul.f32 %v1431, %v906
        %v1458 = vmul.f32 %v1431, %v907
        %v1459 = vmul.f32 %v1431, %v908
        %v1460 = vmul.f32 %v1431, %v909
        %v1461 = vmul.f32 %v1431, %v910
        %v1462 = vmul.f32 %v1431, %v911
        %v1463 = vmul.f32 %v1431, %v912
        %v1464 = vmul.f32 %v1431, %v915
        %v1465 = vmul.f32 %v1431, %v916
        %v1466 = vmul.f32 %v1431, %v917
        %v1467 = vmul.f32 %v1431, %v918
        %v1468 = vmul.f32 %v1431, %v919
        %v1469 = vmul.f32 %v1431, %v920
        %v1470 = vmul.f32 %v1431, %v921
        %v1471 = vmul.f32 %v1431, %v922
        %v1472 = vmul.f32 %v1431, %v925
        %v1473 = vmul.f32 %v1431, %v926
        %v1474 = vmul.f32 %v1431, %v927
        %v1475 = vmul.f32 %v1431, %v928
        %v1476 = vmul.f32 %v1431, %v929
        %v1477 = vmul.f32 %v1431, %v930
        %v1478 = vmul.f32 %v1431, %v931
        %v1479 = vmul.f32 %v1431, %v932
        %v1480 = vmul.f32 %v1431, %v935
        %v1481 = vmul.f32 %v1431, %v936
        %v1482 = vmul.f32 %v1431, %v937
        %v1483 = vmul.f32 %v1431, %v938
        %v1484 = vmul.f32 %v1431, %v939
        %v1485 = vmul.f32 %v1431, %v940
        %v1486 = vmul.f32 %v1431, %v941
        %v1487 = vmul.f32 %v1431, %v942
        %v1488 = vmul.f32 %v1431, %v945
        %v1489 = vmul.f32 %v1431, %v946
        %v1490 = vmul.f32 %v1431, %v947
        %v1491 = vmul.f32 %v1431, %v948
        %v1492 = vmul.f32 %v1431, %v949
        %v1493 = vmul.f32 %v1431, %v950
        %v1494 = vmul.f32 %v1431, %v951
        %v1495 = vmul.f32 %v1431, %v952
        %v1496 = vadd.f32 %v1364, %v1432
        %v1497 = vadd.f32 %v1365, %v1433
        %v1498 = vadd.f32 %v1366, %v1434
        %v1499 = vadd.f32 %v1367, %v1435
        %v1500 = vadd.f32 %v1368, %v1436
        %v1501 = vadd.f32 %v1369, %v1437
        %v1502 = vadd.f32 %v1370, %v1438
        %v1503 = vadd.f32 %v1371, %v1439
        %v1504 = vadd.f32 %v1372, %v1440
        %v1505 = vadd.f32 %v1373, %v1441
        %v1506 = vadd.f32 %v1374, %v1442
        %v1507 = vadd.f32 %v1375, %v1443
        %v1508 = vadd.f32 %v1376, %v1444
        %v1509 = vadd.f32 %v1377, %v1445
        %v1510 = vadd.f32 %v1378, %v1446
        %v1511 = vadd.f32 %v1379, %v1447
        %v1512 = vadd.f32 %v1380, %v1448
        %v1513 = vadd.f32 %v1381, %v1449
        %v1514 = vadd.f32 %v1382, %v1450
        %v1515 = vadd.f32 %v1383, %v1451
        %v1516 = vadd.f32 %v1384, %v1452
        %v1517 = vadd.f32 %v1385, %v1453
        %v1518 = vadd.f32 %v1386, %v1454
        %v1519 = vadd.f32 %v1387, %v1455
        %v1520 = vadd.f32 %v1388, %v1456
        %v1521 = vadd.f32 %v1389, %v1457
        %v1522 = vadd.f32 %v1390, %v1458
        %v1523 = vadd.f32 %v1391, %v1459
        %v1524 = vadd.f32 %v1392, %v1460
        %v1525 = vadd.f32 %v1393, %v1461
        %v1526 = vadd.f32 %v1394, %v1462
        %v1527 = vadd.f32 %v1395, %v1463
        %v1528 = vadd.f32 %v1396, %v1464
        %v1529 = vadd.f32 %v1397, %v1465
        %v1530 = vadd.f32 %v1398, %v1466
        %v1531 = vadd.f32 %v1399, %v1467
        %v1532 = vadd.f32 %v1400, %v1468
        %v1533 = vadd.f32 %v1401, %v1469
        %v1534 = vadd.f32 %v1402, %v1470
        %v1535 = vadd.f32 %v1403, %v1471
        %v1536 = vadd.f32 %v1404, %v1472
        %v1537 = vadd.f32 %v1405, %v1473
        %v1538 = vadd.f32 %v1406, %v1474
        %v1539 = vadd.f32 %v1407, %v1475
        %v1540 = vadd.f32 %v1408, %v1476
        %v1541 = vadd.f32 %v1409, %v1477
        %v1542 = vadd.f32 %v1410, %v1478
        %v1543 = vadd.f32 %v1411, %v1479
        %v1544 = vadd.f32 %v1412, %v1480
        %v1545 = vadd.f32 %v1413, %v1481
        %v1546 = vadd.f32 %v1414, %v1482
        %v1547 = vadd.f32 %v1415, %v1483
        %v1548 = vadd.f32 %v1416, %v1484
        %v1549 = vadd.f32 %v1417, %v1485
        %v1550 = vadd.f32 %v1418, %v1486
        %v1551 = vadd.f32 %v1419, %v1487
        %v1552 = vadd.f32 %v1420, %v1488
        %v1553 = vadd.f32 %v1421, %v1489
        %v1554 = vadd.f32 %v1422, %v1490
        %v1555 = vadd.f32 %v1423, %v1491
        %v1556 = vadd.f32 %v1424, %v1492
        %v1557 = vadd.f32 %v1425, %v1493
        %v1558 = vadd.f32 %v1426, %v1494
        %v1559 = vadd.f32 %v1427, %v1495
        %v1560 = vlaneseq
        %v1561 = vshrl.u32 %v1560, 7
        %v1562 = vsub.s32 7, %v1561
        %v1563 = vrot.slane %v861, %v1562
        %v1564 = vmul.f32 %v1563, %v876
        %v1565 = vmul.f32 %v1563, %v877
        %v1566 = vmul.f32 %v1563, %v878
        %v1567 = vmul.f32 %v1563, %v879
        %v1568 = vmul.f32 %v1563, %v880
        %v1569 = vmul.f32 %v1563, %v881
        %v1570 = vmul.f32 %v1563, %v882
        %v1571 = vmul.f32 %v1563, %v883
        %v1572 = vmul.f32 %v1563, %v886
        %v1573 = vmul.f32 %v1563, %v887
        %v1574 = vmul.f32 %v1563, %v888
        %v1575 = vmul.f32 %v1563, %v889
        %v1576 = vmul.f32 %v1563, %v890
        %v1577 = vmul.f32 %v1563, %v891
        %v1578 = vmul.f32 %v1563, %v892
        %v1579 = vmul.f32 %v1563, %v893
        %v1580 = vmul.f32 %v1563, %v896
        %v1581 = vmul.f32 %v1563, %v897
        %v1582 = vmul.f32 %v1563, %v898
        %v1583 = vmul.f32 %v1563, %v899
        %v1584 = vmul.f32 %v1563, %v900
        %v1585 = vmul.f32 %v1563, %v901
        %v1586 = vmul.f32 %v1563, %v902
        %v1587 = vmul.f32 %v1563, %v903
        %v1588 = vmul.f32 %v1563, %v906
        %v1589 = vmul.f32 %v1563, %v907
        %v1590 = vmul.f32 %v1563, %v908
        %v1591 = vmul.f32 %v1563, %v909
        %v1592 = vmul.f32 %v1563, %v910
        %v1593 = vmul.f32 %v1563, %v911
        %v1594 = vmul.f32 %v1563, %v912
        %v1595 = vmul.f32 %v1563, %v913
        %v1596 = vmul.f32 %v1563, %v916
        %v1597 = vmul.f32 %v1563, %v917
        %v1598 = vmul.f32 %v1563, %v918
        %v1599 = vmul.f32 %v1563, %v919
        %v1600 = vmul.f32 %v1563, %v920
        %v1601 = vmul.f32 %v1563, %v921
        %v1602 = vmul.f32 %v1563, %v922
        %v1603 = vmul.f32 %v1563, %v923
        %v1604 = vmul.f32 %v1563, %v926
        %v1605 = vmul.f32 %v1563, %v927
        %v1606 = vmul.f32 %v1563, %v928
        %v1607 = vmul.f32 %v1563, %v929
        %v1608 = vmul.f32 %v1563, %v930
        %v1609 = vmul.f32 %v1563, %v931
        %v1610 = vmul.f32 %v1563, %v932
        %v1611 = vmul.f32 %v1563, %v933
        %v1612 = vmul.f32 %v1563, %v936
        %v1613 = vmul.f32 %v1563, %v937
        %v1614 = vmul.f32 %v1563, %v938
        %v1615 = vmul.f32 %v1563, %v939
        %v1616 = vmul.f32 %v1563, %v940
        %v1617 = vmul.f32 %v1563, %v941
        %v1618 = vmul.f32 %v1563, %v942
        %v1619 = vmul.f32 %v1563, %v943
        %v1620 = vmul.f32 %v1563, %v946
        %v1621 = vmul.f32 %v1563, %v947
        %v1622 = vmul.f32 %v1563, %v948
        %v1623 = vmul.f32 %v1563, %v949
        %v1624 = vmul.f32 %v1563, %v950
        %v1625 = vmul.f32 %v1563, %v951
        %v1626 = vmul.f32 %v1563, %v952
        %v1627 = vmul.f32 %v1563, %v953
        %v1628 = vadd.f32 %v1496, %v1564
        %v1629 = vadd.f32 %v1497, %v1565
        %v1630 = vadd.f32 %v1498, %v1566
        %v1631 = vadd.f32 %v1499, %v1567
        %v1632 = vadd.f32 %v1500, %v1568
        %v1633 = vadd.f32 %v1501, %v1569
        %v1634 = vadd.f32 %v1502, %v1570
        %v1635 = vadd.f32 %v1503, %v1571
        %v1636 = vadd.f32 %v1504, %v1572
        %v1637 = vadd.f32 %v1505, %v1573
        %v1638 = vadd.f32 %v1506, %v1574
        %v1639 = vadd.f32 %v1507, %v1575
        %v1640 = vadd.f32 %v1508, %v1576
        %v1641 = vadd.f32 %v1509, %v1577
        %v1642 = vadd.f32 %v1510, %v1578
        %v1643 = vadd.f32 %v1511, %v1579
        %v1644 = vadd.f32 %v1512, %v1580
        %v1645 = vadd.f32 %v1513, %v1581
        %v1646 = vadd.f32 %v1514, %v1582
        %v1647 = vadd.f32 %v1515, %v1583
        %v1648 = vadd.f32 %v1516, %v1584
        %v1649 = vadd.f32 %v1517, %v1585
        %v1650 = vadd.f32 %v1518, %v1586
        %v1651 = vadd.f32 %v1519, %v1587
        %v1652 = vadd.f32 %v1520, %v1588
        %v1653 = vadd.f32 %v1521, %v1589
        %v1654 = vadd.f32 %v1522, %v1590
        %v1655 = vadd.f32 %v1523, %v1591
        %v1656 = vadd.f32 %v1524, %v1592
        %v1657 = vadd.f32 %v1525, %v1593
        %v1658 = vadd.f32 %v1526, %v1594
        %v1659 = vadd.f32 %v1527, %v1595
        %v1660 = vadd.f32 %v1528, %v1596
        %v1661 = vadd.f32 %v1529, %v1597
        %v1662 = vadd.f32 %v1530, %v1598
        %v1663 = vadd.f32 %v1531, %v1599
        %v1664 = vadd.f32 %v1532, %v1600
        %v1665 = vadd.f32 %v1533, %v1601
        %v1666 = vadd.f32 %v1534, %v1602
        %v1667 = vadd.f32 %v1535, %v1603
        %v1668 = vadd.f32 %v1536, %v1604
        %v1669 = vadd.f32 %v1537, %v1605
        %v1670 = vadd.f32 %v1538, %v1606
        %v1671 = vadd.f32 %v1539, %v1607
        %v1672 = vadd.f32 %v1540, %v1608
        %v1673 = vadd.f32 %v1541, %v1609
        %v1674 = vadd.f32 %v1542, %v1610
        %v1675 = vadd.f32 %v1543, %v1611
        %v1676 = vadd.f32 %v1544, %v1612
        %v1677 = vadd.f32 %v1545, %v1613
        %v1678 = vadd.f32 %v1546, %v1614
        %v1679 = vadd.f32 %v1547, %v1615
        %v1680 = vadd.f32 %v1548, %v1616
        %v1681 = vadd.f32 %v1549, %v1617
        %v1682 = vadd.f32 %v1550, %v1618
        %v1683 = vadd.f32 %v1551, %v1619
        %v1684 = vadd.f32 %v1552, %v1620
        %v1685 = vadd.f32 %v1553, %v1621
        %v1686 = vadd.f32 %v1554, %v1622
        %v1687 = vadd.f32 %v1555, %v1623
        %v1688 = vadd.f32 %v1556, %v1624
        %v1689 = vadd.f32 %v1557, %v1625
        %v1690 = vadd.f32 %v1558, %v1626
        %v1691 = vadd.f32 %v1559, %v1627
        %v1692 = vlaneseq
        %v1693 = vshrl.u32 %v1692, 7
        %v1694 = vsub.s32 2, %v1693
        %v1695 = vrot.slane %v862, %v1694
        %v1696 = vmul.f32 %v1695, %v884
        %v1697 = vmul.f32 %v1695, %v885
        %v1698 = vmul.f32 %v1695, %v886
        %v1699 = vmul.f32 %v1695, %v887
        %v1700 = vmul.f32 %v1695, %v888
        %v1701 = vmul.f32 %v1695, %v889
        %v1702 = vmul.f32 %v1695, %v890
        %v1703 = vmul.f32 %v1695, %v891
        %v1704 = vmul.f32 %v1695, %v894
        %v1705 = vmul.f32 %v1695, %v895
        %v1706 = vmul.f32 %v1695, %v896
        %v1707 = vmul.f32 %v1695, %v897
        %v1708 = vmul.f32 %v1695, %v898
        %v1709 = vmul.f32 %v1695, %v899
        %v1710 = vmul.f32 %v1695, %v900
        %v1711 = vmul.f32 %v1695, %v901
        %v1712 = vmul.f32 %v1695, %v904
        %v1713 = vmul.f32 %v1695, %v905
        %v1714 = vmul.f32 %v1695, %v906
        %v1715 = vmul.f32 %v1695, %v907
        %v1716 = vmul.f32 %v1695, %v908
        %v1717 = vmul.f32 %v1695, %v909
        %v1718 = vmul.f32 %v1695, %v910
        %v1719 = vmul.f32 %v1695, %v911
        %v1720 = vmul.f32 %v1695, %v914
        %v1721 = vmul.f32 %v1695, %v915
        %v1722 = vmul.f32 %v1695, %v916
        %v1723 = vmul.f32 %v1695, %v917
        %v1724 = vmul.f32 %v1695, %v918
        %v1725 = vmul.f32 %v1695, %v919
        %v1726 = vmul.f32 %v1695, %v920
        %v1727 = vmul.f32 %v1695, %v921
        %v1728 = vmul.f32 %v1695, %v924
        %v1729 = vmul.f32 %v1695, %v925
        %v1730 = vmul.f32 %v1695, %v926
        %v1731 = vmul.f32 %v1695, %v927
        %v1732 = vmul.f32 %v1695, %v928
        %v1733 = vmul.f32 %v1695, %v929
        %v1734 = vmul.f32 %v1695, %v930
        %v1735 = vmul.f32 %v1695, %v931
        %v1736 = vmul.f32 %v1695, %v934
        %v1737 = vmul.f32 %v1695, %v935
        %v1738 = vmul.f32 %v1695, %v936
        %v1739 = vmul.f32 %v1695, %v937
        %v1740 = vmul.f32 %v1695, %v938
        %v1741 = vmul.f32 %v1695, %v939
        %v1742 = vmul.f32 %v1695, %v940
        %v1743 = vmul.f32 %v1695, %v941
        %v1744 = vmul.f32 %v1695, %v944
        %v1745 = vmul.f32 %v1695, %v945
        %v1746 = vmul.f32 %v1695, %v946
        %v1747 = vmul.f32 %v1695, %v947
        %v1748 = vmul.f32 %v1695, %v948
        %v1749 = vmul.f32 %v1695, %v949
        %v1750 = vmul.f32 %v1695, %v950
        %v1751 = vmul.f32 %v1695, %v951
        %v1752 = vmul.f32 %v1695, %v954
        %v1753 = vmul.f32 %v1695, %v955
        %v1754 = vmul.f32 %v1695, %v956
        %v1755 = vmul.f32 %v1695, %v957
        %v1756 = vmul.f32 %v1695, %v958
        %v1757 = vmul.f32 %v1695, %v959
        %v1758 = vmul.f32 %v1695, %v960
        %v1759 = vmul.f32 %v1695, %v961
        %v1760 = vadd.f32 %v1628, %v1696
        %v1761 = vadd.f32 %v1629, %v1697
        %v1762 = vadd.f32 %v1630, %v1698
        %v1763 = vadd.f32 %v1631, %v1699
        %v1764 = vadd.f32 %v1632, %v1700
        %v1765 = vadd.f32 %v1633, %v1701
        %v1766 = vadd.f32 %v1634, %v1702
        %v1767 = vadd.f32 %v1635, %v1703
        %v1768 = vadd.f32 %v1636, %v1704
        %v1769 = vadd.f32 %v1637, %v1705
        %v1770 = vadd.f32 %v1638, %v1706
        %v1771 = vadd.f32 %v1639, %v1707
        %v1772 = vadd.f32 %v1640, %v1708
        %v1773 = vadd.f32 %v1641, %v1709
        %v1774 = vadd.f32 %v1642, %v1710
        %v1775 = vadd.f32 %v1643, %v1711
        %v1776 = vadd.f32 %v1644, %v1712
        %v1777 = vadd.f32 %v1645, %v1713
        %v1778 = vadd.f32 %v1646, %v1714
        %v1779 = vadd.f32 %v1647, %v1715
        %v1780 = vadd.f32 %v1648, %v1716
        %v1781 = vadd.f32 %v1649, %v1717
        %v1782 = vadd.f32 %v1650, %v1718
        %v1783 = vadd.f32 %v1651, %v1719
        %v1784 = vadd.f32 %v1652, %v1720
        %v1785 = vadd.f32 %v1653, %v1721
        %v1786 = vadd.f32 %v1654, %v1722
        %v1787 = vadd.f32 %v1655, %v1723
        %v1788 = vadd.f32 %v1656, %v1724
        %v1789 = vadd.f32 %v1657, %v1725
        %v1790 = vadd.f32 %v1658, %v1726
        %v1791 = vadd.f32 %v1659, %v1727
        %v1792 = vadd.f32 %v1660, %v1728
        %v1793 = vadd.f32 %v1661, %v1729
        %v1794 = vadd.f32 %v1662, %v1730
        %v1795 = vadd.f32 %v1663, %v1731
        %v1796 = vadd.f32 %v1664, %v1732
        %v1797 = vadd.f32 %v1665, %v1733
        %v1798 = vadd.f32 %v1666, %v1734
        %v1799 = vadd.f32 %v1667, %v1735
        %v1800 = vadd.f32 %v1668, %v1736
        %v1801 = vadd.f32 %v1669, %v1737
        %v1802 = vadd.f32 %v1670, %v1738
        %v1803 = vadd.f32 %v1671, %v1739
        %v1804 = vadd.f32 %v1672, %v1740
        %v1805 = vadd.f32 %v1673, %v1741
        %v1806 = vadd.f32 %v1674, %v1742
        %v1807 = vadd.f32 %v1675, %v1743
        %v1808 = vadd.f32 %v1676, %v1744
        %v1809 = vadd.f32 %v1677, %v1745
        %v1810 = vadd.f32 %v1678, %v1746
        %v1811 = vadd.f32 %v1679, %v1747
        %v1812 = vadd.f32 %v1680, %v1748
        %v1813 = vadd.f32 %v1681, %v1749
        %v1814 = vadd.f32 %v1682, %v1750
        %v1815 = vadd.f32 %v1683, %v1751
        %v1816 = vadd.f32 %v1684, %v1752
        %v1817 = vadd.f32 %v1685, %v1753
        %v1818 = vadd.f32 %v1686, %v1754
        %v1819 = vadd.f32 %v1687, %v1755
        %v1820 = vadd.f32 %v1688, %v1756
        %v1821 = vadd.f32 %v1689, %v1757
        %v1822 = vadd.f32 %v1690, %v1758
        %v1823 = vadd.f32 %v1691, %v1759
        %v1824 = vlaneseq
        %v1825 = vshrl.u32 %v1824, 7
        %v1826 = vsub.s32 5, %v1825
        %v1827 = vrot.slane %v862, %v1826
        %v1828 = vmul.f32 %v1827, %v885
        %v1829 = vmul.f32 %v1827, %v886
        %v1830 = vmul.f32 %v1827, %v887
        %v1831 = vmul.f32 %v1827, %v888
        %v1832 = vmul.f32 %v1827, %v889
        %v1833 = vmul.f32 %v1827, %v890
        %v1834 = vmul.f32 %v1827, %v891
        %v1835 = vmul.f32 %v1827, %v892
        %v1836 = vmul.f32 %v1827, %v895
        %v1837 = vmul.f32 %v1827, %v896
        %v1838 = vmul.f32 %v1827, %v897
        %v1839 = vmul.f32 %v1827, %v898
        %v1840 = vmul.f32 %v1827, %v899
        %v1841 = vmul.f32 %v1827, %v900
        %v1842 = vmul.f32 %v1827, %v901
        %v1843 = vmul.f32 %v1827, %v902
        %v1844 = vmul.f32 %v1827, %v905
        %v1845 = vmul.f32 %v1827, %v906
        %v1846 = vmul.f32 %v1827, %v907
        %v1847 = vmul.f32 %v1827, %v908
        %v1848 = vmul.f32 %v1827, %v909
        %v1849 = vmul.f32 %v1827, %v910
        %v1850 = vmul.f32 %v1827, %v911
        %v1851 = vmul.f32 %v1827, %v912
        %v1852 = vmul.f32 %v1827, %v915
        %v1853 = vmul.f32 %v1827, %v916
        %v1854 = vmul.f32 %v1827, %v917
        %v1855 = vmul.f32 %v1827, %v918
        %v1856 = vmul.f32 %v1827, %v919
        %v1857 = vmul.f32 %v1827, %v920
        %v1858 = vmul.f32 %v1827, %v921
        %v1859 = vmul.f32 %v1827, %v922
        %v1860 = vmul.f32 %v1827, %v925
        %v1861 = vmul.f32 %v1827, %v926
        %v1862 = vmul.f32 %v1827, %v927
        %v1863 = vmul.f32 %v1827, %v928
        %v1864 = vmul.f32 %v1827, %v929
        %v1865 = vmul.f32 %v1827, %v930
        %v1866 = vmul.f32 %v1827, %v931
        %v1867 = vmul.f32 %v1827, %v932
        %v1868 = vmul.f32 %v1827, %v935
        %v1869 = vmul.f32 %v1827, %v936
        %v1870 = vmul.f32 %v1827, %v937
        %v1871 = vmul.f32 %v1827, %v938
        %v1872 = vmul.f32 %v1827, %v939
        %v1873 = vmul.f32 %v1827, %v940
        %v1874 = vmul.f32 %v1827, %v941
        %v1875 = vmul.f32 %v1827, %v942
        %v1876 = vmul.f32 %v1827, %v945
        %v1877 = vmul.f32 %v1827, %v946
        %v1878 = vmul.f32 %v1827, %v947
        %v1879 = vmul.f32 %v1827, %v948
        %v1880 = vmul.f32 %v1827, %v949
        %v1881 = vmul.f32 %v1827, %v950
        %v1882 = vmul.f32 %v1827, %v951
        %v1883 = vmul.f32 %v1827, %v952
        %v1884 = vmul.f32 %v1827, %v955
        %v1885 = vmul.f32 %v1827, %v956
        %v1886 = vmul.f32 %v1827, %v957
        %v1887 = vmul.f32 %v1827, %v958
        %v1888 = vmul.f32 %v1827, %v959
        %v1889 = vmul.f32 %v1827, %v960
        %v1890 = vmul.f32 %v1827, %v961
        %v1891 = vmul.f32 %v1827, %v962
        %v1892 = vadd.f32 %v1760, %v1828
        %v1893 = vadd.f32 %v1761, %v1829
        %v1894 = vadd.f32 %v1762, %v1830
        %v1895 = vadd.f32 %v1763, %v1831
        %v1896 = vadd.f32 %v1764, %v1832
        %v1897 = vadd.f32 %v1765, %v1833
        %v1898 = vadd.f32 %v1766, %v1834
        %v1899 = vadd.f32 %v1767, %v1835
        %v1900 = vadd.f32 %v1768, %v1836
        %v1901 = vadd.f32 %v1769, %v1837
        %v1902 = vadd.f32 %v1770, %v1838
        %v1903 = vadd.f32 %v1771, %v1839
        %v1904 = vadd.f32 %v1772, %v1840
        %v1905 = vadd.f32 %v1773, %v1841
        %v1906 = vadd.f32 %v1774, %v1842
        %v1907 = vadd.f32 %v1775, %v1843
        %v1908 = vadd.f32 %v1776, %v1844
        %v1909 = vadd.f32 %v1777, %v1845
        %v1910 = vadd.f32 %v1778, %v1846
        %v1911 = vadd.f32 %v1779, %v1847
        %v1912 = vadd.f32 %v1780, %v1848
        %v1913 = vadd.f32 %v1781, %v1849
        %v1914 = vadd.f32 %v1782, %v1850
        %v1915 = vadd.f32 %v1783, %v1851
        %v1916 = vadd.f32 %v1784, %v1852
        %v1917 = vadd.f32 %v1785, %v1853
        %v1918 = vadd.f32 %v1786, %v1854
        %v1919 = vadd.f32 %v1787, %v1855
        %v1920 = vadd.f32 %v1788, %v1856
        %v1921 = vadd.f32 %v1789, %v1857
        %v1922 = vadd.f32 %v1790, %v1858
        %v1923 = vadd.f32 %v1791, %v1859
        %v1924 = vadd.f32 %v1792, %v1860
        %v1925 = vadd.f32 %v1793, %v1861
        %v1926 = vadd.f32 %v1794, %v1862
        %v1927 = vadd.f32 %v1795, %v1863
        %v1928 = vadd.f32 %v1796, %v1864
        %v1929 = vadd.f32 %v1797, %v1865
        %v1930 = vadd.f32 %v1798, %v1866
        %v1931 = vadd.f32 %v1799, %v1867
        %v1932 = vadd.f32 %v1800, %v1868
        %v1933 = vadd.f32 %v1801, %v1869
        %v1934 = vadd.f32 %v1802, %v1870
        %v1935 = vadd.f32 %v1803, %v1871
        %v1936 = vadd.f32 %v1804, %v1872
        %v1937 = vadd.f32 %v1805, %v1873
        %v1938 = vadd.f32 %v1806, %v1874
        %v1939 = vadd.f32 %v1807, %v1875
        %v1940 = vadd.f32 %v1808, %v1876
        %v1941 = vadd.f32 %v1809, %v1877
        %v1942 = vadd.f32 %v1810, %v1878
        %v1943 = vadd.f32 %v1811, %v1879
        %v1944 = vadd.f32 %v1812, %v1880
        %v1945 = vadd.f32 %v1813, %v1881
        %v1946 = vadd.f32 %v1814, %v1882
        %v1947 = vadd.f32 %v1815, %v1883
        %v1948 = vadd.f32 %v1816, %v1884
        %v1949 = vadd.f32 %v1817, %v1885
        %v1950 = vadd.f32 %v1818, %v1886
        %v1951 = vadd.f32 %v1819, %v1887
        %v1952 = vadd.f32 %v1820, %v1888
        %v1953 = vadd.f32 %v1821, %v1889
        %v1954 = vadd.f32 %v1822, %v1890
        %v1955 = vadd.f32 %v1823, %v1891
        %v1956 = vlaneseq
        %v1957 = vshrl.u32 %v1956, 7
        %v1958 = vsub.s32 0, %v1957
        %v1959 = vrot.slane %v863, %v1958
        %v1960 = vmul.f32 %v1959, %v886
        %v1961 = vmul.f32 %v1959, %v887
        %v1962 = vmul.f32 %v1959, %v888
        %v1963 = vmul.f32 %v1959, %v889
        %v1964 = vmul.f32 %v1959, %v890
        %v1965 = vmul.f32 %v1959, %v891
        %v1966 = vmul.f32 %v1959, %v892
        %v1967 = vmul.f32 %v1959, %v893
        %v1968 = vmul.f32 %v1959, %v896
        %v1969 = vmul.f32 %v1959, %v897
        %v1970 = vmul.f32 %v1959, %v898
        %v1971 = vmul.f32 %v1959, %v899
        %v1972 = vmul.f32 %v1959, %v900
        %v1973 = vmul.f32 %v1959, %v901
        %v1974 = vmul.f32 %v1959, %v902
        %v1975 = vmul.f32 %v1959, %v903
        %v1976 = vmul.f32 %v1959, %v906
        %v1977 = vmul.f32 %v1959, %v907
        %v1978 = vmul.f32 %v1959, %v908
        %v1979 = vmul.f32 %v1959, %v909
        %v1980 = vmul.f32 %v1959, %v910
        %v1981 = vmul.f32 %v1959, %v911
        %v1982 = vmul.f32 %v1959, %v912
        %v1983 = vmul.f32 %v1959, %v913
        %v1984 = vmul.f32 %v1959, %v916
        %v1985 = vmul.f32 %v1959, %v917
        %v1986 = vmul.f32 %v1959, %v918
        %v1987 = vmul.f32 %v1959, %v919
        %v1988 = vmul.f32 %v1959, %v920
        %v1989 = vmul.f32 %v1959, %v921
        %v1990 = vmul.f32 %v1959, %v922
        %v1991 = vmul.f32 %v1959, %v923
        %v1992 = vmul.f32 %v1959, %v926
        %v1993 = vmul.f32 %v1959, %v927
        %v1994 = vmul.f32 %v1959, %v928
        %v1995 = vmul.f32 %v1959, %v929
        %v1996 = vmul.f32 %v1959, %v930
        %v1997 = vmul.f32 %v1959, %v931
        %v1998 = vmul.f32 %v1959, %v932
        %v1999 = vmul.f32 %v1959, %v933
        %v2000 = vmul.f32 %v1959, %v936
        %v2001 = vmul.f32 %v1959, %v937
        %v2002 = vmul.f32 %v1959, %v938
        %v2003 = vmul.f32 %v1959, %v939
        %v2004 = vmul.f32 %v1959, %v940
        %v2005 = vmul.f32 %v1959, %v941
        %v2006 = vmul.f32 %v1959, %v942
        %v2007 = vmul.f32 %v1959, %v943
        %v2008 = vmul.f32 %v1959, %v946
        %v2009 = vmul.f32 %v1959, %v947
        %v2010 = vmul.f32 %v1959, %v948
        %v2011 = vmul.f32 %v1959, %v949
        %v2012 = vmul.f32 %v1959, %v950
        %v2013 = vmul.f32 %v1959, %v951
        %v2014 = vmul.f32 %v1959, %v952
        %v2015 = vmul.f32 %v1959, %v953
        %v2016 = vmul.f32 %v1959, %v956
        %v2017 = vmul.f32 %v1959, %v957
        %v2018 = vmul.f32 %v1959, %v958
        %v2019 = vmul.f32 %v1959, %v959
        %v2020 = vmul.f32 %v1959, %v960
        %v2021 = vmul.f32 %v1959, %v961
        %v2022 = vmul.f32 %v1959, %v962
        %v2023 = vmul.f32 %v1959, %v963
        %v2024 = vadd.f32 %v1892, %v1960
        %v2025 = vadd.f32 %v1893, %v1961
        %v2026 = vadd.f32 %v1894, %v1962
        %v2027 = vadd.f32 %v1895, %v1963
        %v2028 = vadd.f32 %v1896, %v1964
        %v2029 = vadd.f32 %v1897, %v1965
        %v2030 = vadd.f32 %v1898, %v1966
        %v2031 = vadd.f32 %v1899, %v1967
        %v2032 = vadd.f32 %v1900, %v1968
        %v2033 = vadd.f32 %v1901, %v1969
        %v2034 = vadd.f32 %v1902, %v1970
        %v2035 = vadd.f32 %v1903, %v1971
        %v2036 = vadd.f32 %v1904, %v1972
        %v2037 = vadd.f32 %v1905, %v1973
        %v2038 = vadd.f32 %v1906, %v1974
        %v2039 = vadd.f32 %v1907, %v1975
        %v2040 = vadd.f32 %v1908, %v1976
        %v2041 = vadd.f32 %v1909, %v1977
        %v2042 = vadd.f32 %v1910, %v1978
        %v2043 = vadd.f32 %v1911, %v1979
        %v2044 = vadd.f32 %v1912, %v1980
        %v2045 = vadd.f32 %v1913, %v1981
        %v2046 = vadd.f32 %v1914, %v1982
        %v2047 = vadd.f32 %v1915, %v1983
        %v2048 = vadd.f32 %v1916, %v1984
        %v2049 = vadd.f32 %v1917, %v1985
        %v2050 = vadd.f32 %v1918, %v1986
        %v2051 = vadd.f32 %v1919, %v1987
        %v2052 = vadd.f32 %v1920, %v1988
        %v2053 = vadd.f32 %v1921, %v1989
        %v2054 = vadd.f32 %v1922, %v1990
        %v2055 = vadd.f32 %v1923, %v1991
        %v2056 = vadd.f32 %v1924, %v1992
        %v2057 = vadd.f32 %v1925, %v1993
        %v2058 = vadd.f32 %v1926, %v1994
        %v2059 = vadd.f32 %v1927, %v1995
        %v2060 = vadd.f32 %v1928, %v1996
        %v2061 = vadd.f32 %v1929, %v1997
        %v2062 = vadd.f32 %v1930, %v1998
        %v2063 = vadd.f32 %v1931, %v1999
        %v2064 = vadd.f32 %v1932, %v2000
        %v2065 = vadd.f32 %v1933, %v2001
        %v2066 = vadd.f32 %v1934, %v2002
        %v2067 = vadd.f32 %v1935, %v2003
        %v2068 = vadd.f32 %v1936, %v2004
        %v2069 = vadd.f32 %v1937, %v2005
        %v2070 = vadd.f32 %v1938, %v2006
        %v2071 = vadd.f32 %v1939, %v2007
        %v2072 = vadd.f32 %v1940, %v2008
        %v2073 = vadd.f32 %v1941, %v2009
        %v2074 = vadd.f32 %v1942, %v2010
        %v2075 = vadd.f32 %v1943, %v2011
        %v2076 = vadd.f32 %v1944, %v2012
        %v2077 = vadd.f32 %v1945, %v2013
        %v2078 = vadd.f32 %v1946, %v2014
        %v2079 = vadd.f32 %v1947, %v2015
        %v2080 = vadd.f32 %v1948, %v2016
        %v2081 = vadd.f32 %v1949, %v2017
        %v2082 = vadd.f32 %v1950, %v2018
        %v2083 = vadd.f32 %v1951, %v2019
        %v2084 = vadd.f32 %v1952, %v2020
        %v2085 = vadd.f32 %v1953, %v2021
        %v2086 = vadd.f32 %v1954, %v2022
        %v2087 = vadd.f32 %v1955, %v2023
        %v2088 = vld [vmem:[#allocation2 + $0x8] sm:$0xff]
        %v2089 = vld [vmem:[#allocation2 + $0x20] sm:$0xff]
        %v2090 = vld [vmem:[#allocation2 + $0x38] sm:$0xff]
        %v2091 = vld [vmem:[#allocation2 + $0x50] sm:$0xff]
        %v2092 = vld [vmem:[#allocation2 + $0x68] sm:$0xff]
        %v2093 = vld [vmem:[#allocation2 + $0x80] sm:$0xff]
        %v2094 = vld [vmem:[#allocation2 + $0x98] sm:$0xff]
        %v2095 = vld [vmem:[#allocation2 + $0xb0] sm:$0xff]
        %v2096 = vld [vmem:[#allocation2 + $0xc8] sm:$0xff]
        %v2097 = vld [vmem:[#allocation2 + $0xe0] sm:$0xff]
        %v2098 = vld [vmem:[#allocation2 + $0xf8] sm:$0xff]
        %v2099 = vld [vmem:[#allocation2 + $0x110] sm:$0xff]
        %v2100 = vld [vmem:[#allocation2 + $0x128] sm:$0xff]
        %v2101 = vld [vmem:[#allocation2 + $0x140] sm:$0xff]
        %v2102 = vld [vmem:[#allocation2 + $0x158] sm:$0xff]
        %v2103 = vld [vmem:[#allocation2 + $0x170] sm:$0xff]
        %v2104 = vld [vmem:[#allocation2 + $0x188] sm:$0xff]
        %v2105 = vld [vmem:[#allocation2 + $0x1a0] sm:$0xff]
        %v2106 = vld [vmem:[#allocation2 + $0x1b8] sm:$0xff]
        %v2107 = vld [vmem:[#allocation2 + $0x1d0] sm:$0xff]
        %v2108 = vld [vmem:[#allocation2 + $0x1e8] sm:$0xff]
        %v2109 = vld [vmem:[#allocation2 + $0x200] sm:$0xff]
        %v2110 = vld [vmem:[#allocation2 + $0x218] sm:$0xff]
        %v2111 = vld [vmem:[#allocation2 + $0x230] sm:$0xff]
        %v2112 = vld [vmem:[#allocation2 + $0x248] sm:$0xff]
        %v2113 = vld [vmem:[#allocation2 + $0x260] sm:$0xff]
        %v2114 = vld [vmem:[#allocation2 + $0x278] sm:$0xff]
        %v2115 = vld [vmem:[#allocation2 + $0x290] sm:$0xff]
        %v2116 = vld [vmem:[#allocation2 + $0x2a8] sm:$0xff]
        %v2117 = vld [vmem:[#allocation2 + $0x2c0] sm:$0xff]
        %v2118 = vld [vmem:[#allocation2 + $0x2d8] sm:$0xff]
        %v2119 = vld [vmem:[#allocation2 + $0x2f0] sm:$0xff]
        %v2120 = vld [vmem:[#allocation2 + $0x308] sm:$0xff]
        %v2121 = vld [vmem:[#allocation2 + $0x320] sm:$0xff]
        %v2122 = vld [vmem:[#allocation2 + $0x338] sm:$0xff]
        %v2123 = vld [vmem:[#allocation2 + $0x350] sm:$0xff]
        %v2124 = vld [vmem:[#allocation2 + $0x368] sm:$0xff]
        %v2125 = vld [vmem:[#allocation2 + $0x380] sm:$0xff]
        %v2126 = vld [vmem:[#allocation2 + $0x398] sm:$0xff]
        %v2127 = vld [vmem:[#allocation2 + $0x3b0] sm:$0xff]
        %v2128 = vld [vmem:[#allocation2 + $0x3c8] sm:$0xff]
        %v2129 = vld [vmem:[#allocation2 + $0x3e0] sm:$0xff]
        %v2130 = vld [vmem:[#allocation2 + $0x3f8] sm:$0xff]
        %v2131 = vld [vmem:[#allocation2 + $0x410] sm:$0xff]
        %v2132 = vld [vmem:[#allocation2 + $0x428] sm:$0xff]
        %v2133 = vld [vmem:[#allocation2 + $0x440] sm:$0xff]
        %v2134 = vld [vmem:[#allocation2 + $0x458] sm:$0xff]
        %v2135 = vld [vmem:[#allocation2 + $0x470] sm:$0xff]
        %v2136 = vld [vmem:[#allocation2 + $0x488] sm:$0xff]
        %v2137 = vld [vmem:[#allocation2 + $0x4a0] sm:$0xff]
        %v2138 = vld [vmem:[#allocation2 + $0x4b8] sm:$0xff]
        %v2139 = vld [vmem:[#allocation2 + $0x4d0] sm:$0xff]
        %v2140 = vld [vmem:[#allocation2 + $0x4e8] sm:$0xff]
        %v2141 = vld [vmem:[#allocation2 + $0x500] sm:$0xff]
        %v2142 = vld [vmem:[#allocation2 + $0x518] sm:$0xff]
        %v2143 = vld [vmem:[#allocation2 + $0x530] sm:$0xff]
        %v2144 = vld [vmem:[#allocation2 + $0x548] sm:$0xff]
        %v2145 = vld [vmem:[#allocation2 + $0x560] sm:$0xff]
        %v2146 = vld [vmem:[#allocation2 + $0x578] sm:$0xff]
        %v2147 = vld [vmem:[#allocation2 + $0x590] sm:$0xff]
        %v2148 = vld [vmem:[#allocation2 + $0x5a8] sm:$0xff]
        %v2149 = vld [vmem:[#allocation2 + $0x5c0] sm:$0xff]
        %v2150 = vld [vmem:[#allocation2 + $0x5d8] sm:$0xff]
        %v2151 = vld [vmem:[#allocation2 + $0x5f0] sm:$0xff]
        %v2152 = vld [vmem:[#allocation2 + $0x608] sm:$0xff]
        %v2153 = vld [vmem:[#allocation2 + $0x620] sm:$0xff]
        %v2154 = vld [vmem:[#allocation2 + $0x638] sm:$0xff]
        %v2155 = vld [vmem:[#allocation2 + $0x650] sm:$0xff]
        %v2156 = vld [vmem:[#allocation2 + $0x668] sm:$0xff]
        %v2157 = vld [vmem:[#allocation2 + $0x680] sm:$0xff]
        %v2158 = vld [vmem:[#allocation2 + $0x698] sm:$0xff]
        %v2159 = vld [vmem:[#allocation2 + $0x6b0] sm:$0xff]
        %v2160 = vld [vmem:[#allocation2 + $0x6c8] sm:$0xff]
        %v2161 = vld [vmem:[#allocation2 + $0x6e0] sm:$0xff]
        %v2162 = vld [vmem:[#allocation2 + $0x6f8] sm:$0xff]
        %v2163 = vld [vmem:[#allocation2 + $0x710] sm:$0xff]
        %v2164 = vld [vmem:[#allocation2 + $0x728] sm:$0xff]
        %v2165 = vld [vmem:[#allocation2 + $0x740] sm:$0xff]
        %v2166 = vld [vmem:[#allocation2 + $0x758] sm:$0xff]
        %v2167 = vld [vmem:[#allocation2 + $0x770] sm:$0xff]
        %v2168 = vld [vmem:[#allocation2 + $0x788] sm:$0xff]
        %v2169 = vld [vmem:[#allocation2 + $0x7a0] sm:$0xff]
        %v2170 = vld [vmem:[#allocation2 + $0x7b8] sm:$0xff]
        %v2171 = vld [vmem:[#allocation2 + $0x7d0] sm:$0xff]
        %v2172 = vld [vmem:[#allocation2 + $0x7e8] sm:$0xff]
        %v2173 = vld [vmem:[#allocation2 + $0x800] sm:$0xff]
        %v2174 = vld [vmem:[#allocation2 + $0x818] sm:$0xff]
        %v2175 = vld [vmem:[#allocation2 + $0x830] sm:$0xff]
        %v2176 = vld [vmem:[#allocation2 + $0x848] sm:$0xff]
        %v2177 = vld [vmem:[#allocation2 + $0x860] sm:$0xff]
        %v2178 = vld [vmem:[#allocation2 + $0x878] sm:$0xff]
        %v2179 = vld [vmem:[#allocation2 + $0x890] sm:$0xff]
        %v2180 = vld [vmem:[#allocation2 + $0x8a8] sm:$0xff]
        %v2181 = vld [vmem:[#allocation2 + $0x8c0] sm:$0xff]
        %v2182 = vld [vmem:[#allocation2 + $0x8d8] sm:$0xff]
        %v2183 = vld [vmem:[#allocation2 + $0x8f0] sm:$0xff]
        %v2184 = vld [vmem:[#allocation2 + $0x908] sm:$0xff]
        %v2185 = vld [vmem:[#allocation2 + $0x920] sm:$0xff]
        %v2186 = vld [vmem:[#allocation2 + $0x938] sm:$0xff]
        %v2187 = vld [vmem:[#allocation2 + $0x950] sm:$0xff]
        %v2188 = vlaneseq
        %v2189 = vshrl.u32 %v2188, 7
        %v2190 = vsub.s32 1, %v2189
        %v2191 = vrot.slane %v860, %v2190
        %v2192 = vmul.f32 %v2191, %v2088
        %v2193 = vmul.f32 %v2191, %v2089
        %v2194 = vmul.f32 %v2191, %v2090
        %v2195 = vmul.f32 %v2191, %v2091
        %v2196 = vmul.f32 %v2191, %v2092
        %v2197 = vmul.f32 %v2191, %v2093
        %v2198 = vmul.f32 %v2191, %v2094
        %v2199 = vmul.f32 %v2191, %v2095
        %v2200 = vmul.f32 %v2191, %v2098
        %v2201 = vmul.f32 %v2191, %v2099
        %v2202 = vmul.f32 %v2191, %v2100
        %v2203 = vmul.f32 %v2191, %v2101
        %v2204 = vmul.f32 %v2191, %v2102
        %v2205 = vmul.f32 %v2191, %v2103
        %v2206 = vmul.f32 %v2191, %v2104
        %v2207 = vmul.f32 %v2191, %v2105
        %v2208 = vmul.f32 %v2191, %v2108
        %v2209 = vmul.f32 %v2191, %v2109
        %v2210 = vmul.f32 %v2191, %v2110
        %v2211 = vmul.f32 %v2191, %v2111
        %v2212 = vmul.f32 %v2191, %v2112
        %v2213 = vmul.f32 %v2191, %v2113
        %v2214 = vmul.f32 %v2191, %v2114
        %v2215 = vmul.f32 %v2191, %v2115
        %v2216 = vmul.f32 %v2191, %v2118
        %v2217 = vmul.f32 %v2191, %v2119
        %v2218 = vmul.f32 %v2191, %v2120
        %v2219 = vmul.f32 %v2191, %v2121
        %v2220 = vmul.f32 %v2191, %v2122
        %v2221 = vmul.f32 %v2191, %v2123
        %v2222 = vmul.f32 %v2191, %v2124
        %v2223 = vmul.f32 %v2191, %v2125
        %v2224 = vmul.f32 %v2191, %v2128
        %v2225 = vmul.f32 %v2191, %v2129
        %v2226 = vmul.f32 %v2191, %v2130
        %v2227 = vmul.f32 %v2191, %v2131
        %v2228 = vmul.f32 %v2191, %v2132
        %v2229 = vmul.f32 %v2191, %v2133
        %v2230 = vmul.f32 %v2191, %v2134
        %v2231 = vmul.f32 %v2191, %v2135
        %v2232 = vmul.f32 %v2191, %v2138
        %v2233 = vmul.f32 %v2191, %v2139
        %v2234 = vmul.f32 %v2191, %v2140
        %v2235 = vmul.f32 %v2191, %v2141
        %v2236 = vmul.f32 %v2191, %v2142
        %v2237 = vmul.f32 %v2191, %v2143
        %v2238 = vmul.f32 %v2191, %v2144
        %v2239 = vmul.f32 %v2191, %v2145
        %v2240 = vmul.f32 %v2191, %v2148
        %v2241 = vmul.f32 %v2191, %v2149
        %v2242 = vmul.f32 %v2191, %v2150
        %v2243 = vmul.f32 %v2191, %v2151
        %v2244 = vmul.f32 %v2191, %v2152
        %v2245 = vmul.f32 %v2191, %v2153
        %v2246 = vmul.f32 %v2191, %v2154
        %v2247 = vmul.f32 %v2191, %v2155
        %v2248 = vmul.f32 %v2191, %v2158
        %v2249 = vmul.f32 %v2191, %v2159
        %v2250 = vmul.f32 %v2191, %v2160
        %v2251 = vmul.f32 %v2191, %v2161
        %v2252 = vmul.f32 %v2191, %v2162
        %v2253 = vmul.f32 %v2191, %v2163
        %v2254 = vmul.f32 %v2191, %v2164
        %v2255 = vmul.f32 %v2191, %v2165
        %v2256 = vadd.f32 %v2024, %v2192
        %v2257 = vadd.f32 %v2025, %v2193
        %v2258 = vadd.f32 %v2026, %v2194
        %v2259 = vadd.f32 %v2027, %v2195
        %v2260 = vadd.f32 %v2028, %v2196
        %v2261 = vadd.f32 %v2029, %v2197
        %v2262 = vadd.f32 %v2030, %v2198
        %v2263 = vadd.f32 %v2031, %v2199
        %v2264 = vadd.f32 %v2032, %v2200
        %v2265 = vadd.f32 %v2033, %v2201
        %v2266 = vadd.f32 %v2034, %v2202
        %v2267 = vadd.f32 %v2035, %v2203
        %v2268 = vadd.f32 %v2036, %v2204
        %v2269 = vadd.f32 %v2037, %v2205
        %v2270 = vadd.f32 %v2038, %v2206
        %v2271 = vadd.f32 %v2039, %v2207
        %v2272 = vadd.f32 %v2040, %v2208
        %v2273 = vadd.f32 %v2041, %v2209
        %v2274 = vadd.f32 %v2042, %v2210
        %v2275 = vadd.f32 %v2043, %v2211
        %v2276 = vadd.f32 %v2044, %v2212
        %v2277 = vadd.f32 %v2045, %v2213
        %v2278 = vadd.f32 %v2046, %v2214
        %v2279 = vadd.f32 %v2047, %v2215
        %v2280 = vadd.f32 %v2048, %v2216
        %v2281 = vadd.f32 %v2049, %v2217
        %v2282 = vadd.f32 %v2050, %v2218
        %v2283 = vadd.f32 %v2051, %v2219
        %v2284 = vadd.f32 %v2052, %v2220
        %v2285 = vadd.f32 %v2053, %v2221
        %v2286 = vadd.f32 %v2054, %v2222
        %v2287 = vadd.f32 %v2055, %v2223
        %v2288 = vadd.f32 %v2056, %v2224
        %v2289 = vadd.f32 %v2057, %v2225
        %v2290 = vadd.f32 %v2058, %v2226
        %v2291 = vadd.f32 %v2059, %v2227
        %v2292 = vadd.f32 %v2060, %v2228
        %v2293 = vadd.f32 %v2061, %v2229
        %v2294 = vadd.f32 %v2062, %v2230
        %v2295 = vadd.f32 %v2063, %v2231
        %v2296 = vadd.f32 %v2064, %v2232
        %v2297 = vadd.f32 %v2065, %v2233
        %v2298 = vadd.f32 %v2066, %v2234
        %v2299 = vadd.f32 %v2067, %v2235
        %v2300 = vadd.f32 %v2068, %v2236
        %v2301 = vadd.f32 %v2069, %v2237
        %v2302 = vadd.f32 %v2070, %v2238
        %v2303 = vadd.f32 %v2071, %v2239
        %v2304 = vadd.f32 %v2072, %v2240
        %v2305 = vadd.f32 %v2073, %v2241
        %v2306 = vadd.f32 %v2074, %v2242
        %v2307 = vadd.f32 %v2075, %v2243
        %v2308 = vadd.f32 %v2076, %v2244
        %v2309 = vadd.f32 %v2077, %v2245
        %v2310 = vadd.f32 %v2078, %v2246
        %v2311 = vadd.f32 %v2079, %v2247
        %v2312 = vadd.f32 %v2080, %v2248
        %v2313 = vadd.f32 %v2081, %v2249
        %v2314 = vadd.f32 %v2082, %v2250
        %v2315 = vadd.f32 %v2083, %v2251
        %v2316 = vadd.f32 %v2084, %v2252
        %v2317 = vadd.f32 %v2085, %v2253
        %v2318 = vadd.f32 %v2086, %v2254
        %v2319 = vadd.f32 %v2087, %v2255
        %v2320 = vlaneseq
        %v2321 = vshrl.u32 %v2320, 7
        %v2322 = vsub.s32 4, %v2321
        %v2323 = vrot.slane %v860, %v2322
        %v2324 = vmul.f32 %v2323, %v2089
        %v2325 = vmul.f32 %v2323, %v2090
        %v2326 = vmul.f32 %v2323, %v2091
        %v2327 = vmul.f32 %v2323, %v2092
        %v2328 = vmul.f32 %v2323, %v2093
        %v2329 = vmul.f32 %v2323, %v2094
        %v2330 = vmul.f32 %v2323, %v2095
        %v2331 = vmul.f32 %v2323, %v2096
        %v2332 = vmul.f32 %v2323, %v2099
        %v2333 = vmul.f32 %v2323, %v2100
        %v2334 = vmul.f32 %v2323, %v2101
        %v2335 = vmul.f32 %v2323, %v2102
        %v2336 = vmul.f32 %v2323, %v2103
        %v2337 = vmul.f32 %v2323, %v2104
        %v2338 = vmul.f32 %v2323, %v2105
        %v2339 = vmul.f32 %v2323, %v2106
        %v2340 = vmul.f32 %v2323, %v2109
        %v2341 = vmul.f32 %v2323, %v2110
        %v2342 = vmul.f32 %v2323, %v2111
        %v2343 = vmul.f32 %v2323, %v2112
        %v2344 = vmul.f32 %v2323, %v2113
        %v2345 = vmul.f32 %v2323, %v2114
        %v2346 = vmul.f32 %v2323, %v2115
        %v2347 = vmul.f32 %v2323, %v2116
        %v2348 = vmul.f32 %v2323, %v2119
        %v2349 = vmul.f32 %v2323, %v2120
        %v2350 = vmul.f32 %v2323, %v2121
        %v2351 = vmul.f32 %v2323, %v2122
        %v2352 = vmul.f32 %v2323, %v2123
        %v2353 = vmul.f32 %v2323, %v2124
        %v2354 = vmul.f32 %v2323, %v2125
        %v2355 = vmul.f32 %v2323, %v2126
        %v2356 = vmul.f32 %v2323, %v2129
        %v2357 = vmul.f32 %v2323, %v2130
        %v2358 = vmul.f32 %v2323, %v2131
        %v2359 = vmul.f32 %v2323, %v2132
        %v2360 = vmul.f32 %v2323, %v2133
        %v2361 = vmul.f32 %v2323, %v2134
        %v2362 = vmul.f32 %v2323, %v2135
        %v2363 = vmul.f32 %v2323, %v2136
        %v2364 = vmul.f32 %v2323, %v2139
        %v2365 = vmul.f32 %v2323, %v2140
        %v2366 = vmul.f32 %v2323, %v2141
        %v2367 = vmul.f32 %v2323, %v2142
        %v2368 = vmul.f32 %v2323, %v2143
        %v2369 = vmul.f32 %v2323, %v2144
        %v2370 = vmul.f32 %v2323, %v2145
        %v2371 = vmul.f32 %v2323, %v2146
        %v2372 = vmul.f32 %v2323, %v2149
        %v2373 = vmul.f32 %v2323, %v2150
        %v2374 = vmul.f32 %v2323, %v2151
        %v2375 = vmul.f32 %v2323, %v2152
        %v2376 = vmul.f32 %v2323, %v2153
        %v2377 = vmul.f32 %v2323, %v2154
        %v2378 = vmul.f32 %v2323, %v2155
        %v2379 = vmul.f32 %v2323, %v2156
        %v2380 = vmul.f32 %v2323, %v2159
        %v2381 = vmul.f32 %v2323, %v2160
        %v2382 = vmul.f32 %v2323, %v2161
        %v2383 = vmul.f32 %v2323, %v2162
        %v2384 = vmul.f32 %v2323, %v2163
        %v2385 = vmul.f32 %v2323, %v2164
        %v2386 = vmul.f32 %v2323, %v2165
        %v2387 = vmul.f32 %v2323, %v2166
        %v2388 = vadd.f32 %v2256, %v2324
        %v2389 = vadd.f32 %v2257, %v2325
        %v2390 = vadd.f32 %v2258, %v2326
        %v2391 = vadd.f32 %v2259, %v2327
        %v2392 = vadd.f32 %v2260, %v2328
        %v2393 = vadd.f32 %v2261, %v2329
        %v2394 = vadd.f32 %v2262, %v2330
        %v2395 = vadd.f32 %v2263, %v2331
        %v2396 = vadd.f32 %v2264, %v2332
        %v2397 = vadd.f32 %v2265, %v2333
        %v2398 = vadd.f32 %v2266, %v2334
        %v2399 = vadd.f32 %v2267, %v2335
        %v2400 = vadd.f32 %v2268, %v2336
        %v2401 = vadd.f32 %v2269, %v2337
        %v2402 = vadd.f32 %v2270, %v2338
        %v2403 = vadd.f32 %v2271, %v2339
        %v2404 = vadd.f32 %v2272, %v2340
        %v2405 = vadd.f32 %v2273, %v2341
        %v2406 = vadd.f32 %v2274, %v2342
        %v2407 = vadd.f32 %v2275, %v2343
        %v2408 = vadd.f32 %v2276, %v2344
        %v2409 = vadd.f32 %v2277, %v2345
        %v2410 = vadd.f32 %v2278, %v2346
        %v2411 = vadd.f32 %v2279, %v2347
        %v2412 = vadd.f32 %v2280, %v2348
        %v2413 = vadd.f32 %v2281, %v2349
        %v2414 = vadd.f32 %v2282, %v2350
        %v2415 = vadd.f32 %v2283, %v2351
        %v2416 = vadd.f32 %v2284, %v2352
        %v2417 = vadd.f32 %v2285, %v2353
        %v2418 = vadd.f32 %v2286, %v2354
        %v2419 = vadd.f32 %v2287, %v2355
        %v2420 = vadd.f32 %v2288, %v2356
        %v2421 = vadd.f32 %v2289, %v2357
        %v2422 = vadd.f32 %v2290, %v2358
        %v2423 = vadd.f32 %v2291, %v2359
        %v2424 = vadd.f32 %v2292, %v2360
        %v2425 = vadd.f32 %v2293, %v2361
        %v2426 = vadd.f32 %v2294, %v2362
        %v2427 = vadd.f32 %v2295, %v2363
        %v2428 = vadd.f32 %v2296, %v2364
        %v2429 = vadd.f32 %v2297, %v2365
        %v2430 = vadd.f32 %v2298, %v2366
        %v2431 = vadd.f32 %v2299, %v2367
        %v2432 = vadd.f32 %v2300, %v2368
        %v2433 = vadd.f32 %v2301, %v2369
        %v2434 = vadd.f32 %v2302, %v2370
        %v2435 = vadd.f32 %v2303, %v2371
        %v2436 = vadd.f32 %v2304, %v2372
        %v2437 = vadd.f32 %v2305, %v2373
        %v2438 = vadd.f32 %v2306, %v2374
        %v2439 = vadd.f32 %v2307, %v2375
        %v2440 = vadd.f32 %v2308, %v2376
        %v2441 = vadd.f32 %v2309, %v2377
        %v2442 = vadd.f32 %v2310, %v2378
        %v2443 = vadd.f32 %v2311, %v2379
        %v2444 = vadd.f32 %v2312, %v2380
        %v2445 = vadd.f32 %v2313, %v2381
        %v2446 = vadd.f32 %v2314, %v2382
        %v2447 = vadd.f32 %v2315, %v2383
        %v2448 = vadd.f32 %v2316, %v2384
        %v2449 = vadd.f32 %v2317, %v2385
        %v2450 = vadd.f32 %v2318, %v2386
        %v2451 = vadd.f32 %v2319, %v2387
        %v2452 = vlaneseq
        %v2453 = vshrl.u32 %v2452, 7
        %v2454 = vsub.s32 7, %v2453
        %v2455 = vrot.slane %v860, %v2454
        %v2456 = vmul.f32 %v2455, %v2090
        %v2457 = vmul.f32 %v2455, %v2091
        %v2458 = vmul.f32 %v2455, %v2092
        %v2459 = vmul.f32 %v2455, %v2093
        %v2460 = vmul.f32 %v2455, %v2094
        %v2461 = vmul.f32 %v2455, %v2095
        %v2462 = vmul.f32 %v2455, %v2096
        %v2463 = vmul.f32 %v2455, %v2097
        %v2464 = vmul.f32 %v2455, %v2100
        %v2465 = vmul.f32 %v2455, %v2101
        %v2466 = vmul.f32 %v2455, %v2102
        %v2467 = vmul.f32 %v2455, %v2103
        %v2468 = vmul.f32 %v2455, %v2104
        %v2469 = vmul.f32 %v2455, %v2105
        %v2470 = vmul.f32 %v2455, %v2106
        %v2471 = vmul.f32 %v2455, %v2107
        %v2472 = vmul.f32 %v2455, %v2110
        %v2473 = vmul.f32 %v2455, %v2111
        %v2474 = vmul.f32 %v2455, %v2112
        %v2475 = vmul.f32 %v2455, %v2113
        %v2476 = vmul.f32 %v2455, %v2114
        %v2477 = vmul.f32 %v2455, %v2115
        %v2478 = vmul.f32 %v2455, %v2116
        %v2479 = vmul.f32 %v2455, %v2117
        %v2480 = vmul.f32 %v2455, %v2120
        %v2481 = vmul.f32 %v2455, %v2121
        %v2482 = vmul.f32 %v2455, %v2122
        %v2483 = vmul.f32 %v2455, %v2123
        %v2484 = vmul.f32 %v2455, %v2124
        %v2485 = vmul.f32 %v2455, %v2125
        %v2486 = vmul.f32 %v2455, %v2126
        %v2487 = vmul.f32 %v2455, %v2127
        %v2488 = vmul.f32 %v2455, %v2130
        %v2489 = vmul.f32 %v2455, %v2131
        %v2490 = vmul.f32 %v2455, %v2132
        %v2491 = vmul.f32 %v2455, %v2133
        %v2492 = vmul.f32 %v2455, %v2134
        %v2493 = vmul.f32 %v2455, %v2135
        %v2494 = vmul.f32 %v2455, %v2136
        %v2495 = vmul.f32 %v2455, %v2137
        %v2496 = vmul.f32 %v2455, %v2140
        %v2497 = vmul.f32 %v2455, %v2141
        %v2498 = vmul.f32 %v2455, %v2142
        %v2499 = vmul.f32 %v2455, %v2143
        %v2500 = vmul.f32 %v2455, %v2144
        %v2501 = vmul.f32 %v2455, %v2145
        %v2502 = vmul.f32 %v2455, %v2146
        %v2503 = vmul.f32 %v2455, %v2147
        %v2504 = vmul.f32 %v2455, %v2150
        %v2505 = vmul.f32 %v2455, %v2151
        %v2506 = vmul.f32 %v2455, %v2152
        %v2507 = vmul.f32 %v2455, %v2153
        %v2508 = vmul.f32 %v2455, %v2154
        %v2509 = vmul.f32 %v2455, %v2155
        %v2510 = vmul.f32 %v2455, %v2156
        %v2511 = vmul.f32 %v2455, %v2157
        %v2512 = vmul.f32 %v2455, %v2160
        %v2513 = vmul.f32 %v2455, %v2161
        %v2514 = vmul.f32 %v2455, %v2162
        %v2515 = vmul.f32 %v2455, %v2163
        %v2516 = vmul.f32 %v2455, %v2164
        %v2517 = vmul.f32 %v2455, %v2165
        %v2518 = vmul.f32 %v2455, %v2166
        %v2519 = vmul.f32 %v2455, %v2167
        %v2520 = vadd.f32 %v2388, %v2456
        %v2521 = vadd.f32 %v2389, %v2457
        %v2522 = vadd.f32 %v2390, %v2458
        %v2523 = vadd.f32 %v2391, %v2459
        %v2524 = vadd.f32 %v2392, %v2460
        %v2525 = vadd.f32 %v2393, %v2461
        %v2526 = vadd.f32 %v2394, %v2462
        %v2527 = vadd.f32 %v2395, %v2463
        %v2528 = vadd.f32 %v2396, %v2464
        %v2529 = vadd.f32 %v2397, %v2465
        %v2530 = vadd.f32 %v2398, %v2466
        %v2531 = vadd.f32 %v2399, %v2467
        %v2532 = vadd.f32 %v2400, %v2468
        %v2533 = vadd.f32 %v2401, %v2469
        %v2534 = vadd.f32 %v2402, %v2470
        %v2535 = vadd.f32 %v2403, %v2471
        %v2536 = vadd.f32 %v2404, %v2472
        %v2537 = vadd.f32 %v2405, %v2473
        %v2538 = vadd.f32 %v2406, %v2474
        %v2539 = vadd.f32 %v2407, %v2475
        %v2540 = vadd.f32 %v2408, %v2476
        %v2541 = vadd.f32 %v2409, %v2477
        %v2542 = vadd.f32 %v2410, %v2478
        %v2543 = vadd.f32 %v2411, %v2479
        %v2544 = vadd.f32 %v2412, %v2480
        %v2545 = vadd.f32 %v2413, %v2481
        %v2546 = vadd.f32 %v2414, %v2482
        %v2547 = vadd.f32 %v2415, %v2483
        %v2548 = vadd.f32 %v2416, %v2484
        %v2549 = vadd.f32 %v2417, %v2485
        %v2550 = vadd.f32 %v2418, %v2486
        %v2551 = vadd.f32 %v2419, %v2487
        %v2552 = vadd.f32 %v2420, %v2488
        %v2553 = vadd.f32 %v2421, %v2489
        %v2554 = vadd.f32 %v2422, %v2490
        %v2555 = vadd.f32 %v2423, %v2491
        %v2556 = vadd.f32 %v2424, %v2492
        %v2557 = vadd.f32 %v2425, %v2493
        %v2558 = vadd.f32 %v2426, %v2494
        %v2559 = vadd.f32 %v2427, %v2495
        %v2560 = vadd.f32 %v2428, %v2496
        %v2561 = vadd.f32 %v2429, %v2497
        %v2562 = vadd.f32 %v2430, %v2498
        %v2563 = vadd.f32 %v2431, %v2499
        %v2564 = vadd.f32 %v2432, %v2500
        %v2565 = vadd.f32 %v2433, %v2501
        %v2566 = vadd.f32 %v2434, %v2502
        %v2567 = vadd.f32 %v2435, %v2503
        %v2568 = vadd.f32 %v2436, %v2504
        %v2569 = vadd.f32 %v2437, %v2505
        %v2570 = vadd.f32 %v2438, %v2506
        %v2571 = vadd.f32 %v2439, %v2507
        %v2572 = vadd.f32 %v2440, %v2508
        %v2573 = vadd.f32 %v2441, %v2509
        %v2574 = vadd.f32 %v2442, %v2510
        %v2575 = vadd.f32 %v2443, %v2511
        %v2576 = vadd.f32 %v2444, %v2512
        %v2577 = vadd.f32 %v2445, %v2513
        %v2578 = vadd.f32 %v2446, %v2514
        %v2579 = vadd.f32 %v2447, %v2515
        %v2580 = vadd.f32 %v2448, %v2516
        %v2581 = vadd.f32 %v2449, %v2517
        %v2582 = vadd.f32 %v2450, %v2518
        %v2583 = vadd.f32 %v2451, %v2519
        %v2584 = vlaneseq
        %v2585 = vshrl.u32 %v2584, 7
        %v2586 = vsub.s32 2, %v2585
        %v2587 = vrot.slane %v861, %v2586
        %v2588 = vmul.f32 %v2587, %v2098
        %v2589 = vmul.f32 %v2587, %v2099
        %v2590 = vmul.f32 %v2587, %v2100
        %v2591 = vmul.f32 %v2587, %v2101
        %v2592 = vmul.f32 %v2587, %v2102
        %v2593 = vmul.f32 %v2587, %v2103
        %v2594 = vmul.f32 %v2587, %v2104
        %v2595 = vmul.f32 %v2587, %v2105
        %v2596 = vmul.f32 %v2587, %v2108
        %v2597 = vmul.f32 %v2587, %v2109
        %v2598 = vmul.f32 %v2587, %v2110
        %v2599 = vmul.f32 %v2587, %v2111
        %v2600 = vmul.f32 %v2587, %v2112
        %v2601 = vmul.f32 %v2587, %v2113
        %v2602 = vmul.f32 %v2587, %v2114
        %v2603 = vmul.f32 %v2587, %v2115
        %v2604 = vmul.f32 %v2587, %v2118
        %v2605 = vmul.f32 %v2587, %v2119
        %v2606 = vmul.f32 %v2587, %v2120
        %v2607 = vmul.f32 %v2587, %v2121
        %v2608 = vmul.f32 %v2587, %v2122
        %v2609 = vmul.f32 %v2587, %v2123
        %v2610 = vmul.f32 %v2587, %v2124
        %v2611 = vmul.f32 %v2587, %v2125
        %v2612 = vmul.f32 %v2587, %v2128
        %v2613 = vmul.f32 %v2587, %v2129
        %v2614 = vmul.f32 %v2587, %v2130
        %v2615 = vmul.f32 %v2587, %v2131
        %v2616 = vmul.f32 %v2587, %v2132
        %v2617 = vmul.f32 %v2587, %v2133
        %v2618 = vmul.f32 %v2587, %v2134
        %v2619 = vmul.f32 %v2587, %v2135
        %v2620 = vmul.f32 %v2587, %v2138
        %v2621 = vmul.f32 %v2587, %v2139
        %v2622 = vmul.f32 %v2587, %v2140
        %v2623 = vmul.f32 %v2587, %v2141
        %v2624 = vmul.f32 %v2587, %v2142
        %v2625 = vmul.f32 %v2587, %v2143
        %v2626 = vmul.f32 %v2587, %v2144
        %v2627 = vmul.f32 %v2587, %v2145
        %v2628 = vmul.f32 %v2587, %v2148
        %v2629 = vmul.f32 %v2587, %v2149
        %v2630 = vmul.f32 %v2587, %v2150
        %v2631 = vmul.f32 %v2587, %v2151
        %v2632 = vmul.f32 %v2587, %v2152
        %v2633 = vmul.f32 %v2587, %v2153
        %v2634 = vmul.f32 %v2587, %v2154
        %v2635 = vmul.f32 %v2587, %v2155
        %v2636 = vmul.f32 %v2587, %v2158
        %v2637 = vmul.f32 %v2587, %v2159
        %v2638 = vmul.f32 %v2587, %v2160
        %v2639 = vmul.f32 %v2587, %v2161
        %v2640 = vmul.f32 %v2587, %v2162
        %v2641 = vmul.f32 %v2587, %v2163
        %v2642 = vmul.f32 %v2587, %v2164
        %v2643 = vmul.f32 %v2587, %v2165
        %v2644 = vmul.f32 %v2587, %v2168
        %v2645 = vmul.f32 %v2587, %v2169
        %v2646 = vmul.f32 %v2587, %v2170
        %v2647 = vmul.f32 %v2587, %v2171
        %v2648 = vmul.f32 %v2587, %v2172
        %v2649 = vmul.f32 %v2587, %v2173
        %v2650 = vmul.f32 %v2587, %v2174
        %v2651 = vmul.f32 %v2587, %v2175
        %v2652 = vadd.f32 %v2520, %v2588
        %v2653 = vadd.f32 %v2521, %v2589
        %v2654 = vadd.f32 %v2522, %v2590
        %v2655 = vadd.f32 %v2523, %v2591
        %v2656 = vadd.f32 %v2524, %v2592
        %v2657 = vadd.f32 %v2525, %v2593
        %v2658 = vadd.f32 %v2526, %v2594
        %v2659 = vadd.f32 %v2527, %v2595
        %v2660 = vadd.f32 %v2528, %v2596
        %v2661 = vadd.f32 %v2529, %v2597
        %v2662 = vadd.f32 %v2530, %v2598
        %v2663 = vadd.f32 %v2531, %v2599
        %v2664 = vadd.f32 %v2532, %v2600
        %v2665 = vadd.f32 %v2533, %v2601
        %v2666 = vadd.f32 %v2534, %v2602
        %v2667 = vadd.f32 %v2535, %v2603
        %v2668 = vadd.f32 %v2536, %v2604
        %v2669 = vadd.f32 %v2537, %v2605
        %v2670 = vadd.f32 %v2538, %v2606
        %v2671 = vadd.f32 %v2539, %v2607
        %v2672 = vadd.f32 %v2540, %v2608
        %v2673 = vadd.f32 %v2541, %v2609
        %v2674 = vadd.f32 %v2542, %v2610
        %v2675 = vadd.f32 %v2543, %v2611
        %v2676 = vadd.f32 %v2544, %v2612
        %v2677 = vadd.f32 %v2545, %v2613
        %v2678 = vadd.f32 %v2546, %v2614
        %v2679 = vadd.f32 %v2547, %v2615
        %v2680 = vadd.f32 %v2548, %v2616
        %v2681 = vadd.f32 %v2549, %v2617
        %v2682 = vadd.f32 %v2550, %v2618
        %v2683 = vadd.f32 %v2551, %v2619
        %v2684 = vadd.f32 %v2552, %v2620
        %v2685 = vadd.f32 %v2553, %v2621
        %v2686 = vadd.f32 %v2554, %v2622
        %v2687 = vadd.f32 %v2555, %v2623
        %v2688 = vadd.f32 %v2556, %v2624
        %v2689 = vadd.f32 %v2557, %v2625
        %v2690 = vadd.f32 %v2558, %v2626
        %v2691 = vadd.f32 %v2559, %v2627
        %v2692 = vadd.f32 %v2560, %v2628
        %v2693 = vadd.f32 %v2561, %v2629
        %v2694 = vadd.f32 %v2562, %v2630
        %v2695 = vadd.f32 %v2563, %v2631
        %v2696 = vadd.f32 %v2564, %v2632
        %v2697 = vadd.f32 %v2565, %v2633
        %v2698 = vadd.f32 %v2566, %v2634
        %v2699 = vadd.f32 %v2567, %v2635
        %v2700 = vadd.f32 %v2568, %v2636
        %v2701 = vadd.f32 %v2569, %v2637
        %v2702 = vadd.f32 %v2570, %v2638
        %v2703 = vadd.f32 %v2571, %v2639
        %v2704 = vadd.f32 %v2572, %v2640
        %v2705 = vadd.f32 %v2573, %v2641
        %v2706 = vadd.f32 %v2574, %v2642
        %v2707 = vadd.f32 %v2575, %v2643
        %v2708 = vadd.f32 %v2576, %v2644
        %v2709 = vadd.f32 %v2577, %v2645
        %v2710 = vadd.f32 %v2578, %v2646
        %v2711 = vadd.f32 %v2579, %v2647
        %v2712 = vadd.f32 %v2580, %v2648
        %v2713 = vadd.f32 %v2581, %v2649
        %v2714 = vadd.f32 %v2582, %v2650
        %v2715 = vadd.f32 %v2583, %v2651
        %v2716 = vlaneseq
        %v2717 = vshrl.u32 %v2716, 7
        %v2718 = vsub.s32 5, %v2717
        %v2719 = vrot.slane %v861, %v2718
        %v2720 = vmul.f32 %v2719, %v2099
        %v2721 = vmul.f32 %v2719, %v2100
        %v2722 = vmul.f32 %v2719, %v2101
        %v2723 = vmul.f32 %v2719, %v2102
        %v2724 = vmul.f32 %v2719, %v2103
        %v2725 = vmul.f32 %v2719, %v2104
        %v2726 = vmul.f32 %v2719, %v2105
        %v2727 = vmul.f32 %v2719, %v2106
        %v2728 = vmul.f32 %v2719, %v2109
        %v2729 = vmul.f32 %v2719, %v2110
        %v2730 = vmul.f32 %v2719, %v2111
        %v2731 = vmul.f32 %v2719, %v2112
        %v2732 = vmul.f32 %v2719, %v2113
        %v2733 = vmul.f32 %v2719, %v2114
        %v2734 = vmul.f32 %v2719, %v2115
        %v2735 = vmul.f32 %v2719, %v2116
        %v2736 = vmul.f32 %v2719, %v2119
        %v2737 = vmul.f32 %v2719, %v2120
        %v2738 = vmul.f32 %v2719, %v2121
        %v2739 = vmul.f32 %v2719, %v2122
        %v2740 = vmul.f32 %v2719, %v2123
        %v2741 = vmul.f32 %v2719, %v2124
        %v2742 = vmul.f32 %v2719, %v2125
        %v2743 = vmul.f32 %v2719, %v2126
        %v2744 = vmul.f32 %v2719, %v2129
        %v2745 = vmul.f32 %v2719, %v2130
        %v2746 = vmul.f32 %v2719, %v2131
        %v2747 = vmul.f32 %v2719, %v2132
        %v2748 = vmul.f32 %v2719, %v2133
        %v2749 = vmul.f32 %v2719, %v2134
        %v2750 = vmul.f32 %v2719, %v2135
        %v2751 = vmul.f32 %v2719, %v2136
        %v2752 = vmul.f32 %v2719, %v2139
        %v2753 = vmul.f32 %v2719, %v2140
        %v2754 = vmul.f32 %v2719, %v2141
        %v2755 = vmul.f32 %v2719, %v2142
        %v2756 = vmul.f32 %v2719, %v2143
        %v2757 = vmul.f32 %v2719, %v2144
        %v2758 = vmul.f32 %v2719, %v2145
        %v2759 = vmul.f32 %v2719, %v2146
        %v2760 = vmul.f32 %v2719, %v2149
        %v2761 = vmul.f32 %v2719, %v2150
        %v2762 = vmul.f32 %v2719, %v2151
        %v2763 = vmul.f32 %v2719, %v2152
        %v2764 = vmul.f32 %v2719, %v2153
        %v2765 = vmul.f32 %v2719, %v2154
        %v2766 = vmul.f32 %v2719, %v2155
        %v2767 = vmul.f32 %v2719, %v2156
        %v2768 = vmul.f32 %v2719, %v2159
        %v2769 = vmul.f32 %v2719, %v2160
        %v2770 = vmul.f32 %v2719, %v2161
        %v2771 = vmul.f32 %v2719, %v2162
        %v2772 = vmul.f32 %v2719, %v2163
        %v2773 = vmul.f32 %v2719, %v2164
        %v2774 = vmul.f32 %v2719, %v2165
        %v2775 = vmul.f32 %v2719, %v2166
        %v2776 = vmul.f32 %v2719, %v2169
        %v2777 = vmul.f32 %v2719, %v2170
        %v2778 = vmul.f32 %v2719, %v2171
        %v2779 = vmul.f32 %v2719, %v2172
        %v2780 = vmul.f32 %v2719, %v2173
        %v2781 = vmul.f32 %v2719, %v2174
        %v2782 = vmul.f32 %v2719, %v2175
        %v2783 = vmul.f32 %v2719, %v2176
        %v2784 = vadd.f32 %v2652, %v2720
        %v2785 = vadd.f32 %v2653, %v2721
        %v2786 = vadd.f32 %v2654, %v2722
        %v2787 = vadd.f32 %v2655, %v2723
        %v2788 = vadd.f32 %v2656, %v2724
        %v2789 = vadd.f32 %v2657, %v2725
        %v2790 = vadd.f32 %v2658, %v2726
        %v2791 = vadd.f32 %v2659, %v2727
        %v2792 = vadd.f32 %v2660, %v2728
        %v2793 = vadd.f32 %v2661, %v2729
        %v2794 = vadd.f32 %v2662, %v2730
        %v2795 = vadd.f32 %v2663, %v2731
        %v2796 = vadd.f32 %v2664, %v2732
        %v2797 = vadd.f32 %v2665, %v2733
        %v2798 = vadd.f32 %v2666, %v2734
        %v2799 = vadd.f32 %v2667, %v2735
        %v2800 = vadd.f32 %v2668, %v2736
        %v2801 = vadd.f32 %v2669, %v2737
        %v2802 = vadd.f32 %v2670, %v2738
        %v2803 = vadd.f32 %v2671, %v2739
        %v2804 = vadd.f32 %v2672, %v2740
        %v2805 = vadd.f32 %v2673, %v2741
        %v2806 = vadd.f32 %v2674, %v2742
        %v2807 = vadd.f32 %v2675, %v2743
        %v2808 = vadd.f32 %v2676, %v2744
        %v2809 = vadd.f32 %v2677, %v2745
        %v2810 = vadd.f32 %v2678, %v2746
        %v2811 = vadd.f32 %v2679, %v2747
        %v2812 = vadd.f32 %v2680, %v2748
        %v2813 = vadd.f32 %v2681, %v2749
        %v2814 = vadd.f32 %v2682, %v2750
        %v2815 = vadd.f32 %v2683, %v2751
        %v2816 = vadd.f32 %v2684, %v2752
        %v2817 = vadd.f32 %v2685, %v2753
        %v2818 = vadd.f32 %v2686, %v2754
        %v2819 = vadd.f32 %v2687, %v2755
        %v2820 = vadd.f32 %v2688, %v2756
        %v2821 = vadd.f32 %v2689, %v2757
        %v2822 = vadd.f32 %v2690, %v2758
        %v2823 = vadd.f32 %v2691, %v2759
        %v2824 = vadd.f32 %v2692, %v2760
        %v2825 = vadd.f32 %v2693, %v2761
        %v2826 = vadd.f32 %v2694, %v2762
        %v2827 = vadd.f32 %v2695, %v2763
        %v2828 = vadd.f32 %v2696, %v2764
        %v2829 = vadd.f32 %v2697, %v2765
        %v2830 = vadd.f32 %v2698, %v2766
        %v2831 = vadd.f32 %v2699, %v2767
        %v2832 = vadd.f32 %v2700, %v2768
        %v2833 = vadd.f32 %v2701, %v2769
        %v2834 = vadd.f32 %v2702, %v2770
        %v2835 = vadd.f32 %v2703, %v2771
        %v2836 = vadd.f32 %v2704, %v2772
        %v2837 = vadd.f32 %v2705, %v2773
        %v2838 = vadd.f32 %v2706, %v2774
        %v2839 = vadd.f32 %v2707, %v2775
        %v2840 = vadd.f32 %v2708, %v2776
        %v2841 = vadd.f32 %v2709, %v2777
        %v2842 = vadd.f32 %v2710, %v2778
        %v2843 = vadd.f32 %v2711, %v2779
        %v2844 = vadd.f32 %v2712, %v2780
        %v2845 = vadd.f32 %v2713, %v2781
        %v2846 = vadd.f32 %v2714, %v2782
        %v2847 = vadd.f32 %v2715, %v2783
        %v2848 = vlaneseq
        %v2849 = vshrl.u32 %v2848, 7
        %v2850 = vsub.s32 0, %v2849
        %v2851 = vrot.slane %v862, %v2850
        %v2852 = vmul.f32 %v2851, %v2100
        %v2853 = vmul.f32 %v2851, %v2101
        %v2854 = vmul.f32 %v2851, %v2102
        %v2855 = vmul.f32 %v2851, %v2103
        %v2856 = vmul.f32 %v2851, %v2104
        %v2857 = vmul.f32 %v2851, %v2105
        %v2858 = vmul.f32 %v2851, %v2106
        %v2859 = vmul.f32 %v2851, %v2107
        %v2860 = vmul.f32 %v2851, %v2110
        %v2861 = vmul.f32 %v2851, %v2111
        %v2862 = vmul.f32 %v2851, %v2112
        %v2863 = vmul.f32 %v2851, %v2113
        %v2864 = vmul.f32 %v2851, %v2114
        %v2865 = vmul.f32 %v2851, %v2115
        %v2866 = vmul.f32 %v2851, %v2116
        %v2867 = vmul.f32 %v2851, %v2117
        %v2868 = vmul.f32 %v2851, %v2120
        %v2869 = vmul.f32 %v2851, %v2121
        %v2870 = vmul.f32 %v2851, %v2122
        %v2871 = vmul.f32 %v2851, %v2123
        %v2872 = vmul.f32 %v2851, %v2124
        %v2873 = vmul.f32 %v2851, %v2125
        %v2874 = vmul.f32 %v2851, %v2126
        %v2875 = vmul.f32 %v2851, %v2127
        %v2876 = vmul.f32 %v2851, %v2130
        %v2877 = vmul.f32 %v2851, %v2131
        %v2878 = vmul.f32 %v2851, %v2132
        %v2879 = vmul.f32 %v2851, %v2133
        %v2880 = vmul.f32 %v2851, %v2134
        %v2881 = vmul.f32 %v2851, %v2135
        %v2882 = vmul.f32 %v2851, %v2136
        %v2883 = vmul.f32 %v2851, %v2137
        %v2884 = vmul.f32 %v2851, %v2140
        %v2885 = vmul.f32 %v2851, %v2141
        %v2886 = vmul.f32 %v2851, %v2142
        %v2887 = vmul.f32 %v2851, %v2143
        %v2888 = vmul.f32 %v2851, %v2144
        %v2889 = vmul.f32 %v2851, %v2145
        %v2890 = vmul.f32 %v2851, %v2146
        %v2891 = vmul.f32 %v2851, %v2147
        %v2892 = vmul.f32 %v2851, %v2150
        %v2893 = vmul.f32 %v2851, %v2151
        %v2894 = vmul.f32 %v2851, %v2152
        %v2895 = vmul.f32 %v2851, %v2153
        %v2896 = vmul.f32 %v2851, %v2154
        %v2897 = vmul.f32 %v2851, %v2155
        %v2898 = vmul.f32 %v2851, %v2156
        %v2899 = vmul.f32 %v2851, %v2157
        %v2900 = vmul.f32 %v2851, %v2160
        %v2901 = vmul.f32 %v2851, %v2161
        %v2902 = vmul.f32 %v2851, %v2162
        %v2903 = vmul.f32 %v2851, %v2163
        %v2904 = vmul.f32 %v2851, %v2164
        %v2905 = vmul.f32 %v2851, %v2165
        %v2906 = vmul.f32 %v2851, %v2166
        %v2907 = vmul.f32 %v2851, %v2167
        %v2908 = vmul.f32 %v2851, %v2170
        %v2909 = vmul.f32 %v2851, %v2171
        %v2910 = vmul.f32 %v2851, %v2172
        %v2911 = vmul.f32 %v2851, %v2173
        %v2912 = vmul.f32 %v2851, %v2174
        %v2913 = vmul.f32 %v2851, %v2175
        %v2914 = vmul.f32 %v2851, %v2176
        %v2915 = vmul.f32 %v2851, %v2177
        %v2916 = vadd.f32 %v2784, %v2852
        %v2917 = vadd.f32 %v2785, %v2853
        %v2918 = vadd.f32 %v2786, %v2854
        %v2919 = vadd.f32 %v2787, %v2855
        %v2920 = vadd.f32 %v2788, %v2856
        %v2921 = vadd.f32 %v2789, %v2857
        %v2922 = vadd.f32 %v2790, %v2858
        %v2923 = vadd.f32 %v2791, %v2859
        %v2924 = vadd.f32 %v2792, %v2860
        %v2925 = vadd.f32 %v2793, %v2861
        %v2926 = vadd.f32 %v2794, %v2862
        %v2927 = vadd.f32 %v2795, %v2863
        %v2928 = vadd.f32 %v2796, %v2864
        %v2929 = vadd.f32 %v2797, %v2865
        %v2930 = vadd.f32 %v2798, %v2866
        %v2931 = vadd.f32 %v2799, %v2867
        %v2932 = vadd.f32 %v2800, %v2868
        %v2933 = vadd.f32 %v2801, %v2869
        %v2934 = vadd.f32 %v2802, %v2870
        %v2935 = vadd.f32 %v2803, %v2871
        %v2936 = vadd.f32 %v2804, %v2872
        %v2937 = vadd.f32 %v2805, %v2873
        %v2938 = vadd.f32 %v2806, %v2874
        %v2939 = vadd.f32 %v2807, %v2875
        %v2940 = vadd.f32 %v2808, %v2876
        %v2941 = vadd.f32 %v2809, %v2877
        %v2942 = vadd.f32 %v2810, %v2878
        %v2943 = vadd.f32 %v2811, %v2879
        %v2944 = vadd.f32 %v2812, %v2880
        %v2945 = vadd.f32 %v2813, %v2881
        %v2946 = vadd.f32 %v2814, %v2882
        %v2947 = vadd.f32 %v2815, %v2883
        %v2948 = vadd.f32 %v2816, %v2884
        %v2949 = vadd.f32 %v2817, %v2885
        %v2950 = vadd.f32 %v2818, %v2886
        %v2951 = vadd.f32 %v2819, %v2887
        %v2952 = vadd.f32 %v2820, %v2888
        %v2953 = vadd.f32 %v2821, %v2889
        %v2954 = vadd.f32 %v2822, %v2890
        %v2955 = vadd.f32 %v2823, %v2891
        %v2956 = vadd.f32 %v2824, %v2892
        %v2957 = vadd.f32 %v2825, %v2893
        %v2958 = vadd.f32 %v2826, %v2894
        %v2959 = vadd.f32 %v2827, %v2895
        %v2960 = vadd.f32 %v2828, %v2896
        %v2961 = vadd.f32 %v2829, %v2897
        %v2962 = vadd.f32 %v2830, %v2898
        %v2963 = vadd.f32 %v2831, %v2899
        %v2964 = vadd.f32 %v2832, %v2900
        %v2965 = vadd.f32 %v2833, %v2901
        %v2966 = vadd.f32 %v2834, %v2902
        %v2967 = vadd.f32 %v2835, %v2903
        %v2968 = vadd.f32 %v2836, %v2904
        %v2969 = vadd.f32 %v2837, %v2905
        %v2970 = vadd.f32 %v2838, %v2906
        %v2971 = vadd.f32 %v2839, %v2907
        %v2972 = vadd.f32 %v2840, %v2908
        %v2973 = vadd.f32 %v2841, %v2909
        %v2974 = vadd.f32 %v2842, %v2910
        %v2975 = vadd.f32 %v2843, %v2911
        %v2976 = vadd.f32 %v2844, %v2912
        %v2977 = vadd.f32 %v2845, %v2913
        %v2978 = vadd.f32 %v2846, %v2914
        %v2979 = vadd.f32 %v2847, %v2915
        %v2980 = vlaneseq
        %v2981 = vshrl.u32 %v2980, 7
        %v2982 = vsub.s32 3, %v2981
        %v2983 = vrot.slane %v862, %v2982
        %v2984 = vmul.f32 %v2983, %v2108
        %v2985 = vmul.f32 %v2983, %v2109
        %v2986 = vmul.f32 %v2983, %v2110
        %v2987 = vmul.f32 %v2983, %v2111
        %v2988 = vmul.f32 %v2983, %v2112
        %v2989 = vmul.f32 %v2983, %v2113
        %v2990 = vmul.f32 %v2983, %v2114
        %v2991 = vmul.f32 %v2983, %v2115
        %v2992 = vmul.f32 %v2983, %v2118
        %v2993 = vmul.f32 %v2983, %v2119
        %v2994 = vmul.f32 %v2983, %v2120
        %v2995 = vmul.f32 %v2983, %v2121
        %v2996 = vmul.f32 %v2983, %v2122
        %v2997 = vmul.f32 %v2983, %v2123
        %v2998 = vmul.f32 %v2983, %v2124
        %v2999 = vmul.f32 %v2983, %v2125
        %v3000 = vmul.f32 %v2983, %v2128
        %v3001 = vmul.f32 %v2983, %v2129
        %v3002 = vmul.f32 %v2983, %v2130
        %v3003 = vmul.f32 %v2983, %v2131
        %v3004 = vmul.f32 %v2983, %v2132
        %v3005 = vmul.f32 %v2983, %v2133
        %v3006 = vmul.f32 %v2983, %v2134
        %v3007 = vmul.f32 %v2983, %v2135
        %v3008 = vmul.f32 %v2983, %v2138
        %v3009 = vmul.f32 %v2983, %v2139
        %v3010 = vmul.f32 %v2983, %v2140
        %v3011 = vmul.f32 %v2983, %v2141
        %v3012 = vmul.f32 %v2983, %v2142
        %v3013 = vmul.f32 %v2983, %v2143
        %v3014 = vmul.f32 %v2983, %v2144
        %v3015 = vmul.f32 %v2983, %v2145
        %v3016 = vmul.f32 %v2983, %v2148
        %v3017 = vmul.f32 %v2983, %v2149
        %v3018 = vmul.f32 %v2983, %v2150
        %v3019 = vmul.f32 %v2983, %v2151
        %v3020 = vmul.f32 %v2983, %v2152
        %v3021 = vmul.f32 %v2983, %v2153
        %v3022 = vmul.f32 %v2983, %v2154
        %v3023 = vmul.f32 %v2983, %v2155
        %v3024 = vmul.f32 %v2983, %v2158
        %v3025 = vmul.f32 %v2983, %v2159
        %v3026 = vmul.f32 %v2983, %v2160
        %v3027 = vmul.f32 %v2983, %v2161
        %v3028 = vmul.f32 %v2983, %v2162
        %v3029 = vmul.f32 %v2983, %v2163
        %v3030 = vmul.f32 %v2983, %v2164
        %v3031 = vmul.f32 %v2983, %v2165
        %v3032 = vmul.f32 %v2983, %v2168
        %v3033 = vmul.f32 %v2983, %v2169
        %v3034 = vmul.f32 %v2983, %v2170
        %v3035 = vmul.f32 %v2983, %v2171
        %v3036 = vmul.f32 %v2983, %v2172
        %v3037 = vmul.f32 %v2983, %v2173
        %v3038 = vmul.f32 %v2983, %v2174
        %v3039 = vmul.f32 %v2983, %v2175
        %v3040 = vmul.f32 %v2983, %v2178
        %v3041 = vmul.f32 %v2983, %v2179
        %v3042 = vmul.f32 %v2983, %v2180
        %v3043 = vmul.f32 %v2983, %v2181
        %v3044 = vmul.f32 %v2983, %v2182
        %v3045 = vmul.f32 %v2983, %v2183
        %v3046 = vmul.f32 %v2983, %v2184
        %v3047 = vmul.f32 %v2983, %v2185
        %v3048 = vadd.f32 %v2916, %v2984
        %v3049 = vadd.f32 %v2917, %v2985
        %v3050 = vadd.f32 %v2918, %v2986
        %v3051 = vadd.f32 %v2919, %v2987
        %v3052 = vadd.f32 %v2920, %v2988
        %v3053 = vadd.f32 %v2921, %v2989
        %v3054 = vadd.f32 %v2922, %v2990
        %v3055 = vadd.f32 %v2923, %v2991
        %v3056 = vadd.f32 %v2924, %v2992
        %v3057 = vadd.f32 %v2925, %v2993
        %v3058 = vadd.f32 %v2926, %v2994
        %v3059 = vadd.f32 %v2927, %v2995
        %v3060 = vadd.f32 %v2928, %v2996
        %v3061 = vadd.f32 %v2929, %v2997
        %v3062 = vadd.f32 %v2930, %v2998
        %v3063 = vadd.f32 %v2931, %v2999
        %v3064 = vadd.f32 %v2932, %v3000
        %v3065 = vadd.f32 %v2933, %v3001
        %v3066 = vadd.f32 %v2934, %v3002
        %v3067 = vadd.f32 %v2935, %v3003
        %v3068 = vadd.f32 %v2936, %v3004
        %v3069 = vadd.f32 %v2937, %v3005
        %v3070 = vadd.f32 %v2938, %v3006
        %v3071 = vadd.f32 %v2939, %v3007
        %v3072 = vadd.f32 %v2940, %v3008
        %v3073 = vadd.f32 %v2941, %v3009
        %v3074 = vadd.f32 %v2942, %v3010
        %v3075 = vadd.f32 %v2943, %v3011
        %v3076 = vadd.f32 %v2944, %v3012
        %v3077 = vadd.f32 %v2945, %v3013
        %v3078 = vadd.f32 %v2946, %v3014
        %v3079 = vadd.f32 %v2947, %v3015
        %v3080 = vadd.f32 %v2948, %v3016
        %v3081 = vadd.f32 %v2949, %v3017
        %v3082 = vadd.f32 %v2950, %v3018
        %v3083 = vadd.f32 %v2951, %v3019
        %v3084 = vadd.f32 %v2952, %v3020
        %v3085 = vadd.f32 %v2953, %v3021
        %v3086 = vadd.f32 %v2954, %v3022
        %v3087 = vadd.f32 %v2955, %v3023
        %v3088 = vadd.f32 %v2956, %v3024
        %v3089 = vadd.f32 %v2957, %v3025
        %v3090 = vadd.f32 %v2958, %v3026
        %v3091 = vadd.f32 %v2959, %v3027
        %v3092 = vadd.f32 %v2960, %v3028
        %v3093 = vadd.f32 %v2961, %v3029
        %v3094 = vadd.f32 %v2962, %v3030
        %v3095 = vadd.f32 %v2963, %v3031
        %v3096 = vadd.f32 %v2964, %v3032
        %v3097 = vadd.f32 %v2965, %v3033
        %v3098 = vadd.f32 %v2966, %v3034
        %v3099 = vadd.f32 %v2967, %v3035
        %v3100 = vadd.f32 %v2968, %v3036
        %v3101 = vadd.f32 %v2969, %v3037
        %v3102 = vadd.f32 %v2970, %v3038
        %v3103 = vadd.f32 %v2971, %v3039
        %v3104 = vadd.f32 %v2972, %v3040
        %v3105 = vadd.f32 %v2973, %v3041
        %v3106 = vadd.f32 %v2974, %v3042
        %v3107 = vadd.f32 %v2975, %v3043
        %v3108 = vadd.f32 %v2976, %v3044
        %v3109 = vadd.f32 %v2977, %v3045
        %v3110 = vadd.f32 %v2978, %v3046
        %v3111 = vadd.f32 %v2979, %v3047
        %v3112 = vlaneseq
        %v3113 = vshrl.u32 %v3112, 7
        %v3114 = vsub.s32 6, %v3113
        %v3115 = vrot.slane %v862, %v3114
        %v3116 = vmul.f32 %v3115, %v2109
        %v3117 = vmul.f32 %v3115, %v2110
        %v3118 = vmul.f32 %v3115, %v2111
        %v3119 = vmul.f32 %v3115, %v2112
        %v3120 = vmul.f32 %v3115, %v2113
        %v3121 = vmul.f32 %v3115, %v2114
        %v3122 = vmul.f32 %v3115, %v2115
        %v3123 = vmul.f32 %v3115, %v2116
        %v3124 = vmul.f32 %v3115, %v2119
        %v3125 = vmul.f32 %v3115, %v2120
        %v3126 = vmul.f32 %v3115, %v2121
        %v3127 = vmul.f32 %v3115, %v2122
        %v3128 = vmul.f32 %v3115, %v2123
        %v3129 = vmul.f32 %v3115, %v2124
        %v3130 = vmul.f32 %v3115, %v2125
        %v3131 = vmul.f32 %v3115, %v2126
        %v3132 = vmul.f32 %v3115, %v2129
        %v3133 = vmul.f32 %v3115, %v2130
        %v3134 = vmul.f32 %v3115, %v2131
        %v3135 = vmul.f32 %v3115, %v2132
        %v3136 = vmul.f32 %v3115, %v2133
        %v3137 = vmul.f32 %v3115, %v2134
        %v3138 = vmul.f32 %v3115, %v2135
        %v3139 = vmul.f32 %v3115, %v2136
        %v3140 = vmul.f32 %v3115, %v2139
        %v3141 = vmul.f32 %v3115, %v2140
        %v3142 = vmul.f32 %v3115, %v2141
        %v3143 = vmul.f32 %v3115, %v2142
        %v3144 = vmul.f32 %v3115, %v2143
        %v3145 = vmul.f32 %v3115, %v2144
        %v3146 = vmul.f32 %v3115, %v2145
        %v3147 = vmul.f32 %v3115, %v2146
        %v3148 = vmul.f32 %v3115, %v2149
        %v3149 = vmul.f32 %v3115, %v2150
        %v3150 = vmul.f32 %v3115, %v2151
        %v3151 = vmul.f32 %v3115, %v2152
        %v3152 = vmul.f32 %v3115, %v2153
        %v3153 = vmul.f32 %v3115, %v2154
        %v3154 = vmul.f32 %v3115, %v2155
        %v3155 = vmul.f32 %v3115, %v2156
        %v3156 = vmul.f32 %v3115, %v2159
        %v3157 = vmul.f32 %v3115, %v2160
        %v3158 = vmul.f32 %v3115, %v2161
        %v3159 = vmul.f32 %v3115, %v2162
        %v3160 = vmul.f32 %v3115, %v2163
        %v3161 = vmul.f32 %v3115, %v2164
        %v3162 = vmul.f32 %v3115, %v2165
        %v3163 = vmul.f32 %v3115, %v2166
        %v3164 = vmul.f32 %v3115, %v2169
        %v3165 = vmul.f32 %v3115, %v2170
        %v3166 = vmul.f32 %v3115, %v2171
        %v3167 = vmul.f32 %v3115, %v2172
        %v3168 = vmul.f32 %v3115, %v2173
        %v3169 = vmul.f32 %v3115, %v2174
        %v3170 = vmul.f32 %v3115, %v2175
        %v3171 = vmul.f32 %v3115, %v2176
        %v3172 = vmul.f32 %v3115, %v2179
        %v3173 = vmul.f32 %v3115, %v2180
        %v3174 = vmul.f32 %v3115, %v2181
        %v3175 = vmul.f32 %v3115, %v2182
        %v3176 = vmul.f32 %v3115, %v2183
        %v3177 = vmul.f32 %v3115, %v2184
        %v3178 = vmul.f32 %v3115, %v2185
        %v3179 = vmul.f32 %v3115, %v2186
        %v3180 = vadd.f32 %v3048, %v3116
        %v3181 = vadd.f32 %v3049, %v3117
        %v3182 = vadd.f32 %v3050, %v3118
        %v3183 = vadd.f32 %v3051, %v3119
        %v3184 = vadd.f32 %v3052, %v3120
        %v3185 = vadd.f32 %v3053, %v3121
        %v3186 = vadd.f32 %v3054, %v3122
        %v3187 = vadd.f32 %v3055, %v3123
        %v3188 = vadd.f32 %v3056, %v3124
        %v3189 = vadd.f32 %v3057, %v3125
        %v3190 = vadd.f32 %v3058, %v3126
        %v3191 = vadd.f32 %v3059, %v3127
        %v3192 = vadd.f32 %v3060, %v3128
        %v3193 = vadd.f32 %v3061, %v3129
        %v3194 = vadd.f32 %v3062, %v3130
        %v3195 = vadd.f32 %v3063, %v3131
        %v3196 = vadd.f32 %v3064, %v3132
        %v3197 = vadd.f32 %v3065, %v3133
        %v3198 = vadd.f32 %v3066, %v3134
        %v3199 = vadd.f32 %v3067, %v3135
        %v3200 = vadd.f32 %v3068, %v3136
        %v3201 = vadd.f32 %v3069, %v3137
        %v3202 = vadd.f32 %v3070, %v3138
        %v3203 = vadd.f32 %v3071, %v3139
        %v3204 = vadd.f32 %v3072, %v3140
        %v3205 = vadd.f32 %v3073, %v3141
        %v3206 = vadd.f32 %v3074, %v3142
        %v3207 = vadd.f32 %v3075, %v3143
        %v3208 = vadd.f32 %v3076, %v3144
        %v3209 = vadd.f32 %v3077, %v3145
        %v3210 = vadd.f32 %v3078, %v3146
        %v3211 = vadd.f32 %v3079, %v3147
        %v3212 = vadd.f32 %v3080, %v3148
        %v3213 = vadd.f32 %v3081, %v3149
        %v3214 = vadd.f32 %v3082, %v3150
        %v3215 = vadd.f32 %v3083, %v3151
        %v3216 = vadd.f32 %v3084, %v3152
        %v3217 = vadd.f32 %v3085, %v3153
        %v3218 = vadd.f32 %v3086, %v3154
        %v3219 = vadd.f32 %v3087, %v3155
        %v3220 = vadd.f32 %v3088, %v3156
        %v3221 = vadd.f32 %v3089, %v3157
        %v3222 = vadd.f32 %v3090, %v3158
        %v3223 = vadd.f32 %v3091, %v3159
        %v3224 = vadd.f32 %v3092, %v3160
        %v3225 = vadd.f32 %v3093, %v3161
        %v3226 = vadd.f32 %v3094, %v3162
        %v3227 = vadd.f32 %v3095, %v3163
        %v3228 = vadd.f32 %v3096, %v3164
        %v3229 = vadd.f32 %v3097, %v3165
        %v3230 = vadd.f32 %v3098, %v3166
        %v3231 = vadd.f32 %v3099, %v3167
        %v3232 = vadd.f32 %v3100, %v3168
        %v3233 = vadd.f32 %v3101, %v3169
        %v3234 = vadd.f32 %v3102, %v3170
        %v3235 = vadd.f32 %v3103, %v3171
        %v3236 = vadd.f32 %v3104, %v3172
        %v3237 = vadd.f32 %v3105, %v3173
        %v3238 = vadd.f32 %v3106, %v3174
        %v3239 = vadd.f32 %v3107, %v3175
        %v3240 = vadd.f32 %v3108, %v3176
        %v3241 = vadd.f32 %v3109, %v3177
        %v3242 = vadd.f32 %v3110, %v3178
        %v3243 = vadd.f32 %v3111, %v3179
        %v3244 = vlaneseq
        %v3245 = vshrl.u32 %v3244, 7
        %v3246 = vsub.s32 1, %v3245
        %v3247 = vrot.slane %v863, %v3246
        %v3248 = vmul.f32 %v3247, %v2110
        %v3249 = vmul.f32 %v3247, %v2111
        %v3250 = vmul.f32 %v3247, %v2112
        %v3251 = vmul.f32 %v3247, %v2113
        %v3252 = vmul.f32 %v3247, %v2114
        %v3253 = vmul.f32 %v3247, %v2115
        %v3254 = vmul.f32 %v3247, %v2116
        %v3255 = vmul.f32 %v3247, %v2117
        %v3256 = vmul.f32 %v3247, %v2120
        %v3257 = vmul.f32 %v3247, %v2121
        %v3258 = vmul.f32 %v3247, %v2122
        %v3259 = vmul.f32 %v3247, %v2123
        %v3260 = vmul.f32 %v3247, %v2124
        %v3261 = vmul.f32 %v3247, %v2125
        %v3262 = vmul.f32 %v3247, %v2126
        %v3263 = vmul.f32 %v3247, %v2127
        %v3264 = vmul.f32 %v3247, %v2130
        %v3265 = vmul.f32 %v3247, %v2131
        %v3266 = vmul.f32 %v3247, %v2132
        %v3267 = vmul.f32 %v3247, %v2133
        %v3268 = vmul.f32 %v3247, %v2134
        %v3269 = vmul.f32 %v3247, %v2135
        %v3270 = vmul.f32 %v3247, %v2136
        %v3271 = vmul.f32 %v3247, %v2137
        %v3272 = vmul.f32 %v3247, %v2140
        %v3273 = vmul.f32 %v3247, %v2141
        %v3274 = vmul.f32 %v3247, %v2142
        %v3275 = vmul.f32 %v3247, %v2143
        %v3276 = vmul.f32 %v3247, %v2144
        %v3277 = vmul.f32 %v3247, %v2145
        %v3278 = vmul.f32 %v3247, %v2146
        %v3279 = vmul.f32 %v3247, %v2147
        %v3280 = vmul.f32 %v3247, %v2150
        %v3281 = vmul.f32 %v3247, %v2151
        %v3282 = vmul.f32 %v3247, %v2152
        %v3283 = vmul.f32 %v3247, %v2153
        %v3284 = vmul.f32 %v3247, %v2154
        %v3285 = vmul.f32 %v3247, %v2155
        %v3286 = vmul.f32 %v3247, %v2156
        %v3287 = vmul.f32 %v3247, %v2157
        %v3288 = vmul.f32 %v3247, %v2160
        %v3289 = vmul.f32 %v3247, %v2161
        %v3290 = vmul.f32 %v3247, %v2162
        %v3291 = vmul.f32 %v3247, %v2163
        %v3292 = vmul.f32 %v3247, %v2164
        %v3293 = vmul.f32 %v3247, %v2165
        %v3294 = vmul.f32 %v3247, %v2166
        %v3295 = vmul.f32 %v3247, %v2167
        %v3296 = vmul.f32 %v3247, %v2170
        %v3297 = vmul.f32 %v3247, %v2171
        %v3298 = vmul.f32 %v3247, %v2172
        %v3299 = vmul.f32 %v3247, %v2173
        %v3300 = vmul.f32 %v3247, %v2174
        %v3301 = vmul.f32 %v3247, %v2175
        %v3302 = vmul.f32 %v3247, %v2176
        %v3303 = vmul.f32 %v3247, %v2177
        %v3304 = vmul.f32 %v3247, %v2180
        %v3305 = vmul.f32 %v3247, %v2181
        %v3306 = vmul.f32 %v3247, %v2182
        %v3307 = vmul.f32 %v3247, %v2183
        %v3308 = vmul.f32 %v3247, %v2184
        %v3309 = vmul.f32 %v3247, %v2185
        %v3310 = vmul.f32 %v3247, %v2186
        %v3311 = vmul.f32 %v3247, %v2187
        %v3312 = vadd.f32 %v3180, %v3248
        %v3313 = vadd.f32 %v3181, %v3249
        %v3314 = vadd.f32 %v3182, %v3250
        %v3315 = vadd.f32 %v3183, %v3251
        %v3316 = vadd.f32 %v3184, %v3252
        %v3317 = vadd.f32 %v3185, %v3253
        %v3318 = vadd.f32 %v3186, %v3254
        %v3319 = vadd.f32 %v3187, %v3255
        %v3320 = vadd.f32 %v3188, %v3256
        %v3321 = vadd.f32 %v3189, %v3257
        %v3322 = vadd.f32 %v3190, %v3258
        %v3323 = vadd.f32 %v3191, %v3259
        %v3324 = vadd.f32 %v3192, %v3260
        %v3325 = vadd.f32 %v3193, %v3261
        %v3326 = vadd.f32 %v3194, %v3262
        %v3327 = vadd.f32 %v3195, %v3263
        %v3328 = vadd.f32 %v3196, %v3264
        %v3329 = vadd.f32 %v3197, %v3265
        %v3330 = vadd.f32 %v3198, %v3266
        %v3331 = vadd.f32 %v3199, %v3267
        %v3332 = vadd.f32 %v3200, %v3268
        %v3333 = vadd.f32 %v3201, %v3269
        %v3334 = vadd.f32 %v3202, %v3270
        %v3335 = vadd.f32 %v3203, %v3271
        %v3336 = vadd.f32 %v3204, %v3272
        %v3337 = vadd.f32 %v3205, %v3273
        %v3338 = vadd.f32 %v3206, %v3274
        %v3339 = vadd.f32 %v3207, %v3275
        %v3340 = vadd.f32 %v3208, %v3276
        %v3341 = vadd.f32 %v3209, %v3277
        %v3342 = vadd.f32 %v3210, %v3278
        %v3343 = vadd.f32 %v3211, %v3279
        %v3344 = vadd.f32 %v3212, %v3280
        %v3345 = vadd.f32 %v3213, %v3281
        %v3346 = vadd.f32 %v3214, %v3282
        %v3347 = vadd.f32 %v3215, %v3283
        %v3348 = vadd.f32 %v3216, %v3284
        %v3349 = vadd.f32 %v3217, %v3285
        %v3350 = vadd.f32 %v3218, %v3286
        %v3351 = vadd.f32 %v3219, %v3287
        %v3352 = vadd.f32 %v3220, %v3288
        %v3353 = vadd.f32 %v3221, %v3289
        %v3354 = vadd.f32 %v3222, %v3290
        %v3355 = vadd.f32 %v3223, %v3291
        %v3356 = vadd.f32 %v3224, %v3292
        %v3357 = vadd.f32 %v3225, %v3293
        %v3358 = vadd.f32 %v3226, %v3294
        %v3359 = vadd.f32 %v3227, %v3295
        %v3360 = vadd.f32 %v3228, %v3296
        %v3361 = vadd.f32 %v3229, %v3297
        %v3362 = vadd.f32 %v3230, %v3298
        %v3363 = vadd.f32 %v3231, %v3299
        %v3364 = vadd.f32 %v3232, %v3300
        %v3365 = vadd.f32 %v3233, %v3301
        %v3366 = vadd.f32 %v3234, %v3302
        %v3367 = vadd.f32 %v3235, %v3303
        %v3368 = vadd.f32 %v3236, %v3304
        %v3369 = vadd.f32 %v3237, %v3305
        %v3370 = vadd.f32 %v3238, %v3306
        %v3371 = vadd.f32 %v3239, %v3307
        %v3372 = vadd.f32 %v3240, %v3308
        %v3373 = vadd.f32 %v3241, %v3309
        %v3374 = vadd.f32 %v3242, %v3310
        %v3375 = vadd.f32 %v3243, %v3311
        %v3376 = vld [vmem:[#allocation2 + $0x9] sm:$0xff]
        %v3377 = vld [vmem:[#allocation2 + $0x21] sm:$0xff]
        %v3378 = vld [vmem:[#allocation2 + $0x39] sm:$0xff]
        %v3379 = vld [vmem:[#allocation2 + $0x51] sm:$0xff]
        %v3380 = vld [vmem:[#allocation2 + $0x69] sm:$0xff]
        %v3381 = vld [vmem:[#allocation2 + $0x81] sm:$0xff]
        %v3382 = vld [vmem:[#allocation2 + $0x99] sm:$0xff]
        %v3383 = vld [vmem:[#allocation2 + $0xb1] sm:$0xff]
        %v3384 = vld [vmem:[#allocation2 + $0xc9] sm:$0xff]
        %v3385 = vld [vmem:[#allocation2 + $0xe1] sm:$0xff]
        %v3386 = vld [vmem:[#allocation2 + $0xf9] sm:$0xff]
        %v3387 = vld [vmem:[#allocation2 + $0x111] sm:$0xff]
        %v3388 = vld [vmem:[#allocation2 + $0x129] sm:$0xff]
        %v3389 = vld [vmem:[#allocation2 + $0x141] sm:$0xff]
        %v3390 = vld [vmem:[#allocation2 + $0x159] sm:$0xff]
        %v3391 = vld [vmem:[#allocation2 + $0x171] sm:$0xff]
        %v3392 = vld [vmem:[#allocation2 + $0x189] sm:$0xff]
        %v3393 = vld [vmem:[#allocation2 + $0x1a1] sm:$0xff]
        %v3394 = vld [vmem:[#allocation2 + $0x1b9] sm:$0xff]
        %v3395 = vld [vmem:[#allocation2 + $0x1d1] sm:$0xff]
        %v3396 = vld [vmem:[#allocation2 + $0x1e9] sm:$0xff]
        %v3397 = vld [vmem:[#allocation2 + $0x201] sm:$0xff]
        %v3398 = vld [vmem:[#allocation2 + $0x219] sm:$0xff]
        %v3399 = vld [vmem:[#allocation2 + $0x231] sm:$0xff]
        %v3400 = vld [vmem:[#allocation2 + $0x249] sm:$0xff]
        %v3401 = vld [vmem:[#allocation2 + $0x261] sm:$0xff]
        %v3402 = vld [vmem:[#allocation2 + $0x279] sm:$0xff]
        %v3403 = vld [vmem:[#allocation2 + $0x291] sm:$0xff]
        %v3404 = vld [vmem:[#allocation2 + $0x2a9] sm:$0xff]
        %v3405 = vld [vmem:[#allocation2 + $0x2c1] sm:$0xff]
        %v3406 = vld [vmem:[#allocation2 + $0x2d9] sm:$0xff]
        %v3407 = vld [vmem:[#allocation2 + $0x2f1] sm:$0xff]
        %v3408 = vld [vmem:[#allocation2 + $0x309] sm:$0xff]
        %v3409 = vld [vmem:[#allocation2 + $0x321] sm:$0xff]
        %v3410 = vld [vmem:[#allocation2 + $0x339] sm:$0xff]
        %v3411 = vld [vmem:[#allocation2 + $0x351] sm:$0xff]
        %v3412 = vld [vmem:[#allocation2 + $0x369] sm:$0xff]
        %v3413 = vld [vmem:[#allocation2 + $0x381] sm:$0xff]
        %v3414 = vld [vmem:[#allocation2 + $0x399] sm:$0xff]
        %v3415 = vld [vmem:[#allocation2 + $0x3b1] sm:$0xff]
        %v3416 = vld [vmem:[#allocation2 + $0x3c9] sm:$0xff]
        %v3417 = vld [vmem:[#allocation2 + $0x3e1] sm:$0xff]
        %v3418 = vld [vmem:[#allocation2 + $0x3f9] sm:$0xff]
        %v3419 = vld [vmem:[#allocation2 + $0x411] sm:$0xff]
        %v3420 = vld [vmem:[#allocation2 + $0x429] sm:$0xff]
        %v3421 = vld [vmem:[#allocation2 + $0x441] sm:$0xff]
        %v3422 = vld [vmem:[#allocation2 + $0x459] sm:$0xff]
        %v3423 = vld [vmem:[#allocation2 + $0x471] sm:$0xff]
        %v3424 = vld [vmem:[#allocation2 + $0x489] sm:$0xff]
        %v3425 = vld [vmem:[#allocation2 + $0x4a1] sm:$0xff]
        %v3426 = vld [vmem:[#allocation2 + $0x4b9] sm:$0xff]
        %v3427 = vld [vmem:[#allocation2 + $0x4d1] sm:$0xff]
        %v3428 = vld [vmem:[#allocation2 + $0x4e9] sm:$0xff]
        %v3429 = vld [vmem:[#allocation2 + $0x501] sm:$0xff]
        %v3430 = vld [vmem:[#allocation2 + $0x519] sm:$0xff]
        %v3431 = vld [vmem:[#allocation2 + $0x531] sm:$0xff]
        %v3432 = vld [vmem:[#allocation2 + $0x549] sm:$0xff]
        %v3433 = vld [vmem:[#allocation2 + $0x561] sm:$0xff]
        %v3434 = vld [vmem:[#allocation2 + $0x579] sm:$0xff]
        %v3435 = vld [vmem:[#allocation2 + $0x591] sm:$0xff]
        %v3436 = vld [vmem:[#allocation2 + $0x5a9] sm:$0xff]
        %v3437 = vld [vmem:[#allocation2 + $0x5c1] sm:$0xff]
        %v3438 = vld [vmem:[#allocation2 + $0x5d9] sm:$0xff]
        %v3439 = vld [vmem:[#allocation2 + $0x5f1] sm:$0xff]
        %v3440 = vld [vmem:[#allocation2 + $0x609] sm:$0xff]
        %v3441 = vld [vmem:[#allocation2 + $0x621] sm:$0xff]
        %v3442 = vld [vmem:[#allocation2 + $0x639] sm:$0xff]
        %v3443 = vld [vmem:[#allocation2 + $0x651] sm:$0xff]
        %v3444 = vld [vmem:[#allocation2 + $0x669] sm:$0xff]
        %v3445 = vld [vmem:[#allocation2 + $0x681] sm:$0xff]
        %v3446 = vld [vmem:[#allocation2 + $0x699] sm:$0xff]
        %v3447 = vld [vmem:[#allocation2 + $0x6b1] sm:$0xff]
        %v3448 = vld [vmem:[#allocation2 + $0x6c9] sm:$0xff]
        %v3449 = vld [vmem:[#allocation2 + $0x6e1] sm:$0xff]
        %v3450 = vld [vmem:[#allocation2 + $0x6f9] sm:$0xff]
        %v3451 = vld [vmem:[#allocation2 + $0x711] sm:$0xff]
        %v3452 = vld [vmem:[#allocation2 + $0x729] sm:$0xff]
        %v3453 = vld [vmem:[#allocation2 + $0x741] sm:$0xff]
        %v3454 = vld [vmem:[#allocation2 + $0x759] sm:$0xff]
        %v3455 = vld [vmem:[#allocation2 + $0x771] sm:$0xff]
        %v3456 = vld [vmem:[#allocation2 + $0x789] sm:$0xff]
        %v3457 = vld [vmem:[#allocation2 + $0x7a1] sm:$0xff]
        %v3458 = vld [vmem:[#allocation2 + $0x7b9] sm:$0xff]
        %v3459 = vld [vmem:[#allocation2 + $0x7d1] sm:$0xff]
        %v3460 = vld [vmem:[#allocation2 + $0x7e9] sm:$0xff]
        %v3461 = vld [vmem:[#allocation2 + $0x801] sm:$0xff]
        %v3462 = vld [vmem:[#allocation2 + $0x819] sm:$0xff]
        %v3463 = vld [vmem:[#allocation2 + $0x831] sm:$0xff]
        %v3464 = vld [vmem:[#allocation2 + $0x849] sm:$0xff]
        %v3465 = vld [vmem:[#allocation2 + $0x861] sm:$0xff]
        %v3466 = vld [vmem:[#allocation2 + $0x879] sm:$0xff]
        %v3467 = vld [vmem:[#allocation2 + $0x891] sm:$0xff]
        %v3468 = vld [vmem:[#allocation2 + $0x8a9] sm:$0xff]
        %v3469 = vld [vmem:[#allocation2 + $0x8c1] sm:$0xff]
        %v3470 = vld [vmem:[#allocation2 + $0x8d9] sm:$0xff]
        %v3471 = vld [vmem:[#allocation2 + $0x8f1] sm:$0xff]
        %v3472 = vld [vmem:[#allocation2 + $0x909] sm:$0xff]
        %v3473 = vld [vmem:[#allocation2 + $0x921] sm:$0xff]
        %v3474 = vld [vmem:[#allocation2 + $0x939] sm:$0xff]
        %v3475 = vld [vmem:[#allocation2 + $0x951] sm:$0xff]
        %v3476 = vlaneseq
        %v3477 = vshrl.u32 %v3476, 7
        %v3478 = vsub.s32 2, %v3477
        %v3479 = vrot.slane %v860, %v3478
        %v3480 = vmul.f32 %v3479, %v3376
        %v3481 = vmul.f32 %v3479, %v3377
        %v3482 = vmul.f32 %v3479, %v3378
        %v3483 = vmul.f32 %v3479, %v3379
        %v3484 = vmul.f32 %v3479, %v3380
        %v3485 = vmul.f32 %v3479, %v3381
        %v3486 = vmul.f32 %v3479, %v3382
        %v3487 = vmul.f32 %v3479, %v3383
        %v3488 = vmul.f32 %v3479, %v3386
        %v3489 = vmul.f32 %v3479, %v3387
        %v3490 = vmul.f32 %v3479, %v3388
        %v3491 = vmul.f32 %v3479, %v3389
        %v3492 = vmul.f32 %v3479, %v3390
        %v3493 = vmul.f32 %v3479, %v3391
        %v3494 = vmul.f32 %v3479, %v3392
        %v3495 = vmul.f32 %v3479, %v3393
        %v3496 = vmul.f32 %v3479, %v3396
        %v3497 = vmul.f32 %v3479, %v3397
        %v3498 = vmul.f32 %v3479, %v3398
        %v3499 = vmul.f32 %v3479, %v3399
        %v3500 = vmul.f32 %v3479, %v3400
        %v3501 = vmul.f32 %v3479, %v3401
        %v3502 = vmul.f32 %v3479, %v3402
        %v3503 = vmul.f32 %v3479, %v3403
        %v3504 = vmul.f32 %v3479, %v3406
        %v3505 = vmul.f32 %v3479, %v3407
        %v3506 = vmul.f32 %v3479, %v3408
        %v3507 = vmul.f32 %v3479, %v3409
        %v3508 = vmul.f32 %v3479, %v3410
        %v3509 = vmul.f32 %v3479, %v3411
        %v3510 = vmul.f32 %v3479, %v3412
        %v3511 = vmul.f32 %v3479, %v3413
        %v3512 = vmul.f32 %v3479, %v3416
        %v3513 = vmul.f32 %v3479, %v3417
        %v3514 = vmul.f32 %v3479, %v3418
        %v3515 = vmul.f32 %v3479, %v3419
        %v3516 = vmul.f32 %v3479, %v3420
        %v3517 = vmul.f32 %v3479, %v3421
        %v3518 = vmul.f32 %v3479, %v3422
        %v3519 = vmul.f32 %v3479, %v3423
        %v3520 = vmul.f32 %v3479, %v3426
        %v3521 = vmul.f32 %v3479, %v3427
        %v3522 = vmul.f32 %v3479, %v3428
        %v3523 = vmul.f32 %v3479, %v3429
        %v3524 = vmul.f32 %v3479, %v3430
        %v3525 = vmul.f32 %v3479, %v3431
        %v3526 = vmul.f32 %v3479, %v3432
        %v3527 = vmul.f32 %v3479, %v3433
        %v3528 = vmul.f32 %v3479, %v3436
        %v3529 = vmul.f32 %v3479, %v3437
        %v3530 = vmul.f32 %v3479, %v3438
        %v3531 = vmul.f32 %v3479, %v3439
        %v3532 = vmul.f32 %v3479, %v3440
        %v3533 = vmul.f32 %v3479, %v3441
        %v3534 = vmul.f32 %v3479, %v3442
        %v3535 = vmul.f32 %v3479, %v3443
        %v3536 = vmul.f32 %v3479, %v3446
        %v3537 = vmul.f32 %v3479, %v3447
        %v3538 = vmul.f32 %v3479, %v3448
        %v3539 = vmul.f32 %v3479, %v3449
        %v3540 = vmul.f32 %v3479, %v3450
        %v3541 = vmul.f32 %v3479, %v3451
        %v3542 = vmul.f32 %v3479, %v3452
        %v3543 = vmul.f32 %v3479, %v3453
        %v3544 = vadd.f32 %v3312, %v3480
        %v3545 = vadd.f32 %v3313, %v3481
        %v3546 = vadd.f32 %v3314, %v3482
        %v3547 = vadd.f32 %v3315, %v3483
        %v3548 = vadd.f32 %v3316, %v3484
        %v3549 = vadd.f32 %v3317, %v3485
        %v3550 = vadd.f32 %v3318, %v3486
        %v3551 = vadd.f32 %v3319, %v3487
        %v3552 = vadd.f32 %v3320, %v3488
        %v3553 = vadd.f32 %v3321, %v3489
        %v3554 = vadd.f32 %v3322, %v3490
        %v3555 = vadd.f32 %v3323, %v3491
        %v3556 = vadd.f32 %v3324, %v3492
        %v3557 = vadd.f32 %v3325, %v3493
        %v3558 = vadd.f32 %v3326, %v3494
        %v3559 = vadd.f32 %v3327, %v3495
        %v3560 = vadd.f32 %v3328, %v3496
        %v3561 = vadd.f32 %v3329, %v3497
        %v3562 = vadd.f32 %v3330, %v3498
        %v3563 = vadd.f32 %v3331, %v3499
        %v3564 = vadd.f32 %v3332, %v3500
        %v3565 = vadd.f32 %v3333, %v3501
        %v3566 = vadd.f32 %v3334, %v3502
        %v3567 = vadd.f32 %v3335, %v3503
        %v3568 = vadd.f32 %v3336, %v3504
        %v3569 = vadd.f32 %v3337, %v3505
        %v3570 = vadd.f32 %v3338, %v3506
        %v3571 = vadd.f32 %v3339, %v3507
        %v3572 = vadd.f32 %v3340, %v3508
        %v3573 = vadd.f32 %v3341, %v3509
        %v3574 = vadd.f32 %v3342, %v3510
        %v3575 = vadd.f32 %v3343, %v3511
        %v3576 = vadd.f32 %v3344, %v3512
        %v3577 = vadd.f32 %v3345, %v3513
        %v3578 = vadd.f32 %v3346, %v3514
        %v3579 = vadd.f32 %v3347, %v3515
        %v3580 = vadd.f32 %v3348, %v3516
        %v3581 = vadd.f32 %v3349, %v3517
        %v3582 = vadd.f32 %v3350, %v3518
        %v3583 = vadd.f32 %v3351, %v3519
        %v3584 = vadd.f32 %v3352, %v3520
        %v3585 = vadd.f32 %v3353, %v3521
        %v3586 = vadd.f32 %v3354, %v3522
        %v3587 = vadd.f32 %v3355, %v3523
        %v3588 = vadd.f32 %v3356, %v3524
        %v3589 = vadd.f32 %v3357, %v3525
        %v3590 = vadd.f32 %v3358, %v3526
        %v3591 = vadd.f32 %v3359, %v3527
        %v3592 = vadd.f32 %v3360, %v3528
        %v3593 = vadd.f32 %v3361, %v3529
        %v3594 = vadd.f32 %v3362, %v3530
        %v3595 = vadd.f32 %v3363, %v3531
        %v3596 = vadd.f32 %v3364, %v3532
        %v3597 = vadd.f32 %v3365, %v3533
        %v3598 = vadd.f32 %v3366, %v3534
        %v3599 = vadd.f32 %v3367, %v3535
        %v3600 = vadd.f32 %v3368, %v3536
        %v3601 = vadd.f32 %v3369, %v3537
        %v3602 = vadd.f32 %v3370, %v3538
        %v3603 = vadd.f32 %v3371, %v3539
        %v3604 = vadd.f32 %v3372, %v3540
        %v3605 = vadd.f32 %v3373, %v3541
        %v3606 = vadd.f32 %v3374, %v3542
        %v3607 = vadd.f32 %v3375, %v3543
        %v3608 = vlaneseq
        %v3609 = vshrl.u32 %v3608, 7
        %v3610 = vsub.s32 5, %v3609
        %v3611 = vrot.slane %v860, %v3610
        %v3612 = vmul.f32 %v3611, %v3377
        %v3613 = vmul.f32 %v3611, %v3378
        %v3614 = vmul.f32 %v3611, %v3379
        %v3615 = vmul.f32 %v3611, %v3380
        %v3616 = vmul.f32 %v3611, %v3381
        %v3617 = vmul.f32 %v3611, %v3382
        %v3618 = vmul.f32 %v3611, %v3383
        %v3619 = vmul.f32 %v3611, %v3384
        %v3620 = vmul.f32 %v3611, %v3387
        %v3621 = vmul.f32 %v3611, %v3388
        %v3622 = vmul.f32 %v3611, %v3389
        %v3623 = vmul.f32 %v3611, %v3390
        %v3624 = vmul.f32 %v3611, %v3391
        %v3625 = vmul.f32 %v3611, %v3392
        %v3626 = vmul.f32 %v3611, %v3393
        %v3627 = vmul.f32 %v3611, %v3394
        %v3628 = vmul.f32 %v3611, %v3397
        %v3629 = vmul.f32 %v3611, %v3398
        %v3630 = vmul.f32 %v3611, %v3399
        %v3631 = vmul.f32 %v3611, %v3400
        %v3632 = vmul.f32 %v3611, %v3401
        %v3633 = vmul.f32 %v3611, %v3402
        %v3634 = vmul.f32 %v3611, %v3403
        %v3635 = vmul.f32 %v3611, %v3404
        %v3636 = vmul.f32 %v3611, %v3407
        %v3637 = vmul.f32 %v3611, %v3408
        %v3638 = vmul.f32 %v3611, %v3409
        %v3639 = vmul.f32 %v3611, %v3410
        %v3640 = vmul.f32 %v3611, %v3411
        %v3641 = vmul.f32 %v3611, %v3412
        %v3642 = vmul.f32 %v3611, %v3413
        %v3643 = vmul.f32 %v3611, %v3414
        %v3644 = vmul.f32 %v3611, %v3417
        %v3645 = vmul.f32 %v3611, %v3418
        %v3646 = vmul.f32 %v3611, %v3419
        %v3647 = vmul.f32 %v3611, %v3420
        %v3648 = vmul.f32 %v3611, %v3421
        %v3649 = vmul.f32 %v3611, %v3422
        %v3650 = vmul.f32 %v3611, %v3423
        %v3651 = vmul.f32 %v3611, %v3424
        %v3652 = vmul.f32 %v3611, %v3427
        %v3653 = vmul.f32 %v3611, %v3428
        %v3654 = vmul.f32 %v3611, %v3429
        %v3655 = vmul.f32 %v3611, %v3430
        %v3656 = vmul.f32 %v3611, %v3431
        %v3657 = vmul.f32 %v3611, %v3432
        %v3658 = vmul.f32 %v3611, %v3433
        %v3659 = vmul.f32 %v3611, %v3434
        %v3660 = vmul.f32 %v3611, %v3437
        %v3661 = vmul.f32 %v3611, %v3438
        %v3662 = vmul.f32 %v3611, %v3439
        %v3663 = vmul.f32 %v3611, %v3440
        %v3664 = vmul.f32 %v3611, %v3441
        %v3665 = vmul.f32 %v3611, %v3442
        %v3666 = vmul.f32 %v3611, %v3443
        %v3667 = vmul.f32 %v3611, %v3444
        %v3668 = vmul.f32 %v3611, %v3447
        %v3669 = vmul.f32 %v3611, %v3448
        %v3670 = vmul.f32 %v3611, %v3449
        %v3671 = vmul.f32 %v3611, %v3450
        %v3672 = vmul.f32 %v3611, %v3451
        %v3673 = vmul.f32 %v3611, %v3452
        %v3674 = vmul.f32 %v3611, %v3453
        %v3675 = vmul.f32 %v3611, %v3454
        %v3676 = vadd.f32 %v3544, %v3612
        %v3677 = vadd.f32 %v3545, %v3613
        %v3678 = vadd.f32 %v3546, %v3614
        %v3679 = vadd.f32 %v3547, %v3615
        %v3680 = vadd.f32 %v3548, %v3616
        %v3681 = vadd.f32 %v3549, %v3617
        %v3682 = vadd.f32 %v3550, %v3618
        %v3683 = vadd.f32 %v3551, %v3619
        %v3684 = vadd.f32 %v3552, %v3620
        %v3685 = vadd.f32 %v3553, %v3621
        %v3686 = vadd.f32 %v3554, %v3622
        %v3687 = vadd.f32 %v3555, %v3623
        %v3688 = vadd.f32 %v3556, %v3624
        %v3689 = vadd.f32 %v3557, %v3625
        %v3690 = vadd.f32 %v3558, %v3626
        %v3691 = vadd.f32 %v3559, %v3627
        %v3692 = vadd.f32 %v3560, %v3628
        %v3693 = vadd.f32 %v3561, %v3629
        %v3694 = vadd.f32 %v3562, %v3630
        %v3695 = vadd.f32 %v3563, %v3631
        %v3696 = vadd.f32 %v3564, %v3632
        %v3697 = vadd.f32 %v3565, %v3633
        %v3698 = vadd.f32 %v3566, %v3634
        %v3699 = vadd.f32 %v3567, %v3635
        %v3700 = vadd.f32 %v3568, %v3636
        %v3701 = vadd.f32 %v3569, %v3637
        %v3702 = vadd.f32 %v3570, %v3638
        %v3703 = vadd.f32 %v3571, %v3639
        %v3704 = vadd.f32 %v3572, %v3640
        %v3705 = vadd.f32 %v3573, %v3641
        %v3706 = vadd.f32 %v3574, %v3642
        %v3707 = vadd.f32 %v3575, %v3643
        %v3708 = vadd.f32 %v3576, %v3644
        %v3709 = vadd.f32 %v3577, %v3645
        %v3710 = vadd.f32 %v3578, %v3646
        %v3711 = vadd.f32 %v3579, %v3647
        %v3712 = vadd.f32 %v3580, %v3648
        %v3713 = vadd.f32 %v3581, %v3649
        %v3714 = vadd.f32 %v3582, %v3650
        %v3715 = vadd.f32 %v3583, %v3651
        %v3716 = vadd.f32 %v3584, %v3652
        %v3717 = vadd.f32 %v3585, %v3653
        %v3718 = vadd.f32 %v3586, %v3654
        %v3719 = vadd.f32 %v3587, %v3655
        %v3720 = vadd.f32 %v3588, %v3656
        %v3721 = vadd.f32 %v3589, %v3657
        %v3722 = vadd.f32 %v3590, %v3658
        %v3723 = vadd.f32 %v3591, %v3659
        %v3724 = vadd.f32 %v3592, %v3660
        %v3725 = vadd.f32 %v3593, %v3661
        %v3726 = vadd.f32 %v3594, %v3662
        %v3727 = vadd.f32 %v3595, %v3663
        %v3728 = vadd.f32 %v3596, %v3664
        %v3729 = vadd.f32 %v3597, %v3665
        %v3730 = vadd.f32 %v3598, %v3666
        %v3731 = vadd.f32 %v3599, %v3667
        %v3732 = vadd.f32 %v3600, %v3668
        %v3733 = vadd.f32 %v3601, %v3669
        %v3734 = vadd.f32 %v3602, %v3670
        %v3735 = vadd.f32 %v3603, %v3671
        %v3736 = vadd.f32 %v3604, %v3672
        %v3737 = vadd.f32 %v3605, %v3673
        %v3738 = vadd.f32 %v3606, %v3674
        %v3739 = vadd.f32 %v3607, %v3675
        %v3740 = vlaneseq
        %v3741 = vshrl.u32 %v3740, 7
        %v3742 = vsub.s32 0, %v3741
        %v3743 = vrot.slane %v861, %v3742
        %v3744 = vmul.f32 %v3743, %v3378
        %v3745 = vmul.f32 %v3743, %v3379
        %v3746 = vmul.f32 %v3743, %v3380
        %v3747 = vmul.f32 %v3743, %v3381
        %v3748 = vmul.f32 %v3743, %v3382
        %v3749 = vmul.f32 %v3743, %v3383
        %v3750 = vmul.f32 %v3743, %v3384
        %v3751 = vmul.f32 %v3743, %v3385
        %v3752 = vmul.f32 %v3743, %v3388
        %v3753 = vmul.f32 %v3743, %v3389
        %v3754 = vmul.f32 %v3743, %v3390
        %v3755 = vmul.f32 %v3743, %v3391
        %v3756 = vmul.f32 %v3743, %v3392
        %v3757 = vmul.f32 %v3743, %v3393
        %v3758 = vmul.f32 %v3743, %v3394
        %v3759 = vmul.f32 %v3743, %v3395
        %v3760 = vmul.f32 %v3743, %v3398
        %v3761 = vmul.f32 %v3743, %v3399
        %v3762 = vmul.f32 %v3743, %v3400
        %v3763 = vmul.f32 %v3743, %v3401
        %v3764 = vmul.f32 %v3743, %v3402
        %v3765 = vmul.f32 %v3743, %v3403
        %v3766 = vmul.f32 %v3743, %v3404
        %v3767 = vmul.f32 %v3743, %v3405
        %v3768 = vmul.f32 %v3743, %v3408
        %v3769 = vmul.f32 %v3743, %v3409
        %v3770 = vmul.f32 %v3743, %v3410
        %v3771 = vmul.f32 %v3743, %v3411
        %v3772 = vmul.f32 %v3743, %v3412
        %v3773 = vmul.f32 %v3743, %v3413
        %v3774 = vmul.f32 %v3743, %v3414
        %v3775 = vmul.f32 %v3743, %v3415
        %v3776 = vmul.f32 %v3743, %v3418
        %v3777 = vmul.f32 %v3743, %v3419
        %v3778 = vmul.f32 %v3743, %v3420
        %v3779 = vmul.f32 %v3743, %v3421
        %v3780 = vmul.f32 %v3743, %v3422
        %v3781 = vmul.f32 %v3743, %v3423
        %v3782 = vmul.f32 %v3743, %v3424
        %v3783 = vmul.f32 %v3743, %v3425
        %v3784 = vmul.f32 %v3743, %v3428
        %v3785 = vmul.f32 %v3743, %v3429
        %v3786 = vmul.f32 %v3743, %v3430
        %v3787 = vmul.f32 %v3743, %v3431
        %v3788 = vmul.f32 %v3743, %v3432
        %v3789 = vmul.f32 %v3743, %v3433
        %v3790 = vmul.f32 %v3743, %v3434
        %v3791 = vmul.f32 %v3743, %v3435
        %v3792 = vmul.f32 %v3743, %v3438
        %v3793 = vmul.f32 %v3743, %v3439
        %v3794 = vmul.f32 %v3743, %v3440
        %v3795 = vmul.f32 %v3743, %v3441
        %v3796 = vmul.f32 %v3743, %v3442
        %v3797 = vmul.f32 %v3743, %v3443
        %v3798 = vmul.f32 %v3743, %v3444
        %v3799 = vmul.f32 %v3743, %v3445
        %v3800 = vmul.f32 %v3743, %v3448
        %v3801 = vmul.f32 %v3743, %v3449
        %v3802 = vmul.f32 %v3743, %v3450
        %v3803 = vmul.f32 %v3743, %v3451
        %v3804 = vmul.f32 %v3743, %v3452
        %v3805 = vmul.f32 %v3743, %v3453
        %v3806 = vmul.f32 %v3743, %v3454
        %v3807 = vmul.f32 %v3743, %v3455
        %v3808 = vadd.f32 %v3676, %v3744
        %v3809 = vadd.f32 %v3677, %v3745
        %v3810 = vadd.f32 %v3678, %v3746
        %v3811 = vadd.f32 %v3679, %v3747
        %v3812 = vadd.f32 %v3680, %v3748
        %v3813 = vadd.f32 %v3681, %v3749
        %v3814 = vadd.f32 %v3682, %v3750
        %v3815 = vadd.f32 %v3683, %v3751
        %v3816 = vadd.f32 %v3684, %v3752
        %v3817 = vadd.f32 %v3685, %v3753
        %v3818 = vadd.f32 %v3686, %v3754
        %v3819 = vadd.f32 %v3687, %v3755
        %v3820 = vadd.f32 %v3688, %v3756
        %v3821 = vadd.f32 %v3689, %v3757
        %v3822 = vadd.f32 %v3690, %v3758
        %v3823 = vadd.f32 %v3691, %v3759
        %v3824 = vadd.f32 %v3692, %v3760
        %v3825 = vadd.f32 %v3693, %v3761
        %v3826 = vadd.f32 %v3694, %v3762
        %v3827 = vadd.f32 %v3695, %v3763
        %v3828 = vadd.f32 %v3696, %v3764
        %v3829 = vadd.f32 %v3697, %v3765
        %v3830 = vadd.f32 %v3698, %v3766
        %v3831 = vadd.f32 %v3699, %v3767
        %v3832 = vadd.f32 %v3700, %v3768
        %v3833 = vadd.f32 %v3701, %v3769
        %v3834 = vadd.f32 %v3702, %v3770
        %v3835 = vadd.f32 %v3703, %v3771
        %v3836 = vadd.f32 %v3704, %v3772
        %v3837 = vadd.f32 %v3705, %v3773
        %v3838 = vadd.f32 %v3706, %v3774
        %v3839 = vadd.f32 %v3707, %v3775
        %v3840 = vadd.f32 %v3708, %v3776
        %v3841 = vadd.f32 %v3709, %v3777
        %v3842 = vadd.f32 %v3710, %v3778
        %v3843 = vadd.f32 %v3711, %v3779
        %v3844 = vadd.f32 %v3712, %v3780
        %v3845 = vadd.f32 %v3713, %v3781
        %v3846 = vadd.f32 %v3714, %v3782
        %v3847 = vadd.f32 %v3715, %v3783
        %v3848 = vadd.f32 %v3716, %v3784
        %v3849 = vadd.f32 %v3717, %v3785
        %v3850 = vadd.f32 %v3718, %v3786
        %v3851 = vadd.f32 %v3719, %v3787
        %v3852 = vadd.f32 %v3720, %v3788
        %v3853 = vadd.f32 %v3721, %v3789
        %v3854 = vadd.f32 %v3722, %v3790
        %v3855 = vadd.f32 %v3723, %v3791
        %v3856 = vadd.f32 %v3724, %v3792
        %v3857 = vadd.f32 %v3725, %v3793
        %v3858 = vadd.f32 %v3726, %v3794
        %v3859 = vadd.f32 %v3727, %v3795
        %v3860 = vadd.f32 %v3728, %v3796
        %v3861 = vadd.f32 %v3729, %v3797
        %v3862 = vadd.f32 %v3730, %v3798
        %v3863 = vadd.f32 %v3731, %v3799
        %v3864 = vadd.f32 %v3732, %v3800
        %v3865 = vadd.f32 %v3733, %v3801
        %v3866 = vadd.f32 %v3734, %v3802
        %v3867 = vadd.f32 %v3735, %v3803
        %v3868 = vadd.f32 %v3736, %v3804
        %v3869 = vadd.f32 %v3737, %v3805
        %v3870 = vadd.f32 %v3738, %v3806
        %v3871 = vadd.f32 %v3739, %v3807
        %v3872 = vlaneseq
        %v3873 = vshrl.u32 %v3872, 7
        %v3874 = vsub.s32 3, %v3873
        %v3875 = vrot.slane %v861, %v3874
        %v3876 = vmul.f32 %v3875, %v3386
        %v3877 = vmul.f32 %v3875, %v3387
        %v3878 = vmul.f32 %v3875, %v3388
        %v3879 = vmul.f32 %v3875, %v3389
        %v3880 = vmul.f32 %v3875, %v3390
        %v3881 = vmul.f32 %v3875, %v3391
        %v3882 = vmul.f32 %v3875, %v3392
        %v3883 = vmul.f32 %v3875, %v3393
        %v3884 = vmul.f32 %v3875, %v3396
        %v3885 = vmul.f32 %v3875, %v3397
        %v3886 = vmul.f32 %v3875, %v3398
        %v3887 = vmul.f32 %v3875, %v3399
        %v3888 = vmul.f32 %v3875, %v3400
        %v3889 = vmul.f32 %v3875, %v3401
        %v3890 = vmul.f32 %v3875, %v3402
        %v3891 = vmul.f32 %v3875, %v3403
        %v3892 = vmul.f32 %v3875, %v3406
        %v3893 = vmul.f32 %v3875, %v3407
        %v3894 = vmul.f32 %v3875, %v3408
        %v3895 = vmul.f32 %v3875, %v3409
        %v3896 = vmul.f32 %v3875, %v3410
        %v3897 = vmul.f32 %v3875, %v3411
        %v3898 = vmul.f32 %v3875, %v3412
        %v3899 = vmul.f32 %v3875, %v3413
        %v3900 = vmul.f32 %v3875, %v3416
        %v3901 = vmul.f32 %v3875, %v3417
        %v3902 = vmul.f32 %v3875, %v3418
        %v3903 = vmul.f32 %v3875, %v3419
        %v3904 = vmul.f32 %v3875, %v3420
        %v3905 = vmul.f32 %v3875, %v3421
        %v3906 = vmul.f32 %v3875, %v3422
        %v3907 = vmul.f32 %v3875, %v3423
        %v3908 = vmul.f32 %v3875, %v3426
        %v3909 = vmul.f32 %v3875, %v3427
        %v3910 = vmul.f32 %v3875, %v3428
        %v3911 = vmul.f32 %v3875, %v3429
        %v3912 = vmul.f32 %v3875, %v3430
        %v3913 = vmul.f32 %v3875, %v3431
        %v3914 = vmul.f32 %v3875, %v3432
        %v3915 = vmul.f32 %v3875, %v3433
        %v3916 = vmul.f32 %v3875, %v3436
        %v3917 = vmul.f32 %v3875, %v3437
        %v3918 = vmul.f32 %v3875, %v3438
        %v3919 = vmul.f32 %v3875, %v3439
        %v3920 = vmul.f32 %v3875, %v3440
        %v3921 = vmul.f32 %v3875, %v3441
        %v3922 = vmul.f32 %v3875, %v3442
        %v3923 = vmul.f32 %v3875, %v3443
        %v3924 = vmul.f32 %v3875, %v3446
        %v3925 = vmul.f32 %v3875, %v3447
        %v3926 = vmul.f32 %v3875, %v3448
        %v3927 = vmul.f32 %v3875, %v3449
        %v3928 = vmul.f32 %v3875, %v3450
        %v3929 = vmul.f32 %v3875, %v3451
        %v3930 = vmul.f32 %v3875, %v3452
        %v3931 = vmul.f32 %v3875, %v3453
        %v3932 = vmul.f32 %v3875, %v3456
        %v3933 = vmul.f32 %v3875, %v3457
        %v3934 = vmul.f32 %v3875, %v3458
        %v3935 = vmul.f32 %v3875, %v3459
        %v3936 = vmul.f32 %v3875, %v3460
        %v3937 = vmul.f32 %v3875, %v3461
        %v3938 = vmul.f32 %v3875, %v3462
        %v3939 = vmul.f32 %v3875, %v3463
        %v3940 = vadd.f32 %v3808, %v3876
        %v3941 = vadd.f32 %v3809, %v3877
        %v3942 = vadd.f32 %v3810, %v3878
        %v3943 = vadd.f32 %v3811, %v3879
        %v3944 = vadd.f32 %v3812, %v3880
        %v3945 = vadd.f32 %v3813, %v3881
        %v3946 = vadd.f32 %v3814, %v3882
        %v3947 = vadd.f32 %v3815, %v3883
        %v3948 = vadd.f32 %v3816, %v3884
        %v3949 = vadd.f32 %v3817, %v3885
        %v3950 = vadd.f32 %v3818, %v3886
        %v3951 = vadd.f32 %v3819, %v3887
        %v3952 = vadd.f32 %v3820, %v3888
        %v3953 = vadd.f32 %v3821, %v3889
        %v3954 = vadd.f32 %v3822, %v3890
        %v3955 = vadd.f32 %v3823, %v3891
        %v3956 = vadd.f32 %v3824, %v3892
        %v3957 = vadd.f32 %v3825, %v3893
        %v3958 = vadd.f32 %v3826, %v3894
        %v3959 = vadd.f32 %v3827, %v3895
        %v3960 = vadd.f32 %v3828, %v3896
        %v3961 = vadd.f32 %v3829, %v3897
        %v3962 = vadd.f32 %v3830, %v3898
        %v3963 = vadd.f32 %v3831, %v3899
        %v3964 = vadd.f32 %v3832, %v3900
        %v3965 = vadd.f32 %v3833, %v3901
        %v3966 = vadd.f32 %v3834, %v3902
        %v3967 = vadd.f32 %v3835, %v3903
        %v3968 = vadd.f32 %v3836, %v3904
        %v3969 = vadd.f32 %v3837, %v3905
        %v3970 = vadd.f32 %v3838, %v3906
        %v3971 = vadd.f32 %v3839, %v3907
        %v3972 = vadd.f32 %v3840, %v3908
        %v3973 = vadd.f32 %v3841, %v3909
        %v3974 = vadd.f32 %v3842, %v3910
        %v3975 = vadd.f32 %v3843, %v3911
        %v3976 = vadd.f32 %v3844, %v3912
        %v3977 = vadd.f32 %v3845, %v3913
        %v3978 = vadd.f32 %v3846, %v3914
        %v3979 = vadd.f32 %v3847, %v3915
        %v3980 = vadd.f32 %v3848, %v3916
        %v3981 = vadd.f32 %v3849, %v3917
        %v3982 = vadd.f32 %v3850, %v3918
        %v3983 = vadd.f32 %v3851, %v3919
        %v3984 = vadd.f32 %v3852, %v3920
        %v3985 = vadd.f32 %v3853, %v3921
        %v3986 = vadd.f32 %v3854, %v3922
        %v3987 = vadd.f32 %v3855, %v3923
        %v3988 = vadd.f32 %v3856, %v3924
        %v3989 = vadd.f32 %v3857, %v3925
        %v3990 = vadd.f32 %v3858, %v3926
        %v3991 = vadd.f32 %v3859, %v3927
        %v3992 = vadd.f32 %v3860, %v3928
        %v3993 = vadd.f32 %v3861, %v3929
        %v3994 = vadd.f32 %v3862, %v3930
        %v3995 = vadd.f32 %v3863, %v3931
        %v3996 = vadd.f32 %v3864, %v3932
        %v3997 = vadd.f32 %v3865, %v3933
        %v3998 = vadd.f32 %v3866, %v3934
        %v3999 = vadd.f32 %v3867, %v3935
        %v4000 = vadd.f32 %v3868, %v3936
        %v4001 = vadd.f32 %v3869, %v3937
        %v4002 = vadd.f32 %v3870, %v3938
        %v4003 = vadd.f32 %v3871, %v3939
        %v4004 = vlaneseq
        %v4005 = vshrl.u32 %v4004, 7
        %v4006 = vsub.s32 6, %v4005
        %v4007 = vrot.slane %v861, %v4006
        %v4008 = vmul.f32 %v4007, %v3387
        %v4009 = vmul.f32 %v4007, %v3388
        %v4010 = vmul.f32 %v4007, %v3389
        %v4011 = vmul.f32 %v4007, %v3390
        %v4012 = vmul.f32 %v4007, %v3391
        %v4013 = vmul.f32 %v4007, %v3392
        %v4014 = vmul.f32 %v4007, %v3393
        %v4015 = vmul.f32 %v4007, %v3394
        %v4016 = vmul.f32 %v4007, %v3397
        %v4017 = vmul.f32 %v4007, %v3398
        %v4018 = vmul.f32 %v4007, %v3399
        %v4019 = vmul.f32 %v4007, %v3400
        %v4020 = vmul.f32 %v4007, %v3401
        %v4021 = vmul.f32 %v4007, %v3402
        %v4022 = vmul.f32 %v4007, %v3403
        %v4023 = vmul.f32 %v4007, %v3404
        %v4024 = vmul.f32 %v4007, %v3407
        %v4025 = vmul.f32 %v4007, %v3408
        %v4026 = vmul.f32 %v4007, %v3409
        %v4027 = vmul.f32 %v4007, %v3410
        %v4028 = vmul.f32 %v4007, %v3411
        %v4029 = vmul.f32 %v4007, %v3412
        %v4030 = vmul.f32 %v4007, %v3413
        %v4031 = vmul.f32 %v4007, %v3414
        %v4032 = vmul.f32 %v4007, %v3417
        %v4033 = vmul.f32 %v4007, %v3418
        %v4034 = vmul.f32 %v4007, %v3419
        %v4035 = vmul.f32 %v4007, %v3420
        %v4036 = vmul.f32 %v4007, %v3421
        %v4037 = vmul.f32 %v4007, %v3422
        %v4038 = vmul.f32 %v4007, %v3423
        %v4039 = vmul.f32 %v4007, %v3424
        %v4040 = vmul.f32 %v4007, %v3427
        %v4041 = vmul.f32 %v4007, %v3428
        %v4042 = vmul.f32 %v4007, %v3429
        %v4043 = vmul.f32 %v4007, %v3430
        %v4044 = vmul.f32 %v4007, %v3431
        %v4045 = vmul.f32 %v4007, %v3432
        %v4046 = vmul.f32 %v4007, %v3433
        %v4047 = vmul.f32 %v4007, %v3434
        %v4048 = vmul.f32 %v4007, %v3437
        %v4049 = vmul.f32 %v4007, %v3438
        %v4050 = vmul.f32 %v4007, %v3439
        %v4051 = vmul.f32 %v4007, %v3440
        %v4052 = vmul.f32 %v4007, %v3441
        %v4053 = vmul.f32 %v4007, %v3442
        %v4054 = vmul.f32 %v4007, %v3443
        %v4055 = vmul.f32 %v4007, %v3444
        %v4056 = vmul.f32 %v4007, %v3447
        %v4057 = vmul.f32 %v4007, %v3448
        %v4058 = vmul.f32 %v4007, %v3449
        %v4059 = vmul.f32 %v4007, %v3450
        %v4060 = vmul.f32 %v4007, %v3451
        %v4061 = vmul.f32 %v4007, %v3452
        %v4062 = vmul.f32 %v4007, %v3453
        %v4063 = vmul.f32 %v4007, %v3454
        %v4064 = vmul.f32 %v4007, %v3457
        %v4065 = vmul.f32 %v4007, %v3458
        %v4066 = vmul.f32 %v4007, %v3459
        %v4067 = vmul.f32 %v4007, %v3460
        %v4068 = vmul.f32 %v4007, %v3461
        %v4069 = vmul.f32 %v4007, %v3462
        %v4070 = vmul.f32 %v4007, %v3463
        %v4071 = vmul.f32 %v4007, %v3464
        %v4072 = vadd.f32 %v3940, %v4008
        %v4073 = vadd.f32 %v3941, %v4009
        %v4074 = vadd.f32 %v3942, %v4010
        %v4075 = vadd.f32 %v3943, %v4011
        %v4076 = vadd.f32 %v3944, %v4012
        %v4077 = vadd.f32 %v3945, %v4013
        %v4078 = vadd.f32 %v3946, %v4014
        %v4079 = vadd.f32 %v3947, %v4015
        %v4080 = vadd.f32 %v3948, %v4016
        %v4081 = vadd.f32 %v3949, %v4017
        %v4082 = vadd.f32 %v3950, %v4018
        %v4083 = vadd.f32 %v3951, %v4019
        %v4084 = vadd.f32 %v3952, %v4020
        %v4085 = vadd.f32 %v3953, %v4021
        %v4086 = vadd.f32 %v3954, %v4022
        %v4087 = vadd.f32 %v3955, %v4023
        %v4088 = vadd.f32 %v3956, %v4024
        %v4089 = vadd.f32 %v3957, %v4025
        %v4090 = vadd.f32 %v3958, %v4026
        %v4091 = vadd.f32 %v3959, %v4027
        %v4092 = vadd.f32 %v3960, %v4028
        %v4093 = vadd.f32 %v3961, %v4029
        %v4094 = vadd.f32 %v3962, %v4030
        %v4095 = vadd.f32 %v3963, %v4031
        %v4096 = vadd.f32 %v3964, %v4032
        %v4097 = vadd.f32 %v3965, %v4033
        %v4098 = vadd.f32 %v3966, %v4034
        %v4099 = vadd.f32 %v3967, %v4035
        %v4100 = vadd.f32 %v3968, %v4036
        %v4101 = vadd.f32 %v3969, %v4037
        %v4102 = vadd.f32 %v3970, %v4038
        %v4103 = vadd.f32 %v3971, %v4039
        %v4104 = vadd.f32 %v3972, %v4040
        %v4105 = vadd.f32 %v3973, %v4041
        %v4106 = vadd.f32 %v3974, %v4042
        %v4107 = vadd.f32 %v3975, %v4043
        %v4108 = vadd.f32 %v3976, %v4044
        %v4109 = vadd.f32 %v3977, %v4045
        %v4110 = vadd.f32 %v3978, %v4046
        %v4111 = vadd.f32 %v3979, %v4047
        %v4112 = vadd.f32 %v3980, %v4048
        %v4113 = vadd.f32 %v3981, %v4049
        %v4114 = vadd.f32 %v3982, %v4050
        %v4115 = vadd.f32 %v3983, %v4051
        %v4116 = vadd.f32 %v3984, %v4052
        %v4117 = vadd.f32 %v3985, %v4053
        %v4118 = vadd.f32 %v3986, %v4054
        %v4119 = vadd.f32 %v3987, %v4055
        %v4120 = vadd.f32 %v3988, %v4056
        %v4121 = vadd.f32 %v3989, %v4057
        %v4122 = vadd.f32 %v3990, %v4058
        %v4123 = vadd.f32 %v3991, %v4059
        %v4124 = vadd.f32 %v3992, %v4060
        %v4125 = vadd.f32 %v3993, %v4061
        %v4126 = vadd.f32 %v3994, %v4062
        %v4127 = vadd.f32 %v3995, %v4063
        %v4128 = vadd.f32 %v3996, %v4064
        %v4129 = vadd.f32 %v3997, %v4065
        %v4130 = vadd.f32 %v3998, %v4066
        %v4131 = vadd.f32 %v3999, %v4067
        %v4132 = vadd.f32 %v4000, %v4068
        %v4133 = vadd.f32 %v4001, %v4069
        %v4134 = vadd.f32 %v4002, %v4070
        %v4135 = vadd.f32 %v4003, %v4071
        %v4136 = vlaneseq
        %v4137 = vshrl.u32 %v4136, 7
        %v4138 = vsub.s32 1, %v4137
        %v4139 = vrot.slane %v862, %v4138
        %v4140 = vmul.f32 %v4139, %v3388
        %v4141 = vmul.f32 %v4139, %v3389
        %v4142 = vmul.f32 %v4139, %v3390
        %v4143 = vmul.f32 %v4139, %v3391
        %v4144 = vmul.f32 %v4139, %v3392
        %v4145 = vmul.f32 %v4139, %v3393
        %v4146 = vmul.f32 %v4139, %v3394
        %v4147 = vmul.f32 %v4139, %v3395
        %v4148 = vmul.f32 %v4139, %v3398
        %v4149 = vmul.f32 %v4139, %v3399
        %v4150 = vmul.f32 %v4139, %v3400
        %v4151 = vmul.f32 %v4139, %v3401
        %v4152 = vmul.f32 %v4139, %v3402
        %v4153 = vmul.f32 %v4139, %v3403
        %v4154 = vmul.f32 %v4139, %v3404
        %v4155 = vmul.f32 %v4139, %v3405
        %v4156 = vmul.f32 %v4139, %v3408
        %v4157 = vmul.f32 %v4139, %v3409
        %v4158 = vmul.f32 %v4139, %v3410
        %v4159 = vmul.f32 %v4139, %v3411
        %v4160 = vmul.f32 %v4139, %v3412
        %v4161 = vmul.f32 %v4139, %v3413
        %v4162 = vmul.f32 %v4139, %v3414
        %v4163 = vmul.f32 %v4139, %v3415
        %v4164 = vmul.f32 %v4139, %v3418
        %v4165 = vmul.f32 %v4139, %v3419
        %v4166 = vmul.f32 %v4139, %v3420
        %v4167 = vmul.f32 %v4139, %v3421
        %v4168 = vmul.f32 %v4139, %v3422
        %v4169 = vmul.f32 %v4139, %v3423
        %v4170 = vmul.f32 %v4139, %v3424
        %v4171 = vmul.f32 %v4139, %v3425
        %v4172 = vmul.f32 %v4139, %v3428
        %v4173 = vmul.f32 %v4139, %v3429
        %v4174 = vmul.f32 %v4139, %v3430
        %v4175 = vmul.f32 %v4139, %v3431
        %v4176 = vmul.f32 %v4139, %v3432
        %v4177 = vmul.f32 %v4139, %v3433
        %v4178 = vmul.f32 %v4139, %v3434
        %v4179 = vmul.f32 %v4139, %v3435
        %v4180 = vmul.f32 %v4139, %v3438
        %v4181 = vmul.f32 %v4139, %v3439
        %v4182 = vmul.f32 %v4139, %v3440
        %v4183 = vmul.f32 %v4139, %v3441
        %v4184 = vmul.f32 %v4139, %v3442
        %v4185 = vmul.f32 %v4139, %v3443
        %v4186 = vmul.f32 %v4139, %v3444
        %v4187 = vmul.f32 %v4139, %v3445
        %v4188 = vmul.f32 %v4139, %v3448
        %v4189 = vmul.f32 %v4139, %v3449
        %v4190 = vmul.f32 %v4139, %v3450
        %v4191 = vmul.f32 %v4139, %v3451
        %v4192 = vmul.f32 %v4139, %v3452
        %v4193 = vmul.f32 %v4139, %v3453
        %v4194 = vmul.f32 %v4139, %v3454
        %v4195 = vmul.f32 %v4139, %v3455
        %v4196 = vmul.f32 %v4139, %v3458
        %v4197 = vmul.f32 %v4139, %v3459
        %v4198 = vmul.f32 %v4139, %v3460
        %v4199 = vmul.f32 %v4139, %v3461
        %v4200 = vmul.f32 %v4139, %v3462
        %v4201 = vmul.f32 %v4139, %v3463
        %v4202 = vmul.f32 %v4139, %v3464
        %v4203 = vmul.f32 %v4139, %v3465
        %v4204 = vadd.f32 %v4072, %v4140
        %v4205 = vadd.f32 %v4073, %v4141
        %v4206 = vadd.f32 %v4074, %v4142
        %v4207 = vadd.f32 %v4075, %v4143
        %v4208 = vadd.f32 %v4076, %v4144
        %v4209 = vadd.f32 %v4077, %v4145
        %v4210 = vadd.f32 %v4078, %v4146
        %v4211 = vadd.f32 %v4079, %v4147
        %v4212 = vadd.f32 %v4080, %v4148
        %v4213 = vadd.f32 %v4081, %v4149
        %v4214 = vadd.f32 %v4082, %v4150
        %v4215 = vadd.f32 %v4083, %v4151
        %v4216 = vadd.f32 %v4084, %v4152
        %v4217 = vadd.f32 %v4085, %v4153
        %v4218 = vadd.f32 %v4086, %v4154
        %v4219 = vadd.f32 %v4087, %v4155
        %v4220 = vadd.f32 %v4088, %v4156
        %v4221 = vadd.f32 %v4089, %v4157
        %v4222 = vadd.f32 %v4090, %v4158
        %v4223 = vadd.f32 %v4091, %v4159
        %v4224 = vadd.f32 %v4092, %v4160
        %v4225 = vadd.f32 %v4093, %v4161
        %v4226 = vadd.f32 %v4094, %v4162
        %v4227 = vadd.f32 %v4095, %v4163
        %v4228 = vadd.f32 %v4096, %v4164
        %v4229 = vadd.f32 %v4097, %v4165
        %v4230 = vadd.f32 %v4098, %v4166
        %v4231 = vadd.f32 %v4099, %v4167
        %v4232 = vadd.f32 %v4100, %v4168
        %v4233 = vadd.f32 %v4101, %v4169
        %v4234 = vadd.f32 %v4102, %v4170
        %v4235 = vadd.f32 %v4103, %v4171
        %v4236 = vadd.f32 %v4104, %v4172
        %v4237 = vadd.f32 %v4105, %v4173
        %v4238 = vadd.f32 %v4106, %v4174
        %v4239 = vadd.f32 %v4107, %v4175
        %v4240 = vadd.f32 %v4108, %v4176
        %v4241 = vadd.f32 %v4109, %v4177
        %v4242 = vadd.f32 %v4110, %v4178
        %v4243 = vadd.f32 %v4111, %v4179
        %v4244 = vadd.f32 %v4112, %v4180
        %v4245 = vadd.f32 %v4113, %v4181
        %v4246 = vadd.f32 %v4114, %v4182
        %v4247 = vadd.f32 %v4115, %v4183
        %v4248 = vadd.f32 %v4116, %v4184
        %v4249 = vadd.f32 %v4117, %v4185
        %v4250 = vadd.f32 %v4118, %v4186
        %v4251 = vadd.f32 %v4119, %v4187
        %v4252 = vadd.f32 %v4120, %v4188
        %v4253 = vadd.f32 %v4121, %v4189
        %v4254 = vadd.f32 %v4122, %v4190
        %v4255 = vadd.f32 %v4123, %v4191
        %v4256 = vadd.f32 %v4124, %v4192
        %v4257 = vadd.f32 %v4125, %v4193
        %v4258 = vadd.f32 %v4126, %v4194
        %v4259 = vadd.f32 %v4127, %v4195
        %v4260 = vadd.f32 %v4128, %v4196
        %v4261 = vadd.f32 %v4129, %v4197
        %v4262 = vadd.f32 %v4130, %v4198
        %v4263 = vadd.f32 %v4131, %v4199
        %v4264 = vadd.f32 %v4132, %v4200
        %v4265 = vadd.f32 %v4133, %v4201
        %v4266 = vadd.f32 %v4134, %v4202
        %v4267 = vadd.f32 %v4135, %v4203
        %v4268 = vlaneseq
        %v4269 = vshrl.u32 %v4268, 7
        %v4270 = vsub.s32 4, %v4269
        %v4271 = vrot.slane %v862, %v4270
        %v4272 = vmul.f32 %v4271, %v3396
        %v4273 = vmul.f32 %v4271, %v3397
        %v4274 = vmul.f32 %v4271, %v3398
        %v4275 = vmul.f32 %v4271, %v3399
        %v4276 = vmul.f32 %v4271, %v3400
        %v4277 = vmul.f32 %v4271, %v3401
        %v4278 = vmul.f32 %v4271, %v3402
        %v4279 = vmul.f32 %v4271, %v3403
        %v4280 = vmul.f32 %v4271, %v3406
        %v4281 = vmul.f32 %v4271, %v3407
        %v4282 = vmul.f32 %v4271, %v3408
        %v4283 = vmul.f32 %v4271, %v3409
        %v4284 = vmul.f32 %v4271, %v3410
        %v4285 = vmul.f32 %v4271, %v3411
        %v4286 = vmul.f32 %v4271, %v3412
        %v4287 = vmul.f32 %v4271, %v3413
        %v4288 = vmul.f32 %v4271, %v3416
        %v4289 = vmul.f32 %v4271, %v3417
        %v4290 = vmul.f32 %v4271, %v3418
        %v4291 = vmul.f32 %v4271, %v3419
        %v4292 = vmul.f32 %v4271, %v3420
        %v4293 = vmul.f32 %v4271, %v3421
        %v4294 = vmul.f32 %v4271, %v3422
        %v4295 = vmul.f32 %v4271, %v3423
        %v4296 = vmul.f32 %v4271, %v3426
        %v4297 = vmul.f32 %v4271, %v3427
        %v4298 = vmul.f32 %v4271, %v3428
        %v4299 = vmul.f32 %v4271, %v3429
        %v4300 = vmul.f32 %v4271, %v3430
        %v4301 = vmul.f32 %v4271, %v3431
        %v4302 = vmul.f32 %v4271, %v3432
        %v4303 = vmul.f32 %v4271, %v3433
        %v4304 = vmul.f32 %v4271, %v3436
        %v4305 = vmul.f32 %v4271, %v3437
        %v4306 = vmul.f32 %v4271, %v3438
        %v4307 = vmul.f32 %v4271, %v3439
        %v4308 = vmul.f32 %v4271, %v3440
        %v4309 = vmul.f32 %v4271, %v3441
        %v4310 = vmul.f32 %v4271, %v3442
        %v4311 = vmul.f32 %v4271, %v3443
        %v4312 = vmul.f32 %v4271, %v3446
        %v4313 = vmul.f32 %v4271, %v3447
        %v4314 = vmul.f32 %v4271, %v3448
        %v4315 = vmul.f32 %v4271, %v3449
        %v4316 = vmul.f32 %v4271, %v3450
        %v4317 = vmul.f32 %v4271, %v3451
        %v4318 = vmul.f32 %v4271, %v3452
        %v4319 = vmul.f32 %v4271, %v3453
        %v4320 = vmul.f32 %v4271, %v3456
        %v4321 = vmul.f32 %v4271, %v3457
        %v4322 = vmul.f32 %v4271, %v3458
        %v4323 = vmul.f32 %v4271, %v3459
        %v4324 = vmul.f32 %v4271, %v3460
        %v4325 = vmul.f32 %v4271, %v3461
        %v4326 = vmul.f32 %v4271, %v3462
        %v4327 = vmul.f32 %v4271, %v3463
        %v4328 = vmul.f32 %v4271, %v3466
        %v4329 = vmul.f32 %v4271, %v3467
        %v4330 = vmul.f32 %v4271, %v3468
        %v4331 = vmul.f32 %v4271, %v3469
        %v4332 = vmul.f32 %v4271, %v3470
        %v4333 = vmul.f32 %v4271, %v3471
        %v4334 = vmul.f32 %v4271, %v3472
        %v4335 = vmul.f32 %v4271, %v3473
        %v4336 = vadd.f32 %v4204, %v4272
        %v4337 = vadd.f32 %v4205, %v4273
        %v4338 = vadd.f32 %v4206, %v4274
        %v4339 = vadd.f32 %v4207, %v4275
        %v4340 = vadd.f32 %v4208, %v4276
        %v4341 = vadd.f32 %v4209, %v4277
        %v4342 = vadd.f32 %v4210, %v4278
        %v4343 = vadd.f32 %v4211, %v4279
        %v4344 = vadd.f32 %v4212, %v4280
        %v4345 = vadd.f32 %v4213, %v4281
        %v4346 = vadd.f32 %v4214, %v4282
        %v4347 = vadd.f32 %v4215, %v4283
        %v4348 = vadd.f32 %v4216, %v4284
        %v4349 = vadd.f32 %v4217, %v4285
        %v4350 = vadd.f32 %v4218, %v4286
        %v4351 = vadd.f32 %v4219, %v4287
        %v4352 = vadd.f32 %v4220, %v4288
        %v4353 = vadd.f32 %v4221, %v4289
        %v4354 = vadd.f32 %v4222, %v4290
        %v4355 = vadd.f32 %v4223, %v4291
        %v4356 = vadd.f32 %v4224, %v4292
        %v4357 = vadd.f32 %v4225, %v4293
        %v4358 = vadd.f32 %v4226, %v4294
        %v4359 = vadd.f32 %v4227, %v4295
        %v4360 = vadd.f32 %v4228, %v4296
        %v4361 = vadd.f32 %v4229, %v4297
        %v4362 = vadd.f32 %v4230, %v4298
        %v4363 = vadd.f32 %v4231, %v4299
        %v4364 = vadd.f32 %v4232, %v4300
        %v4365 = vadd.f32 %v4233, %v4301
        %v4366 = vadd.f32 %v4234, %v4302
        %v4367 = vadd.f32 %v4235, %v4303
        %v4368 = vadd.f32 %v4236, %v4304
        %v4369 = vadd.f32 %v4237, %v4305
        %v4370 = vadd.f32 %v4238, %v4306
        %v4371 = vadd.f32 %v4239, %v4307
        %v4372 = vadd.f32 %v4240, %v4308
        %v4373 = vadd.f32 %v4241, %v4309
        %v4374 = vadd.f32 %v4242, %v4310
        %v4375 = vadd.f32 %v4243, %v4311
        %v4376 = vadd.f32 %v4244, %v4312
        %v4377 = vadd.f32 %v4245, %v4313
        %v4378 = vadd.f32 %v4246, %v4314
        %v4379 = vadd.f32 %v4247, %v4315
        %v4380 = vadd.f32 %v4248, %v4316
        %v4381 = vadd.f32 %v4249, %v4317
        %v4382 = vadd.f32 %v4250, %v4318
        %v4383 = vadd.f32 %v4251, %v4319
        %v4384 = vadd.f32 %v4252, %v4320
        %v4385 = vadd.f32 %v4253, %v4321
        %v4386 = vadd.f32 %v4254, %v4322
        %v4387 = vadd.f32 %v4255, %v4323
        %v4388 = vadd.f32 %v4256, %v4324
        %v4389 = vadd.f32 %v4257, %v4325
        %v4390 = vadd.f32 %v4258, %v4326
        %v4391 = vadd.f32 %v4259, %v4327
        %v4392 = vadd.f32 %v4260, %v4328
        %v4393 = vadd.f32 %v4261, %v4329
        %v4394 = vadd.f32 %v4262, %v4330
        %v4395 = vadd.f32 %v4263, %v4331
        %v4396 = vadd.f32 %v4264, %v4332
        %v4397 = vadd.f32 %v4265, %v4333
        %v4398 = vadd.f32 %v4266, %v4334
        %v4399 = vadd.f32 %v4267, %v4335
        %v4400 = vlaneseq
        %v4401 = vshrl.u32 %v4400, 7
        %v4402 = vsub.s32 7, %v4401
        %v4403 = vrot.slane %v862, %v4402
        %v4404 = vmul.f32 %v4403, %v3397
        %v4405 = vmul.f32 %v4403, %v3398
        %v4406 = vmul.f32 %v4403, %v3399
        %v4407 = vmul.f32 %v4403, %v3400
        %v4408 = vmul.f32 %v4403, %v3401
        %v4409 = vmul.f32 %v4403, %v3402
        %v4410 = vmul.f32 %v4403, %v3403
        %v4411 = vmul.f32 %v4403, %v3404
        %v4412 = vmul.f32 %v4403, %v3407
        %v4413 = vmul.f32 %v4403, %v3408
        %v4414 = vmul.f32 %v4403, %v3409
        %v4415 = vmul.f32 %v4403, %v3410
        %v4416 = vmul.f32 %v4403, %v3411
        %v4417 = vmul.f32 %v4403, %v3412
        %v4418 = vmul.f32 %v4403, %v3413
        %v4419 = vmul.f32 %v4403, %v3414
        %v4420 = vmul.f32 %v4403, %v3417
        %v4421 = vmul.f32 %v4403, %v3418
        %v4422 = vmul.f32 %v4403, %v3419
        %v4423 = vmul.f32 %v4403, %v3420
        %v4424 = vmul.f32 %v4403, %v3421
        %v4425 = vmul.f32 %v4403, %v3422
        %v4426 = vmul.f32 %v4403, %v3423
        %v4427 = vmul.f32 %v4403, %v3424
        %v4428 = vmul.f32 %v4403, %v3427
        %v4429 = vmul.f32 %v4403, %v3428
        %v4430 = vmul.f32 %v4403, %v3429
        %v4431 = vmul.f32 %v4403, %v3430
        %v4432 = vmul.f32 %v4403, %v3431
        %v4433 = vmul.f32 %v4403, %v3432
        %v4434 = vmul.f32 %v4403, %v3433
        %v4435 = vmul.f32 %v4403, %v3434
        %v4436 = vmul.f32 %v4403, %v3437
        %v4437 = vmul.f32 %v4403, %v3438
        %v4438 = vmul.f32 %v4403, %v3439
        %v4439 = vmul.f32 %v4403, %v3440
        %v4440 = vmul.f32 %v4403, %v3441
        %v4441 = vmul.f32 %v4403, %v3442
        %v4442 = vmul.f32 %v4403, %v3443
        %v4443 = vmul.f32 %v4403, %v3444
        %v4444 = vmul.f32 %v4403, %v3447
        %v4445 = vmul.f32 %v4403, %v3448
        %v4446 = vmul.f32 %v4403, %v3449
        %v4447 = vmul.f32 %v4403, %v3450
        %v4448 = vmul.f32 %v4403, %v3451
        %v4449 = vmul.f32 %v4403, %v3452
        %v4450 = vmul.f32 %v4403, %v3453
        %v4451 = vmul.f32 %v4403, %v3454
        %v4452 = vmul.f32 %v4403, %v3457
        %v4453 = vmul.f32 %v4403, %v3458
        %v4454 = vmul.f32 %v4403, %v3459
        %v4455 = vmul.f32 %v4403, %v3460
        %v4456 = vmul.f32 %v4403, %v3461
        %v4457 = vmul.f32 %v4403, %v3462
        %v4458 = vmul.f32 %v4403, %v3463
        %v4459 = vmul.f32 %v4403, %v3464
        %v4460 = vmul.f32 %v4403, %v3467
        %v4461 = vmul.f32 %v4403, %v3468
        %v4462 = vmul.f32 %v4403, %v3469
        %v4463 = vmul.f32 %v4403, %v3470
        %v4464 = vmul.f32 %v4403, %v3471
        %v4465 = vmul.f32 %v4403, %v3472
        %v4466 = vmul.f32 %v4403, %v3473
        %v4467 = vmul.f32 %v4403, %v3474
        %v4468 = vadd.f32 %v4336, %v4404
        %v4469 = vadd.f32 %v4337, %v4405
        %v4470 = vadd.f32 %v4338, %v4406
        %v4471 = vadd.f32 %v4339, %v4407
        %v4472 = vadd.f32 %v4340, %v4408
        %v4473 = vadd.f32 %v4341, %v4409
        %v4474 = vadd.f32 %v4342, %v4410
        %v4475 = vadd.f32 %v4343, %v4411
        %v4476 = vadd.f32 %v4344, %v4412
        %v4477 = vadd.f32 %v4345, %v4413
        %v4478 = vadd.f32 %v4346, %v4414
        %v4479 = vadd.f32 %v4347, %v4415
        %v4480 = vadd.f32 %v4348, %v4416
        %v4481 = vadd.f32 %v4349, %v4417
        %v4482 = vadd.f32 %v4350, %v4418
        %v4483 = vadd.f32 %v4351, %v4419
        %v4484 = vadd.f32 %v4352, %v4420
        %v4485 = vadd.f32 %v4353, %v4421
        %v4486 = vadd.f32 %v4354, %v4422
        %v4487 = vadd.f32 %v4355, %v4423
        %v4488 = vadd.f32 %v4356, %v4424
        %v4489 = vadd.f32 %v4357, %v4425
        %v4490 = vadd.f32 %v4358, %v4426
        %v4491 = vadd.f32 %v4359, %v4427
        %v4492 = vadd.f32 %v4360, %v4428
        %v4493 = vadd.f32 %v4361, %v4429
        %v4494 = vadd.f32 %v4362, %v4430
        %v4495 = vadd.f32 %v4363, %v4431
        %v4496 = vadd.f32 %v4364, %v4432
        %v4497 = vadd.f32 %v4365, %v4433
        %v4498 = vadd.f32 %v4366, %v4434
        %v4499 = vadd.f32 %v4367, %v4435
        %v4500 = vadd.f32 %v4368, %v4436
        %v4501 = vadd.f32 %v4369, %v4437
        %v4502 = vadd.f32 %v4370, %v4438
        %v4503 = vadd.f32 %v4371, %v4439
        %v4504 = vadd.f32 %v4372, %v4440
        %v4505 = vadd.f32 %v4373, %v4441
        %v4506 = vadd.f32 %v4374, %v4442
        %v4507 = vadd.f32 %v4375, %v4443
        %v4508 = vadd.f32 %v4376, %v4444
        %v4509 = vadd.f32 %v4377, %v4445
        %v4510 = vadd.f32 %v4378, %v4446
        %v4511 = vadd.f32 %v4379, %v4447
        %v4512 = vadd.f32 %v4380, %v4448
        %v4513 = vadd.f32 %v4381, %v4449
        %v4514 = vadd.f32 %v4382, %v4450
        %v4515 = vadd.f32 %v4383, %v4451
        %v4516 = vadd.f32 %v4384, %v4452
        %v4517 = vadd.f32 %v4385, %v4453
        %v4518 = vadd.f32 %v4386, %v4454
        %v4519 = vadd.f32 %v4387, %v4455
        %v4520 = vadd.f32 %v4388, %v4456
        %v4521 = vadd.f32 %v4389, %v4457
        %v4522 = vadd.f32 %v4390, %v4458
        %v4523 = vadd.f32 %v4391, %v4459
        %v4524 = vadd.f32 %v4392, %v4460
        %v4525 = vadd.f32 %v4393, %v4461
        %v4526 = vadd.f32 %v4394, %v4462
        %v4527 = vadd.f32 %v4395, %v4463
        %v4528 = vadd.f32 %v4396, %v4464
        %v4529 = vadd.f32 %v4397, %v4465
        %v4530 = vadd.f32 %v4398, %v4466
        %v4531 = vadd.f32 %v4399, %v4467
        %v4532 = vlaneseq
        %v4533 = vshrl.u32 %v4532, 7
        %v4534 = vsub.s32 2, %v4533
        %v4535 = vrot.slane %v863, %v4534
        %v4536 = vmul.f32 %v4535, %v3398
        %v4537 = vmul.f32 %v4535, %v3399
        %v4538 = vmul.f32 %v4535, %v3400
        %v4539 = vmul.f32 %v4535, %v3401
        %v4540 = vmul.f32 %v4535, %v3402
        %v4541 = vmul.f32 %v4535, %v3403
        %v4542 = vmul.f32 %v4535, %v3404
        %v4543 = vmul.f32 %v4535, %v3405
        %v4544 = vmul.f32 %v4535, %v3408
        %v4545 = vmul.f32 %v4535, %v3409
        %v4546 = vmul.f32 %v4535, %v3410
        %v4547 = vmul.f32 %v4535, %v3411
        %v4548 = vmul.f32 %v4535, %v3412
        %v4549 = vmul.f32 %v4535, %v3413
        %v4550 = vmul.f32 %v4535, %v3414
        %v4551 = vmul.f32 %v4535, %v3415
        %v4552 = vmul.f32 %v4535, %v3418
        %v4553 = vmul.f32 %v4535, %v3419
        %v4554 = vmul.f32 %v4535, %v3420
        %v4555 = vmul.f32 %v4535, %v3421
        %v4556 = vmul.f32 %v4535, %v3422
        %v4557 = vmul.f32 %v4535, %v3423
        %v4558 = vmul.f32 %v4535, %v3424
        %v4559 = vmul.f32 %v4535, %v3425
        %v4560 = vmul.f32 %v4535, %v3428
        %v4561 = vmul.f32 %v4535, %v3429
        %v4562 = vmul.f32 %v4535, %v3430
        %v4563 = vmul.f32 %v4535, %v3431
        %v4564 = vmul.f32 %v4535, %v3432
        %v4565 = vmul.f32 %v4535, %v3433
        %v4566 = vmul.f32 %v4535, %v3434
        %v4567 = vmul.f32 %v4535, %v3435
        %v4568 = vmul.f32 %v4535, %v3438
        %v4569 = vmul.f32 %v4535, %v3439
        %v4570 = vmul.f32 %v4535, %v3440
        %v4571 = vmul.f32 %v4535, %v3441
        %v4572 = vmul.f32 %v4535, %v3442
        %v4573 = vmul.f32 %v4535, %v3443
        %v4574 = vmul.f32 %v4535, %v3444
        %v4575 = vmul.f32 %v4535, %v3445
        %v4576 = vmul.f32 %v4535, %v3448
        %v4577 = vmul.f32 %v4535, %v3449
        %v4578 = vmul.f32 %v4535, %v3450
        %v4579 = vmul.f32 %v4535, %v3451
        %v4580 = vmul.f32 %v4535, %v3452
        %v4581 = vmul.f32 %v4535, %v3453
        %v4582 = vmul.f32 %v4535, %v3454
        %v4583 = vmul.f32 %v4535, %v3455
        %v4584 = vmul.f32 %v4535, %v3458
        %v4585 = vmul.f32 %v4535, %v3459
        %v4586 = vmul.f32 %v4535, %v3460
        %v4587 = vmul.f32 %v4535, %v3461
        %v4588 = vmul.f32 %v4535, %v3462
        %v4589 = vmul.f32 %v4535, %v3463
        %v4590 = vmul.f32 %v4535, %v3464
        %v4591 = vmul.f32 %v4535, %v3465
        %v4592 = vmul.f32 %v4535, %v3468
        %v4593 = vmul.f32 %v4535, %v3469
        %v4594 = vmul.f32 %v4535, %v3470
        %v4595 = vmul.f32 %v4535, %v3471
        %v4596 = vmul.f32 %v4535, %v3472
        %v4597 = vmul.f32 %v4535, %v3473
        %v4598 = vmul.f32 %v4535, %v3474
        %v4599 = vmul.f32 %v4535, %v3475
        %v4600 = vadd.f32 %v4468, %v4536
        %v4601 = vadd.f32 %v4469, %v4537
        %v4602 = vadd.f32 %v4470, %v4538
        %v4603 = vadd.f32 %v4471, %v4539
        %v4604 = vadd.f32 %v4472, %v4540
        %v4605 = vadd.f32 %v4473, %v4541
        %v4606 = vadd.f32 %v4474, %v4542
        %v4607 = vadd.f32 %v4475, %v4543
        %v4608 = vadd.f32 %v4476, %v4544
        %v4609 = vadd.f32 %v4477, %v4545
        %v4610 = vadd.f32 %v4478, %v4546
        %v4611 = vadd.f32 %v4479, %v4547
        %v4612 = vadd.f32 %v4480, %v4548
        %v4613 = vadd.f32 %v4481, %v4549
        %v4614 = vadd.f32 %v4482, %v4550
        %v4615 = vadd.f32 %v4483, %v4551
        %v4616 = vadd.f32 %v4484, %v4552
        %v4617 = vadd.f32 %v4485, %v4553
        %v4618 = vadd.f32 %v4486, %v4554
        %v4619 = vadd.f32 %v4487, %v4555
        %v4620 = vadd.f32 %v4488, %v4556
        %v4621 = vadd.f32 %v4489, %v4557
        %v4622 = vadd.f32 %v4490, %v4558
        %v4623 = vadd.f32 %v4491, %v4559
        %v4624 = vadd.f32 %v4492, %v4560
        %v4625 = vadd.f32 %v4493, %v4561
        %v4626 = vadd.f32 %v4494, %v4562
        %v4627 = vadd.f32 %v4495, %v4563
        %v4628 = vadd.f32 %v4496, %v4564
        %v4629 = vadd.f32 %v4497, %v4565
        %v4630 = vadd.f32 %v4498, %v4566
        %v4631 = vadd.f32 %v4499, %v4567
        %v4632 = vadd.f32 %v4500, %v4568
        %v4633 = vadd.f32 %v4501, %v4569
        %v4634 = vadd.f32 %v4502, %v4570
        %v4635 = vadd.f32 %v4503, %v4571
        %v4636 = vadd.f32 %v4504, %v4572
        %v4637 = vadd.f32 %v4505, %v4573
        %v4638 = vadd.f32 %v4506, %v4574
        %v4639 = vadd.f32 %v4507, %v4575
        %v4640 = vadd.f32 %v4508, %v4576
        %v4641 = vadd.f32 %v4509, %v4577
        %v4642 = vadd.f32 %v4510, %v4578
        %v4643 = vadd.f32 %v4511, %v4579
        %v4644 = vadd.f32 %v4512, %v4580
        %v4645 = vadd.f32 %v4513, %v4581
        %v4646 = vadd.f32 %v4514, %v4582
        %v4647 = vadd.f32 %v4515, %v4583
        %v4648 = vadd.f32 %v4516, %v4584
        %v4649 = vadd.f32 %v4517, %v4585
        %v4650 = vadd.f32 %v4518, %v4586
        %v4651 = vadd.f32 %v4519, %v4587
        %v4652 = vadd.f32 %v4520, %v4588
        %v4653 = vadd.f32 %v4521, %v4589
        %v4654 = vadd.f32 %v4522, %v4590
        %v4655 = vadd.f32 %v4523, %v4591
        %v4656 = vadd.f32 %v4524, %v4592
        %v4657 = vadd.f32 %v4525, %v4593
        %v4658 = vadd.f32 %v4526, %v4594
        %v4659 = vadd.f32 %v4527, %v4595
        %v4660 = vadd.f32 %v4528, %v4596
        %v4661 = vadd.f32 %v4529, %v4597
        %v4662 = vadd.f32 %v4530, %v4598
        %v4663 = vadd.f32 %v4531, %v4599
        %v4664 = vadd.f32 %v4600, %v4601
        %v4665 = vadd.f32 %v4664, %v4602
        %v4666 = vadd.f32 %v4665, %v4603
        %v4667 = vadd.f32 %v4666, %v4604
        %v4668 = vadd.f32 %v4667, %v4605
        %v4669 = vadd.f32 %v4668, %v4606
        %v4670 = vadd.f32 %v4669, %v4607
        %v4671 = vadd.f32 %v4670, %v4608
        %v4672 = vadd.f32 %v4671, %v4609
        %v4673 = vadd.f32 %v4672, %v4610
        %v4674 = vadd.f32 %v4673, %v4611
        %v4675 = vadd.f32 %v4674, %v4612
        %v4676 = vadd.f32 %v4675, %v4613
        %v4677 = vadd.f32 %v4676, %v4614
        %v4678 = vadd.f32 %v4677, %v4615
        %v4679 = vadd.f32 %v4678, %v4616
        %v4680 = vadd.f32 %v4679, %v4617
        %v4681 = vadd.f32 %v4680, %v4618
        %v4682 = vadd.f32 %v4681, %v4619
        %v4683 = vadd.f32 %v4682, %v4620
        %v4684 = vadd.f32 %v4683, %v4621
        %v4685 = vadd.f32 %v4684, %v4622
        %v4686 = vadd.f32 %v4685, %v4623
        %v4687 = vadd.f32 %v4686, %v4624
        %v4688 = vadd.f32 %v4687, %v4625
        %v4689 = vadd.f32 %v4688, %v4626
        %v4690 = vadd.f32 %v4689, %v4627
        %v4691 = vadd.f32 %v4690, %v4628
        %v4692 = vadd.f32 %v4691, %v4629
        %v4693 = vadd.f32 %v4692, %v4630
        %v4694 = vadd.f32 %v4693, %v4631
        %v4695 = vadd.f32 %v4694, %v4632
        %v4696 = vadd.f32 %v4695, %v4633
        %v4697 = vadd.f32 %v4696, %v4634
        %v4698 = vadd.f32 %v4697, %v4635
        %v4699 = vadd.f32 %v4698, %v4636
        %v4700 = vadd.f32 %v4699, %v4637
        %v4701 = vadd.f32 %v4700, %v4638
        %v4702 = vadd.f32 %v4701, %v4639
        %v4703 = vadd.f32 %v4702, %v4640
        %v4704 = vadd.f32 %v4703, %v4641
        %v4705 = vadd.f32 %v4704, %v4642
        %v4706 = vadd.f32 %v4705, %v4643
        %v4707 = vadd.f32 %v4706, %v4644
        %v4708 = vadd.f32 %v4707, %v4645
        %v4709 = vadd.f32 %v4708, %v4646
        %v4710 = vadd.f32 %v4709, %v4647
        %v4711 = vadd.f32 %v4710, %v4648
        %v4712 = vadd.f32 %v4711, %v4649
        %v4713 = vadd.f32 %v4712, %v4650
        %v4714 = vadd.f32 %v4713, %v4651
        %v4715 = vadd.f32 %v4714, %v4652
        %v4716 = vadd.f32 %v4715, %v4653
        %v4717 = vadd.f32 %v4716, %v4654
        %v4718 = vadd.f32 %v4717, %v4655
        %v4719 = vadd.f32 %v4718, %v4656
        %v4720 = vadd.f32 %v4719, %v4657
        %v4721 = vadd.f32 %v4720, %v4658
        %v4722 = vadd.f32 %v4721, %v4659
        %v4723 = vadd.f32 %v4722, %v4660
        %v4724 = vadd.f32 %v4723, %v4661
        %v4725 = vadd.f32 %v4724, %v4662
        %v4726 = vadd.f32 %v4725, %v4663
        %v4727 = vrot.slane %v4726, 4
        %v4728 = vadd.f32 %v4726, %v4727
        %v4729 = vrot.slane %v4728, 2
        %v4730 = vadd.f32 %v4728, %v4729
        %v4731 = vrot.slane %v4730, 1
        %v4732 = vadd.f32 %v4730, %v4731
        %v4733 = vmul.f32 %v4600, %v4600
        %v4734 = vmul.f32 %v4601, %v4601
        %v4735 = vmul.f32 %v4602, %v4602
        %v4736 = vmul.f32 %v4603, %v4603
        %v4737 = vmul.f32 %v4604, %v4604
        %v4738 = vmul.f32 %v4605, %v4605
        %v4739 = vmul.f32 %v4606, %v4606
        %v4740 = vmul.f32 %v4607, %v4607
        %v4741 = vmul.f32 %v4608, %v4608
        %v4742 = vmul.f32 %v4609, %v4609
        %v4743 = vmul.f32 %v4610, %v4610
        %v4744 = vmul.f32 %v4611, %v4611
        %v4745 = vmul.f32 %v4612, %v4612
        %v4746 = vmul.f32 %v4613, %v4613
        %v4747 = vmul.f32 %v4614, %v4614
        %v4748 = vmul.f32 %v4615, %v4615
        %v4749 = vmul.f32 %v4616, %v4616
        %v4750 = vmul.f32 %v4617, %v4617
        %v4751 = vmul.f32 %v4618, %v4618
        %v4752 = vmul.f32 %v4619, %v4619
        %v4753 = vmul.f32 %v4620, %v4620
        %v4754 = vmul.f32 %v4621, %v4621
        %v4755 = vmul.f32 %v4622, %v4622
        %v4756 = vmul.f32 %v4623, %v4623
        %v4757 = vmul.f32 %v4624, %v4624
        %v4758 = vmul.f32 %v4625, %v4625
        %v4759 = vmul.f32 %v4626, %v4626
        %v4760 = vmul.f32 %v4627, %v4627
        %v4761 = vmul.f32 %v4628, %v4628
        %v4762 = vmul.f32 %v4629, %v4629
        %v4763 = vmul.f32 %v4630, %v4630
        %v4764 = vmul.f32 %v4631, %v4631
        %v4765 = vmul.f32 %v4632, %v4632
        %v4766 = vmul.f32 %v4633, %v4633
        %v4767 = vmul.f32 %v4634, %v4634
        %v4768 = vmul.f32 %v4635, %v4635
        %v4769 = vmul.f32 %v4636, %v4636
        %v4770 = vmul.f32 %v4637, %v4637
        %v4771 = vmul.f32 %v4638, %v4638
        %v4772 = vmul.f32 %v4639, %v4639
        %v4773 = vmul.f32 %v4640, %v4640
        %v4774 = vmul.f32 %v4641, %v4641
        %v4775 = vmul.f32 %v4642, %v4642
        %v4776 = vmul.f32 %v4643, %v4643
        %v4777 = vmul.f32 %v4644, %v4644
        %v4778 = vmul.f32 %v4645, %v4645
        %v4779 = vmul.f32 %v4646, %v4646
        %v4780 = vmul.f32 %v4647, %v4647
        %v4781 = vmul.f32 %v4648, %v4648
        %v4782 = vmul.f32 %v4649, %v4649
        %v4783 = vmul.f32 %v4650, %v4650
        %v4784 = vmul.f32 %v4651, %v4651
        %v4785 = vmul.f32 %v4652, %v4652
        %v4786 = vmul.f32 %v4653, %v4653
        %v4787 = vmul.f32 %v4654, %v4654
        %v4788 = vmul.f32 %v4655, %v4655
        %v4789 = vmul.f32 %v4656, %v4656
        %v4790 = vmul.f32 %v4657, %v4657
        %v4791 = vmul.f32 %v4658, %v4658
        %v4792 = vmul.f32 %v4659, %v4659
        %v4793 = vmul.f32 %v4660, %v4660
        %v4794 = vmul.f32 %v4661, %v4661
        %v4795 = vmul.f32 %v4662, %v4662
        %v4796 = vmul.f32 %v4663, %v4663
        %v4797 = vadd.f32 %v4733, %v4734
        %v4798 = vadd.f32 %v4797, %v4735
        %v4799 = vadd.f32 %v4798, %v4736
        %v4800 = vadd.f32 %v4799, %v4737
        %v4801 = vadd.f32 %v4800, %v4738
        %v4802 = vadd.f32 %v4801, %v4739
        %v4803 = vadd.f32 %v4802, %v4740
        %v4804 = vadd.f32 %v4803, %v4741
        %v4805 = vadd.f32 %v4804, %v4742
        %v4806 = vadd.f32 %v4805, %v4743
        %v4807 = vadd.f32 %v4806, %v4744
        %v4808 = vadd.f32 %v4807, %v4745
        %v4809 = vadd.f32 %v4808, %v4746
        %v4810 = vadd.f32 %v4809, %v4747
        %v4811 = vadd.f32 %v4810, %v4748
        %v4812 = vadd.f32 %v4811, %v4749
        %v4813 = vadd.f32 %v4812, %v4750
        %v4814 = vadd.f32 %v4813, %v4751
        %v4815 = vadd.f32 %v4814, %v4752
        %v4816 = vadd.f32 %v4815, %v4753
        %v4817 = vadd.f32 %v4816, %v4754
        %v4818 = vadd.f32 %v4817, %v4755
        %v4819 = vadd.f32 %v4818, %v4756
        %v4820 = vadd.f32 %v4819, %v4757
        %v4821 = vadd.f32 %v4820, %v4758
        %v4822 = vadd.f32 %v4821, %v4759
        %v4823 = vadd.f32 %v4822, %v4760
        %v4824 = vadd.f32 %v4823, %v4761
        %v4825 = vadd.f32 %v4824, %v4762
        %v4826 = vadd.f32 %v4825, %v4763
        %v4827 = vadd.f32 %v4826, %v4764
        %v4828 = vadd.f32 %v4827, %v4765
        %v4829 = vadd.f32 %v4828, %v4766
        %v4830 = vadd.f32 %v4829, %v4767
        %v4831 = vadd.f32 %v4830, %v4768
        %v4832 = vadd.f32 %v4831, %v4769
        %v4833 = vadd.f32 %v4832, %v4770
        %v4834 = vadd.f32 %v4833, %v4771
        %v4835 = vadd.f32 %v4834, %v4772
        %v4836 = vadd.f32 %v4835, %v4773
        %v4837 = vadd.f32 %v4836, %v4774
        %v4838 = vadd.f32 %v4837, %v4775
        %v4839 = vadd.f32 %v4838, %v4776
        %v4840 = vadd.f32 %v4839, %v4777
        %v4841 = vadd.f32 %v4840, %v4778
        %v4842 = vadd.f32 %v4841, %v4779
        %v4843 = vadd.f32 %v4842, %v4780
        %v4844 = vadd.f32 %v4843, %v4781
        %v4845 = vadd.f32 %v4844, %v4782
        %v4846 = vadd.f32 %v4845, %v4783
        %v4847 = vadd.f32 %v4846, %v4784
        %v4848 = vadd.f32 %v4847, %v4785
        %v4849 = vadd.f32 %v4848, %v4786
        %v4850 = vadd.f32 %v4849, %v4787
        %v4851 = vadd.f32 %v4850, %v4788
        %v4852 = vadd.f32 %v4851, %v4789
        %v4853 = vadd.f32 %v4852, %v4790
        %v4854 = vadd.f32 %v4853, %v4791
        %v4855 = vadd.f32 %v4854, %v4792
        %v4856 = vadd.f32 %v4855, %v4793
        %v4857 = vadd.f32 %v4856, %v4794
        %v4858 = vadd.f32 %v4857, %v4795
        %v4859 = vadd.f32 %v4858, %v4796
        %v4860 = vrot.slane %v4859, 4
        %v4861 = vadd.f32 %v4859, %v4860
        %v4862 = vrot.slane %v4861, 2
        %v4863 = vadd.f32 %v4861, %v4862
        %v4864 = vrot.slane %v4863, 1
        %v4865 = vadd.f32 %v4863, %v4864
        %v4866 = vmul.f32 %v4732, 0.001953125
        %v4867 = vmul.f32 %v4865, 0.001953125
        %v4868 = vmul.f32 %v4866, %v4866
        %v4869 = vsub.f32 %v4867, %v4868
        %v4870 = vmax.f32 %v4869, 0.0
        %v4871 = vadd.f32 %v4870, 1e-05
        %v4872 = vrsqrt.pop %v4871
        %v4873 = vld [vmem:[%s470] sm:$0x1]
        %v4874 = vmul.f32 %v4873, %v4872
        %v4875 = vld [vmem:[%s473] sm:$0x1]
        %v4876 = vmul.f32 %v4866, %v4874
        %v4877 = vsub.f32 %v4875, %v4876
        %4878 = vst [vmem:[#allocation3] sm:$0xff] %v4600
        %4879 = vst [vmem:[#allocation3 + $0x8] sm:$0xff] %v4601
        %4880 = vst [vmem:[#allocation3 + $0x10] sm:$0xff] %v4602
        %4881 = vst [vmem:[#allocation3 + $0x18] sm:$0xff] %v4603
        %4882 = vst [vmem:[#allocation3 + $0x20] sm:$0xff] %v4604
        %4883 = vst [vmem:[#allocation3 + $0x28] sm:$0xff] %v4605
        %4884 = vst [vmem:[#allocation3 + $0x30] sm:$0xff] %v4606
        %4885 = vst [vmem:[#allocation3 + $0x38] sm:$0xff] %v4607
        %4886 = vst [vmem:[#allocation3 + $0x40] sm:$0xff] %v4608
        %4887 = vst [vmem:[#allocation3 + $0x48] sm:$0xff] %v4609
        %4888 = vst [vmem:[#allocation3 + $0x50] sm:$0xff] %v4610
        %4889 = vst [vmem:[#allocation3 + $0x58] sm:$0xff] %v4611
        %4890 = vst [vmem:[#allocation3 + $0x60] sm:$0xff] %v4612
        %4891 = vst [vmem:[#allocation3 + $0x68] sm:$0xff] %v4613
        %4892 = vst [vmem:[#allocation3 + $0x70] sm:$0xff] %v4614
        %4893 = vst [vmem:[#allocation3 + $0x78] sm:$0xff] %v4615
        %4894 = vst [vmem:[#allocation3 + $0x80] sm:$0xff] %v4616
        %4895 = vst [vmem:[#allocation3 + $0x88] sm:$0xff] %v4617
        %4896 = vst [vmem:[#allocation3 + $0x90] sm:$0xff] %v4618
        %4897 = vst [vmem:[#allocation3 + $0x98] sm:$0xff] %v4619
        %4898 = vst [vmem:[#allocation3 + $0xa0] sm:$0xff] %v4620
        %4899 = vst [vmem:[#allocation3 + $0xa8] sm:$0xff] %v4621
        %4900 = vst [vmem:[#allocation3 + $0xb0] sm:$0xff] %v4622
        %4901 = vst [vmem:[#allocation3 + $0xb8] sm:$0xff] %v4623
        %4902 = vst [vmem:[#allocation3 + $0xc0] sm:$0xff] %v4624
        %4903 = vst [vmem:[#allocation3 + $0xc8] sm:$0xff] %v4625
        %4904 = vst [vmem:[#allocation3 + $0xd0] sm:$0xff] %v4626
        %4905 = vst [vmem:[#allocation3 + $0xd8] sm:$0xff] %v4627
        %4906 = vst [vmem:[#allocation3 + $0xe0] sm:$0xff] %v4628
        %4907 = vst [vmem:[#allocation3 + $0xe8] sm:$0xff] %v4629
        %4908 = vst [vmem:[#allocation3 + $0xf0] sm:$0xff] %v4630
        %4909 = vst [vmem:[#allocation3 + $0xf8] sm:$0xff] %v4631
        %4910 = vst [vmem:[#allocation3 + $0x100] sm:$0xff] %v4632
        %4911 = vst [vmem:[#allocation3 + $0x108] sm:$0xff] %v4633
        %4912 = vst [vmem:[#allocation3 + $0x110] sm:$0xff] %v4634
        %4913 = vst [vmem:[#allocation3 + $0x118] sm:$0xff] %v4635
        %4914 = vst [vmem:[#allocation3 + $0x120] sm:$0xff] %v4636
        %4915 = vst [vmem:[#allocation3 + $0x128] sm:$0xff] %v4637
        %4916 = vst [vmem:[#allocation3 + $0x130] sm:$0xff] %v4638
        %4917 = vst [vmem:[#allocation3 + $0x138] sm:$0xff] %v4639
        %4918 = vst [vmem:[#allocation3 + $0x140] sm:$0xff] %v4640
        %4919 = vst [vmem:[#allocation3 + $0x148] sm:$0xff] %v4641
        %4920 = vst [vmem:[#allocation3 + $0x150] sm:$0xff] %v4642
        %4921 = vst [vmem:[#allocation3 + $0x158] sm:$0xff] %v4643
        %4922 = vst [vmem:[#allocation3 + $0x160] sm:$0xff] %v4644
        %4923 = vst [vmem:[#allocation3 + $0x168] sm:$0xff] %v4645
        %4924 = vst [vmem:[#allocation3 + $0x170] sm:$0xff] %v4646
        %4925 = vst [vmem:[#allocation3 + $0x178] sm:$0xff] %v4647
        %4926 = vst [vmem:[#allocation3 + $0x180] sm:$0xff] %v4648
        %4927 = vst [vmem:[#allocation3 + $0x188] sm:$0xff] %v4649
        %4928 = vst [vmem:[#allocation3 + $0x190] sm:$0xff] %v4650
        %4929 = vst [vmem:[#allocation3 + $0x198] sm:$0xff] %v4651
        %4930 = vst [vmem:[#allocation3 + $0x1a0] sm:$0xff] %v4652
        %4931 = vst [vmem:[#allocation3 + $0x1a8] sm:$0xff] %v4653
        %4932 = vst [vmem:[#allocation3 + $0x1b0] sm:$0xff] %v4654
        %4933 = vst [vmem:[#allocation3 + $0x1b8] sm:$0xff] %v4655
        %4934 = vst [vmem:[#allocation3 + $0x1c0] sm:$0xff] %v4656
        %4935 = vst [vmem:[#allocation3 + $0x1c8] sm:$0xff] %v4657
        %4936 = vst [vmem:[#allocation3 + $0x1d0] sm:$0xff] %v4658
        %4937 = vst [vmem:[#allocation3 + $0x1d8] sm:$0xff] %v4659
        %4938 = vst [vmem:[#allocation3 + $0x1e0] sm:$0xff] %v4660
        %4939 = vst [vmem:[#allocation3 + $0x1e8] sm:$0xff] %v4661
        %4940 = vst [vmem:[#allocation3 + $0x1f0] sm:$0xff] %v4662
        %4941 = vst [vmem:[#allocation3 + $0x1f8] sm:$0xff] %v4663
        %v4942 = vld [vmem:[%s477] sm:$0xf]
        %v4943 = vld [vmem:[%s481] sm:$0xf]
        %v4944 = vld [vmem:[%s485] sm:$0xf]
        %v4945 = vld [vmem:[%s488] sm:$0x1]
        %v4946 = vld [vmem:[%s491] sm:$0x1]
        %v4947 = vld [vmem:[#allocation3] sm:$0xff]
        %v4948 = vld [vmem:[#allocation3 + $0x8] sm:$0xff]
        %v4949 = vld [vmem:[#allocation3 + $0x10] sm:$0xff]
        %v4950 = vld [vmem:[#allocation3 + $0x18] sm:$0xff]
        %v4951 = vld [vmem:[#allocation3 + $0x20] sm:$0xff]
        %v4952 = vld [vmem:[#allocation3 + $0x28] sm:$0xff]
        %v4953 = vld [vmem:[#allocation3 + $0x30] sm:$0xff]
        %v4954 = vld [vmem:[#allocation3 + $0x38] sm:$0xff]
        %v4956 = vlaneseq
        %v4957 = vshrl.u32 %v4956, 7
        %v4958 = vsub.s32 0, %v4957
        %v4959 = vrot.slane %v4874, %v4958
        %v4961 = vmul.f32 %v4947, %v4959
        %v4962 = vmul.f32 %v4948, %v4959
        %v4963 = vmul.f32 %v4949, %v4959
        %v4964 = vmul.f32 %v4950, %v4959
        %v4965 = vmul.f32 %v4951, %v4959
        %v4966 = vmul.f32 %v4952, %v4959
        %v4967 = vmul.f32 %v4953, %v4959
        %v4968 = vmul.f32 %v4954, %v4959
        %v4970 = vlaneseq
        %v4971 = vshrl.u32 %v4970, 7
        %v4972 = vsub.s32 0, %v4971
        %v4973 = vrot.slane %v4877, %v4972
        %v4975 = vadd.f32 %v4961, %v4973
        %v4976 = vadd.f32 %v4962, %v4973
        %v4977 = vadd.f32 %v4963, %v4973
        %v4978 = vadd.f32 %v4964, %v4973
        %v4979 = vadd.f32 %v4965, %v4973
        %v4980 = vadd.f32 %v4966, %v4973
        %v4981 = vadd.f32 %v4967, %v4973
        %v4982 = vadd.f32 %v4968, %v4973
        %v4983 = vlaneseq
        %v4984 = vshrl.u32 %v4983, 7
        %v4985 = vsub.s32 0, %v4984
        %v4986 = vrot.slane %v4942, %v4985
        %v4987 = vmul.f32 %v4975, %v4986
        %v4988 = vmul.f32 %v4976, %v4986
        %v4989 = vmul.f32 %v4977, %v4986
        %v4990 = vmul.f32 %v4978, %v4986
        %v4991 = vmul.f32 %v4979, %v4986
        %v4992 = vmul.f32 %v4980, %v4986
        %v4993 = vmul.f32 %v4981, %v4986
        %v4994 = vmul.f32 %v4982, %v4986
        %v4995 = vlaneseq
        %v4996 = vshrl.u32 %v4995, 7
        %v4997 = vsub.s32 0, %v4996
        %v4998 = vrot.slane %v4943, %v4997
        %v4999 = vadd.f32 %v4987, %v4998
        %v5000 = vadd.f32 %v4988, %v4998
        %v5001 = vadd.f32 %v4989, %v4998
        %v5002 = vadd.f32 %v4990, %v4998
        %v5003 = vadd.f32 %v4991, %v4998
        %v5004 = vadd.f32 %v4992, %v4998
        %v5005 = vadd.f32 %v4993, %v4998
        %v5006 = vadd.f32 %v4994, %v4998
        %v5007 = vmul.f32 %v4999, 0.5
        %v5008 = vmul.f32 %v5000, 0.5
        %v5009 = vmul.f32 %v5001, 0.5
        %v5010 = vmul.f32 %v5002, 0.5
        %v5011 = vmul.f32 %v5003, 0.5
        %v5012 = vmul.f32 %v5004, 0.5
        %v5013 = vmul.f32 %v5005, 0.5
        %v5014 = vmul.f32 %v5006, 0.5
        %v5015 = vmul.f32 %v4999, 0.70710677
        %v5016 = vmul.f32 %v5000, 0.70710677
        %v5017 = vmul.f32 %v5001, 0.70710677
        %v5018 = vmul.f32 %v5002, 0.70710677
        %v5019 = vmul.f32 %v5003, 0.70710677
        %v5020 = vmul.f32 %v5004, 0.70710677
        %v5021 = vmul.f32 %v5005, 0.70710677
        %v5022 = vmul.f32 %v5006, 0.70710677
        %v5023 = verf.f32.pop %v5015
        %v5024 = verf.f32.pop %v5016
        %v5025 = verf.f32.pop %v5017
        %v5026 = verf.f32.pop %v5018
        %v5027 = verf.f32.pop %v5019
        %v5028 = verf.f32.pop %v5020
        %v5029 = verf.f32.pop %v5021
        %v5030 = verf.f32.pop %v5022
        %v5031 = vadd.f32 %v5023, 1.0
        %v5032 = vadd.f32 %v5024, 1.0
        %v5033 = vadd.f32 %v5025, 1.0
        %v5034 = vadd.f32 %v5026, 1.0
        %v5035 = vadd.f32 %v5027, 1.0
        %v5036 = vadd.f32 %v5028, 1.0
        %v5037 = vadd.f32 %v5029, 1.0
        %v5038 = vadd.f32 %v5030, 1.0
        %v5039 = vmul.f32 %v5007, %v5031
        %v5040 = vmul.f32 %v5008, %v5032
        %v5041 = vmul.f32 %v5009, %v5033
        %v5042 = vmul.f32 %v5010, %v5034
        %v5043 = vmul.f32 %v5011, %v5035
        %v5044 = vmul.f32 %v5012, %v5036
        %v5045 = vmul.f32 %v5013, %v5037
        %v5046 = vmul.f32 %v5014, %v5038
        %v5047 = vlaneseq
        %v5048 = vshrl.u32 %v5047, 7
        %v5049 = vsub.s32 0, %v5048
        %v5050 = vrot.slane %v4944, %v5049
        %v5051 = vmul.f32 %v5050, %v5039
        %v5052 = vmul.f32 %v5050, %v5040
        %v5053 = vmul.f32 %v5050, %v5041
        %v5054 = vmul.f32 %v5050, %v5042
        %v5055 = vmul.f32 %v5050, %v5043
        %v5056 = vmul.f32 %v5050, %v5044
        %v5057 = vmul.f32 %v5050, %v5045
        %v5058 = vmul.f32 %v5050, %v5046
        %v5059 = vlaneseq
        %v5060 = vshrl.u32 %v5059, 7
        %v5061 = vsub.s32 1, %v5060
        %v5062 = vrot.slane %v4942, %v5061
        %v5063 = vmul.f32 %v4975, %v5062
        %v5064 = vmul.f32 %v4976, %v5062
        %v5065 = vmul.f32 %v4977, %v5062
        %v5066 = vmul.f32 %v4978, %v5062
        %v5067 = vmul.f32 %v4979, %v5062
        %v5068 = vmul.f32 %v4980, %v5062
        %v5069 = vmul.f32 %v4981, %v5062
        %v5070 = vmul.f32 %v4982, %v5062
        %v5071 = vlaneseq
        %v5072 = vshrl.u32 %v5071, 7
        %v5073 = vsub.s32 1, %v5072
        %v5074 = vrot.slane %v4943, %v5073
        %v5075 = vadd.f32 %v5063, %v5074
        %v5076 = vadd.f32 %v5064, %v5074
        %v5077 = vadd.f32 %v5065, %v5074
        %v5078 = vadd.f32 %v5066, %v5074
        %v5079 = vadd.f32 %v5067, %v5074
        %v5080 = vadd.f32 %v5068, %v5074
        %v5081 = vadd.f32 %v5069, %v5074
        %v5082 = vadd.f32 %v5070, %v5074
        %v5083 = vmul.f32 %v5075, 0.5
        %v5084 = vmul.f32 %v5076, 0.5
        %v5085 = vmul.f32 %v5077, 0.5
        %v5086 = vmul.f32 %v5078, 0.5
        %v5087 = vmul.f32 %v5079, 0.5
        %v5088 = vmul.f32 %v5080, 0.5
        %v5089 = vmul.f32 %v5081, 0.5
        %v5090 = vmul.f32 %v5082, 0.5
        %v5091 = vmul.f32 %v5075, 0.70710677
        %v5092 = vmul.f32 %v5076, 0.70710677
        %v5093 = vmul.f32 %v5077, 0.70710677
        %v5094 = vmul.f32 %v5078, 0.70710677
        %v5095 = vmul.f32 %v5079, 0.70710677
        %v5096 = vmul.f32 %v5080, 0.70710677
        %v5097 = vmul.f32 %v5081, 0.70710677
        %v5098 = vmul.f32 %v5082, 0.70710677
        %v5099 = verf.f32.pop %v5091
        %v5100 = verf.f32.pop %v5092
        %v5101 = verf.f32.pop %v5093
        %v5102 = verf.f32.pop %v5094
        %v5103 = verf.f32.pop %v5095
        %v5104 = verf.f32.pop %v5096
        %v5105 = verf.f32.pop %v5097
        %v5106 = verf.f32.pop %v5098
        %v5107 = vadd.f32 %v5099, 1.0
        %v5108 = vadd.f32 %v5100, 1.0
        %v5109 = vadd.f32 %v5101, 1.0
        %v5110 = vadd.f32 %v5102, 1.0
        %v5111 = vadd.f32 %v5103, 1.0
        %v5112 = vadd.f32 %v5104, 1.0
        %v5113 = vadd.f32 %v5105, 1.0
        %v5114 = vadd.f32 %v5106, 1.0
        %v5115 = vmul.f32 %v5083, %v5107
        %v5116 = vmul.f32 %v5084, %v5108
        %v5117 = vmul.f32 %v5085, %v5109
        %v5118 = vmul.f32 %v5086, %v5110
        %v5119 = vmul.f32 %v5087, %v5111
        %v5120 = vmul.f32 %v5088, %v5112
        %v5121 = vmul.f32 %v5089, %v5113
        %v5122 = vmul.f32 %v5090, %v5114
        %v5123 = vlaneseq
        %v5124 = vshrl.u32 %v5123, 7
        %v5125 = vsub.s32 1, %v5124
        %v5126 = vrot.slane %v4944, %v5125
        %v5127 = vmul.f32 %v5126, %v5115
        %v5128 = vmul.f32 %v5126, %v5116
        %v5129 = vmul.f32 %v5126, %v5117
        %v5130 = vmul.f32 %v5126, %v5118
        %v5131 = vmul.f32 %v5126, %v5119
        %v5132 = vmul.f32 %v5126, %v5120
        %v5133 = vmul.f32 %v5126, %v5121
        %v5134 = vmul.f32 %v5126, %v5122
        %v5135 = vadd.f32 %v5051, %v5127
        %v5136 = vadd.f32 %v5052, %v5128
        %v5137 = vadd.f32 %v5053, %v5129
        %v5138 = vadd.f32 %v5054, %v5130
        %v5139 = vadd.f32 %v5055, %v5131
        %v5140 = vadd.f32 %v5056, %v5132
        %v5141 = vadd.f32 %v5057, %v5133
        %v5142 = vadd.f32 %v5058, %v5134
        %v5143 = vlaneseq
        %v5144 = vshrl.u32 %v5143, 7
        %v5145 = vsub.s32 2, %v5144
        %v5146 = vrot.slane %v4942, %v5145
        %v5147 = vmul.f32 %v4975, %v5146
        %v5148 = vmul.f32 %v4976, %v5146
        %v5149 = vmul.f32 %v4977, %v5146
        %v5150 = vmul.f32 %v4978, %v5146
        %v5151 = vmul.f32 %v4979, %v5146
        %v5152 = vmul.f32 %v4980, %v5146
        %v5153 = vmul.f32 %v4981, %v5146
        %v5154 = vmul.f32 %v4982, %v5146
        %v5155 = vlaneseq
        %v5156 = vshrl.u32 %v5155, 7
        %v5157 = vsub.s32 2, %v5156
        %v5158 = vrot.slane %v4943, %v5157
        %v5159 = vadd.f32 %v5147, %v5158
        %v5160 = vadd.f32 %v5148, %v5158
        %v5161 = vadd.f32 %v5149, %v5158
        %v5162 = vadd.f32 %v5150, %v5158
        %v5163 = vadd.f32 %v5151, %v5158
        %v5164 = vadd.f32 %v5152, %v5158
        %v5165 = vadd.f32 %v5153, %v5158
        %v5166 = vadd.f32 %v5154, %v5158
        %v5167 = vmul.f32 %v5159, 0.5
        %v5168 = vmul.f32 %v5160, 0.5
        %v5169 = vmul.f32 %v5161, 0.5
        %v5170 = vmul.f32 %v5162, 0.5
        %v5171 = vmul.f32 %v5163, 0.5
        %v5172 = vmul.f32 %v5164, 0.5
        %v5173 = vmul.f32 %v5165, 0.5
        %v5174 = vmul.f32 %v5166, 0.5
        %v5175 = vmul.f32 %v5159, 0.70710677
        %v5176 = vmul.f32 %v5160, 0.70710677
        %v5177 = vmul.f32 %v5161, 0.70710677
        %v5178 = vmul.f32 %v5162, 0.70710677
        %v5179 = vmul.f32 %v5163, 0.70710677
        %v5180 = vmul.f32 %v5164, 0.70710677
        %v5181 = vmul.f32 %v5165, 0.70710677
        %v5182 = vmul.f32 %v5166, 0.70710677
        %v5183 = verf.f32.pop %v5175
        %v5184 = verf.f32.pop %v5176
        %v5185 = verf.f32.pop %v5177
        %v5186 = verf.f32.pop %v5178
        %v5187 = verf.f32.pop %v5179
        %v5188 = verf.f32.pop %v5180
        %v5189 = verf.f32.pop %v5181
        %v5190 = verf.f32.pop %v5182
        %v5191 = vadd.f32 %v5183, 1.0
        %v5192 = vadd.f32 %v5184, 1.0
        %v5193 = vadd.f32 %v5185, 1.0
        %v5194 = vadd.f32 %v5186, 1.0
        %v5195 = vadd.f32 %v5187, 1.0
        %v5196 = vadd.f32 %v5188, 1.0
        %v5197 = vadd.f32 %v5189, 1.0
        %v5198 = vadd.f32 %v5190, 1.0
        %v5199 = vmul.f32 %v5167, %v5191
        %v5200 = vmul.f32 %v5168, %v5192
        %v5201 = vmul.f32 %v5169, %v5193
        %v5202 = vmul.f32 %v5170, %v5194
        %v5203 = vmul.f32 %v5171, %v5195
        %v5204 = vmul.f32 %v5172, %v5196
        %v5205 = vmul.f32 %v5173, %v5197
        %v5206 = vmul.f32 %v5174, %v5198
        %v5207 = vlaneseq
        %v5208 = vshrl.u32 %v5207, 7
        %v5209 = vsub.s32 2, %v5208
        %v5210 = vrot.slane %v4944, %v5209
        %v5211 = vmul.f32 %v5210, %v5199
        %v5212 = vmul.f32 %v5210, %v5200
        %v5213 = vmul.f32 %v5210, %v5201
        %v5214 = vmul.f32 %v5210, %v5202
        %v5215 = vmul.f32 %v5210, %v5203
        %v5216 = vmul.f32 %v5210, %v5204
        %v5217 = vmul.f32 %v5210, %v5205
        %v5218 = vmul.f32 %v5210, %v5206
        %v5219 = vadd.f32 %v5135, %v5211
        %v5220 = vadd.f32 %v5136, %v5212
        %v5221 = vadd.f32 %v5137, %v5213
        %v5222 = vadd.f32 %v5138, %v5214
        %v5223 = vadd.f32 %v5139, %v5215
        %v5224 = vadd.f32 %v5140, %v5216
        %v5225 = vadd.f32 %v5141, %v5217
        %v5226 = vadd.f32 %v5142, %v5218
        %v5227 = vlaneseq
        %v5228 = vshrl.u32 %v5227, 7
        %v5229 = vsub.s32 3, %v5228
        %v5230 = vrot.slane %v4942, %v5229
        %v5231 = vmul.f32 %v4975, %v5230
        %v5232 = vmul.f32 %v4976, %v5230
        %v5233 = vmul.f32 %v4977, %v5230
        %v5234 = vmul.f32 %v4978, %v5230
        %v5235 = vmul.f32 %v4979, %v5230
        %v5236 = vmul.f32 %v4980, %v5230
        %v5237 = vmul.f32 %v4981, %v5230
        %v5238 = vmul.f32 %v4982, %v5230
        %v5239 = vlaneseq
        %v5240 = vshrl.u32 %v5239, 7
        %v5241 = vsub.s32 3, %v5240
        %v5242 = vrot.slane %v4943, %v5241
        %v5243 = vadd.f32 %v5231, %v5242
        %v5244 = vadd.f32 %v5232, %v5242
        %v5245 = vadd.f32 %v5233, %v5242
        %v5246 = vadd.f32 %v5234, %v5242
        %v5247 = vadd.f32 %v5235, %v5242
        %v5248 = vadd.f32 %v5236, %v5242
        %v5249 = vadd.f32 %v5237, %v5242
        %v5250 = vadd.f32 %v5238, %v5242
        %v5251 = vmul.f32 %v5243, 0.5
        %v5252 = vmul.f32 %v5244, 0.5
        %v5253 = vmul.f32 %v5245, 0.5
        %v5254 = vmul.f32 %v5246, 0.5
        %v5255 = vmul.f32 %v5247, 0.5
        %v5256 = vmul.f32 %v5248, 0.5
        %v5257 = vmul.f32 %v5249, 0.5
        %v5258 = vmul.f32 %v5250, 0.5
        %v5259 = vmul.f32 %v5243, 0.70710677
        %v5260 = vmul.f32 %v5244, 0.70710677
        %v5261 = vmul.f32 %v5245, 0.70710677
        %v5262 = vmul.f32 %v5246, 0.70710677
        %v5263 = vmul.f32 %v5247, 0.70710677
        %v5264 = vmul.f32 %v5248, 0.70710677
        %v5265 = vmul.f32 %v5249, 0.70710677
        %v5266 = vmul.f32 %v5250, 0.70710677
        %v5267 = verf.f32.pop %v5259
        %v5268 = verf.f32.pop %v5260
        %v5269 = verf.f32.pop %v5261
        %v5270 = verf.f32.pop %v5262
        %v5271 = verf.f32.pop %v5263
        %v5272 = verf.f32.pop %v5264
        %v5273 = verf.f32.pop %v5265
        %v5274 = verf.f32.pop %v5266
        %v5275 = vadd.f32 %v5267, 1.0
        %v5276 = vadd.f32 %v5268, 1.0
        %v5277 = vadd.f32 %v5269, 1.0
        %v5278 = vadd.f32 %v5270, 1.0
        %v5279 = vadd.f32 %v5271, 1.0
        %v5280 = vadd.f32 %v5272, 1.0
        %v5281 = vadd.f32 %v5273, 1.0
        %v5282 = vadd.f32 %v5274, 1.0
        %v5283 = vmul.f32 %v5251, %v5275
        %v5284 = vmul.f32 %v5252, %v5276
        %v5285 = vmul.f32 %v5253, %v5277
        %v5286 = vmul.f32 %v5254, %v5278
        %v5287 = vmul.f32 %v5255, %v5279
        %v5288 = vmul.f32 %v5256, %v5280
        %v5289 = vmul.f32 %v5257, %v5281
        %v5290 = vmul.f32 %v5258, %v5282
        %v5291 = vlaneseq
        %v5292 = vshrl.u32 %v5291, 7
        %v5293 = vsub.s32 3, %v5292
        %v5294 = vrot.slane %v4944, %v5293
        %v5295 = vmul.f32 %v5294, %v5283
        %v5296 = vmul.f32 %v5294, %v5284
        %v5297 = vmul.f32 %v5294, %v5285
        %v5298 = vmul.f32 %v5294, %v5286
        %v5299 = vmul.f32 %v5294, %v5287
        %v5300 = vmul.f32 %v5294, %v5288
        %v5301 = vmul.f32 %v5294, %v5289
        %v5302 = vmul.f32 %v5294, %v5290
        %v5303 = vadd.f32 %v5219, %v5295
        %v5304 = vadd.f32 %v5220, %v5296
        %v5305 = vadd.f32 %v5221, %v5297
        %v5306 = vadd.f32 %v5222, %v5298
        %v5307 = vadd.f32 %v5223, %v5299
        %v5308 = vadd.f32 %v5224, %v5300
        %v5309 = vadd.f32 %v5225, %v5301
        %v5310 = vadd.f32 %v5226, %v5302
        %v5312 = vlaneseq
        %v5313 = vshrl.u32 %v5312, 7
        %v5314 = vsub.s32 0, %v5313
        %v5315 = vrot.slane %v4945, %v5314
        %v5317 = vadd.f32 %v5303, %v5315
        %v5318 = vadd.f32 %v5304, %v5315
        %v5319 = vadd.f32 %v5305, %v5315
        %v5320 = vadd.f32 %v5306, %v5315
        %v5321 = vadd.f32 %v5307, %v5315
        %v5322 = vadd.f32 %v5308, %v5315
        %v5323 = vadd.f32 %v5309, %v5315
        %v5324 = vadd.f32 %v5310, %v5315
        %v5326 = vlaneseq
        %v5327 = vshrl.u32 %v5326, 7
        %v5328 = vsub.s32 0, %v5327
        %v5329 = vrot.slane %v4946, %v5328
        %v5331 = vmul.f32 %v5329, %v5317
        %v5332 = vmul.f32 %v5329, %v5318
        %v5333 = vmul.f32 %v5329, %v5319
        %v5334 = vmul.f32 %v5329, %v5320
        %v5335 = vmul.f32 %v5329, %v5321
        %v5336 = vmul.f32 %v5329, %v5322
        %v5337 = vmul.f32 %v5329, %v5323
        %v5338 = vmul.f32 %v5329, %v5324
        %v5339 = vld [vmem:[%s401] sm:$0xff]
        %v5340 = vld [vmem:[%s401 + $0x8] sm:$0xff]
        %v5341 = vld [vmem:[%s401 + $0x10] sm:$0xff]
        %v5342 = vld [vmem:[%s401 + $0x18] sm:$0xff]
        %v5343 = vld [vmem:[%s401 + $0x20] sm:$0xff]
        %v5344 = vld [vmem:[%s401 + $0x28] sm:$0xff]
        %v5345 = vld [vmem:[%s401 + $0x30] sm:$0xff]
        %v5346 = vld [vmem:[%s401 + $0x38] sm:$0xff]
        %v5347 = vadd.f32 %v5331, %v5339
        %v5348 = vadd.f32 %v5332, %v5340
        %v5349 = vadd.f32 %v5333, %v5341
        %v5350 = vadd.f32 %v5334, %v5342
        %v5351 = vadd.f32 %v5335, %v5343
        %v5352 = vadd.f32 %v5336, %v5344
        %v5353 = vadd.f32 %v5337, %v5345
        %v5354 = vadd.f32 %v5338, %v5346
        %5355 = vst [vmem:[%s463] sm:$0xff] %v5347
        %5356 = vst [vmem:[%s463 + $0x8] sm:$0xff] %v5348
        %5357 = vst [vmem:[%s463 + $0x10] sm:$0xff] %v5349
        %5358 = vst [vmem:[%s463 + $0x18] sm:$0xff] %v5350
        %5359 = vst [vmem:[%s463 + $0x20] sm:$0xff] %v5351
        %5360 = vst [vmem:[%s463 + $0x28] sm:$0xff] %v5352
        %5361 = vst [vmem:[%s463 + $0x30] sm:$0xff] %v5353
        %5362 = vst [vmem:[%s463 + $0x38] sm:$0xff] %v5354
        %s5363 = scalar_lea.vmem [#allocation3], 64
        %v5364 = vld [vmem:[%s5363] sm:$0xff]
        %v5365 = vld [vmem:[%s5363 + $0x8] sm:$0xff]
        %v5366 = vld [vmem:[%s5363 + $0x10] sm:$0xff]
        %v5367 = vld [vmem:[%s5363 + $0x18] sm:$0xff]
        %v5368 = vld [vmem:[%s5363 + $0x20] sm:$0xff]
        %v5369 = vld [vmem:[%s5363 + $0x28] sm:$0xff]
        %v5370 = vld [vmem:[%s5363 + $0x30] sm:$0xff]
        %v5371 = vld [vmem:[%s5363 + $0x38] sm:$0xff]
        %v5372 = vmul.f32 %v5364, %v4959
        %v5373 = vmul.f32 %v5365, %v4959
        %v5374 = vmul.f32 %v5366, %v4959
        %v5375 = vmul.f32 %v5367, %v4959
        %v5376 = vmul.f32 %v5368, %v4959
        %v5377 = vmul.f32 %v5369, %v4959
        %v5378 = vmul.f32 %v5370, %v4959
        %v5379 = vmul.f32 %v5371, %v4959
        %v5380 = vadd.f32 %v5372, %v4973
        %v5381 = vadd.f32 %v5373, %v4973
        %v5382 = vadd.f32 %v5374, %v4973
        %v5383 = vadd.f32 %v5375, %v4973
        %v5384 = vadd.f32 %v5376, %v4973
        %v5385 = vadd.f32 %v5377, %v4973
        %v5386 = vadd.f32 %v5378, %v4973
        %v5387 = vadd.f32 %v5379, %v4973
        %v5388 = vmul.f32 %v5380, %v4986
        %v5389 = vmul.f32 %v5381, %v4986
        %v5390 = vmul.f32 %v5382, %v4986
        %v5391 = vmul.f32 %v5383, %v4986
        %v5392 = vmul.f32 %v5384, %v4986
        %v5393 = vmul.f32 %v5385, %v4986
        %v5394 = vmul.f32 %v5386, %v4986
        %v5395 = vmul.f32 %v5387, %v4986
        %v5396 = vadd.f32 %v5388, %v4998
        %v5397 = vadd.f32 %v5389, %v4998
        %v5398 = vadd.f32 %v5390, %v4998
        %v5399 = vadd.f32 %v5391, %v4998
        %v5400 = vadd.f32 %v5392, %v4998
        %v5401 = vadd.f32 %v5393, %v4998
        %v5402 = vadd.f32 %v5394, %v4998
        %v5403 = vadd.f32 %v5395, %v4998
        %v5404 = vmul.f32 %v5396, 0.5
        %v5405 = vmul.f32 %v5397, 0.5
        %v5406 = vmul.f32 %v5398, 0.5
        %v5407 = vmul.f32 %v5399, 0.5
        %v5408 = vmul.f32 %v5400, 0.5
        %v5409 = vmul.f32 %v5401, 0.5
        %v5410 = vmul.f32 %v5402, 0.5
        %v5411 = vmul.f32 %v5403, 0.5
        %v5412 = vmul.f32 %v5396, 0.70710677
        %v5413 = vmul.f32 %v5397, 0.70710677
        %v5414 = vmul.f32 %v5398, 0.70710677
        %v5415 = vmul.f32 %v5399, 0.70710677
        %v5416 = vmul.f32 %v5400, 0.70710677
        %v5417 = vmul.f32 %v5401, 0.70710677
        %v5418 = vmul.f32 %v5402, 0.70710677
        %v5419 = vmul.f32 %v5403, 0.70710677
        %v5420 = verf.f32.pop %v5412
        %v5421 = verf.f32.pop %v5413
        %v5422 = verf.f32.pop %v5414
        %v5423 = verf.f32.pop %v5415
        %v5424 = verf.f32.pop %v5416
        %v5425 = verf.f32.pop %v5417
        %v5426 = verf.f32.pop %v5418
        %v5427 = verf.f32.pop %v5419
        %v5428 = vadd.f32 %v5420, 1.0
        %v5429 = vadd.f32 %v5421, 1.0
        %v5430 = vadd.f32 %v5422, 1.0
        %v5431 = vadd.f32 %v5423, 1.0
        %v5432 = vadd.f32 %v5424, 1.0
        %v5433 = vadd.f32 %v5425, 1.0
        %v5434 = vadd.f32 %v5426, 1.0
        %v5435 = vadd.f32 %v5427, 1.0
        %v5436 = vmul.f32 %v5404, %v5428
        %v5437 = vmul.f32 %v5405, %v5429
        %v5438 = vmul.f32 %v5406, %v5430
        %v5439 = vmul.f32 %v5407, %v5431
        %v5440 = vmul.f32 %v5408, %v5432
        %v5441 = vmul.f32 %v5409, %v5433
        %v5442 = vmul.f32 %v5410, %v5434
        %v5443 = vmul.f32 %v5411, %v5435
        %v5444 = vmul.f32 %v5050, %v5436
        %v5445 = vmul.f32 %v5050, %v5437
        %v5446 = vmul.f32 %v5050, %v5438
        %v5447 = vmul.f32 %v5050, %v5439
        %v5448 = vmul.f32 %v5050, %v5440
        %v5449 = vmul.f32 %v5050, %v5441
        %v5450 = vmul.f32 %v5050, %v5442
        %v5451 = vmul.f32 %v5050, %v5443
        %v5452 = vmul.f32 %v5380, %v5062
        %v5453 = vmul.f32 %v5381, %v5062
        %v5454 = vmul.f32 %v5382, %v5062
        %v5455 = vmul.f32 %v5383, %v5062
        %v5456 = vmul.f32 %v5384, %v5062
        %v5457 = vmul.f32 %v5385, %v5062
        %v5458 = vmul.f32 %v5386, %v5062
        %v5459 = vmul.f32 %v5387, %v5062
        %v5460 = vadd.f32 %v5452, %v5074
        %v5461 = vadd.f32 %v5453, %v5074
        %v5462 = vadd.f32 %v5454, %v5074
        %v5463 = vadd.f32 %v5455, %v5074
        %v5464 = vadd.f32 %v5456, %v5074
        %v5465 = vadd.f32 %v5457, %v5074
        %v5466 = vadd.f32 %v5458, %v5074
        %v5467 = vadd.f32 %v5459, %v5074
        %v5468 = vmul.f32 %v5460, 0.5
        %v5469 = vmul.f32 %v5461, 0.5
        %v5470 = vmul.f32 %v5462, 0.5
        %v5471 = vmul.f32 %v5463, 0.5
        %v5472 = vmul.f32 %v5464, 0.5
        %v5473 = vmul.f32 %v5465, 0.5
        %v5474 = vmul.f32 %v5466, 0.5
        %v5475 = vmul.f32 %v5467, 0.5
        %v5476 = vmul.f32 %v5460, 0.70710677
        %v5477 = vmul.f32 %v5461, 0.70710677
        %v5478 = vmul.f32 %v5462, 0.70710677
        %v5479 = vmul.f32 %v5463, 0.70710677
        %v5480 = vmul.f32 %v5464, 0.70710677
        %v5481 = vmul.f32 %v5465, 0.70710677
        %v5482 = vmul.f32 %v5466, 0.70710677
        %v5483 = vmul.f32 %v5467, 0.70710677
        %v5484 = verf.f32.pop %v5476
        %v5485 = verf.f32.pop %v5477
        %v5486 = verf.f32.pop %v5478
        %v5487 = verf.f32.pop %v5479
        %v5488 = verf.f32.pop %v5480
        %v5489 = verf.f32.pop %v5481
        %v5490 = verf.f32.pop %v5482
        %v5491 = verf.f32.pop %v5483
        %v5492 = vadd.f32 %v5484, 1.0
        %v5493 = vadd.f32 %v5485, 1.0
        %v5494 = vadd.f32 %v5486, 1.0
        %v5495 = vadd.f32 %v5487, 1.0
        %v5496 = vadd.f32 %v5488, 1.0
        %v5497 = vadd.f32 %v5489, 1.0
        %v5498 = vadd.f32 %v5490, 1.0
        %v5499 = vadd.f32 %v5491, 1.0
        %v5500 = vmul.f32 %v5468, %v5492
        %v5501 = vmul.f32 %v5469, %v5493
        %v5502 = vmul.f32 %v5470, %v5494
        %v5503 = vmul.f32 %v5471, %v5495
        %v5504 = vmul.f32 %v5472, %v5496
        %v5505 = vmul.f32 %v5473, %v5497
        %v5506 = vmul.f32 %v5474, %v5498
        %v5507 = vmul.f32 %v5475, %v5499
        %v5508 = vmul.f32 %v5126, %v5500
        %v5509 = vmul.f32 %v5126, %v5501
        %v5510 = vmul.f32 %v5126, %v5502
        %v5511 = vmul.f32 %v5126, %v5503
        %v5512 = vmul.f32 %v5126, %v5504
        %v5513 = vmul.f32 %v5126, %v5505
        %v5514 = vmul.f32 %v5126, %v5506
        %v5515 = vmul.f32 %v5126, %v5507
        %v5516 = vadd.f32 %v5444, %v5508
        %v5517 = vadd.f32 %v5445, %v5509
        %v5518 = vadd.f32 %v5446, %v5510
        %v5519 = vadd.f32 %v5447, %v5511
        %v5520 = vadd.f32 %v5448, %v5512
        %v5521 = vadd.f32 %v5449, %v5513
        %v5522 = vadd.f32 %v5450, %v5514
        %v5523 = vadd.f32 %v5451, %v5515
        %v5524 = vmul.f32 %v5380, %v5146
        %v5525 = vmul.f32 %v5381, %v5146
        %v5526 = vmul.f32 %v5382, %v5146
        %v5527 = vmul.f32 %v5383, %v5146
        %v5528 = vmul.f32 %v5384, %v5146
        %v5529 = vmul.f32 %v5385, %v5146
        %v5530 = vmul.f32 %v5386, %v5146
        %v5531 = vmul.f32 %v5387, %v5146
        %v5532 = vadd.f32 %v5524, %v5158
        %v5533 = vadd.f32 %v5525, %v5158
        %v5534 = vadd.f32 %v5526, %v5158
        %v5535 = vadd.f32 %v5527, %v5158
        %v5536 = vadd.f32 %v5528, %v5158
        %v5537 = vadd.f32 %v5529, %v5158
        %v5538 = vadd.f32 %v5530, %v5158
        %v5539 = vadd.f32 %v5531, %v5158
        %v5540 = vmul.f32 %v5532, 0.5
        %v5541 = vmul.f32 %v5533, 0.5
        %v5542 = vmul.f32 %v5534, 0.5
        %v5543 = vmul.f32 %v5535, 0.5
        %v5544 = vmul.f32 %v5536, 0.5
        %v5545 = vmul.f32 %v5537, 0.5
        %v5546 = vmul.f32 %v5538, 0.5
        %v5547 = vmul.f32 %v5539, 0.5
        %v5548 = vmul.f32 %v5532, 0.70710677
        %v5549 = vmul.f32 %v5533, 0.70710677
        %v5550 = vmul.f32 %v5534, 0.70710677
        %v5551 = vmul.f32 %v5535, 0.70710677
        %v5552 = vmul.f32 %v5536, 0.70710677
        %v5553 = vmul.f32 %v5537, 0.70710677
        %v5554 = vmul.f32 %v5538, 0.70710677
        %v5555 = vmul.f32 %v5539, 0.70710677
        %v5556 = verf.f32.pop %v5548
        %v5557 = verf.f32.pop %v5549
        %v5558 = verf.f32.pop %v5550
        %v5559 = verf.f32.pop %v5551
        %v5560 = verf.f32.pop %v5552
        %v5561 = verf.f32.pop %v5553
        %v5562 = verf.f32.pop %v5554
        %v5563 = verf.f32.pop %v5555
        %v5564 = vadd.f32 %v5556, 1.0
        %v5565 = vadd.f32 %v5557, 1.0
        %v5566 = vadd.f32 %v5558, 1.0
        %v5567 = vadd.f32 %v5559, 1.0
        %v5568 = vadd.f32 %v5560, 1.0
        %v5569 = vadd.f32 %v5561, 1.0
        %v5570 = vadd.f32 %v5562, 1.0
        %v5571 = vadd.f32 %v5563, 1.0
        %v5572 = vmul.f32 %v5540, %v5564
        %v5573 = vmul.f32 %v5541, %v5565
        %v5574 = vmul.f32 %v5542, %v5566
        %v5575 = vmul.f32 %v5543, %v5567
        %v5576 = vmul.f32 %v5544, %v5568
        %v5577 = vmul.f32 %v5545, %v5569
        %v5578 = vmul.f32 %v5546, %v5570
        %v5579 = vmul.f32 %v5547, %v5571
        %v5580 = vmul.f32 %v5210, %v5572
        %v5581 = vmul.f32 %v5210, %v5573
        %v5582 = vmul.f32 %v5210, %v5574
        %v5583 = vmul.f32 %v5210, %v5575
        %v5584 = vmul.f32 %v5210, %v5576
        %v5585 = vmul.f32 %v5210, %v5577
        %v5586 = vmul.f32 %v5210, %v5578
        %v5587 = vmul.f32 %v5210, %v5579
        %v5588 = vadd.f32 %v5516, %v5580
        %v5589 = vadd.f32 %v5517, %v5581
        %v5590 = vadd.f32 %v5518, %v5582
        %v5591 = vadd.f32 %v5519, %v5583
        %v5592 = vadd.f32 %v5520, %v5584
        %v5593 = vadd.f32 %v5521, %v5585
        %v5594 = vadd.f32 %v5522, %v5586
        %v5595 = vadd.f32 %v5523, %v5587
        %v5596 = vmul.f32 %v5380, %v5230
        %v5597 = vmul.f32 %v5381, %v5230
        %v5598 = vmul.f32 %v5382, %v5230
        %v5599 = vmul.f32 %v5383, %v5230
        %v5600 = vmul.f32 %v5384, %v5230
        %v5601 = vmul.f32 %v5385, %v5230
        %v5602 = vmul.f32 %v5386, %v5230
        %v5603 = vmul.f32 %v5387, %v5230
        %v5604 = vadd.f32 %v5596, %v5242
        %v5605 = vadd.f32 %v5597, %v5242
        %v5606 = vadd.f32 %v5598, %v5242
        %v5607 = vadd.f32 %v5599, %v5242
        %v5608 = vadd.f32 %v5600, %v5242
        %v5609 = vadd.f32 %v5601, %v5242
        %v5610 = vadd.f32 %v5602, %v5242
        %v5611 = vadd.f32 %v5603, %v5242
        %v5612 = vmul.f32 %v5604, 0.5
        %v5613 = vmul.f32 %v5605, 0.5
        %v5614 = vmul.f32 %v5606, 0.5
        %v5615 = vmul.f32 %v5607, 0.5
        %v5616 = vmul.f32 %v5608, 0.5
        %v5617 = vmul.f32 %v5609, 0.5
        %v5618 = vmul.f32 %v5610, 0.5
        %v5619 = vmul.f32 %v5611, 0.5
        %v5620 = vmul.f32 %v5604, 0.70710677
        %v5621 = vmul.f32 %v5605, 0.70710677
        %v5622 = vmul.f32 %v5606, 0.70710677
        %v5623 = vmul.f32 %v5607, 0.70710677
        %v5624 = vmul.f32 %v5608, 0.70710677
        %v5625 = vmul.f32 %v5609, 0.70710677
        %v5626 = vmul.f32 %v5610, 0.70710677
        %v5627 = vmul.f32 %v5611, 0.70710677
        %v5628 = verf.f32.pop %v5620
        %v5629 = verf.f32.pop %v5621
        %v5630 = verf.f32.pop %v5622
        %v5631 = verf.f32.pop %v5623
        %v5632 = verf.f32.pop %v5624
        %v5633 = verf.f32.pop %v5625
        %v5634 = verf.f32.pop %v5626
        %v5635 = verf.f32.pop %v5627
        %v5636 = vadd.f32 %v5628, 1.0
        %v5637 = vadd.f32 %v5629, 1.0
        %v5638 = vadd.f32 %v5630, 1.0
        %v5639 = vadd.f32 %v5631, 1.0
        %v5640 = vadd.f32 %v5632, 1.0
        %v5641 = vadd.f32 %v5633, 1.0
        %v5642 = vadd.f32 %v5634, 1.0
        %v5643 = vadd.f32 %v5635, 1.0
        %v5644 = vmul.f32 %v5612, %v5636
        %v5645 = vmul.f32 %v5613, %v5637
        %v5646 = vmul.f32 %v5614, %v5638
        %v5647 = vmul.f32 %v5615, %v5639
        %v5648 = vmul.f32 %v5616, %v5640
        %v5649 = vmul.f32 %v5617, %v5641
        %v5650 = vmul.f32 %v5618, %v5642
        %v5651 = vmul.f32 %v5619, %v5643
        %v5652 = vmul.f32 %v5294, %v5644
        %v5653 = vmul.f32 %v5294, %v5645
        %v5654 = vmul.f32 %v5294, %v5646
        %v5655 = vmul.f32 %v5294, %v5647
        %v5656 = vmul.f32 %v5294, %v5648
        %v5657 = vmul.f32 %v5294, %v5649
        %v5658 = vmul.f32 %v5294, %v5650
        %v5659 = vmul.f32 %v5294, %v5651
        %v5660 = vadd.f32 %v5588, %v5652
        %v5661 = vadd.f32 %v5589, %v5653
        %v5662 = vadd.f32 %v5590, %v5654
        %v5663 = vadd.f32 %v5591, %v5655
        %v5664 = vadd.f32 %v5592, %v5656
        %v5665 = vadd.f32 %v5593, %v5657
        %v5666 = vadd.f32 %v5594, %v5658
        %v5667 = vadd.f32 %v5595, %v5659
        %v5668 = vadd.f32 %v5660, %v5315
        %v5669 = vadd.f32 %v5661, %v5315
        %v5670 = vadd.f32 %v5662, %v5315
        %v5671 = vadd.f32 %v5663, %v5315
        %v5672 = vadd.f32 %v5664, %v5315
        %v5673 = vadd.f32 %v5665, %v5315
        %v5674 = vadd.f32 %v5666, %v5315
        %v5675 = vadd.f32 %v5667, %v5315
        %v5676 = vmul.f32 %v5329, %v5668
        %v5677 = vmul.f32 %v5329, %v5669
        %v5678 = vmul.f32 %v5329, %v5670
        %v5679 = vmul.f32 %v5329, %v5671
        %v5680 = vmul.f32 %v5329, %v5672
        %v5681 = vmul.f32 %v5329, %v5673
        %v5682 = vmul.f32 %v5329, %v5674
        %v5683 = vmul.f32 %v5329, %v5675
        %s5684 = scalar_lea.vmem %s401, 64 [#allocation4]
        %v5685 = vld [vmem:[%s5684] sm:$0xff]
        %v5686 = vld [vmem:[%s5684 + $0x8] sm:$0xff]
        %v5687 = vld [vmem:[%s5684 + $0x10] sm:$0xff]
        %v5688 = vld [vmem:[%s5684 + $0x18] sm:$0xff]
        %v5689 = vld [vmem:[%s5684 + $0x20] sm:$0xff]
        %v5690 = vld [vmem:[%s5684 + $0x28] sm:$0xff]
        %v5691 = vld [vmem:[%s5684 + $0x30] sm:$0xff]
        %v5692 = vld [vmem:[%s5684 + $0x38] sm:$0xff]
        %v5693 = vadd.f32 %v5676, %v5685
        %v5694 = vadd.f32 %v5677, %v5686
        %v5695 = vadd.f32 %v5678, %v5687
        %v5696 = vadd.f32 %v5679, %v5688
        %v5697 = vadd.f32 %v5680, %v5689
        %v5698 = vadd.f32 %v5681, %v5690
        %v5699 = vadd.f32 %v5682, %v5691
        %v5700 = vadd.f32 %v5683, %v5692
        %s5701 = scalar_lea.vmem %s463, 64 [#allocation7]
        %5702 = vst [vmem:[%s5701] sm:$0xff] %v5693
        %5703 = vst [vmem:[%s5701 + $0x8] sm:$0xff] %v5694
        %5704 = vst [vmem:[%s5701 + $0x10] sm:$0xff] %v5695
        %5705 = vst [vmem:[%s5701 + $0x18] sm:$0xff] %v5696
        %5706 = vst [vmem:[%s5701 + $0x20] sm:$0xff] %v5697
        %5707 = vst [vmem:[%s5701 + $0x28] sm:$0xff] %v5698
        %5708 = vst [vmem:[%s5701 + $0x30] sm:$0xff] %v5699
        %5709 = vst [vmem:[%s5701 + $0x38] sm:$0xff] %v5700
        %s5710 = scalar_lea.vmem [#allocation3], 128
        %v5711 = vld [vmem:[%s5710] sm:$0xff]
        %v5712 = vld [vmem:[%s5710 + $0x8] sm:$0xff]
        %v5713 = vld [vmem:[%s5710 + $0x10] sm:$0xff]
        %v5714 = vld [vmem:[%s5710 + $0x18] sm:$0xff]
        %v5715 = vld [vmem:[%s5710 + $0x20] sm:$0xff]
        %v5716 = vld [vmem:[%s5710 + $0x28] sm:$0xff]
        %v5717 = vld [vmem:[%s5710 + $0x30] sm:$0xff]
        %v5718 = vld [vmem:[%s5710 + $0x38] sm:$0xff]
        %v5719 = vmul.f32 %v5711, %v4959
        %v5720 = vmul.f32 %v5712, %v4959
        %v5721 = vmul.f32 %v5713, %v4959
        %v5722 = vmul.f32 %v5714, %v4959
        %v5723 = vmul.f32 %v5715, %v4959
        %v5724 = vmul.f32 %v5716, %v4959
        %v5725 = vmul.f32 %v5717, %v4959
        %v5726 = vmul.f32 %v5718, %v4959
        %v5727 = vadd.f32 %v5719, %v4973
        %v5728 = vadd.f32 %v5720, %v4973
        %v5729 = vadd.f32 %v5721, %v4973
        %v5730 = vadd.f32 %v5722, %v4973
        %v5731 = vadd.f32 %v5723, %v4973
        %v5732 = vadd.f32 %v5724, %v4973
        %v5733 = vadd.f32 %v5725, %v4973
        %v5734 = vadd.f32 %v5726, %v4973
        %v5735 = vmul.f32 %v5727, %v4986
        %v5736 = vmul.f32 %v5728, %v4986
        %v5737 = vmul.f32 %v5729, %v4986
        %v5738 = vmul.f32 %v5730, %v4986
        %v5739 = vmul.f32 %v5731, %v4986
        %v5740 = vmul.f32 %v5732, %v4986
        %v5741 = vmul.f32 %v5733, %v4986
        %v5742 = vmul.f32 %v5734, %v4986
        %v5743 = vadd.f32 %v5735, %v4998
        %v5744 = vadd.f32 %v5736, %v4998
        %v5745 = vadd.f32 %v5737, %v4998
        %v5746 = vadd.f32 %v5738, %v4998
        %v5747 = vadd.f32 %v5739, %v4998
        %v5748 = vadd.f32 %v5740, %v4998
        %v5749 = vadd.f32 %v5741, %v4998
        %v5750 = vadd.f32 %v5742, %v4998
        %v5751 = vmul.f32 %v5743, 0.5
        %v5752 = vmul.f32 %v5744, 0.5
        %v5753 = vmul.f32 %v5745, 0.5
        %v5754 = vmul.f32 %v5746, 0.5
        %v5755 = vmul.f32 %v5747, 0.5
        %v5756 = vmul.f32 %v5748, 0.5
        %v5757 = vmul.f32 %v5749, 0.5
        %v5758 = vmul.f32 %v5750, 0.5
        %v5759 = vmul.f32 %v5743, 0.70710677
        %v5760 = vmul.f32 %v5744, 0.70710677
        %v5761 = vmul.f32 %v5745, 0.70710677
        %v5762 = vmul.f32 %v5746, 0.70710677
        %v5763 = vmul.f32 %v5747, 0.70710677
        %v5764 = vmul.f32 %v5748, 0.70710677
        %v5765 = vmul.f32 %v5749, 0.70710677
        %v5766 = vmul.f32 %v5750, 0.70710677
        %v5767 = verf.f32.pop %v5759
        %v5768 = verf.f32.pop %v5760
        %v5769 = verf.f32.pop %v5761
        %v5770 = verf.f32.pop %v5762
        %v5771 = verf.f32.pop %v5763
        %v5772 = verf.f32.pop %v5764
        %v5773 = verf.f32.pop %v5765
        %v5774 = verf.f32.pop %v5766
        %v5775 = vadd.f32 %v5767, 1.0
        %v5776 = vadd.f32 %v5768, 1.0
        %v5777 = vadd.f32 %v5769, 1.0
        %v5778 = vadd.f32 %v5770, 1.0
        %v5779 = vadd.f32 %v5771, 1.0
        %v5780 = vadd.f32 %v5772, 1.0
        %v5781 = vadd.f32 %v5773, 1.0
        %v5782 = vadd.f32 %v5774, 1.0
        %v5783 = vmul.f32 %v5751, %v5775
        %v5784 = vmul.f32 %v5752, %v5776
        %v5785 = vmul.f32 %v5753, %v5777
        %v5786 = vmul.f32 %v5754, %v5778
        %v5787 = vmul.f32 %v5755, %v5779
        %v5788 = vmul.f32 %v5756, %v5780
        %v5789 = vmul.f32 %v5757, %v5781
        %v5790 = vmul.f32 %v5758, %v5782
        %v5791 = vmul.f32 %v5050, %v5783
        %v5792 = vmul.f32 %v5050, %v5784
        %v5793 = vmul.f32 %v5050, %v5785
        %v5794 = vmul.f32 %v5050, %v5786
        %v5795 = vmul.f32 %v5050, %v5787
        %v5796 = vmul.f32 %v5050, %v5788
        %v5797 = vmul.f32 %v5050, %v5789
        %v5798 = vmul.f32 %v5050, %v5790
        %v5799 = vmul.f32 %v5727, %v5062
        %v5800 = vmul.f32 %v5728, %v5062
        %v5801 = vmul.f32 %v5729, %v5062
        %v5802 = vmul.f32 %v5730, %v5062
        %v5803 = vmul.f32 %v5731, %v5062
        %v5804 = vmul.f32 %v5732, %v5062
        %v5805 = vmul.f32 %v5733, %v5062
        %v5806 = vmul.f32 %v5734, %v5062
        %v5807 = vadd.f32 %v5799, %v5074
        %v5808 = vadd.f32 %v5800, %v5074
        %v5809 = vadd.f32 %v5801, %v5074
        %v5810 = vadd.f32 %v5802, %v5074
        %v5811 = vadd.f32 %v5803, %v5074
        %v5812 = vadd.f32 %v5804, %v5074
        %v5813 = vadd.f32 %v5805, %v5074
        %v5814 = vadd.f32 %v5806, %v5074
        %v5815 = vmul.f32 %v5807, 0.5
        %v5816 = vmul.f32 %v5808, 0.5
        %v5817 = vmul.f32 %v5809, 0.5
        %v5818 = vmul.f32 %v5810, 0.5
        %v5819 = vmul.f32 %v5811, 0.5
        %v5820 = vmul.f32 %v5812, 0.5
        %v5821 = vmul.f32 %v5813, 0.5
        %v5822 = vmul.f32 %v5814, 0.5
        %v5823 = vmul.f32 %v5807, 0.70710677
        %v5824 = vmul.f32 %v5808, 0.70710677
        %v5825 = vmul.f32 %v5809, 0.70710677
        %v5826 = vmul.f32 %v5810, 0.70710677
        %v5827 = vmul.f32 %v5811, 0.70710677
        %v5828 = vmul.f32 %v5812, 0.70710677
        %v5829 = vmul.f32 %v5813, 0.70710677
        %v5830 = vmul.f32 %v5814, 0.70710677
        %v5831 = verf.f32.pop %v5823
        %v5832 = verf.f32.pop %v5824
        %v5833 = verf.f32.pop %v5825
        %v5834 = verf.f32.pop %v5826
        %v5835 = verf.f32.pop %v5827
        %v5836 = verf.f32.pop %v5828
        %v5837 = verf.f32.pop %v5829
        %v5838 = verf.f32.pop %v5830
        %v5839 = vadd.f32 %v5831, 1.0
        %v5840 = vadd.f32 %v5832, 1.0
        %v5841 = vadd.f32 %v5833, 1.0
        %v5842 = vadd.f32 %v5834, 1.0
        %v5843 = vadd.f32 %v5835, 1.0
        %v5844 = vadd.f32 %v5836, 1.0
        %v5845 = vadd.f32 %v5837, 1.0
        %v5846 = vadd.f32 %v5838, 1.0
        %v5847 = vmul.f32 %v5815, %v5839
        %v5848 = vmul.f32 %v5816, %v5840
        %v5849 = vmul.f32 %v5817, %v5841
        %v5850 = vmul.f32 %v5818, %v5842
        %v5851 = vmul.f32 %v5819, %v5843
        %v5852 = vmul.f32 %v5820, %v5844
        %v5853 = vmul.f32 %v5821, %v5845
        %v5854 = vmul.f32 %v5822, %v5846
        %v5855 = vmul.f32 %v5126, %v5847
        %v5856 = vmul.f32 %v5126, %v5848
        %v5857 = vmul.f32 %v5126, %v5849
        %v5858 = vmul.f32 %v5126, %v5850
        %v5859 = vmul.f32 %v5126, %v5851
        %v5860 = vmul.f32 %v5126, %v5852
        %v5861 = vmul.f32 %v5126, %v5853
        %v5862 = vmul.f32 %v5126, %v5854
        %v5863 = vadd.f32 %v5791, %v5855
        %v5864 = vadd.f32 %v5792, %v5856
        %v5865 = vadd.f32 %v5793, %v5857
        %v5866 = vadd.f32 %v5794, %v5858
        %v5867 = vadd.f32 %v5795, %v5859
        %v5868 = vadd.f32 %v5796, %v5860
        %v5869 = vadd.f32 %v5797, %v5861
        %v5870 = vadd.f32 %v5798, %v5862
        %v5871 = vmul.f32 %v5727, %v5146
        %v5872 = vmul.f32 %v5728, %v5146
        %v5873 = vmul.f32 %v5729, %v5146
        %v5874 = vmul.f32 %v5730, %v5146
        %v5875 = vmul.f32 %v5731, %v5146
        %v5876 = vmul.f32 %v5732, %v5146
        %v5877 = vmul.f32 %v5733, %v5146
        %v5878 = vmul.f32 %v5734, %v5146
        %v5879 = vadd.f32 %v5871, %v5158
        %v5880 = vadd.f32 %v5872, %v5158
        %v5881 = vadd.f32 %v5873, %v5158
        %v5882 = vadd.f32 %v5874, %v5158
        %v5883 = vadd.f32 %v5875, %v5158
        %v5884 = vadd.f32 %v5876, %v5158
        %v5885 = vadd.f32 %v5877, %v5158
        %v5886 = vadd.f32 %v5878, %v5158
        %v5887 = vmul.f32 %v5879, 0.5
        %v5888 = vmul.f32 %v5880, 0.5
        %v5889 = vmul.f32 %v5881, 0.5
        %v5890 = vmul.f32 %v5882, 0.5
        %v5891 = vmul.f32 %v5883, 0.5
        %v5892 = vmul.f32 %v5884, 0.5
        %v5893 = vmul.f32 %v5885, 0.5
        %v5894 = vmul.f32 %v5886, 0.5
        %v5895 = vmul.f32 %v5879, 0.70710677
        %v5896 = vmul.f32 %v5880, 0.70710677
        %v5897 = vmul.f32 %v5881, 0.70710677
        %v5898 = vmul.f32 %v5882, 0.70710677
        %v5899 = vmul.f32 %v5883, 0.70710677
        %v5900 = vmul.f32 %v5884, 0.70710677
        %v5901 = vmul.f32 %v5885, 0.70710677
        %v5902 = vmul.f32 %v5886, 0.70710677
        %v5903 = verf.f32.pop %v5895
        %v5904 = verf.f32.pop %v5896
        %v5905 = verf.f32.pop %v5897
        %v5906 = verf.f32.pop %v5898
        %v5907 = verf.f32.pop %v5899
        %v5908 = verf.f32.pop %v5900
        %v5909 = verf.f32.pop %v5901
        %v5910 = verf.f32.pop %v5902
        %v5911 = vadd.f32 %v5903, 1.0
        %v5912 = vadd.f32 %v5904, 1.0
        %v5913 = vadd.f32 %v5905, 1.0
        %v5914 = vadd.f32 %v5906, 1.0
        %v5915 = vadd.f32 %v5907, 1.0
        %v5916 = vadd.f32 %v5908, 1.0
        %v5917 = vadd.f32 %v5909, 1.0
        %v5918 = vadd.f32 %v5910, 1.0
        %v5919 = vmul.f32 %v5887, %v5911
        %v5920 = vmul.f32 %v5888, %v5912
        %v5921 = vmul.f32 %v5889, %v5913
        %v5922 = vmul.f32 %v5890, %v5914
        %v5923 = vmul.f32 %v5891, %v5915
        %v5924 = vmul.f32 %v5892, %v5916
        %v5925 = vmul.f32 %v5893, %v5917
        %v5926 = vmul.f32 %v5894, %v5918
        %v5927 = vmul.f32 %v5210, %v5919
        %v5928 = vmul.f32 %v5210, %v5920
        %v5929 = vmul.f32 %v5210, %v5921
        %v5930 = vmul.f32 %v5210, %v5922
        %v5931 = vmul.f32 %v5210, %v5923
        %v5932 = vmul.f32 %v5210, %v5924
        %v5933 = vmul.f32 %v5210, %v5925
        %v5934 = vmul.f32 %v5210, %v5926
        %v5935 = vadd.f32 %v5863, %v5927
        %v5936 = vadd.f32 %v5864, %v5928
        %v5937 = vadd.f32 %v5865, %v5929
        %v5938 = vadd.f32 %v5866, %v5930
        %v5939 = vadd.f32 %v5867, %v5931
        %v5940 = vadd.f32 %v5868, %v5932
        %v5941 = vadd.f32 %v5869, %v5933
        %v5942 = vadd.f32 %v5870, %v5934
        %v5943 = vmul.f32 %v5727, %v5230
        %v5944 = vmul.f32 %v5728, %v5230
        %v5945 = vmul.f32 %v5729, %v5230
        %v5946 = vmul.f32 %v5730, %v5230
        %v5947 = vmul.f32 %v5731, %v5230
        %v5948 = vmul.f32 %v5732, %v5230
        %v5949 = vmul.f32 %v5733, %v5230
        %v5950 = vmul.f32 %v5734, %v5230
        %v5951 = vadd.f32 %v5943, %v5242
        %v5952 = vadd.f32 %v5944, %v5242
        %v5953 = vadd.f32 %v5945, %v5242
        %v5954 = vadd.f32 %v5946, %v5242
        %v5955 = vadd.f32 %v5947, %v5242
        %v5956 = vadd.f32 %v5948, %v5242
        %v5957 = vadd.f32 %v5949, %v5242
        %v5958 = vadd.f32 %v5950, %v5242
        %v5959 = vmul.f32 %v5951, 0.5
        %v5960 = vmul.f32 %v5952, 0.5
        %v5961 = vmul.f32 %v5953, 0.5
        %v5962 = vmul.f32 %v5954, 0.5
        %v5963 = vmul.f32 %v5955, 0.5
        %v5964 = vmul.f32 %v5956, 0.5
        %v5965 = vmul.f32 %v5957, 0.5
        %v5966 = vmul.f32 %v5958, 0.5
        %v5967 = vmul.f32 %v5951, 0.70710677
        %v5968 = vmul.f32 %v5952, 0.70710677
        %v5969 = vmul.f32 %v5953, 0.70710677
        %v5970 = vmul.f32 %v5954, 0.70710677
        %v5971 = vmul.f32 %v5955, 0.70710677
        %v5972 = vmul.f32 %v5956, 0.70710677
        %v5973 = vmul.f32 %v5957, 0.70710677
        %v5974 = vmul.f32 %v5958, 0.70710677
        %v5975 = verf.f32.pop %v5967
        %v5976 = verf.f32.pop %v5968
        %v5977 = verf.f32.pop %v5969
        %v5978 = verf.f32.pop %v5970
        %v5979 = verf.f32.pop %v5971
        %v5980 = verf.f32.pop %v5972
        %v5981 = verf.f32.pop %v5973
        %v5982 = verf.f32.pop %v5974
        %v5983 = vadd.f32 %v5975, 1.0
        %v5984 = vadd.f32 %v5976, 1.0
        %v5985 = vadd.f32 %v5977, 1.0
        %v5986 = vadd.f32 %v5978, 1.0
        %v5987 = vadd.f32 %v5979, 1.0
        %v5988 = vadd.f32 %v5980, 1.0
        %v5989 = vadd.f32 %v5981, 1.0
        %v5990 = vadd.f32 %v5982, 1.0
        %v5991 = vmul.f32 %v5959, %v5983
        %v5992 = vmul.f32 %v5960, %v5984
        %v5993 = vmul.f32 %v5961, %v5985
        %v5994 = vmul.f32 %v5962, %v5986
        %v5995 = vmul.f32 %v5963, %v5987
        %v5996 = vmul.f32 %v5964, %v5988
        %v5997 = vmul.f32 %v5965, %v5989
        %v5998 = vmul.f32 %v5966, %v5990
        %v5999 = vmul.f32 %v5294, %v5991
        %v6000 = vmul.f32 %v5294, %v5992
        %v6001 = vmul.f32 %v5294, %v5993
        %v6002 = vmul.f32 %v5294, %v5994
        %v6003 = vmul.f32 %v5294, %v5995
        %v6004 = vmul.f32 %v5294, %v5996
        %v6005 = vmul.f32 %v5294, %v5997
        %v6006 = vmul.f32 %v5294, %v5998
        %v6007 = vadd.f32 %v5935, %v5999
        %v6008 = vadd.f32 %v5936, %v6000
        %v6009 = vadd.f32 %v5937, %v6001
        %v6010 = vadd.f32 %v5938, %v6002
        %v6011 = vadd.f32 %v5939, %v6003
        %v6012 = vadd.f32 %v5940, %v6004
        %v6013 = vadd.f32 %v5941, %v6005
        %v6014 = vadd.f32 %v5942, %v6006
        %v6015 = vadd.f32 %v6007, %v5315
        %v6016 = vadd.f32 %v6008, %v5315
        %v6017 = vadd.f32 %v6009, %v5315
        %v6018 = vadd.f32 %v6010, %v5315
        %v6019 = vadd.f32 %v6011, %v5315
        %v6020 = vadd.f32 %v6012, %v5315
        %v6021 = vadd.f32 %v6013, %v5315
        %v6022 = vadd.f32 %v6014, %v5315
        %v6023 = vmul.f32 %v5329, %v6015
        %v6024 = vmul.f32 %v5329, %v6016
        %v6025 = vmul.f32 %v5329, %v6017
        %v6026 = vmul.f32 %v5329, %v6018
        %v6027 = vmul.f32 %v5329, %v6019
        %v6028 = vmul.f32 %v5329, %v6020
        %v6029 = vmul.f32 %v5329, %v6021
        %v6030 = vmul.f32 %v5329, %v6022
        %s6031 = scalar_lea.vmem %s401, 128 [#allocation4]
        %v6032 = vld [vmem:[%s6031] sm:$0xff]
        %v6033 = vld [vmem:[%s6031 + $0x8] sm:$0xff]
        %v6034 = vld [vmem:[%s6031 + $0x10] sm:$0xff]
        %v6035 = vld [vmem:[%s6031 + $0x18] sm:$0xff]
        %v6036 = vld [vmem:[%s6031 + $0x20] sm:$0xff]
        %v6037 = vld [vmem:[%s6031 + $0x28] sm:$0xff]
        %v6038 = vld [vmem:[%s6031 + $0x30] sm:$0xff]
        %v6039 = vld [vmem:[%s6031 + $0x38] sm:$0xff]
        %v6040 = vadd.f32 %v6023, %v6032
        %v6041 = vadd.f32 %v6024, %v6033
        %v6042 = vadd.f32 %v6025, %v6034
        %v6043 = vadd.f32 %v6026, %v6035
        %v6044 = vadd.f32 %v6027, %v6036
        %v6045 = vadd.f32 %v6028, %v6037
        %v6046 = vadd.f32 %v6029, %v6038
        %v6047 = vadd.f32 %v6030, %v6039
        %s6048 = scalar_lea.vmem %s463, 128 [#allocation7]
        %6049 = vst [vmem:[%s6048] sm:$0xff] %v6040
        %6050 = vst [vmem:[%s6048 + $0x8] sm:$0xff] %v6041
        %6051 = vst [vmem:[%s6048 + $0x10] sm:$0xff] %v6042
        %6052 = vst [vmem:[%s6048 + $0x18] sm:$0xff] %v6043
        %6053 = vst [vmem:[%s6048 + $0x20] sm:$0xff] %v6044
        %6054 = vst [vmem:[%s6048 + $0x28] sm:$0xff] %v6045
        %6055 = vst [vmem:[%s6048 + $0x30] sm:$0xff] %v6046
        %6056 = vst [vmem:[%s6048 + $0x38] sm:$0xff] %v6047
        %s6057 = scalar_lea.vmem [#allocation3], 192
        %v6058 = vld [vmem:[%s6057] sm:$0xff]
        %v6059 = vld [vmem:[%s6057 + $0x8] sm:$0xff]
        %v6060 = vld [vmem:[%s6057 + $0x10] sm:$0xff]
        %v6061 = vld [vmem:[%s6057 + $0x18] sm:$0xff]
        %v6062 = vld [vmem:[%s6057 + $0x20] sm:$0xff]
        %v6063 = vld [vmem:[%s6057 + $0x28] sm:$0xff]
        %v6064 = vld [vmem:[%s6057 + $0x30] sm:$0xff]
        %v6065 = vld [vmem:[%s6057 + $0x38] sm:$0xff]
        %v6066 = vmul.f32 %v6058, %v4959
        %v6067 = vmul.f32 %v6059, %v4959
        %v6068 = vmul.f32 %v6060, %v4959
        %v6069 = vmul.f32 %v6061, %v4959
        %v6070 = vmul.f32 %v6062, %v4959
        %v6071 = vmul.f32 %v6063, %v4959
        %v6072 = vmul.f32 %v6064, %v4959
        %v6073 = vmul.f32 %v6065, %v4959
        %v6074 = vadd.f32 %v6066, %v4973
        %v6075 = vadd.f32 %v6067, %v4973
        %v6076 = vadd.f32 %v6068, %v4973
        %v6077 = vadd.f32 %v6069, %v4973
        %v6078 = vadd.f32 %v6070, %v4973
        %v6079 = vadd.f32 %v6071, %v4973
        %v6080 = vadd.f32 %v6072, %v4973
        %v6081 = vadd.f32 %v6073, %v4973
        %v6082 = vmul.f32 %v6074, %v4986
        %v6083 = vmul.f32 %v6075, %v4986
        %v6084 = vmul.f32 %v6076, %v4986
        %v6085 = vmul.f32 %v6077, %v4986
        %v6086 = vmul.f32 %v6078, %v4986
        %v6087 = vmul.f32 %v6079, %v4986
        %v6088 = vmul.f32 %v6080, %v4986
        %v6089 = vmul.f32 %v6081, %v4986
        %v6090 = vadd.f32 %v6082, %v4998
        %v6091 = vadd.f32 %v6083, %v4998
        %v6092 = vadd.f32 %v6084, %v4998
        %v6093 = vadd.f32 %v6085, %v4998
        %v6094 = vadd.f32 %v6086, %v4998
        %v6095 = vadd.f32 %v6087, %v4998
        %v6096 = vadd.f32 %v6088, %v4998
        %v6097 = vadd.f32 %v6089, %v4998
        %v6098 = vmul.f32 %v6090, 0.5
        %v6099 = vmul.f32 %v6091, 0.5
        %v6100 = vmul.f32 %v6092, 0.5
        %v6101 = vmul.f32 %v6093, 0.5
        %v6102 = vmul.f32 %v6094, 0.5
        %v6103 = vmul.f32 %v6095, 0.5
        %v6104 = vmul.f32 %v6096, 0.5
        %v6105 = vmul.f32 %v6097, 0.5
        %v6106 = vmul.f32 %v6090, 0.70710677
        %v6107 = vmul.f32 %v6091, 0.70710677
        %v6108 = vmul.f32 %v6092, 0.70710677
        %v6109 = vmul.f32 %v6093, 0.70710677
        %v6110 = vmul.f32 %v6094, 0.70710677
        %v6111 = vmul.f32 %v6095, 0.70710677
        %v6112 = vmul.f32 %v6096, 0.70710677
        %v6113 = vmul.f32 %v6097, 0.70710677
        %v6114 = verf.f32.pop %v6106
        %v6115 = verf.f32.pop %v6107
        %v6116 = verf.f32.pop %v6108
        %v6117 = verf.f32.pop %v6109
        %v6118 = verf.f32.pop %v6110
        %v6119 = verf.f32.pop %v6111
        %v6120 = verf.f32.pop %v6112
        %v6121 = verf.f32.pop %v6113
        %v6122 = vadd.f32 %v6114, 1.0
        %v6123 = vadd.f32 %v6115, 1.0
        %v6124 = vadd.f32 %v6116, 1.0
        %v6125 = vadd.f32 %v6117, 1.0
        %v6126 = vadd.f32 %v6118, 1.0
        %v6127 = vadd.f32 %v6119, 1.0
        %v6128 = vadd.f32 %v6120, 1.0
        %v6129 = vadd.f32 %v6121, 1.0
        %v6130 = vmul.f32 %v6098, %v6122
        %v6131 = vmul.f32 %v6099, %v6123
        %v6132 = vmul.f32 %v6100, %v6124
        %v6133 = vmul.f32 %v6101, %v6125
        %v6134 = vmul.f32 %v6102, %v6126
        %v6135 = vmul.f32 %v6103, %v6127
        %v6136 = vmul.f32 %v6104, %v6128
        %v6137 = vmul.f32 %v6105, %v6129
        %v6138 = vmul.f32 %v5050, %v6130
        %v6139 = vmul.f32 %v5050, %v6131
        %v6140 = vmul.f32 %v5050, %v6132
        %v6141 = vmul.f32 %v5050, %v6133
        %v6142 = vmul.f32 %v5050, %v6134
        %v6143 = vmul.f32 %v5050, %v6135
        %v6144 = vmul.f32 %v5050, %v6136
        %v6145 = vmul.f32 %v5050, %v6137
        %v6146 = vmul.f32 %v6074, %v5062
        %v6147 = vmul.f32 %v6075, %v5062
        %v6148 = vmul.f32 %v6076, %v5062
        %v6149 = vmul.f32 %v6077, %v5062
        %v6150 = vmul.f32 %v6078, %v5062
        %v6151 = vmul.f32 %v6079, %v5062
        %v6152 = vmul.f32 %v6080, %v5062
        %v6153 = vmul.f32 %v6081, %v5062
        %v6154 = vadd.f32 %v6146, %v5074
        %v6155 = vadd.f32 %v6147, %v5074
        %v6156 = vadd.f32 %v6148, %v5074
        %v6157 = vadd.f32 %v6149, %v5074
        %v6158 = vadd.f32 %v6150, %v5074
        %v6159 = vadd.f32 %v6151, %v5074
        %v6160 = vadd.f32 %v6152, %v5074
        %v6161 = vadd.f32 %v6153, %v5074
        %v6162 = vmul.f32 %v6154, 0.5
        %v6163 = vmul.f32 %v6155, 0.5
        %v6164 = vmul.f32 %v6156, 0.5
        %v6165 = vmul.f32 %v6157, 0.5
        %v6166 = vmul.f32 %v6158, 0.5
        %v6167 = vmul.f32 %v6159, 0.5
        %v6168 = vmul.f32 %v6160, 0.5
        %v6169 = vmul.f32 %v6161, 0.5
        %v6170 = vmul.f32 %v6154, 0.70710677
        %v6171 = vmul.f32 %v6155, 0.70710677
        %v6172 = vmul.f32 %v6156, 0.70710677
        %v6173 = vmul.f32 %v6157, 0.70710677
        %v6174 = vmul.f32 %v6158, 0.70710677
        %v6175 = vmul.f32 %v6159, 0.70710677
        %v6176 = vmul.f32 %v6160, 0.70710677
        %v6177 = vmul.f32 %v6161, 0.70710677
        %v6178 = verf.f32.pop %v6170
        %v6179 = verf.f32.pop %v6171
        %v6180 = verf.f32.pop %v6172
        %v6181 = verf.f32.pop %v6173
        %v6182 = verf.f32.pop %v6174
        %v6183 = verf.f32.pop %v6175
        %v6184 = verf.f32.pop %v6176
        %v6185 = verf.f32.pop %v6177
        %v6186 = vadd.f32 %v6178, 1.0
        %v6187 = vadd.f32 %v6179, 1.0
        %v6188 = vadd.f32 %v6180, 1.0
        %v6189 = vadd.f32 %v6181, 1.0
        %v6190 = vadd.f32 %v6182, 1.0
        %v6191 = vadd.f32 %v6183, 1.0
        %v6192 = vadd.f32 %v6184, 1.0
        %v6193 = vadd.f32 %v6185, 1.0
        %v6194 = vmul.f32 %v6162, %v6186
        %v6195 = vmul.f32 %v6163, %v6187
        %v6196 = vmul.f32 %v6164, %v6188
        %v6197 = vmul.f32 %v6165, %v6189
        %v6198 = vmul.f32 %v6166, %v6190
        %v6199 = vmul.f32 %v6167, %v6191
        %v6200 = vmul.f32 %v6168, %v6192
        %v6201 = vmul.f32 %v6169, %v6193
        %v6202 = vmul.f32 %v5126, %v6194
        %v6203 = vmul.f32 %v5126, %v6195
        %v6204 = vmul.f32 %v5126, %v6196
        %v6205 = vmul.f32 %v5126, %v6197
        %v6206 = vmul.f32 %v5126, %v6198
        %v6207 = vmul.f32 %v5126, %v6199
        %v6208 = vmul.f32 %v5126, %v6200
        %v6209 = vmul.f32 %v5126, %v6201
        %v6210 = vadd.f32 %v6138, %v6202
        %v6211 = vadd.f32 %v6139, %v6203
        %v6212 = vadd.f32 %v6140, %v6204
        %v6213 = vadd.f32 %v6141, %v6205
        %v6214 = vadd.f32 %v6142, %v6206
        %v6215 = vadd.f32 %v6143, %v6207
        %v6216 = vadd.f32 %v6144, %v6208
        %v6217 = vadd.f32 %v6145, %v6209
        %v6218 = vmul.f32 %v6074, %v5146
        %v6219 = vmul.f32 %v6075, %v5146
        %v6220 = vmul.f32 %v6076, %v5146
        %v6221 = vmul.f32 %v6077, %v5146
        %v6222 = vmul.f32 %v6078, %v5146
        %v6223 = vmul.f32 %v6079, %v5146
        %v6224 = vmul.f32 %v6080, %v5146
        %v6225 = vmul.f32 %v6081, %v5146
        %v6226 = vadd.f32 %v6218, %v5158
        %v6227 = vadd.f32 %v6219, %v5158
        %v6228 = vadd.f32 %v6220, %v5158
        %v6229 = vadd.f32 %v6221, %v5158
        %v6230 = vadd.f32 %v6222, %v5158
        %v6231 = vadd.f32 %v6223, %v5158
        %v6232 = vadd.f32 %v6224, %v5158
        %v6233 = vadd.f32 %v6225, %v5158
        %v6234 = vmul.f32 %v6226, 0.5
        %v6235 = vmul.f32 %v6227, 0.5
        %v6236 = vmul.f32 %v6228, 0.5
        %v6237 = vmul.f32 %v6229, 0.5
        %v6238 = vmul.f32 %v6230, 0.5
        %v6239 = vmul.f32 %v6231, 0.5
        %v6240 = vmul.f32 %v6232, 0.5
        %v6241 = vmul.f32 %v6233, 0.5
        %v6242 = vmul.f32 %v6226, 0.70710677
        %v6243 = vmul.f32 %v6227, 0.70710677
        %v6244 = vmul.f32 %v6228, 0.70710677
        %v6245 = vmul.f32 %v6229, 0.70710677
        %v6246 = vmul.f32 %v6230, 0.70710677
        %v6247 = vmul.f32 %v6231, 0.70710677
        %v6248 = vmul.f32 %v6232, 0.70710677
        %v6249 = vmul.f32 %v6233, 0.70710677
        %v6250 = verf.f32.pop %v6242
        %v6251 = verf.f32.pop %v6243
        %v6252 = verf.f32.pop %v6244
        %v6253 = verf.f32.pop %v6245
        %v6254 = verf.f32.pop %v6246
        %v6255 = verf.f32.pop %v6247
        %v6256 = verf.f32.pop %v6248
        %v6257 = verf.f32.pop %v6249
        %v6258 = vadd.f32 %v6250, 1.0
        %v6259 = vadd.f32 %v6251, 1.0
        %v6260 = vadd.f32 %v6252, 1.0
        %v6261 = vadd.f32 %v6253, 1.0
        %v6262 = vadd.f32 %v6254, 1.0
        %v6263 = vadd.f32 %v6255, 1.0
        %v6264 = vadd.f32 %v6256, 1.0
        %v6265 = vadd.f32 %v6257, 1.0
        %v6266 = vmul.f32 %v6234, %v6258
        %v6267 = vmul.f32 %v6235, %v6259
        %v6268 = vmul.f32 %v6236, %v6260
        %v6269 = vmul.f32 %v6237, %v6261
        %v6270 = vmul.f32 %v6238, %v6262
        %v6271 = vmul.f32 %v6239, %v6263
        %v6272 = vmul.f32 %v6240, %v6264
        %v6273 = vmul.f32 %v6241, %v6265
        %v6274 = vmul.f32 %v5210, %v6266
        %v6275 = vmul.f32 %v5210, %v6267
        %v6276 = vmul.f32 %v5210, %v6268
        %v6277 = vmul.f32 %v5210, %v6269
        %v6278 = vmul.f32 %v5210, %v6270
        %v6279 = vmul.f32 %v5210, %v6271
        %v6280 = vmul.f32 %v5210, %v6272
        %v6281 = vmul.f32 %v5210, %v6273
        %v6282 = vadd.f32 %v6210, %v6274
        %v6283 = vadd.f32 %v6211, %v6275
        %v6284 = vadd.f32 %v6212, %v6276
        %v6285 = vadd.f32 %v6213, %v6277
        %v6286 = vadd.f32 %v6214, %v6278
        %v6287 = vadd.f32 %v6215, %v6279
        %v6288 = vadd.f32 %v6216, %v6280
        %v6289 = vadd.f32 %v6217, %v6281
        %v6290 = vmul.f32 %v6074, %v5230
        %v6291 = vmul.f32 %v6075, %v5230
        %v6292 = vmul.f32 %v6076, %v5230
        %v6293 = vmul.f32 %v6077, %v5230
        %v6294 = vmul.f32 %v6078, %v5230
        %v6295 = vmul.f32 %v6079, %v5230
        %v6296 = vmul.f32 %v6080, %v5230
        %v6297 = vmul.f32 %v6081, %v5230
        %v6298 = vadd.f32 %v6290, %v5242
        %v6299 = vadd.f32 %v6291, %v5242
        %v6300 = vadd.f32 %v6292, %v5242
        %v6301 = vadd.f32 %v6293, %v5242
        %v6302 = vadd.f32 %v6294, %v5242
        %v6303 = vadd.f32 %v6295, %v5242
        %v6304 = vadd.f32 %v6296, %v5242
        %v6305 = vadd.f32 %v6297, %v5242
        %v6306 = vmul.f32 %v6298, 0.5
        %v6307 = vmul.f32 %v6299, 0.5
        %v6308 = vmul.f32 %v6300, 0.5
        %v6309 = vmul.f32 %v6301, 0.5
        %v6310 = vmul.f32 %v6302, 0.5
        %v6311 = vmul.f32 %v6303, 0.5
        %v6312 = vmul.f32 %v6304, 0.5
        %v6313 = vmul.f32 %v6305, 0.5
        %v6314 = vmul.f32 %v6298, 0.70710677
        %v6315 = vmul.f32 %v6299, 0.70710677
        %v6316 = vmul.f32 %v6300, 0.70710677
        %v6317 = vmul.f32 %v6301, 0.70710677
        %v6318 = vmul.f32 %v6302, 0.70710677
        %v6319 = vmul.f32 %v6303, 0.70710677
        %v6320 = vmul.f32 %v6304, 0.70710677
        %v6321 = vmul.f32 %v6305, 0.70710677
        %v6322 = verf.f32.pop %v6314
        %v6323 = verf.f32.pop %v6315
        %v6324 = verf.f32.pop %v6316
        %v6325 = verf.f32.pop %v6317
        %v6326 = verf.f32.pop %v6318
        %v6327 = verf.f32.pop %v6319
        %v6328 = verf.f32.pop %v6320
        %v6329 = verf.f32.pop %v6321
        %v6330 = vadd.f32 %v6322, 1.0
        %v6331 = vadd.f32 %v6323, 1.0
        %v6332 = vadd.f32 %v6324, 1.0
        %v6333 = vadd.f32 %v6325, 1.0
        %v6334 = vadd.f32 %v6326, 1.0
        %v6335 = vadd.f32 %v6327, 1.0
        %v6336 = vadd.f32 %v6328, 1.0
        %v6337 = vadd.f32 %v6329, 1.0
        %v6338 = vmul.f32 %v6306, %v6330
        %v6339 = vmul.f32 %v6307, %v6331
        %v6340 = vmul.f32 %v6308, %v6332
        %v6341 = vmul.f32 %v6309, %v6333
        %v6342 = vmul.f32 %v6310, %v6334
        %v6343 = vmul.f32 %v6311, %v6335
        %v6344 = vmul.f32 %v6312, %v6336
        %v6345 = vmul.f32 %v6313, %v6337
        %v6346 = vmul.f32 %v5294, %v6338
        %v6347 = vmul.f32 %v5294, %v6339
        %v6348 = vmul.f32 %v5294, %v6340
        %v6349 = vmul.f32 %v5294, %v6341
        %v6350 = vmul.f32 %v5294, %v6342
        %v6351 = vmul.f32 %v5294, %v6343
        %v6352 = vmul.f32 %v5294, %v6344
        %v6353 = vmul.f32 %v5294, %v6345
        %v6354 = vadd.f32 %v6282, %v6346
        %v6355 = vadd.f32 %v6283, %v6347
        %v6356 = vadd.f32 %v6284, %v6348
        %v6357 = vadd.f32 %v6285, %v6349
        %v6358 = vadd.f32 %v6286, %v6350
        %v6359 = vadd.f32 %v6287, %v6351
        %v6360 = vadd.f32 %v6288, %v6352
        %v6361 = vadd.f32 %v6289, %v6353
        %v6362 = vadd.f32 %v6354, %v5315
        %v6363 = vadd.f32 %v6355, %v5315
        %v6364 = vadd.f32 %v6356, %v5315
        %v6365 = vadd.f32 %v6357, %v5315
        %v6366 = vadd.f32 %v6358, %v5315
        %v6367 = vadd.f32 %v6359, %v5315
        %v6368 = vadd.f32 %v6360, %v5315
        %v6369 = vadd.f32 %v6361, %v5315
        %v6370 = vmul.f32 %v5329, %v6362
        %v6371 = vmul.f32 %v5329, %v6363
        %v6372 = vmul.f32 %v5329, %v6364
        %v6373 = vmul.f32 %v5329, %v6365
        %v6374 = vmul.f32 %v5329, %v6366
        %v6375 = vmul.f32 %v5329, %v6367
        %v6376 = vmul.f32 %v5329, %v6368
        %v6377 = vmul.f32 %v5329, %v6369
        %s6378 = scalar_lea.vmem %s401, 192 [#allocation4]
        %v6379 = vld [vmem:[%s6378] sm:$0xff]
        %v6380 = vld [vmem:[%s6378 + $0x8] sm:$0xff]
        %v6381 = vld [vmem:[%s6378 + $0x10] sm:$0xff]
        %v6382 = vld [vmem:[%s6378 + $0x18] sm:$0xff]
        %v6383 = vld [vmem:[%s6378 + $0x20] sm:$0xff]
        %v6384 = vld [vmem:[%s6378 + $0x28] sm:$0xff]
        %v6385 = vld [vmem:[%s6378 + $0x30] sm:$0xff]
        %v6386 = vld [vmem:[%s6378 + $0x38] sm:$0xff]
        %v6387 = vadd.f32 %v6370, %v6379
        %v6388 = vadd.f32 %v6371, %v6380
        %v6389 = vadd.f32 %v6372, %v6381
        %v6390 = vadd.f32 %v6373, %v6382
        %v6391 = vadd.f32 %v6374, %v6383
        %v6392 = vadd.f32 %v6375, %v6384
        %v6393 = vadd.f32 %v6376, %v6385
        %v6394 = vadd.f32 %v6377, %v6386
        %s6395 = scalar_lea.vmem %s463, 192 [#allocation7]
        %6396 = vst [vmem:[%s6395] sm:$0xff] %v6387
        %6397 = vst [vmem:[%s6395 + $0x8] sm:$0xff] %v6388
        %6398 = vst [vmem:[%s6395 + $0x10] sm:$0xff] %v6389
        %6399 = vst [vmem:[%s6395 + $0x18] sm:$0xff] %v6390
        %6400 = vst [vmem:[%s6395 + $0x20] sm:$0xff] %v6391
        %6401 = vst [vmem:[%s6395 + $0x28] sm:$0xff] %v6392
        %6402 = vst [vmem:[%s6395 + $0x30] sm:$0xff] %v6393
        %6403 = vst [vmem:[%s6395 + $0x38] sm:$0xff] %v6394
        %s6404 = scalar_lea.vmem [#allocation3], 256
        %v6405 = vld [vmem:[%s6404] sm:$0xff]
        %v6406 = vld [vmem:[%s6404 + $0x8] sm:$0xff]
        %v6407 = vld [vmem:[%s6404 + $0x10] sm:$0xff]
        %v6408 = vld [vmem:[%s6404 + $0x18] sm:$0xff]
        %v6409 = vld [vmem:[%s6404 + $0x20] sm:$0xff]
        %v6410 = vld [vmem:[%s6404 + $0x28] sm:$0xff]
        %v6411 = vld [vmem:[%s6404 + $0x30] sm:$0xff]
        %v6412 = vld [vmem:[%s6404 + $0x38] sm:$0xff]
        %v6413 = vmul.f32 %v6405, %v4959
        %v6414 = vmul.f32 %v6406, %v4959
        %v6415 = vmul.f32 %v6407, %v4959
        %v6416 = vmul.f32 %v6408, %v4959
        %v6417 = vmul.f32 %v6409, %v4959
        %v6418 = vmul.f32 %v6410, %v4959
        %v6419 = vmul.f32 %v6411, %v4959
        %v6420 = vmul.f32 %v6412, %v4959
        %v6421 = vadd.f32 %v6413, %v4973
        %v6422 = vadd.f32 %v6414, %v4973
        %v6423 = vadd.f32 %v6415, %v4973
        %v6424 = vadd.f32 %v6416, %v4973
        %v6425 = vadd.f32 %v6417, %v4973
        %v6426 = vadd.f32 %v6418, %v4973
        %v6427 = vadd.f32 %v6419, %v4973
        %v6428 = vadd.f32 %v6420, %v4973
        %v6429 = vmul.f32 %v6421, %v4986
        %v6430 = vmul.f32 %v6422, %v4986
        %v6431 = vmul.f32 %v6423, %v4986
        %v6432 = vmul.f32 %v6424, %v4986
        %v6433 = vmul.f32 %v6425, %v4986
        %v6434 = vmul.f32 %v6426, %v4986
        %v6435 = vmul.f32 %v6427, %v4986
        %v6436 = vmul.f32 %v6428, %v4986
        %v6437 = vadd.f32 %v6429, %v4998
        %v6438 = vadd.f32 %v6430, %v4998
        %v6439 = vadd.f32 %v6431, %v4998
        %v6440 = vadd.f32 %v6432, %v4998
        %v6441 = vadd.f32 %v6433, %v4998
        %v6442 = vadd.f32 %v6434, %v4998
        %v6443 = vadd.f32 %v6435, %v4998
        %v6444 = vadd.f32 %v6436, %v4998
        %v6445 = vmul.f32 %v6437, 0.5
        %v6446 = vmul.f32 %v6438, 0.5
        %v6447 = vmul.f32 %v6439, 0.5
        %v6448 = vmul.f32 %v6440, 0.5
        %v6449 = vmul.f32 %v6441, 0.5
        %v6450 = vmul.f32 %v6442, 0.5
        %v6451 = vmul.f32 %v6443, 0.5
        %v6452 = vmul.f32 %v6444, 0.5
        %v6453 = vmul.f32 %v6437, 0.70710677
        %v6454 = vmul.f32 %v6438, 0.70710677
        %v6455 = vmul.f32 %v6439, 0.70710677
        %v6456 = vmul.f32 %v6440, 0.70710677
        %v6457 = vmul.f32 %v6441, 0.70710677
        %v6458 = vmul.f32 %v6442, 0.70710677
        %v6459 = vmul.f32 %v6443, 0.70710677
        %v6460 = vmul.f32 %v6444, 0.70710677
        %v6461 = verf.f32.pop %v6453
        %v6462 = verf.f32.pop %v6454
        %v6463 = verf.f32.pop %v6455
        %v6464 = verf.f32.pop %v6456
        %v6465 = verf.f32.pop %v6457
        %v6466 = verf.f32.pop %v6458
        %v6467 = verf.f32.pop %v6459
        %v6468 = verf.f32.pop %v6460
        %v6469 = vadd.f32 %v6461, 1.0
        %v6470 = vadd.f32 %v6462, 1.0
        %v6471 = vadd.f32 %v6463, 1.0
        %v6472 = vadd.f32 %v6464, 1.0
        %v6473 = vadd.f32 %v6465, 1.0
        %v6474 = vadd.f32 %v6466, 1.0
        %v6475 = vadd.f32 %v6467, 1.0
        %v6476 = vadd.f32 %v6468, 1.0
        %v6477 = vmul.f32 %v6445, %v6469
        %v6478 = vmul.f32 %v6446, %v6470
        %v6479 = vmul.f32 %v6447, %v6471
        %v6480 = vmul.f32 %v6448, %v6472
        %v6481 = vmul.f32 %v6449, %v6473
        %v6482 = vmul.f32 %v6450, %v6474
        %v6483 = vmul.f32 %v6451, %v6475
        %v6484 = vmul.f32 %v6452, %v6476
        %v6485 = vmul.f32 %v5050, %v6477
        %v6486 = vmul.f32 %v5050, %v6478
        %v6487 = vmul.f32 %v5050, %v6479
        %v6488 = vmul.f32 %v5050, %v6480
        %v6489 = vmul.f32 %v5050, %v6481
        %v6490 = vmul.f32 %v5050, %v6482
        %v6491 = vmul.f32 %v5050, %v6483
        %v6492 = vmul.f32 %v5050, %v6484
        %v6493 = vmul.f32 %v6421, %v5062
        %v6494 = vmul.f32 %v6422, %v5062
        %v6495 = vmul.f32 %v6423, %v5062
        %v6496 = vmul.f32 %v6424, %v5062
        %v6497 = vmul.f32 %v6425, %v5062
        %v6498 = vmul.f32 %v6426, %v5062
        %v6499 = vmul.f32 %v6427, %v5062
        %v6500 = vmul.f32 %v6428, %v5062
        %v6501 = vadd.f32 %v6493, %v5074
        %v6502 = vadd.f32 %v6494, %v5074
        %v6503 = vadd.f32 %v6495, %v5074
        %v6504 = vadd.f32 %v6496, %v5074
        %v6505 = vadd.f32 %v6497, %v5074
        %v6506 = vadd.f32 %v6498, %v5074
        %v6507 = vadd.f32 %v6499, %v5074
        %v6508 = vadd.f32 %v6500, %v5074
        %v6509 = vmul.f32 %v6501, 0.5
        %v6510 = vmul.f32 %v6502, 0.5
        %v6511 = vmul.f32 %v6503, 0.5
        %v6512 = vmul.f32 %v6504, 0.5
        %v6513 = vmul.f32 %v6505, 0.5
        %v6514 = vmul.f32 %v6506, 0.5
        %v6515 = vmul.f32 %v6507, 0.5
        %v6516 = vmul.f32 %v6508, 0.5
        %v6517 = vmul.f32 %v6501, 0.70710677
        %v6518 = vmul.f32 %v6502, 0.70710677
        %v6519 = vmul.f32 %v6503, 0.70710677
        %v6520 = vmul.f32 %v6504, 0.70710677
        %v6521 = vmul.f32 %v6505, 0.70710677
        %v6522 = vmul.f32 %v6506, 0.70710677
        %v6523 = vmul.f32 %v6507, 0.70710677
        %v6524 = vmul.f32 %v6508, 0.70710677
        %v6525 = verf.f32.pop %v6517
        %v6526 = verf.f32.pop %v6518
        %v6527 = verf.f32.pop %v6519
        %v6528 = verf.f32.pop %v6520
        %v6529 = verf.f32.pop %v6521
        %v6530 = verf.f32.pop %v6522
        %v6531 = verf.f32.pop %v6523
        %v6532 = verf.f32.pop %v6524
        %v6533 = vadd.f32 %v6525, 1.0
        %v6534 = vadd.f32 %v6526, 1.0
        %v6535 = vadd.f32 %v6527, 1.0
        %v6536 = vadd.f32 %v6528, 1.0
        %v6537 = vadd.f32 %v6529, 1.0
        %v6538 = vadd.f32 %v6530, 1.0
        %v6539 = vadd.f32 %v6531, 1.0
        %v6540 = vadd.f32 %v6532, 1.0
        %v6541 = vmul.f32 %v6509, %v6533
        %v6542 = vmul.f32 %v6510, %v6534
        %v6543 = vmul.f32 %v6511, %v6535
        %v6544 = vmul.f32 %v6512, %v6536
        %v6545 = vmul.f32 %v6513, %v6537
        %v6546 = vmul.f32 %v6514, %v6538
        %v6547 = vmul.f32 %v6515, %v6539
        %v6548 = vmul.f32 %v6516, %v6540
        %v6549 = vmul.f32 %v5126, %v6541
        %v6550 = vmul.f32 %v5126, %v6542
        %v6551 = vmul.f32 %v5126, %v6543
        %v6552 = vmul.f32 %v5126, %v6544
        %v6553 = vmul.f32 %v5126, %v6545
        %v6554 = vmul.f32 %v5126, %v6546
        %v6555 = vmul.f32 %v5126, %v6547
        %v6556 = vmul.f32 %v5126, %v6548
        %v6557 = vadd.f32 %v6485, %v6549
        %v6558 = vadd.f32 %v6486, %v6550
        %v6559 = vadd.f32 %v6487, %v6551
        %v6560 = vadd.f32 %v6488, %v6552
        %v6561 = vadd.f32 %v6489, %v6553
        %v6562 = vadd.f32 %v6490, %v6554
        %v6563 = vadd.f32 %v6491, %v6555
        %v6564 = vadd.f32 %v6492, %v6556
        %v6565 = vmul.f32 %v6421, %v5146
        %v6566 = vmul.f32 %v6422, %v5146
        %v6567 = vmul.f32 %v6423, %v5146
        %v6568 = vmul.f32 %v6424, %v5146
        %v6569 = vmul.f32 %v6425, %v5146
        %v6570 = vmul.f32 %v6426, %v5146
        %v6571 = vmul.f32 %v6427, %v5146
        %v6572 = vmul.f32 %v6428, %v5146
        %v6573 = vadd.f32 %v6565, %v5158
        %v6574 = vadd.f32 %v6566, %v5158
        %v6575 = vadd.f32 %v6567, %v5158
        %v6576 = vadd.f32 %v6568, %v5158
        %v6577 = vadd.f32 %v6569, %v5158
        %v6578 = vadd.f32 %v6570, %v5158
        %v6579 = vadd.f32 %v6571, %v5158
        %v6580 = vadd.f32 %v6572, %v5158
        %v6581 = vmul.f32 %v6573, 0.5
        %v6582 = vmul.f32 %v6574, 0.5
        %v6583 = vmul.f32 %v6575, 0.5
        %v6584 = vmul.f32 %v6576, 0.5
        %v6585 = vmul.f32 %v6577, 0.5
        %v6586 = vmul.f32 %v6578, 0.5
        %v6587 = vmul.f32 %v6579, 0.5
        %v6588 = vmul.f32 %v6580, 0.5
        %v6589 = vmul.f32 %v6573, 0.70710677
        %v6590 = vmul.f32 %v6574, 0.70710677
        %v6591 = vmul.f32 %v6575, 0.70710677
        %v6592 = vmul.f32 %v6576, 0.70710677
        %v6593 = vmul.f32 %v6577, 0.70710677
        %v6594 = vmul.f32 %v6578, 0.70710677
        %v6595 = vmul.f32 %v6579, 0.70710677
        %v6596 = vmul.f32 %v6580, 0.70710677
        %v6597 = verf.f32.pop %v6589
        %v6598 = verf.f32.pop %v6590
        %v6599 = verf.f32.pop %v6591
        %v6600 = verf.f32.pop %v6592
        %v6601 = verf.f32.pop %v6593
        %v6602 = verf.f32.pop %v6594
        %v6603 = verf.f32.pop %v6595
        %v6604 = verf.f32.pop %v6596
        %v6605 = vadd.f32 %v6597, 1.0
        %v6606 = vadd.f32 %v6598, 1.0
        %v6607 = vadd.f32 %v6599, 1.0
        %v6608 = vadd.f32 %v6600, 1.0
        %v6609 = vadd.f32 %v6601, 1.0
        %v6610 = vadd.f32 %v6602, 1.0
        %v6611 = vadd.f32 %v6603, 1.0
        %v6612 = vadd.f32 %v6604, 1.0
        %v6613 = vmul.f32 %v6581, %v6605
        %v6614 = vmul.f32 %v6582, %v6606
        %v6615 = vmul.f32 %v6583, %v6607
        %v6616 = vmul.f32 %v6584, %v6608
        %v6617 = vmul.f32 %v6585, %v6609
        %v6618 = vmul.f32 %v6586, %v6610
        %v6619 = vmul.f32 %v6587, %v6611
        %v6620 = vmul.f32 %v6588, %v6612
        %v6621 = vmul.f32 %v5210, %v6613
        %v6622 = vmul.f32 %v5210, %v6614
        %v6623 = vmul.f32 %v5210, %v6615
        %v6624 = vmul.f32 %v5210, %v6616
        %v6625 = vmul.f32 %v5210, %v6617
        %v6626 = vmul.f32 %v5210, %v6618
        %v6627 = vmul.f32 %v5210, %v6619
        %v6628 = vmul.f32 %v5210, %v6620
        %v6629 = vadd.f32 %v6557, %v6621
        %v6630 = vadd.f32 %v6558, %v6622
        %v6631 = vadd.f32 %v6559, %v6623
        %v6632 = vadd.f32 %v6560, %v6624
        %v6633 = vadd.f32 %v6561, %v6625
        %v6634 = vadd.f32 %v6562, %v6626
        %v6635 = vadd.f32 %v6563, %v6627
        %v6636 = vadd.f32 %v6564, %v6628
        %v6637 = vmul.f32 %v6421, %v5230
        %v6638 = vmul.f32 %v6422, %v5230
        %v6639 = vmul.f32 %v6423, %v5230
        %v6640 = vmul.f32 %v6424, %v5230
        %v6641 = vmul.f32 %v6425, %v5230
        %v6642 = vmul.f32 %v6426, %v5230
        %v6643 = vmul.f32 %v6427, %v5230
        %v6644 = vmul.f32 %v6428, %v5230
        %v6645 = vadd.f32 %v6637, %v5242
        %v6646 = vadd.f32 %v6638, %v5242
        %v6647 = vadd.f32 %v6639, %v5242
        %v6648 = vadd.f32 %v6640, %v5242
        %v6649 = vadd.f32 %v6641, %v5242
        %v6650 = vadd.f32 %v6642, %v5242
        %v6651 = vadd.f32 %v6643, %v5242
        %v6652 = vadd.f32 %v6644, %v5242
        %v6653 = vmul.f32 %v6645, 0.5
        %v6654 = vmul.f32 %v6646, 0.5
        %v6655 = vmul.f32 %v6647, 0.5
        %v6656 = vmul.f32 %v6648, 0.5
        %v6657 = vmul.f32 %v6649, 0.5
        %v6658 = vmul.f32 %v6650, 0.5
        %v6659 = vmul.f32 %v6651, 0.5
        %v6660 = vmul.f32 %v6652, 0.5
        %v6661 = vmul.f32 %v6645, 0.70710677
        %v6662 = vmul.f32 %v6646, 0.70710677
        %v6663 = vmul.f32 %v6647, 0.70710677
        %v6664 = vmul.f32 %v6648, 0.70710677
        %v6665 = vmul.f32 %v6649, 0.70710677
        %v6666 = vmul.f32 %v6650, 0.70710677
        %v6667 = vmul.f32 %v6651, 0.70710677
        %v6668 = vmul.f32 %v6652, 0.70710677
        %v6669 = verf.f32.pop %v6661
        %v6670 = verf.f32.pop %v6662
        %v6671 = verf.f32.pop %v6663
        %v6672 = verf.f32.pop %v6664
        %v6673 = verf.f32.pop %v6665
        %v6674 = verf.f32.pop %v6666
        %v6675 = verf.f32.pop %v6667
        %v6676 = verf.f32.pop %v6668
        %v6677 = vadd.f32 %v6669, 1.0
        %v6678 = vadd.f32 %v6670, 1.0
        %v6679 = vadd.f32 %v6671, 1.0
        %v6680 = vadd.f32 %v6672, 1.0
        %v6681 = vadd.f32 %v6673, 1.0
        %v6682 = vadd.f32 %v6674, 1.0
        %v6683 = vadd.f32 %v6675, 1.0
        %v6684 = vadd.f32 %v6676, 1.0
        %v6685 = vmul.f32 %v6653, %v6677
        %v6686 = vmul.f32 %v6654, %v6678
        %v6687 = vmul.f32 %v6655, %v6679
        %v6688 = vmul.f32 %v6656, %v6680
        %v6689 = vmul.f32 %v6657, %v6681
        %v6690 = vmul.f32 %v6658, %v6682
        %v6691 = vmul.f32 %v6659, %v6683
        %v6692 = vmul.f32 %v6660, %v6684
        %v6693 = vmul.f32 %v5294, %v6685
        %v6694 = vmul.f32 %v5294, %v6686
        %v6695 = vmul.f32 %v5294, %v6687
        %v6696 = vmul.f32 %v5294, %v6688
        %v6697 = vmul.f32 %v5294, %v6689
        %v6698 = vmul.f32 %v5294, %v6690
        %v6699 = vmul.f32 %v5294, %v6691
        %v6700 = vmul.f32 %v5294, %v6692
        %v6701 = vadd.f32 %v6629, %v6693
        %v6702 = vadd.f32 %v6630, %v6694
        %v6703 = vadd.f32 %v6631, %v6695
        %v6704 = vadd.f32 %v6632, %v6696
        %v6705 = vadd.f32 %v6633, %v6697
        %v6706 = vadd.f32 %v6634, %v6698
        %v6707 = vadd.f32 %v6635, %v6699
        %v6708 = vadd.f32 %v6636, %v6700
        %v6709 = vadd.f32 %v6701, %v5315
        %v6710 = vadd.f32 %v6702, %v5315
        %v6711 = vadd.f32 %v6703, %v5315
        %v6712 = vadd.f32 %v6704, %v5315
        %v6713 = vadd.f32 %v6705, %v5315
        %v6714 = vadd.f32 %v6706, %v5315
        %v6715 = vadd.f32 %v6707, %v5315
        %v6716 = vadd.f32 %v6708, %v5315
        %v6717 = vmul.f32 %v5329, %v6709
        %v6718 = vmul.f32 %v5329, %v6710
        %v6719 = vmul.f32 %v5329, %v6711
        %v6720 = vmul.f32 %v5329, %v6712
        %v6721 = vmul.f32 %v5329, %v6713
        %v6722 = vmul.f32 %v5329, %v6714
        %v6723 = vmul.f32 %v5329, %v6715
        %v6724 = vmul.f32 %v5329, %v6716
        %s6725 = scalar_lea.vmem %s401, 256 [#allocation4]
        %v6726 = vld [vmem:[%s6725] sm:$0xff]
        %v6727 = vld [vmem:[%s6725 + $0x8] sm:$0xff]
        %v6728 = vld [vmem:[%s6725 + $0x10] sm:$0xff]
        %v6729 = vld [vmem:[%s6725 + $0x18] sm:$0xff]
        %v6730 = vld [vmem:[%s6725 + $0x20] sm:$0xff]
        %v6731 = vld [vmem:[%s6725 + $0x28] sm:$0xff]
        %v6732 = vld [vmem:[%s6725 + $0x30] sm:$0xff]
        %v6733 = vld [vmem:[%s6725 + $0x38] sm:$0xff]
        %v6734 = vadd.f32 %v6717, %v6726
        %v6735 = vadd.f32 %v6718, %v6727
        %v6736 = vadd.f32 %v6719, %v6728
        %v6737 = vadd.f32 %v6720, %v6729
        %v6738 = vadd.f32 %v6721, %v6730
        %v6739 = vadd.f32 %v6722, %v6731
        %v6740 = vadd.f32 %v6723, %v6732
        %v6741 = vadd.f32 %v6724, %v6733
        %s6742 = scalar_lea.vmem %s463, 256 [#allocation7]
        %6743 = vst [vmem:[%s6742] sm:$0xff] %v6734
        %6744 = vst [vmem:[%s6742 + $0x8] sm:$0xff] %v6735
        %6745 = vst [vmem:[%s6742 + $0x10] sm:$0xff] %v6736
        %6746 = vst [vmem:[%s6742 + $0x18] sm:$0xff] %v6737
        %6747 = vst [vmem:[%s6742 + $0x20] sm:$0xff] %v6738
        %6748 = vst [vmem:[%s6742 + $0x28] sm:$0xff] %v6739
        %6749 = vst [vmem:[%s6742 + $0x30] sm:$0xff] %v6740
        %6750 = vst [vmem:[%s6742 + $0x38] sm:$0xff] %v6741
        %s6751 = scalar_lea.vmem [#allocation3], 320
        %v6752 = vld [vmem:[%s6751] sm:$0xff]
        %v6753 = vld [vmem:[%s6751 + $0x8] sm:$0xff]
        %v6754 = vld [vmem:[%s6751 + $0x10] sm:$0xff]
        %v6755 = vld [vmem:[%s6751 + $0x18] sm:$0xff]
        %v6756 = vld [vmem:[%s6751 + $0x20] sm:$0xff]
        %v6757 = vld [vmem:[%s6751 + $0x28] sm:$0xff]
        %v6758 = vld [vmem:[%s6751 + $0x30] sm:$0xff]
        %v6759 = vld [vmem:[%s6751 + $0x38] sm:$0xff]
        %v6760 = vmul.f32 %v6752, %v4959
        %v6761 = vmul.f32 %v6753, %v4959
        %v6762 = vmul.f32 %v6754, %v4959
        %v6763 = vmul.f32 %v6755, %v4959
        %v6764 = vmul.f32 %v6756, %v4959
        %v6765 = vmul.f32 %v6757, %v4959
        %v6766 = vmul.f32 %v6758, %v4959
        %v6767 = vmul.f32 %v6759, %v4959
        %v6768 = vadd.f32 %v6760, %v4973
        %v6769 = vadd.f32 %v6761, %v4973
        %v6770 = vadd.f32 %v6762, %v4973
        %v6771 = vadd.f32 %v6763, %v4973
        %v6772 = vadd.f32 %v6764, %v4973
        %v6773 = vadd.f32 %v6765, %v4973
        %v6774 = vadd.f32 %v6766, %v4973
        %v6775 = vadd.f32 %v6767, %v4973
        %v6776 = vmul.f32 %v6768, %v4986
        %v6777 = vmul.f32 %v6769, %v4986
        %v6778 = vmul.f32 %v6770, %v4986
        %v6779 = vmul.f32 %v6771, %v4986
        %v6780 = vmul.f32 %v6772, %v4986
        %v6781 = vmul.f32 %v6773, %v4986
        %v6782 = vmul.f32 %v6774, %v4986
        %v6783 = vmul.f32 %v6775, %v4986
        %v6784 = vadd.f32 %v6776, %v4998
        %v6785 = vadd.f32 %v6777, %v4998
        %v6786 = vadd.f32 %v6778, %v4998
        %v6787 = vadd.f32 %v6779, %v4998
        %v6788 = vadd.f32 %v6780, %v4998
        %v6789 = vadd.f32 %v6781, %v4998
        %v6790 = vadd.f32 %v6782, %v4998
        %v6791 = vadd.f32 %v6783, %v4998
        %v6792 = vmul.f32 %v6784, 0.5
        %v6793 = vmul.f32 %v6785, 0.5
        %v6794 = vmul.f32 %v6786, 0.5
        %v6795 = vmul.f32 %v6787, 0.5
        %v6796 = vmul.f32 %v6788, 0.5
        %v6797 = vmul.f32 %v6789, 0.5
        %v6798 = vmul.f32 %v6790, 0.5
        %v6799 = vmul.f32 %v6791, 0.5
        %v6800 = vmul.f32 %v6784, 0.70710677
        %v6801 = vmul.f32 %v6785, 0.70710677
        %v6802 = vmul.f32 %v6786, 0.70710677
        %v6803 = vmul.f32 %v6787, 0.70710677
        %v6804 = vmul.f32 %v6788, 0.70710677
        %v6805 = vmul.f32 %v6789, 0.70710677
        %v6806 = vmul.f32 %v6790, 0.70710677
        %v6807 = vmul.f32 %v6791, 0.70710677
        %v6808 = verf.f32.pop %v6800
        %v6809 = verf.f32.pop %v6801
        %v6810 = verf.f32.pop %v6802
        %v6811 = verf.f32.pop %v6803
        %v6812 = verf.f32.pop %v6804
        %v6813 = verf.f32.pop %v6805
        %v6814 = verf.f32.pop %v6806
        %v6815 = verf.f32.pop %v6807
        %v6816 = vadd.f32 %v6808, 1.0
        %v6817 = vadd.f32 %v6809, 1.0
        %v6818 = vadd.f32 %v6810, 1.0
        %v6819 = vadd.f32 %v6811, 1.0
        %v6820 = vadd.f32 %v6812, 1.0
        %v6821 = vadd.f32 %v6813, 1.0
        %v6822 = vadd.f32 %v6814, 1.0
        %v6823 = vadd.f32 %v6815, 1.0
        %v6824 = vmul.f32 %v6792, %v6816
        %v6825 = vmul.f32 %v6793, %v6817
        %v6826 = vmul.f32 %v6794, %v6818
        %v6827 = vmul.f32 %v6795, %v6819
        %v6828 = vmul.f32 %v6796, %v6820
        %v6829 = vmul.f32 %v6797, %v6821
        %v6830 = vmul.f32 %v6798, %v6822
        %v6831 = vmul.f32 %v6799, %v6823
        %v6832 = vmul.f32 %v5050, %v6824
        %v6833 = vmul.f32 %v5050, %v6825
        %v6834 = vmul.f32 %v5050, %v6826
        %v6835 = vmul.f32 %v5050, %v6827
        %v6836 = vmul.f32 %v5050, %v6828
        %v6837 = vmul.f32 %v5050, %v6829
        %v6838 = vmul.f32 %v5050, %v6830
        %v6839 = vmul.f32 %v5050, %v6831
        %v6840 = vmul.f32 %v6768, %v5062
        %v6841 = vmul.f32 %v6769, %v5062
        %v6842 = vmul.f32 %v6770, %v5062
        %v6843 = vmul.f32 %v6771, %v5062
        %v6844 = vmul.f32 %v6772, %v5062
        %v6845 = vmul.f32 %v6773, %v5062
        %v6846 = vmul.f32 %v6774, %v5062
        %v6847 = vmul.f32 %v6775, %v5062
        %v6848 = vadd.f32 %v6840, %v5074
        %v6849 = vadd.f32 %v6841, %v5074
        %v6850 = vadd.f32 %v6842, %v5074
        %v6851 = vadd.f32 %v6843, %v5074
        %v6852 = vadd.f32 %v6844, %v5074
        %v6853 = vadd.f32 %v6845, %v5074
        %v6854 = vadd.f32 %v6846, %v5074
        %v6855 = vadd.f32 %v6847, %v5074
        %v6856 = vmul.f32 %v6848, 0.5
        %v6857 = vmul.f32 %v6849, 0.5
        %v6858 = vmul.f32 %v6850, 0.5
        %v6859 = vmul.f32 %v6851, 0.5
        %v6860 = vmul.f32 %v6852, 0.5
        %v6861 = vmul.f32 %v6853, 0.5
        %v6862 = vmul.f32 %v6854, 0.5
        %v6863 = vmul.f32 %v6855, 0.5
        %v6864 = vmul.f32 %v6848, 0.70710677
        %v6865 = vmul.f32 %v6849, 0.70710677
        %v6866 = vmul.f32 %v6850, 0.70710677
        %v6867 = vmul.f32 %v6851, 0.70710677
        %v6868 = vmul.f32 %v6852, 0.70710677
        %v6869 = vmul.f32 %v6853, 0.70710677
        %v6870 = vmul.f32 %v6854, 0.70710677
        %v6871 = vmul.f32 %v6855, 0.70710677
        %v6872 = verf.f32.pop %v6864
        %v6873 = verf.f32.pop %v6865
        %v6874 = verf.f32.pop %v6866
        %v6875 = verf.f32.pop %v6867
        %v6876 = verf.f32.pop %v6868
        %v6877 = verf.f32.pop %v6869
        %v6878 = verf.f32.pop %v6870
        %v6879 = verf.f32.pop %v6871
        %v6880 = vadd.f32 %v6872, 1.0
        %v6881 = vadd.f32 %v6873, 1.0
        %v6882 = vadd.f32 %v6874, 1.0
        %v6883 = vadd.f32 %v6875, 1.0
        %v6884 = vadd.f32 %v6876, 1.0
        %v6885 = vadd.f32 %v6877, 1.0
        %v6886 = vadd.f32 %v6878, 1.0
        %v6887 = vadd.f32 %v6879, 1.0
        %v6888 = vmul.f32 %v6856, %v6880
        %v6889 = vmul.f32 %v6857, %v6881
        %v6890 = vmul.f32 %v6858, %v6882
        %v6891 = vmul.f32 %v6859, %v6883
        %v6892 = vmul.f32 %v6860, %v6884
        %v6893 = vmul.f32 %v6861, %v6885
        %v6894 = vmul.f32 %v6862, %v6886
        %v6895 = vmul.f32 %v6863, %v6887
        %v6896 = vmul.f32 %v5126, %v6888
        %v6897 = vmul.f32 %v5126, %v6889
        %v6898 = vmul.f32 %v5126, %v6890
        %v6899 = vmul.f32 %v5126, %v6891
        %v6900 = vmul.f32 %v5126, %v6892
        %v6901 = vmul.f32 %v5126, %v6893
        %v6902 = vmul.f32 %v5126, %v6894
        %v6903 = vmul.f32 %v5126, %v6895
        %v6904 = vadd.f32 %v6832, %v6896
        %v6905 = vadd.f32 %v6833, %v6897
        %v6906 = vadd.f32 %v6834, %v6898
        %v6907 = vadd.f32 %v6835, %v6899
        %v6908 = vadd.f32 %v6836, %v6900
        %v6909 = vadd.f32 %v6837, %v6901
        %v6910 = vadd.f32 %v6838, %v6902
        %v6911 = vadd.f32 %v6839, %v6903
        %v6912 = vmul.f32 %v6768, %v5146
        %v6913 = vmul.f32 %v6769, %v5146
        %v6914 = vmul.f32 %v6770, %v5146
        %v6915 = vmul.f32 %v6771, %v5146
        %v6916 = vmul.f32 %v6772, %v5146
        %v6917 = vmul.f32 %v6773, %v5146
        %v6918 = vmul.f32 %v6774, %v5146
        %v6919 = vmul.f32 %v6775, %v5146
        %v6920 = vadd.f32 %v6912, %v5158
        %v6921 = vadd.f32 %v6913, %v5158
        %v6922 = vadd.f32 %v6914, %v5158
        %v6923 = vadd.f32 %v6915, %v5158
        %v6924 = vadd.f32 %v6916, %v5158
        %v6925 = vadd.f32 %v6917, %v5158
        %v6926 = vadd.f32 %v6918, %v5158
        %v6927 = vadd.f32 %v6919, %v5158
        %v6928 = vmul.f32 %v6920, 0.5
        %v6929 = vmul.f32 %v6921, 0.5
        %v6930 = vmul.f32 %v6922, 0.5
        %v6931 = vmul.f32 %v6923, 0.5
        %v6932 = vmul.f32 %v6924, 0.5
        %v6933 = vmul.f32 %v6925, 0.5
        %v6934 = vmul.f32 %v6926, 0.5
        %v6935 = vmul.f32 %v6927, 0.5
        %v6936 = vmul.f32 %v6920, 0.70710677
        %v6937 = vmul.f32 %v6921, 0.70710677
        %v6938 = vmul.f32 %v6922, 0.70710677
        %v6939 = vmul.f32 %v6923, 0.70710677
        %v6940 = vmul.f32 %v6924, 0.70710677
        %v6941 = vmul.f32 %v6925, 0.70710677
        %v6942 = vmul.f32 %v6926, 0.70710677
        %v6943 = vmul.f32 %v6927, 0.70710677
        %v6944 = verf.f32.pop %v6936
        %v6945 = verf.f32.pop %v6937
        %v6946 = verf.f32.pop %v6938
        %v6947 = verf.f32.pop %v6939
        %v6948 = verf.f32.pop %v6940
        %v6949 = verf.f32.pop %v6941
        %v6950 = verf.f32.pop %v6942
        %v6951 = verf.f32.pop %v6943
        %v6952 = vadd.f32 %v6944, 1.0
        %v6953 = vadd.f32 %v6945, 1.0
        %v6954 = vadd.f32 %v6946, 1.0
        %v6955 = vadd.f32 %v6947, 1.0
        %v6956 = vadd.f32 %v6948, 1.0
        %v6957 = vadd.f32 %v6949, 1.0
        %v6958 = vadd.f32 %v6950, 1.0
        %v6959 = vadd.f32 %v6951, 1.0
        %v6960 = vmul.f32 %v6928, %v6952
        %v6961 = vmul.f32 %v6929, %v6953
        %v6962 = vmul.f32 %v6930, %v6954
        %v6963 = vmul.f32 %v6931, %v6955
        %v6964 = vmul.f32 %v6932, %v6956
        %v6965 = vmul.f32 %v6933, %v6957
        %v6966 = vmul.f32 %v6934, %v6958
        %v6967 = vmul.f32 %v6935, %v6959
        %v6968 = vmul.f32 %v5210, %v6960
        %v6969 = vmul.f32 %v5210, %v6961
        %v6970 = vmul.f32 %v5210, %v6962
        %v6971 = vmul.f32 %v5210, %v6963
        %v6972 = vmul.f32 %v5210, %v6964
        %v6973 = vmul.f32 %v5210, %v6965
        %v6974 = vmul.f32 %v5210, %v6966
        %v6975 = vmul.f32 %v5210, %v6967
        %v6976 = vadd.f32 %v6904, %v6968
        %v6977 = vadd.f32 %v6905, %v6969
        %v6978 = vadd.f32 %v6906, %v6970
        %v6979 = vadd.f32 %v6907, %v6971
        %v6980 = vadd.f32 %v6908, %v6972
        %v6981 = vadd.f32 %v6909, %v6973
        %v6982 = vadd.f32 %v6910, %v6974
        %v6983 = vadd.f32 %v6911, %v6975
        %v6984 = vmul.f32 %v6768, %v5230
        %v6985 = vmul.f32 %v6769, %v5230
        %v6986 = vmul.f32 %v6770, %v5230
        %v6987 = vmul.f32 %v6771, %v5230
        %v6988 = vmul.f32 %v6772, %v5230
        %v6989 = vmul.f32 %v6773, %v5230
        %v6990 = vmul.f32 %v6774, %v5230
        %v6991 = vmul.f32 %v6775, %v5230
        %v6992 = vadd.f32 %v6984, %v5242
        %v6993 = vadd.f32 %v6985, %v5242
        %v6994 = vadd.f32 %v6986, %v5242
        %v6995 = vadd.f32 %v6987, %v5242
        %v6996 = vadd.f32 %v6988, %v5242
        %v6997 = vadd.f32 %v6989, %v5242
        %v6998 = vadd.f32 %v6990, %v5242
        %v6999 = vadd.f32 %v6991, %v5242
        %v7000 = vmul.f32 %v6992, 0.5
        %v7001 = vmul.f32 %v6993, 0.5
        %v7002 = vmul.f32 %v6994, 0.5
        %v7003 = vmul.f32 %v6995, 0.5
        %v7004 = vmul.f32 %v6996, 0.5
        %v7005 = vmul.f32 %v6997, 0.5
        %v7006 = vmul.f32 %v6998, 0.5
        %v7007 = vmul.f32 %v6999, 0.5
        %v7008 = vmul.f32 %v6992, 0.70710677
        %v7009 = vmul.f32 %v6993, 0.70710677
        %v7010 = vmul.f32 %v6994, 0.70710677
        %v7011 = vmul.f32 %v6995, 0.70710677
        %v7012 = vmul.f32 %v6996, 0.70710677
        %v7013 = vmul.f32 %v6997, 0.70710677
        %v7014 = vmul.f32 %v6998, 0.70710677
        %v7015 = vmul.f32 %v6999, 0.70710677
        %v7016 = verf.f32.pop %v7008
        %v7017 = verf.f32.pop %v7009
        %v7018 = verf.f32.pop %v7010
        %v7019 = verf.f32.pop %v7011
        %v7020 = verf.f32.pop %v7012
        %v7021 = verf.f32.pop %v7013
        %v7022 = verf.f32.pop %v7014
        %v7023 = verf.f32.pop %v7015
        %v7024 = vadd.f32 %v7016, 1.0
        %v7025 = vadd.f32 %v7017, 1.0
        %v7026 = vadd.f32 %v7018, 1.0
        %v7027 = vadd.f32 %v7019, 1.0
        %v7028 = vadd.f32 %v7020, 1.0
        %v7029 = vadd.f32 %v7021, 1.0
        %v7030 = vadd.f32 %v7022, 1.0
        %v7031 = vadd.f32 %v7023, 1.0
        %v7032 = vmul.f32 %v7000, %v7024
        %v7033 = vmul.f32 %v7001, %v7025
        %v7034 = vmul.f32 %v7002, %v7026
        %v7035 = vmul.f32 %v7003, %v7027
        %v7036 = vmul.f32 %v7004, %v7028
        %v7037 = vmul.f32 %v7005, %v7029
        %v7038 = vmul.f32 %v7006, %v7030
        %v7039 = vmul.f32 %v7007, %v7031
        %v7040 = vmul.f32 %v5294, %v7032
        %v7041 = vmul.f32 %v5294, %v7033
        %v7042 = vmul.f32 %v5294, %v7034
        %v7043 = vmul.f32 %v5294, %v7035
        %v7044 = vmul.f32 %v5294, %v7036
        %v7045 = vmul.f32 %v5294, %v7037
        %v7046 = vmul.f32 %v5294, %v7038
        %v7047 = vmul.f32 %v5294, %v7039
        %v7048 = vadd.f32 %v6976, %v7040
        %v7049 = vadd.f32 %v6977, %v7041
        %v7050 = vadd.f32 %v6978, %v7042
        %v7051 = vadd.f32 %v6979, %v7043
        %v7052 = vadd.f32 %v6980, %v7044
        %v7053 = vadd.f32 %v6981, %v7045
        %v7054 = vadd.f32 %v6982, %v7046
        %v7055 = vadd.f32 %v6983, %v7047
        %v7056 = vadd.f32 %v7048, %v5315
        %v7057 = vadd.f32 %v7049, %v5315
        %v7058 = vadd.f32 %v7050, %v5315
        %v7059 = vadd.f32 %v7051, %v5315
        %v7060 = vadd.f32 %v7052, %v5315
        %v7061 = vadd.f32 %v7053, %v5315
        %v7062 = vadd.f32 %v7054, %v5315
        %v7063 = vadd.f32 %v7055, %v5315
        %v7064 = vmul.f32 %v5329, %v7056
        %v7065 = vmul.f32 %v5329, %v7057
        %v7066 = vmul.f32 %v5329, %v7058
        %v7067 = vmul.f32 %v5329, %v7059
        %v7068 = vmul.f32 %v5329, %v7060
        %v7069 = vmul.f32 %v5329, %v7061
        %v7070 = vmul.f32 %v5329, %v7062
        %v7071 = vmul.f32 %v5329, %v7063
        %s7072 = scalar_lea.vmem %s401, 320 [#allocation4]
        %v7073 = vld [vmem:[%s7072] sm:$0xff]
        %v7074 = vld [vmem:[%s7072 + $0x8] sm:$0xff]
        %v7075 = vld [vmem:[%s7072 + $0x10] sm:$0xff]
        %v7076 = vld [vmem:[%s7072 + $0x18] sm:$0xff]
        %v7077 = vld [vmem:[%s7072 + $0x20] sm:$0xff]
        %v7078 = vld [vmem:[%s7072 + $0x28] sm:$0xff]
        %v7079 = vld [vmem:[%s7072 + $0x30] sm:$0xff]
        %v7080 = vld [vmem:[%s7072 + $0x38] sm:$0xff]
        %v7081 = vadd.f32 %v7064, %v7073
        %v7082 = vadd.f32 %v7065, %v7074
        %v7083 = vadd.f32 %v7066, %v7075
        %v7084 = vadd.f32 %v7067, %v7076
        %v7085 = vadd.f32 %v7068, %v7077
        %v7086 = vadd.f32 %v7069, %v7078
        %v7087 = vadd.f32 %v7070, %v7079
        %v7088 = vadd.f32 %v7071, %v7080
        %s7089 = scalar_lea.vmem %s463, 320 [#allocation7]
        %7090 = vst [vmem:[%s7089] sm:$0xff] %v7081
        %7091 = vst [vmem:[%s7089 + $0x8] sm:$0xff] %v7082
        %7092 = vst [vmem:[%s7089 + $0x10] sm:$0xff] %v7083
        %7093 = vst [vmem:[%s7089 + $0x18] sm:$0xff] %v7084
        %7094 = vst [vmem:[%s7089 + $0x20] sm:$0xff] %v7085
        %7095 = vst [vmem:[%s7089 + $0x28] sm:$0xff] %v7086
        %7096 = vst [vmem:[%s7089 + $0x30] sm:$0xff] %v7087
        %7097 = vst [vmem:[%s7089 + $0x38] sm:$0xff] %v7088
        %s7098 = scalar_lea.vmem [#allocation3], 384
        %v7099 = vld [vmem:[%s7098] sm:$0xff]
        %v7100 = vld [vmem:[%s7098 + $0x8] sm:$0xff]
        %v7101 = vld [vmem:[%s7098 + $0x10] sm:$0xff]
        %v7102 = vld [vmem:[%s7098 + $0x18] sm:$0xff]
        %v7103 = vld [vmem:[%s7098 + $0x20] sm:$0xff]
        %v7104 = vld [vmem:[%s7098 + $0x28] sm:$0xff]
        %v7105 = vld [vmem:[%s7098 + $0x30] sm:$0xff]
        %v7106 = vld [vmem:[%s7098 + $0x38] sm:$0xff]
        %v7107 = vmul.f32 %v7099, %v4959
        %v7108 = vmul.f32 %v7100, %v4959
        %v7109 = vmul.f32 %v7101, %v4959
        %v7110 = vmul.f32 %v7102, %v4959
        %v7111 = vmul.f32 %v7103, %v4959
        %v7112 = vmul.f32 %v7104, %v4959
        %v7113 = vmul.f32 %v7105, %v4959
        %v7114 = vmul.f32 %v7106, %v4959
        %v7115 = vadd.f32 %v7107, %v4973
        %v7116 = vadd.f32 %v7108, %v4973
        %v7117 = vadd.f32 %v7109, %v4973
        %v7118 = vadd.f32 %v7110, %v4973
        %v7119 = vadd.f32 %v7111, %v4973
        %v7120 = vadd.f32 %v7112, %v4973
        %v7121 = vadd.f32 %v7113, %v4973
        %v7122 = vadd.f32 %v7114, %v4973
        %v7123 = vmul.f32 %v7115, %v4986
        %v7124 = vmul.f32 %v7116, %v4986
        %v7125 = vmul.f32 %v7117, %v4986
        %v7126 = vmul.f32 %v7118, %v4986
        %v7127 = vmul.f32 %v7119, %v4986
        %v7128 = vmul.f32 %v7120, %v4986
        %v7129 = vmul.f32 %v7121, %v4986
        %v7130 = vmul.f32 %v7122, %v4986
        %v7131 = vadd.f32 %v7123, %v4998
        %v7132 = vadd.f32 %v7124, %v4998
        %v7133 = vadd.f32 %v7125, %v4998
        %v7134 = vadd.f32 %v7126, %v4998
        %v7135 = vadd.f32 %v7127, %v4998
        %v7136 = vadd.f32 %v7128, %v4998
        %v7137 = vadd.f32 %v7129, %v4998
        %v7138 = vadd.f32 %v7130, %v4998
        %v7139 = vmul.f32 %v7131, 0.5
        %v7140 = vmul.f32 %v7132, 0.5
        %v7141 = vmul.f32 %v7133, 0.5
        %v7142 = vmul.f32 %v7134, 0.5
        %v7143 = vmul.f32 %v7135, 0.5
        %v7144 = vmul.f32 %v7136, 0.5
        %v7145 = vmul.f32 %v7137, 0.5
        %v7146 = vmul.f32 %v7138, 0.5
        %v7147 = vmul.f32 %v7131, 0.70710677
        %v7148 = vmul.f32 %v7132, 0.70710677
        %v7149 = vmul.f32 %v7133, 0.70710677
        %v7150 = vmul.f32 %v7134, 0.70710677
        %v7151 = vmul.f32 %v7135, 0.70710677
        %v7152 = vmul.f32 %v7136, 0.70710677
        %v7153 = vmul.f32 %v7137, 0.70710677
        %v7154 = vmul.f32 %v7138, 0.70710677
        %v7155 = verf.f32.pop %v7147
        %v7156 = verf.f32.pop %v7148
        %v7157 = verf.f32.pop %v7149
        %v7158 = verf.f32.pop %v7150
        %v7159 = verf.f32.pop %v7151
        %v7160 = verf.f32.pop %v7152
        %v7161 = verf.f32.pop %v7153
        %v7162 = verf.f32.pop %v7154
        %v7163 = vadd.f32 %v7155, 1.0
        %v7164 = vadd.f32 %v7156, 1.0
        %v7165 = vadd.f32 %v7157, 1.0
        %v7166 = vadd.f32 %v7158, 1.0
        %v7167 = vadd.f32 %v7159, 1.0
        %v7168 = vadd.f32 %v7160, 1.0
        %v7169 = vadd.f32 %v7161, 1.0
        %v7170 = vadd.f32 %v7162, 1.0
        %v7171 = vmul.f32 %v7139, %v7163
        %v7172 = vmul.f32 %v7140, %v7164
        %v7173 = vmul.f32 %v7141, %v7165
        %v7174 = vmul.f32 %v7142, %v7166
        %v7175 = vmul.f32 %v7143, %v7167
        %v7176 = vmul.f32 %v7144, %v7168
        %v7177 = vmul.f32 %v7145, %v7169
        %v7178 = vmul.f32 %v7146, %v7170
        %v7179 = vmul.f32 %v5050, %v7171
        %v7180 = vmul.f32 %v5050, %v7172
        %v7181 = vmul.f32 %v5050, %v7173
        %v7182 = vmul.f32 %v5050, %v7174
        %v7183 = vmul.f32 %v5050, %v7175
        %v7184 = vmul.f32 %v5050, %v7176
        %v7185 = vmul.f32 %v5050, %v7177
        %v7186 = vmul.f32 %v5050, %v7178
        %v7187 = vmul.f32 %v7115, %v5062
        %v7188 = vmul.f32 %v7116, %v5062
        %v7189 = vmul.f32 %v7117, %v5062
        %v7190 = vmul.f32 %v7118, %v5062
        %v7191 = vmul.f32 %v7119, %v5062
        %v7192 = vmul.f32 %v7120, %v5062
        %v7193 = vmul.f32 %v7121, %v5062
        %v7194 = vmul.f32 %v7122, %v5062
        %v7195 = vadd.f32 %v7187, %v5074
        %v7196 = vadd.f32 %v7188, %v5074
        %v7197 = vadd.f32 %v7189, %v5074
        %v7198 = vadd.f32 %v7190, %v5074
        %v7199 = vadd.f32 %v7191, %v5074
        %v7200 = vadd.f32 %v7192, %v5074
        %v7201 = vadd.f32 %v7193, %v5074
        %v7202 = vadd.f32 %v7194, %v5074
        %v7203 = vmul.f32 %v7195, 0.5
        %v7204 = vmul.f32 %v7196, 0.5
        %v7205 = vmul.f32 %v7197, 0.5
        %v7206 = vmul.f32 %v7198, 0.5
        %v7207 = vmul.f32 %v7199, 0.5
        %v7208 = vmul.f32 %v7200, 0.5
        %v7209 = vmul.f32 %v7201, 0.5
        %v7210 = vmul.f32 %v7202, 0.5
        %v7211 = vmul.f32 %v7195, 0.70710677
        %v7212 = vmul.f32 %v7196, 0.70710677
        %v7213 = vmul.f32 %v7197, 0.70710677
        %v7214 = vmul.f32 %v7198, 0.70710677
        %v7215 = vmul.f32 %v7199, 0.70710677
        %v7216 = vmul.f32 %v7200, 0.70710677
        %v7217 = vmul.f32 %v7201, 0.70710677
        %v7218 = vmul.f32 %v7202, 0.70710677
        %v7219 = verf.f32.pop %v7211
        %v7220 = verf.f32.pop %v7212
        %v7221 = verf.f32.pop %v7213
        %v7222 = verf.f32.pop %v7214
        %v7223 = verf.f32.pop %v7215
        %v7224 = verf.f32.pop %v7216
        %v7225 = verf.f32.pop %v7217
        %v7226 = verf.f32.pop %v7218
        %v7227 = vadd.f32 %v7219, 1.0
        %v7228 = vadd.f32 %v7220, 1.0
        %v7229 = vadd.f32 %v7221, 1.0
        %v7230 = vadd.f32 %v7222, 1.0
        %v7231 = vadd.f32 %v7223, 1.0
        %v7232 = vadd.f32 %v7224, 1.0
        %v7233 = vadd.f32 %v7225, 1.0
        %v7234 = vadd.f32 %v7226, 1.0
        %v7235 = vmul.f32 %v7203, %v7227
        %v7236 = vmul.f32 %v7204, %v7228
        %v7237 = vmul.f32 %v7205, %v7229
        %v7238 = vmul.f32 %v7206, %v7230
        %v7239 = vmul.f32 %v7207, %v7231
        %v7240 = vmul.f32 %v7208, %v7232
        %v7241 = vmul.f32 %v7209, %v7233
        %v7242 = vmul.f32 %v7210, %v7234
        %v7243 = vmul.f32 %v5126, %v7235
        %v7244 = vmul.f32 %v5126, %v7236
        %v7245 = vmul.f32 %v5126, %v7237
        %v7246 = vmul.f32 %v5126, %v7238
        %v7247 = vmul.f32 %v5126, %v7239
        %v7248 = vmul.f32 %v5126, %v7240
        %v7249 = vmul.f32 %v5126, %v7241
        %v7250 = vmul.f32 %v5126, %v7242
        %v7251 = vadd.f32 %v7179, %v7243
        %v7252 = vadd.f32 %v7180, %v7244
        %v7253 = vadd.f32 %v7181, %v7245
        %v7254 = vadd.f32 %v7182, %v7246
        %v7255 = vadd.f32 %v7183, %v7247
        %v7256 = vadd.f32 %v7184, %v7248
        %v7257 = vadd.f32 %v7185, %v7249
        %v7258 = vadd.f32 %v7186, %v7250
        %v7259 = vmul.f32 %v7115, %v5146
        %v7260 = vmul.f32 %v7116, %v5146
        %v7261 = vmul.f32 %v7117, %v5146
        %v7262 = vmul.f32 %v7118, %v5146
        %v7263 = vmul.f32 %v7119, %v5146
        %v7264 = vmul.f32 %v7120, %v5146
        %v7265 = vmul.f32 %v7121, %v5146
        %v7266 = vmul.f32 %v7122, %v5146
        %v7267 = vadd.f32 %v7259, %v5158
        %v7268 = vadd.f32 %v7260, %v5158
        %v7269 = vadd.f32 %v7261, %v5158
        %v7270 = vadd.f32 %v7262, %v5158
        %v7271 = vadd.f32 %v7263, %v5158
        %v7272 = vadd.f32 %v7264, %v5158
        %v7273 = vadd.f32 %v7265, %v5158
        %v7274 = vadd.f32 %v7266, %v5158
        %v7275 = vmul.f32 %v7267, 0.5
        %v7276 = vmul.f32 %v7268, 0.5
        %v7277 = vmul.f32 %v7269, 0.5
        %v7278 = vmul.f32 %v7270, 0.5
        %v7279 = vmul.f32 %v7271, 0.5
        %v7280 = vmul.f32 %v7272, 0.5
        %v7281 = vmul.f32 %v7273, 0.5
        %v7282 = vmul.f32 %v7274, 0.5
        %v7283 = vmul.f32 %v7267, 0.70710677
        %v7284 = vmul.f32 %v7268, 0.70710677
        %v7285 = vmul.f32 %v7269, 0.70710677
        %v7286 = vmul.f32 %v7270, 0.70710677
        %v7287 = vmul.f32 %v7271, 0.70710677
        %v7288 = vmul.f32 %v7272, 0.70710677
        %v7289 = vmul.f32 %v7273, 0.70710677
        %v7290 = vmul.f32 %v7274, 0.70710677
        %v7291 = verf.f32.pop %v7283
        %v7292 = verf.f32.pop %v7284
        %v7293 = verf.f32.pop %v7285
        %v7294 = verf.f32.pop %v7286
        %v7295 = verf.f32.pop %v7287
        %v7296 = verf.f32.pop %v7288
        %v7297 = verf.f32.pop %v7289
        %v7298 = verf.f32.pop %v7290
        %v7299 = vadd.f32 %v7291, 1.0
        %v7300 = vadd.f32 %v7292, 1.0
        %v7301 = vadd.f32 %v7293, 1.0
        %v7302 = vadd.f32 %v7294, 1.0
        %v7303 = vadd.f32 %v7295, 1.0
        %v7304 = vadd.f32 %v7296, 1.0
        %v7305 = vadd.f32 %v7297, 1.0
        %v7306 = vadd.f32 %v7298, 1.0
        %v7307 = vmul.f32 %v7275, %v7299
        %v7308 = vmul.f32 %v7276, %v7300
        %v7309 = vmul.f32 %v7277, %v7301
        %v7310 = vmul.f32 %v7278, %v7302
        %v7311 = vmul.f32 %v7279, %v7303
        %v7312 = vmul.f32 %v7280, %v7304
        %v7313 = vmul.f32 %v7281, %v7305
        %v7314 = vmul.f32 %v7282, %v7306
        %v7315 = vmul.f32 %v5210, %v7307
        %v7316 = vmul.f32 %v5210, %v7308
        %v7317 = vmul.f32 %v5210, %v7309
        %v7318 = vmul.f32 %v5210, %v7310
        %v7319 = vmul.f32 %v5210, %v7311
        %v7320 = vmul.f32 %v5210, %v7312
        %v7321 = vmul.f32 %v5210, %v7313
        %v7322 = vmul.f32 %v5210, %v7314
        %v7323 = vadd.f32 %v7251, %v7315
        %v7324 = vadd.f32 %v7252, %v7316
        %v7325 = vadd.f32 %v7253, %v7317
        %v7326 = vadd.f32 %v7254, %v7318
        %v7327 = vadd.f32 %v7255, %v7319
        %v7328 = vadd.f32 %v7256, %v7320
        %v7329 = vadd.f32 %v7257, %v7321
        %v7330 = vadd.f32 %v7258, %v7322
        %v7331 = vmul.f32 %v7115, %v5230
        %v7332 = vmul.f32 %v7116, %v5230
        %v7333 = vmul.f32 %v7117, %v5230
        %v7334 = vmul.f32 %v7118, %v5230
        %v7335 = vmul.f32 %v7119, %v5230
        %v7336 = vmul.f32 %v7120, %v5230
        %v7337 = vmul.f32 %v7121, %v5230
        %v7338 = vmul.f32 %v7122, %v5230
        %v7339 = vadd.f32 %v7331, %v5242
        %v7340 = vadd.f32 %v7332, %v5242
        %v7341 = vadd.f32 %v7333, %v5242
        %v7342 = vadd.f32 %v7334, %v5242
        %v7343 = vadd.f32 %v7335, %v5242
        %v7344 = vadd.f32 %v7336, %v5242
        %v7345 = vadd.f32 %v7337, %v5242
        %v7346 = vadd.f32 %v7338, %v5242
        %v7347 = vmul.f32 %v7339, 0.5
        %v7348 = vmul.f32 %v7340, 0.5
        %v7349 = vmul.f32 %v7341, 0.5
        %v7350 = vmul.f32 %v7342, 0.5
        %v7351 = vmul.f32 %v7343, 0.5
        %v7352 = vmul.f32 %v7344, 0.5
        %v7353 = vmul.f32 %v7345, 0.5
        %v7354 = vmul.f32 %v7346, 0.5
        %v7355 = vmul.f32 %v7339, 0.70710677
        %v7356 = vmul.f32 %v7340, 0.70710677
        %v7357 = vmul.f32 %v7341, 0.70710677
        %v7358 = vmul.f32 %v7342, 0.70710677
        %v7359 = vmul.f32 %v7343, 0.70710677
        %v7360 = vmul.f32 %v7344, 0.70710677
        %v7361 = vmul.f32 %v7345, 0.70710677
        %v7362 = vmul.f32 %v7346, 0.70710677
        %v7363 = verf.f32.pop %v7355
        %v7364 = verf.f32.pop %v7356
        %v7365 = verf.f32.pop %v7357
        %v7366 = verf.f32.pop %v7358
        %v7367 = verf.f32.pop %v7359
        %v7368 = verf.f32.pop %v7360
        %v7369 = verf.f32.pop %v7361
        %v7370 = verf.f32.pop %v7362
        %v7371 = vadd.f32 %v7363, 1.0
        %v7372 = vadd.f32 %v7364, 1.0
        %v7373 = vadd.f32 %v7365, 1.0
        %v7374 = vadd.f32 %v7366, 1.0
        %v7375 = vadd.f32 %v7367, 1.0
        %v7376 = vadd.f32 %v7368, 1.0
        %v7377 = vadd.f32 %v7369, 1.0
        %v7378 = vadd.f32 %v7370, 1.0
        %v7379 = vmul.f32 %v7347, %v7371
        %v7380 = vmul.f32 %v7348, %v7372
        %v7381 = vmul.f32 %v7349, %v7373
        %v7382 = vmul.f32 %v7350, %v7374
        %v7383 = vmul.f32 %v7351, %v7375
        %v7384 = vmul.f32 %v7352, %v7376
        %v7385 = vmul.f32 %v7353, %v7377
        %v7386 = vmul.f32 %v7354, %v7378
        %v7387 = vmul.f32 %v5294, %v7379
        %v7388 = vmul.f32 %v5294, %v7380
        %v7389 = vmul.f32 %v5294, %v7381
        %v7390 = vmul.f32 %v5294, %v7382
        %v7391 = vmul.f32 %v5294, %v7383
        %v7392 = vmul.f32 %v5294, %v7384
        %v7393 = vmul.f32 %v5294, %v7385
        %v7394 = vmul.f32 %v5294, %v7386
        %v7395 = vadd.f32 %v7323, %v7387
        %v7396 = vadd.f32 %v7324, %v7388
        %v7397 = vadd.f32 %v7325, %v7389
        %v7398 = vadd.f32 %v7326, %v7390
        %v7399 = vadd.f32 %v7327, %v7391
        %v7400 = vadd.f32 %v7328, %v7392
        %v7401 = vadd.f32 %v7329, %v7393
        %v7402 = vadd.f32 %v7330, %v7394
        %v7403 = vadd.f32 %v7395, %v5315
        %v7404 = vadd.f32 %v7396, %v5315
        %v7405 = vadd.f32 %v7397, %v5315
        %v7406 = vadd.f32 %v7398, %v5315
        %v7407 = vadd.f32 %v7399, %v5315
        %v7408 = vadd.f32 %v7400, %v5315
        %v7409 = vadd.f32 %v7401, %v5315
        %v7410 = vadd.f32 %v7402, %v5315
        %v7411 = vmul.f32 %v5329, %v7403
        %v7412 = vmul.f32 %v5329, %v7404
        %v7413 = vmul.f32 %v5329, %v7405
        %v7414 = vmul.f32 %v5329, %v7406
        %v7415 = vmul.f32 %v5329, %v7407
        %v7416 = vmul.f32 %v5329, %v7408
        %v7417 = vmul.f32 %v5329, %v7409
        %v7418 = vmul.f32 %v5329, %v7410
        %s7419 = scalar_lea.vmem %s401, 384 [#allocation4]
        %v7420 = vld [vmem:[%s7419] sm:$0xff]
        %v7421 = vld [vmem:[%s7419 + $0x8] sm:$0xff]
        %v7422 = vld [vmem:[%s7419 + $0x10] sm:$0xff]
        %v7423 = vld [vmem:[%s7419 + $0x18] sm:$0xff]
        %v7424 = vld [vmem:[%s7419 + $0x20] sm:$0xff]
        %v7425 = vld [vmem:[%s7419 + $0x28] sm:$0xff]
        %v7426 = vld [vmem:[%s7419 + $0x30] sm:$0xff]
        %v7427 = vld [vmem:[%s7419 + $0x38] sm:$0xff]
        %v7428 = vadd.f32 %v7411, %v7420
        %v7429 = vadd.f32 %v7412, %v7421
        %v7430 = vadd.f32 %v7413, %v7422
        %v7431 = vadd.f32 %v7414, %v7423
        %v7432 = vadd.f32 %v7415, %v7424
        %v7433 = vadd.f32 %v7416, %v7425
        %v7434 = vadd.f32 %v7417, %v7426
        %v7435 = vadd.f32 %v7418, %v7427
        %s7436 = scalar_lea.vmem %s463, 384 [#allocation7]
        %7437 = vst [vmem:[%s7436] sm:$0xff] %v7428
        %7438 = vst [vmem:[%s7436 + $0x8] sm:$0xff] %v7429
        %7439 = vst [vmem:[%s7436 + $0x10] sm:$0xff] %v7430
        %7440 = vst [vmem:[%s7436 + $0x18] sm:$0xff] %v7431
        %7441 = vst [vmem:[%s7436 + $0x20] sm:$0xff] %v7432
        %7442 = vst [vmem:[%s7436 + $0x28] sm:$0xff] %v7433
        %7443 = vst [vmem:[%s7436 + $0x30] sm:$0xff] %v7434
        %7444 = vst [vmem:[%s7436 + $0x38] sm:$0xff] %v7435
        %s7445 = scalar_lea.vmem [#allocation3], 448
        %v7446 = vld [vmem:[%s7445] sm:$0xff]
        %v7447 = vld [vmem:[%s7445 + $0x8] sm:$0xff]
        %v7448 = vld [vmem:[%s7445 + $0x10] sm:$0xff]
        %v7449 = vld [vmem:[%s7445 + $0x18] sm:$0xff]
        %v7450 = vld [vmem:[%s7445 + $0x20] sm:$0xff]
        %v7451 = vld [vmem:[%s7445 + $0x28] sm:$0xff]
        %v7452 = vld [vmem:[%s7445 + $0x30] sm:$0xff]
        %v7453 = vld [vmem:[%s7445 + $0x38] sm:$0xff]
        %v7454 = vmul.f32 %v7446, %v4959
        %v7455 = vmul.f32 %v7447, %v4959
        %v7456 = vmul.f32 %v7448, %v4959
        %v7457 = vmul.f32 %v7449, %v4959
        %v7458 = vmul.f32 %v7450, %v4959
        %v7459 = vmul.f32 %v7451, %v4959
        %v7460 = vmul.f32 %v7452, %v4959
        %v7461 = vmul.f32 %v7453, %v4959
        %v7462 = vadd.f32 %v7454, %v4973
        %v7463 = vadd.f32 %v7455, %v4973
        %v7464 = vadd.f32 %v7456, %v4973
        %v7465 = vadd.f32 %v7457, %v4973
        %v7466 = vadd.f32 %v7458, %v4973
        %v7467 = vadd.f32 %v7459, %v4973
        %v7468 = vadd.f32 %v7460, %v4973
        %v7469 = vadd.f32 %v7461, %v4973
        %v7470 = vmul.f32 %v7462, %v4986
        %v7471 = vmul.f32 %v7463, %v4986
        %v7472 = vmul.f32 %v7464, %v4986
        %v7473 = vmul.f32 %v7465, %v4986
        %v7474 = vmul.f32 %v7466, %v4986
        %v7475 = vmul.f32 %v7467, %v4986
        %v7476 = vmul.f32 %v7468, %v4986
        %v7477 = vmul.f32 %v7469, %v4986
        %v7478 = vadd.f32 %v7470, %v4998
        %v7479 = vadd.f32 %v7471, %v4998
        %v7480 = vadd.f32 %v7472, %v4998
        %v7481 = vadd.f32 %v7473, %v4998
        %v7482 = vadd.f32 %v7474, %v4998
        %v7483 = vadd.f32 %v7475, %v4998
        %v7484 = vadd.f32 %v7476, %v4998
        %v7485 = vadd.f32 %v7477, %v4998
        %v7486 = vmul.f32 %v7478, 0.5
        %v7487 = vmul.f32 %v7479, 0.5
        %v7488 = vmul.f32 %v7480, 0.5
        %v7489 = vmul.f32 %v7481, 0.5
        %v7490 = vmul.f32 %v7482, 0.5
        %v7491 = vmul.f32 %v7483, 0.5
        %v7492 = vmul.f32 %v7484, 0.5
        %v7493 = vmul.f32 %v7485, 0.5
        %v7494 = vmul.f32 %v7478, 0.70710677
        %v7495 = vmul.f32 %v7479, 0.70710677
        %v7496 = vmul.f32 %v7480, 0.70710677
        %v7497 = vmul.f32 %v7481, 0.70710677
        %v7498 = vmul.f32 %v7482, 0.70710677
        %v7499 = vmul.f32 %v7483, 0.70710677
        %v7500 = vmul.f32 %v7484, 0.70710677
        %v7501 = vmul.f32 %v7485, 0.70710677
        %v7502 = verf.f32.pop %v7494
        %v7503 = verf.f32.pop %v7495
        %v7504 = verf.f32.pop %v7496
        %v7505 = verf.f32.pop %v7497
        %v7506 = verf.f32.pop %v7498
        %v7507 = verf.f32.pop %v7499
        %v7508 = verf.f32.pop %v7500
        %v7509 = verf.f32.pop %v7501
        %v7510 = vadd.f32 %v7502, 1.0
        %v7511 = vadd.f32 %v7503, 1.0
        %v7512 = vadd.f32 %v7504, 1.0
        %v7513 = vadd.f32 %v7505, 1.0
        %v7514 = vadd.f32 %v7506, 1.0
        %v7515 = vadd.f32 %v7507, 1.0
        %v7516 = vadd.f32 %v7508, 1.0
        %v7517 = vadd.f32 %v7509, 1.0
        %v7518 = vmul.f32 %v7486, %v7510
        %v7519 = vmul.f32 %v7487, %v7511
        %v7520 = vmul.f32 %v7488, %v7512
        %v7521 = vmul.f32 %v7489, %v7513
        %v7522 = vmul.f32 %v7490, %v7514
        %v7523 = vmul.f32 %v7491, %v7515
        %v7524 = vmul.f32 %v7492, %v7516
        %v7525 = vmul.f32 %v7493, %v7517
        %v7526 = vmul.f32 %v5050, %v7518
        %v7527 = vmul.f32 %v5050, %v7519
        %v7528 = vmul.f32 %v5050, %v7520
        %v7529 = vmul.f32 %v5050, %v7521
        %v7530 = vmul.f32 %v5050, %v7522
        %v7531 = vmul.f32 %v5050, %v7523
        %v7532 = vmul.f32 %v5050, %v7524
        %v7533 = vmul.f32 %v5050, %v7525
        %v7534 = vmul.f32 %v7462, %v5062
        %v7535 = vmul.f32 %v7463, %v5062
        %v7536 = vmul.f32 %v7464, %v5062
        %v7537 = vmul.f32 %v7465, %v5062
        %v7538 = vmul.f32 %v7466, %v5062
        %v7539 = vmul.f32 %v7467, %v5062
        %v7540 = vmul.f32 %v7468, %v5062
        %v7541 = vmul.f32 %v7469, %v5062
        %v7542 = vadd.f32 %v7534, %v5074
        %v7543 = vadd.f32 %v7535, %v5074
        %v7544 = vadd.f32 %v7536, %v5074
        %v7545 = vadd.f32 %v7537, %v5074
        %v7546 = vadd.f32 %v7538, %v5074
        %v7547 = vadd.f32 %v7539, %v5074
        %v7548 = vadd.f32 %v7540, %v5074
        %v7549 = vadd.f32 %v7541, %v5074
        %v7550 = vmul.f32 %v7542, 0.5
        %v7551 = vmul.f32 %v7543, 0.5
        %v7552 = vmul.f32 %v7544, 0.5
        %v7553 = vmul.f32 %v7545, 0.5
        %v7554 = vmul.f32 %v7546, 0.5
        %v7555 = vmul.f32 %v7547, 0.5
        %v7556 = vmul.f32 %v7548, 0.5
        %v7557 = vmul.f32 %v7549, 0.5
        %v7558 = vmul.f32 %v7542, 0.70710677
        %v7559 = vmul.f32 %v7543, 0.70710677
        %v7560 = vmul.f32 %v7544, 0.70710677
        %v7561 = vmul.f32 %v7545, 0.70710677
        %v7562 = vmul.f32 %v7546, 0.70710677
        %v7563 = vmul.f32 %v7547, 0.70710677
        %v7564 = vmul.f32 %v7548, 0.70710677
        %v7565 = vmul.f32 %v7549, 0.70710677
        %v7566 = verf.f32.pop %v7558
        %v7567 = verf.f32.pop %v7559
        %v7568 = verf.f32.pop %v7560
        %v7569 = verf.f32.pop %v7561
        %v7570 = verf.f32.pop %v7562
        %v7571 = verf.f32.pop %v7563
        %v7572 = verf.f32.pop %v7564
        %v7573 = verf.f32.pop %v7565
        %v7574 = vadd.f32 %v7566, 1.0
        %v7575 = vadd.f32 %v7567, 1.0
        %v7576 = vadd.f32 %v7568, 1.0
        %v7577 = vadd.f32 %v7569, 1.0
        %v7578 = vadd.f32 %v7570, 1.0
        %v7579 = vadd.f32 %v7571, 1.0
        %v7580 = vadd.f32 %v7572, 1.0
        %v7581 = vadd.f32 %v7573, 1.0
        %v7582 = vmul.f32 %v7550, %v7574
        %v7583 = vmul.f32 %v7551, %v7575
        %v7584 = vmul.f32 %v7552, %v7576
        %v7585 = vmul.f32 %v7553, %v7577
        %v7586 = vmul.f32 %v7554, %v7578
        %v7587 = vmul.f32 %v7555, %v7579
        %v7588 = vmul.f32 %v7556, %v7580
        %v7589 = vmul.f32 %v7557, %v7581
        %v7590 = vmul.f32 %v5126, %v7582
        %v7591 = vmul.f32 %v5126, %v7583
        %v7592 = vmul.f32 %v5126, %v7584
        %v7593 = vmul.f32 %v5126, %v7585
        %v7594 = vmul.f32 %v5126, %v7586
        %v7595 = vmul.f32 %v5126, %v7587
        %v7596 = vmul.f32 %v5126, %v7588
        %v7597 = vmul.f32 %v5126, %v7589
        %v7598 = vadd.f32 %v7526, %v7590
        %v7599 = vadd.f32 %v7527, %v7591
        %v7600 = vadd.f32 %v7528, %v7592
        %v7601 = vadd.f32 %v7529, %v7593
        %v7602 = vadd.f32 %v7530, %v7594
        %v7603 = vadd.f32 %v7531, %v7595
        %v7604 = vadd.f32 %v7532, %v7596
        %v7605 = vadd.f32 %v7533, %v7597
        %v7606 = vmul.f32 %v7462, %v5146
        %v7607 = vmul.f32 %v7463, %v5146
        %v7608 = vmul.f32 %v7464, %v5146
        %v7609 = vmul.f32 %v7465, %v5146
        %v7610 = vmul.f32 %v7466, %v5146
        %v7611 = vmul.f32 %v7467, %v5146
        %v7612 = vmul.f32 %v7468, %v5146
        %v7613 = vmul.f32 %v7469, %v5146
        %v7614 = vadd.f32 %v7606, %v5158
        %v7615 = vadd.f32 %v7607, %v5158
        %v7616 = vadd.f32 %v7608, %v5158
        %v7617 = vadd.f32 %v7609, %v5158
        %v7618 = vadd.f32 %v7610, %v5158
        %v7619 = vadd.f32 %v7611, %v5158
        %v7620 = vadd.f32 %v7612, %v5158
        %v7621 = vadd.f32 %v7613, %v5158
        %v7622 = vmul.f32 %v7614, 0.5
        %v7623 = vmul.f32 %v7615, 0.5
        %v7624 = vmul.f32 %v7616, 0.5
        %v7625 = vmul.f32 %v7617, 0.5
        %v7626 = vmul.f32 %v7618, 0.5
        %v7627 = vmul.f32 %v7619, 0.5
        %v7628 = vmul.f32 %v7620, 0.5
        %v7629 = vmul.f32 %v7621, 0.5
        %v7630 = vmul.f32 %v7614, 0.70710677
        %v7631 = vmul.f32 %v7615, 0.70710677
        %v7632 = vmul.f32 %v7616, 0.70710677
        %v7633 = vmul.f32 %v7617, 0.70710677
        %v7634 = vmul.f32 %v7618, 0.70710677
        %v7635 = vmul.f32 %v7619, 0.70710677
        %v7636 = vmul.f32 %v7620, 0.70710677
        %v7637 = vmul.f32 %v7621, 0.70710677
        %v7638 = verf.f32.pop %v7630
        %v7639 = verf.f32.pop %v7631
        %v7640 = verf.f32.pop %v7632
        %v7641 = verf.f32.pop %v7633
        %v7642 = verf.f32.pop %v7634
        %v7643 = verf.f32.pop %v7635
        %v7644 = verf.f32.pop %v7636
        %v7645 = verf.f32.pop %v7637
        %v7646 = vadd.f32 %v7638, 1.0
        %v7647 = vadd.f32 %v7639, 1.0
        %v7648 = vadd.f32 %v7640, 1.0
        %v7649 = vadd.f32 %v7641, 1.0
        %v7650 = vadd.f32 %v7642, 1.0
        %v7651 = vadd.f32 %v7643, 1.0
        %v7652 = vadd.f32 %v7644, 1.0
        %v7653 = vadd.f32 %v7645, 1.0
        %v7654 = vmul.f32 %v7622, %v7646
        %v7655 = vmul.f32 %v7623, %v7647
        %v7656 = vmul.f32 %v7624, %v7648
        %v7657 = vmul.f32 %v7625, %v7649
        %v7658 = vmul.f32 %v7626, %v7650
        %v7659 = vmul.f32 %v7627, %v7651
        %v7660 = vmul.f32 %v7628, %v7652
        %v7661 = vmul.f32 %v7629, %v7653
        %v7662 = vmul.f32 %v5210, %v7654
        %v7663 = vmul.f32 %v5210, %v7655
        %v7664 = vmul.f32 %v5210, %v7656
        %v7665 = vmul.f32 %v5210, %v7657
        %v7666 = vmul.f32 %v5210, %v7658
        %v7667 = vmul.f32 %v5210, %v7659
        %v7668 = vmul.f32 %v5210, %v7660
        %v7669 = vmul.f32 %v5210, %v7661
        %v7670 = vadd.f32 %v7598, %v7662
        %v7671 = vadd.f32 %v7599, %v7663
        %v7672 = vadd.f32 %v7600, %v7664
        %v7673 = vadd.f32 %v7601, %v7665
        %v7674 = vadd.f32 %v7602, %v7666
        %v7675 = vadd.f32 %v7603, %v7667
        %v7676 = vadd.f32 %v7604, %v7668
        %v7677 = vadd.f32 %v7605, %v7669
        %v7678 = vmul.f32 %v7462, %v5230
        %v7679 = vmul.f32 %v7463, %v5230
        %v7680 = vmul.f32 %v7464, %v5230
        %v7681 = vmul.f32 %v7465, %v5230
        %v7682 = vmul.f32 %v7466, %v5230
        %v7683 = vmul.f32 %v7467, %v5230
        %v7684 = vmul.f32 %v7468, %v5230
        %v7685 = vmul.f32 %v7469, %v5230
        %v7686 = vadd.f32 %v7678, %v5242
        %v7687 = vadd.f32 %v7679, %v5242
        %v7688 = vadd.f32 %v7680, %v5242
        %v7689 = vadd.f32 %v7681, %v5242
        %v7690 = vadd.f32 %v7682, %v5242
        %v7691 = vadd.f32 %v7683, %v5242
        %v7692 = vadd.f32 %v7684, %v5242
        %v7693 = vadd.f32 %v7685, %v5242
        %v7694 = vmul.f32 %v7686, 0.5
        %v7695 = vmul.f32 %v7687, 0.5
        %v7696 = vmul.f32 %v7688, 0.5
        %v7697 = vmul.f32 %v7689, 0.5
        %v7698 = vmul.f32 %v7690, 0.5
        %v7699 = vmul.f32 %v7691, 0.5
        %v7700 = vmul.f32 %v7692, 0.5
        %v7701 = vmul.f32 %v7693, 0.5
        %v7702 = vmul.f32 %v7686, 0.70710677
        %v7703 = vmul.f32 %v7687, 0.70710677
        %v7704 = vmul.f32 %v7688, 0.70710677
        %v7705 = vmul.f32 %v7689, 0.70710677
        %v7706 = vmul.f32 %v7690, 0.70710677
        %v7707 = vmul.f32 %v7691, 0.70710677
        %v7708 = vmul.f32 %v7692, 0.70710677
        %v7709 = vmul.f32 %v7693, 0.70710677
        %v7710 = verf.f32.pop %v7702
        %v7711 = verf.f32.pop %v7703
        %v7712 = verf.f32.pop %v7704
        %v7713 = verf.f32.pop %v7705
        %v7714 = verf.f32.pop %v7706
        %v7715 = verf.f32.pop %v7707
        %v7716 = verf.f32.pop %v7708
        %v7717 = verf.f32.pop %v7709
        %v7718 = vadd.f32 %v7710, 1.0
        %v7719 = vadd.f32 %v7711, 1.0
        %v7720 = vadd.f32 %v7712, 1.0
        %v7721 = vadd.f32 %v7713, 1.0
        %v7722 = vadd.f32 %v7714, 1.0
        %v7723 = vadd.f32 %v7715, 1.0
        %v7724 = vadd.f32 %v7716, 1.0
        %v7725 = vadd.f32 %v7717, 1.0
        %v7726 = vmul.f32 %v7694, %v7718
        %v7727 = vmul.f32 %v7695, %v7719
        %v7728 = vmul.f32 %v7696, %v7720
        %v7729 = vmul.f32 %v7697, %v7721
        %v7730 = vmul.f32 %v7698, %v7722
        %v7731 = vmul.f32 %v7699, %v7723
        %v7732 = vmul.f32 %v7700, %v7724
        %v7733 = vmul.f32 %v7701, %v7725
        %v7734 = vmul.f32 %v5294, %v7726
        %v7735 = vmul.f32 %v5294, %v7727
        %v7736 = vmul.f32 %v5294, %v7728
        %v7737 = vmul.f32 %v5294, %v7729
        %v7738 = vmul.f32 %v5294, %v7730
        %v7739 = vmul.f32 %v5294, %v7731
        %v7740 = vmul.f32 %v5294, %v7732
        %v7741 = vmul.f32 %v5294, %v7733
        %v7742 = vadd.f32 %v7670, %v7734
        %v7743 = vadd.f32 %v7671, %v7735
        %v7744 = vadd.f32 %v7672, %v7736
        %v7745 = vadd.f32 %v7673, %v7737
        %v7746 = vadd.f32 %v7674, %v7738
        %v7747 = vadd.f32 %v7675, %v7739
        %v7748 = vadd.f32 %v7676, %v7740
        %v7749 = vadd.f32 %v7677, %v7741
        %v7750 = vadd.f32 %v7742, %v5315
        %v7751 = vadd.f32 %v7743, %v5315
        %v7752 = vadd.f32 %v7744, %v5315
        %v7753 = vadd.f32 %v7745, %v5315
        %v7754 = vadd.f32 %v7746, %v5315
        %v7755 = vadd.f32 %v7747, %v5315
        %v7756 = vadd.f32 %v7748, %v5315
        %v7757 = vadd.f32 %v7749, %v5315
        %v7758 = vmul.f32 %v5329, %v7750
        %v7759 = vmul.f32 %v5329, %v7751
        %v7760 = vmul.f32 %v5329, %v7752
        %v7761 = vmul.f32 %v5329, %v7753
        %v7762 = vmul.f32 %v5329, %v7754
        %v7763 = vmul.f32 %v5329, %v7755
        %v7764 = vmul.f32 %v5329, %v7756
        %v7765 = vmul.f32 %v5329, %v7757
        %s7766 = scalar_lea.vmem %s401, 448 [#allocation4]
        %v7767 = vld [vmem:[%s7766] sm:$0xff]
        %v7768 = vld [vmem:[%s7766 + $0x8] sm:$0xff]
        %v7769 = vld [vmem:[%s7766 + $0x10] sm:$0xff]
        %v7770 = vld [vmem:[%s7766 + $0x18] sm:$0xff]
        %v7771 = vld [vmem:[%s7766 + $0x20] sm:$0xff]
        %v7772 = vld [vmem:[%s7766 + $0x28] sm:$0xff]
        %v7773 = vld [vmem:[%s7766 + $0x30] sm:$0xff]
        %v7774 = vld [vmem:[%s7766 + $0x38] sm:$0xff]
        %v7775 = vadd.f32 %v7758, %v7767
        %v7776 = vadd.f32 %v7759, %v7768
        %v7777 = vadd.f32 %v7760, %v7769
        %v7778 = vadd.f32 %v7761, %v7770
        %v7779 = vadd.f32 %v7762, %v7771
        %v7780 = vadd.f32 %v7763, %v7772
        %v7781 = vadd.f32 %v7764, %v7773
        %v7782 = vadd.f32 %v7765, %v7774
        %s7783 = scalar_lea.vmem %s463, 448 [#allocation7]
        %7784 = vst [vmem:[%s7783] sm:$0xff] %v7775
        %7785 = vst [vmem:[%s7783 + $0x8] sm:$0xff] %v7776
        %7786 = vst [vmem:[%s7783 + $0x10] sm:$0xff] %v7777
        %7787 = vst [vmem:[%s7783 + $0x18] sm:$0xff] %v7778
        %7788 = vst [vmem:[%s7783 + $0x20] sm:$0xff] %v7779
        %7789 = vst [vmem:[%s7783 + $0x28] sm:$0xff] %v7780
        %7790 = vst [vmem:[%s7783 + $0x30] sm:$0xff] %v7781
        %7791 = vst [vmem:[%s7783 + $0x38] sm:$0xff] %v7782
        %s7792 = sand.u32 %s284, 1
        %s7793 = scalar_lea.sflag [#allocation6], %s7792
        %s7794 = sand.u32 %s284, 1
        %s7795 = smul.addr %s7794, 512
        %s7796 = scalar_lea.vmem [#allocation7], %s7795
        // Predicated region
        $region61: #{mednext_block.1} parent=55 // pred_check
          %p7797 = pneg %p294
        $region62: #{mednext_block.1} parent=55 // pred_check_branch
          %7799 = sbr.rel (%p7797) target = $region64
        $region63: #{mednext_block.1} parent=55 // pred_region
          %s7801 = ssub.s32 8192, 8192
          %7802 = vsyncadd %s7793, %s7801
          %s7803 = smul.addr %s30, 64
          %s7804 = sadd.s32 %s31, %s7803
          %s7805 = smul.addr %s7804, 128
          %s7806 = scalar_lea.hbm %s9, %s7805
          %s7807 = sshll.u32 %s7796, 4
          %s7808 = int_to_ptr.vmem [resolvable:$true] %s7807
          %7813 = dma.vmem_to_hbm [thread:$0]  %s7808, 8192, %s7806, %s7793, 128, 128, 8
        $region64: #{mednext_block.1} parent=55 // pred_fallthru
          _
      $region56: #{mednext_block.1} parent=5 // pred_fallthru
        _
      %p7814 = scmp.le.s32.totalorder 2, %s21
      // Predicated region
      $region65: #{mednext_block.1} parent=5 // pred_check
        %p7815 = pneg %p7814
      $region66: #{mednext_block.1} parent=5 // pred_check_branch
        %7817 = sbr.rel (%p7815) target = $region68
      $region67: #{mednext_block.1} parent=5 // pred_region
        %s7818 = ssub.s32 %s21, 2
        // Predicated region
        $region69: #{mednext_block.1} parent=67 // pred_check
          %p7819 = pneg %p300
        $region70: #{mednext_block.1} parent=67 // pred_check_branch
          %7821 = sbr.rel (%p7819) target = $region72
        $region71: #{mednext_block.1} parent=67 // pred_region
          %s7822 = sand.u32 %s285, 1
          %s7823 = scalar_lea.sflag [#allocation6], %s7822
          %s7824 = sand.u32 %s285, 1
          %s7825 = smul.addr %s7824, 512
          %s7826 = scalar_lea.vmem [#allocation7], %s7825
          %7827 = dma.done %s7823, 8192
        $region72: #{mednext_block.1} parent=67 // pred_fallthru
          _
      $region68: #{mednext_block.1} parent=5 // pred_fallthru
        _
    $region6: #{mednext_block.1} parent=1 // loop_footer
      %s25 = sadd.s32 1, %s21
    $region7: #{mednext_block.1} parent=1 // loop_footer_branch
      %20 = sbr.rel target = $region3
    $region8: #{mednext_block.1} parent=1 // loop_exit
      _
    %7828 = vsyncpa [#allocation5], 1
    %s7829 = scalar_lea.sflag [#allocation5], 1
    %7830 = vsyncpa %s7829, 1
    %7831 = vsyncpa [#allocation6], 1
    %s7832 = scalar_lea.sflag [#allocation6], 1
    %7833 = vsyncpa %s7832, 1

</llo_original>
